<compile_context>
chip_gen: v7x
topology: tpu7x:2x2x1
jax: 0.10.0
libtpu: 0.0.40
codegen_flags: <defaults>
</compile_context>

<pallas_src>
import functools

import jax
import jax.numpy as jnp
from jax.experimental import pallas as pl
from jax.experimental.pallas import tpu as pltpu


# ----------------------------------------------------------------------------
# Fused GraphFeat kernel (one batch element per grid step)
# ----------------------------------------------------------------------------
def _graph_feat_kernel(
    x_ref,       # (H, W, C)          f32   one image, NHWC
    p1_ref,      # (4*H1*W1, H*W)     bf16  pool1 one-hot tap selection (4 stacked taps)
    w1_ref,      # (25*128, C1)       bf16  conv1 im2col weights (channel-padded taps)
    b1_ref,      # (1, C1)            f32
    p2_ref,      # (4*H2*W2, H1*W1)   bf16  pool2 one-hot tap selection
    w2_ref,      # (25*128, C2)       bf16  conv2 im2col weights
    b2_ref,      # (1, C2)            f32
    flt_ref,     # (C2, K)            bf16  flatten helper: (j % C2 == c)
    flm_ref,     # (H2*W2, K)         f32   flatten helper: (j // C2 == r)
    fc1w_ref,    # (K, 128)           bf16
    fc1b_ref,    # (1, 128)           f32
    fc2w_ref,    # (128, 2N)          bf16
    fc2b_ref,    # (1, 2N)            f32
    scale_ref,   # (1, 2N)            f32   get_coord pixel scaling
    hh_ref,      # (1, H*W)           f32   pixel row-index grid
    ww_ref,      # (1, H*W)           f32   pixel col-index grid
    feat_ref,    # (N, C)             f32   OUT: sampled graph features
    coord_ref,   # (1, 2N)            f32   OUT: pixel coords (y0,x0,y1,x1,...)
    pad1_ref,    # (H1+4, W1+4, 128)  f32   scratch: padded conv1 input
    pad2_ref,    # (H2+4, W2+4, 128)  f32   scratch: padded conv2 input
    wgt_ref,     # (N, H*W)           f32   scratch: bilinear weights
    *, H, W, num_node):
    C = x_ref.shape[-1]
    H1, W1 = H // 2, W // 2
    H2, W2 = H // 4, W // 4
    CP = pad1_ref.shape[-1]          # padded conv input channels (128, lane-aligned)
    C1 = b1_ref.shape[-1]            # conv1 out channels (48)
    C2 = b2_ref.shape[-1]            # conv2 out channels (24)

    x_flat = x_ref[...].reshape(H * W, C)                     # f32, reused by the sampler

    # ---- pool1: 2x2 max pool via four one-hot selection matmuls + max ----
    xb = x_flat.astype(jnp.bfloat16)                          # (512, 96)
    q1 = H1 * W1
    t0 = jnp.dot(p1_ref[0 * q1:1 * q1, :], xb, preferred_element_type=jnp.float32)
    t1 = jnp.dot(p1_ref[1 * q1:2 * q1, :], xb, preferred_element_type=jnp.float32)
    t2 = jnp.dot(p1_ref[2 * q1:3 * q1, :], xb, preferred_element_type=jnp.float32)
    t3 = jnp.dot(p1_ref[3 * q1:4 * q1, :], xb, preferred_element_type=jnp.float32)
    pooled1 = jnp.maximum(jnp.maximum(t0, t1), jnp.maximum(t2, t3))      # (128, 96) f32

    # ---- conv1: zero-pad(2) + im2col + ONE long-K bf16 MXU matmul + bias + ReLU ----
    pad1_ref[...] = jnp.zeros(pad1_ref.shape, pad1_ref.dtype)
    pad1_ref[2:2 + H1, 2:2 + W1, 0:C] = pooled1.reshape(H1, W1, C)
    wins = []
    for t in range(25):                                       # static unroll over 5x5 taps
        di, dj = divmod(t, 5)
        win = pad1_ref[di:di + H1, dj:dj + W1, :]             # (8, 16, 128) f32
        wins.append(win.reshape(H1 * W1, CP).astype(jnp.bfloat16))
    patches1 = jnp.concatenate(wins, axis=1)                  # (128, 3200) bf16
    a1 = jnp.dot(patches1, w1_ref[...], preferred_element_type=jnp.float32)   # (128, 48)
    a1 = jnp.maximum(a1 + b1_ref[...], 0.0)

    # ---- pool2 ----
    a1b = a1.astype(jnp.bfloat16)
    q2 = H2 * W2
    s0 = jnp.dot(p2_ref[0 * q2:1 * q2, :], a1b, preferred_element_type=jnp.float32)
    s1 = jnp.dot(p2_ref[1 * q2:2 * q2, :], a1b, preferred_element_type=jnp.float32)
    s2 = jnp.dot(p2_ref[2 * q2:3 * q2, :], a1b, preferred_element_type=jnp.float32)
    s3 = jnp.dot(p2_ref[3 * q2:4 * q2, :], a1b, preferred_element_type=jnp.float32)
    pooled2 = jnp.maximum(jnp.maximum(s0, s1), jnp.maximum(s2, s3))      # (32, 48) f32

    # ---- conv2 ----
    pad2_ref[...] = jnp.zeros(pad2_ref.shape, pad2_ref.dtype)
    pad2_ref[2:2 + H2, 2:2 + W2, 0:C1] = pooled2.reshape(H2, W2, C1)
    wins2 = []
    for t in range(25):
        di, dj = divmod(t, 5)
        win = pad2_ref[di:di + H2, dj:dj + W2, :]             # (4, 8, 128) f32
        wins2.append(win.reshape(H2 * W2, CP).astype(jnp.bfloat16))
    patches2 = jnp.concatenate(wins2, axis=1)                 # (32, 3200) bf16
    a2 = jnp.dot(patches2, w2_ref[...], preferred_element_type=jnp.float32)   # (32, 24)
    a2 = jnp.maximum(a2 + b2_ref[...], 0.0)

    # ---- flatten (hw, c) -> (1, hw*c) without a sublane->lane reshape:
    #      ysel[r, j] = a2[r, j % C2]; v[j] = ysel[j // C2, j] = a2[j//C2, j%C2]
    ysel = jnp.dot(a2.astype(jnp.bfloat16), flt_ref[...],
                   preferred_element_type=jnp.float32)        # (32, 768)
    v = jnp.sum(ysel * flm_ref[...], axis=0, keepdims=True)   # (1, 768) f32 (exact selection)

    # ---- fc1 + ReLU + fc2 + n_Sigmoid(., 3) + get_coord scaling ----
    h1 = jnp.dot(v.astype(jnp.bfloat16), fc1w_ref[...], preferred_element_type=jnp.float32)
    h1 = jnp.maximum(h1 + fc1b_ref[...], 0.0)                 # (1, 128)
    y2 = jnp.dot(h1.astype(jnp.bfloat16), fc2w_ref[...], preferred_element_type=jnp.float32)
    y2 = y2 + fc2b_ref[...]                                   # (1, 2N)
    # TODO(synk): n_Sigmoid(x, 3) is undefined upstream; implemented as 1/(1+exp(-3x)).
    sig = 1.0 / (1.0 + jnp.exp(-3.0 * y2))
    # TODO(synk): get_coord is undefined upstream; implemented as scaling to pixel space:
    # even entries (y) -> [0, H-1], odd entries (x) -> [0, W-1].
    coord_row = sig * scale_ref[...]                          # (1, 2N)
    coord_ref[...] = coord_row

    # ---- bilinear sampling at the predicted coords, shared across all C channels ----
    hh = hh_ref[...]                                          # (1, H*W)
    ww = ww_ref[...]
    for n in range(num_node):                                 # static unroll over nodes
        yn = jnp.clip(coord_row[0:1, 2 * n:2 * n + 1], 0.0, float(H - 1))   # (1, 1)
        xn = jnp.clip(coord_row[0:1, 2 * n + 1:2 * n + 2], 0.0, float(W - 1))
        y0 = jnp.floor(yn)
        y1 = jnp.ceil(yn)
        x0 = jnp.floor(xn)
        x1 = jnp.ceil(xn)
        dy = yn - y0
        dx = xn - x0
        wy = jnp.where(hh == y0, 1.0 - dy, 0.0) + jnp.where(hh == y1, dy, 0.0)
        wx = jnp.where(ww == x0, 1.0 - dx, 0.0) + jnp.where(ww == x1, dx, 0.0)
        wgt_ref[n:n + 1, :] = wy * wx                         # (1, H*W)
    feat_ref[...] = jnp.dot(wgt_ref[...], x_flat,
                            preferred_element_type=jnp.float32)           # (N, C) f32


# ----------------------------------------------------------------------------
# GraphFeat forward (single fused pallas_call; only the NCHW->NHWC transpose
# and the final (B, 2N) -> (B, N, 2) view run in XLA)
# ----------------------------------------------------------------------------
def graph_feat_forward(params, x, num_node):
    B, C, H, W = x.shape
    H1, W1, H2, W2 = H // 2, W // 2, H // 4, W // 4
    C1 = params["b1"].shape[-1]
    C2 = params["b2"].shape[-1]
    K = params["fc1_w"].shape[0]
    x_nhwc = jnp.transpose(x, (0, 2, 3, 1))                   # single layout change

    kern = functools.partial(_graph_feat_kernel, H=H, W=W, num_node=num_node)

    flops_per_b = 2 * (
        4 * (H1 * W1) * (H * W) * C          # pool1 selection matmuls
        + (H1 * W1) * (25 * 128) * C1        # conv1
        + 4 * (H2 * W2) * (H1 * W1) * C1     # pool2
        + (H2 * W2) * (25 * 128) * C2        # conv2
        + (H2 * W2) * C2 * K                 # flatten selection
        + K * 128 + 128 * 2 * num_node       # fc1, fc2
        + num_node * (H * W) * C)            # bilinear sampling
    param_bytes = sum(int(v.size) * v.dtype.itemsize for v in params.values())
    out_bytes = B * (num_node * C + 2 * num_node) * 4
    cost = pl.CostEstimate(flops=int(B * flops_per_b),
                           transcendentals=int(B * 2 * num_node),
                           bytes_accessed=int(x.size) * 4 + param_bytes + out_bytes)

    const2d = lambda b: (0, 0)
    feat, coord3 = pl.pallas_call(
        kern,
        out_shape=(jax.ShapeDtypeStruct((B, num_node, C), jnp.float32),
                   jax.ShapeDtypeStruct((B, 1, 2 * num_node), jnp.float32)),
        grid=(B,),
        in_specs=[
            pl.BlockSpec((None, H, W, C), lambda b: (b, 0, 0, 0)),
            pl.BlockSpec(params["p1"].shape, const2d),
            pl.BlockSpec(params["w1"].shape, const2d),
            pl.BlockSpec(params["b1"].shape, const2d),
            pl.BlockSpec(params["p2"].shape, const2d),
            pl.BlockSpec(params["w2"].shape, const2d),
            pl.BlockSpec(params["b2"].shape, const2d),
            pl.BlockSpec(params["flat_T"].shape, const2d),
            pl.BlockSpec(params["flat_M"].shape, const2d),
            pl.BlockSpec(params["fc1_w"].shape, const2d),
            pl.BlockSpec(params["fc1_b"].shape, const2d),
            pl.BlockSpec(params["fc2_w"].shape, const2d),
            pl.BlockSpec(params["fc2_b"].shape, const2d),
            pl.BlockSpec(params["coord_scale"].shape, const2d),
            pl.BlockSpec(params["hh"].shape, const2d),
            pl.BlockSpec(params["ww"].shape, const2d),
        ],
        out_specs=(pl.BlockSpec((None, num_node, C), lambda b: (b, 0, 0)),
                   pl.BlockSpec((None, 1, 2 * num_node), lambda b: (b, 0, 0))),
        scratch_shapes=[
            pltpu.VMEM((H1 + 4, W1 + 4, 128), jnp.float32),   # padded conv1 input
            pltpu.VMEM((H2 + 4, W2 + 4, 128), jnp.float32),   # padded conv2 input
            pltpu.VMEM((num_node, H * W), jnp.float32),       # bilinear weight matrix
        ],
        compiler_params=pltpu.CompilerParams(dimension_semantics=("parallel",)),
        cost_estimate=cost,
    )(x_nhwc, params["p1"], params["w1"], params["b1"], params["p2"], params["w2"],
      params["b2"], params["flat_T"], params["flat_M"], params["fc1_w"], params["fc1_b"],
      params["fc2_w"], params["fc2_b"], params["coord_scale"], params["hh"], params["ww"])

    coord = coord3.reshape(B, num_node, 2)
    return feat, coord


# ----------------------------------------------------------------------------
# Parameters: PyTorch-convention init + one-time kernel-layout preparation
# ----------------------------------------------------------------------------
def init_params(key, num_node):
    ks = jax.random.split(key, 8)
    p = {}
    p["w1"] = jax.random.normal(ks[0], (48, 96, 5, 5), jnp.float32) * 0.02
    p["b1"] = jax.random.normal(ks[1], (48,), jnp.float32) * 0.02
    p["w2"] = jax.random.normal(ks[2], (24, 48, 5, 5), jnp.float32) * 0.02
    p["b2"] = jax.random.normal(ks[3], (24,), jnp.float32) * 0.02
    p["fc1_w"] = jax.random.normal(ks[4], (128, 4 * 8 * 24), jnp.float32) * 0.02
    p["fc1_b"] = jax.random.normal(ks[5], (128,), jnp.float32) * 0.02
    # fc2: normal(0, 0.4) as in GraphGen._init_params
    p["fc2_w"] = jax.random.normal(ks[6], (2 * num_node, 128), jnp.float32) * 0.4
    p["fc2_b"] = jax.random.normal(ks[7], (2 * num_node,), jnp.float32) * 0.4
    return p


def _pool_select(Hi, Wi):
    """One-hot selection matrices for a 2x2/stride-2 max pool over an (Hi, Wi) grid.
    Returns (4*Ho*Wo, Hi*Wi) bf16: four stacked tap selections (dy, dx) in row blocks."""
    Ho, Wo = Hi // 2, Wi // 2
    q = jnp.arange(Ho * Wo)
    hq, wq = q // Wo, q % Wo
    p = jnp.arange(Hi * Wi)
    mats = []
    for dy in range(2):
        for dx in range(2):
            src = (2 * hq + dy) * Wi + (2 * wq + dx)
            mats.append((p[None, :] == src[:, None]).astype(jnp.bfloat16))
    return jnp.concatenate(mats, axis=0)


def prepare_params(raw, H, W, num_node):
    """One-time re-layout of PyTorch-convention params into fused-kernel layout."""
    CP = 128                                   # lane-aligned padded conv input channels
    H1, W1, H2, W2 = H // 2, W // 2, H // 4, W // 4
    C2 = 24
    R = H2 * W2                                # 32 spatial positions after stage 2
    K = R * C2                                 # 768 fc1 inputs
    p = {}
    # conv taps: (Cout, Cin, 5, 5) -> im2col (25*128, Cout) bf16, channel-padded per tap.
    w1 = jnp.transpose(raw["w1"], (2, 3, 1, 0)).reshape(25, 96, 48)
    p["w1"] = jnp.pad(w1, ((0, 0), (0, CP - 96), (0, 0))).reshape(25 * CP, 48).astype(jnp.bfloat16)
    p["b1"] = raw["b1"].reshape(1, -1).astype(jnp.float32)
    w2 = jnp.transpose(raw["w2"], (2, 3, 1, 0)).reshape(25, 48, 24)
    p["w2"] = jnp.pad(w2, ((0, 0), (0, CP - 48), (0, 0))).reshape(25 * CP, 24).astype(jnp.bfloat16)
    p["b2"] = raw["b2"].reshape(1, -1).astype(jnp.float32)
    # max-pool tap-selection matrices.
    p["p1"] = _pool_select(H, W)               # (4*H1*W1, H*W)
    p["p2"] = _pool_select(H1, W1)             # (4*H2*W2, H1*W1)
    # flatten helpers: v[j] = conv2[j // C2, j % C2]  (hw-major, channel-minor order).
    j = jnp.arange(K)
    p["flat_T"] = (j[None, :] % C2 == jnp.arange(C2)[:, None]).astype(jnp.bfloat16)   # (24, 768)
    p["flat_M"] = (j[None, :] // C2 == jnp.arange(R)[:, None]).astype(jnp.float32)    # (32, 768)
    # fc1: PyTorch flattens NCHW (c, h, w); the kernel produces (h, w, c)-ordered inputs,
    # so permute fc1 input columns once here.
    fc1 = raw["fc1_w"].reshape(128, C2, H2, W2).transpose(2, 3, 1, 0).reshape(K, 128)
    p["fc1_w"] = fc1.astype(jnp.bfloat16)
    p["fc1_b"] = raw["fc1_b"].reshape(1, -1).astype(jnp.float32)
    p["fc2_w"] = raw["fc2_w"].T.astype(jnp.bfloat16)
    p["fc2_b"] = raw["fc2_b"].reshape(1, -1).astype(jnp.float32)
    # get_coord scaling for the flat (1, 2N) coord row: even -> H-1 (y), odd -> W-1 (x).
    p["coord_scale"] = jnp.tile(jnp.array([H - 1.0, W - 1.0], jnp.float32),
                                num_node).reshape(1, 2 * num_node)
    # sampler pixel grids (batch-invariant, hoisted out of the kernel body).
    pidx = jnp.arange(H * W)
    p["hh"] = (pidx // W).astype(jnp.float32).reshape(1, H * W)
    p["ww"] = (pidx % W).astype(jnp.float32).reshape(1, H * W)
    return p


if __name__ == "__main__":
    key = jax.random.PRNGKey(0)
    kx, kp = jax.random.split(key)

    num_node = 8
    B, C, H, W = 2, 96, 16, 32            # pinned by conv1 (96 ch) and fc1 (4*8*24)
    x = jax.random.normal(kx, (B, C, H, W), jnp.float32)
    raw_params = init_params(kp, num_node)
    params = prepare_params(raw_params, H, W, num_node)   # one-time weight re-layout

    fwd = jax.jit(functools.partial(graph_feat_forward, num_node=num_node))
    graph_feat, coord = fwd(params, x)
    jax.block_until_ready((graph_feat, coord))

    assert graph_feat.shape == (B, num_node, C)
    assert coord.shape == (B, num_node, 2)
    assert bool(jnp.isfinite(graph_feat).all())
    assert bool(jnp.isfinite(coord).all())
    print("KERNEL_OK")
</pallas_src>

<mosaic_0001>
module attributes {stable_mosaic.version = 11 : i64} {
  func.func @_graph_feat_kernel(%arg0: i32, %arg1: memref<1x16x32x96xf32, #tpu.memory_space<vmem>>, %arg2: memref<512x512xbf16, #tpu.memory_space<vmem>>, %arg3: memref<3200x48xbf16, #tpu.memory_space<vmem>>, %arg4: memref<1x48xf32, #tpu.memory_space<vmem>>, %arg5: memref<128x128xbf16, #tpu.memory_space<vmem>>, %arg6: memref<3200x24xbf16, #tpu.memory_space<vmem>>, %arg7: memref<1x24xf32, #tpu.memory_space<vmem>>, %arg8: memref<24x768xbf16, #tpu.memory_space<vmem>>, %arg9: memref<32x768xf32, #tpu.memory_space<vmem>>, %arg10: memref<768x128xbf16, #tpu.memory_space<vmem>>, %arg11: memref<1x128xf32, #tpu.memory_space<vmem>>, %arg12: memref<128x16xbf16, #tpu.memory_space<vmem>>, %arg13: memref<1x16xf32, #tpu.memory_space<vmem>>, %arg14: memref<1x16xf32, #tpu.memory_space<vmem>>, %arg15: memref<1x512xf32, #tpu.memory_space<vmem>>, %arg16: memref<1x512xf32, #tpu.memory_space<vmem>>, %arg17: memref<1x8x96xf32, #tpu.memory_space<vmem>>, %arg18: memref<1x1x16xf32, #tpu.memory_space<vmem>>, %arg19: memref<12x20x128xf32, #tpu.memory_space<vmem>>, %arg20: memref<8x12x128xf32, #tpu.memory_space<vmem>>, %arg21: memref<8x512xf32, #tpu.memory_space<vmem>>) attributes {dimension_semantics = [#tpu.dimension_semantics<parallel>], iteration_bounds = array<i64: 2>, scalar_prefetch = 0 : i64, scratch_operands = 3 : i64, tpu.core_type = #tpu.core_type<tc>, window_params = [{transform_indices = @transform_0, window_bounds = array<i64: 1, 16, 32, 96>}, {pipeline_mode = #tpu.pipeline_mode<synchronous>, transform_indices = @transform_1, window_bounds = array<i64: 512, 512>}, {pipeline_mode = #tpu.pipeline_mode<synchronous>, transform_indices = @transform_2, window_bounds = array<i64: 3200, 48>}, {pipeline_mode = #tpu.pipeline_mode<synchronous>, transform_indices = @transform_3, window_bounds = array<i64: 1, 48>}, {pipeline_mode = #tpu.pipeline_mode<synchronous>, transform_indices = @transform_4, window_bounds = array<i64: 128, 128>}, {pipeline_mode = #tpu.pipeline_mode<synchronous>, transform_indices = @transform_5, window_bounds = array<i64: 3200, 24>}, {pipeline_mode = #tpu.pipeline_mode<synchronous>, transform_indices = @transform_6, window_bounds = array<i64: 1, 24>}, {pipeline_mode = #tpu.pipeline_mode<synchronous>, transform_indices = @transform_7, window_bounds = array<i64: 24, 768>}, {pipeline_mode = #tpu.pipeline_mode<synchronous>, transform_indices = @transform_8, window_bounds = array<i64: 32, 768>}, {pipeline_mode = #tpu.pipeline_mode<synchronous>, transform_indices = @transform_9, window_bounds = array<i64: 768, 128>}, {pipeline_mode = #tpu.pipeline_mode<synchronous>, transform_indices = @transform_10, window_bounds = array<i64: 1, 128>}, {pipeline_mode = #tpu.pipeline_mode<synchronous>, transform_indices = @transform_11, window_bounds = array<i64: 128, 16>}, {pipeline_mode = #tpu.pipeline_mode<synchronous>, transform_indices = @transform_12, window_bounds = array<i64: 1, 16>}, {pipeline_mode = #tpu.pipeline_mode<synchronous>, transform_indices = @transform_13, window_bounds = array<i64: 1, 16>}, {pipeline_mode = #tpu.pipeline_mode<synchronous>, transform_indices = @transform_14, window_bounds = array<i64: 1, 512>}, {pipeline_mode = #tpu.pipeline_mode<synchronous>, transform_indices = @transform_15, window_bounds = array<i64: 1, 512>}, {transform_indices = @transform_16, window_bounds = array<i64: 1, 8, 96>}, {transform_indices = @transform_17, window_bounds = array<i64: 1, 1, 16>}]} {
    %c0 = arith.constant 0 : index
    %c0_0 = arith.constant 0 : index
    %c0_1 = arith.constant 0 : index
    %c0_2 = arith.constant 0 : index
    %0 = vector.load %arg1[%c0, %c0_0, %c0_1, %c0_2] : memref<1x16x32x96xf32, #tpu.memory_space<vmem>>, vector<1x16x32x96xf32>
    %1 = vector.shape_cast %0 : vector<1x16x32x96xf32> to vector<16x32x96xf32>
    %2 = vector.shape_cast %1 : vector<16x32x96xf32> to vector<512x96xf32>
    %3 = arith.truncf %2 : vector<512x96xf32> to vector<512x96xbf16>
    %c0_3 = arith.constant 0 : index
    %c0_4 = arith.constant 0 : index
    %4 = vector.load %arg2[%c0_3, %c0_4] : memref<512x512xbf16, #tpu.memory_space<vmem>>, vector<128x512xbf16>
    %cst = arith.constant dense<0.000000e+00> : vector<128x96xf32>
    %5 = tpu.matmul %4, %3, %cst {dimension_numbers = #tpu.dot_dimension_numbers<[1], [0], [0], [1], [0, 0, 1, 1], [], []>} : vector<128x512xbf16>, vector<512x96xbf16>, vector<128x96xf32> -> vector<128x96xf32>
    %c128 = arith.constant 128 : index
    %c0_5 = arith.constant 0 : index
    %6 = vector.load %arg2[%c128, %c0_5] : memref<512x512xbf16, #tpu.memory_space<vmem>>, vector<128x512xbf16>
    %cst_6 = arith.constant dense<0.000000e+00> : vector<128x96xf32>
    %7 = tpu.matmul %6, %3, %cst_6 {dimension_numbers = #tpu.dot_dimension_numbers<[1], [0], [0], [1], [0, 0, 1, 1], [], []>} : vector<128x512xbf16>, vector<512x96xbf16>, vector<128x96xf32> -> vector<128x96xf32>
    %c256 = arith.constant 256 : index
    %c0_7 = arith.constant 0 : index
    %8 = vector.load %arg2[%c256, %c0_7] : memref<512x512xbf16, #tpu.memory_space<vmem>>, vector<128x512xbf16>
    %cst_8 = arith.constant dense<0.000000e+00> : vector<128x96xf32>
    %9 = tpu.matmul %8, %3, %cst_8 {dimension_numbers = #tpu.dot_dimension_numbers<[1], [0], [0], [1], [0, 0, 1, 1], [], []>} : vector<128x512xbf16>, vector<512x96xbf16>, vector<128x96xf32> -> vector<128x96xf32>
    %c384 = arith.constant 384 : index
    %c0_9 = arith.constant 0 : index
    %10 = vector.load %arg2[%c384, %c0_9] : memref<512x512xbf16, #tpu.memory_space<vmem>>, vector<128x512xbf16>
    %cst_10 = arith.constant dense<0.000000e+00> : vector<128x96xf32>
    %11 = tpu.matmul %10, %3, %cst_10 {dimension_numbers = #tpu.dot_dimension_numbers<[1], [0], [0], [1], [0, 0, 1, 1], [], []>} : vector<128x512xbf16>, vector<512x96xbf16>, vector<128x96xf32> -> vector<128x96xf32>
    %12 = arith.maximumf %5, %7 : vector<128x96xf32>
    %13 = arith.maximumf %9, %11 : vector<128x96xf32>
    %14 = arith.maximumf %12, %13 : vector<128x96xf32>
    %cst_11 = arith.constant 0.000000e+00 : f32
    %15 = vector.broadcast %cst_11 : f32 to vector<12x20x128xf32>
    %c0_12 = arith.constant 0 : index
    %c0_13 = arith.constant 0 : index
    %c0_14 = arith.constant 0 : index
    %16 = vector.load %arg19[%c0_12, %c0_13, %c0_14] : memref<12x20x128xf32, #tpu.memory_space<vmem>>, vector<12x20x128xf32>
    tpu.vector_store %arg19[%c0_12, %c0_13, %c0_14], %15 {strides = array<i32>} : memref<12x20x128xf32, #tpu.memory_space<vmem>>, vector<12x20x128xf32>,
    %17 = vector.shape_cast %14 : vector<128x96xf32> to vector<8x16x96xf32>
    %c2 = arith.constant 2 : index
    %c2_15 = arith.constant 2 : index
    %c0_16 = arith.constant 0 : index
    %18 = vector.load %arg19[%c2, %c2_15, %c0_16] : memref<12x20x128xf32, #tpu.memory_space<vmem>>, vector<8x16x96xf32>
    tpu.vector_store %arg19[%c2, %c2_15, %c0_16], %17 {strides = array<i32>} : memref<12x20x128xf32, #tpu.memory_space<vmem>>, vector<8x16x96xf32>,
    %c0_17 = arith.constant 0 : index
    %c0_18 = arith.constant 0 : index
    %c0_19 = arith.constant 0 : index
    %19 = vector.load %arg19[%c0_17, %c0_18, %c0_19] : memref<12x20x128xf32, #tpu.memory_space<vmem>>, vector<8x16x128xf32>
    %20 = vector.shape_cast %19 : vector<8x16x128xf32> to vector<128x128xf32>
    %21 = arith.truncf %20 : vector<128x128xf32> to vector<128x128xbf16>
    %c0_20 = arith.constant 0 : index
    %c1 = arith.constant 1 : index
    %c0_21 = arith.constant 0 : index
    %22 = vector.load %arg19[%c0_20, %c1, %c0_21] : memref<12x20x128xf32, #tpu.memory_space<vmem>>, vector<8x16x128xf32>
    %23 = vector.shape_cast %22 : vector<8x16x128xf32> to vector<128x128xf32>
    %24 = arith.truncf %23 : vector<128x128xf32> to vector<128x128xbf16>
    %c0_22 = arith.constant 0 : index
    %c2_23 = arith.constant 2 : index
    %c0_24 = arith.constant 0 : index
    %25 = vector.load %arg19[%c0_22, %c2_23, %c0_24] : memref<12x20x128xf32, #tpu.memory_space<vmem>>, vector<8x16x128xf32>
    %26 = vector.shape_cast %25 : vector<8x16x128xf32> to vector<128x128xf32>
    %27 = arith.truncf %26 : vector<128x128xf32> to vector<128x128xbf16>
    %c0_25 = arith.constant 0 : index
    %c3 = arith.constant 3 : index
    %c0_26 = arith.constant 0 : index
    %28 = vector.load %arg19[%c0_25, %c3, %c0_26] : memref<12x20x128xf32, #tpu.memory_space<vmem>>, vector<8x16x128xf32>
    %29 = vector.shape_cast %28 : vector<8x16x128xf32> to vector<128x128xf32>
    %30 = arith.truncf %29 : vector<128x128xf32> to vector<128x128xbf16>
    %c0_27 = arith.constant 0 : index
    %c4 = arith.constant 4 : index
    %c0_28 = arith.constant 0 : index
    %31 = vector.load %arg19[%c0_27, %c4, %c0_28] : memref<12x20x128xf32, #tpu.memory_space<vmem>>, vector<8x16x128xf32>
    %32 = vector.shape_cast %31 : vector<8x16x128xf32> to vector<128x128xf32>
    %33 = arith.truncf %32 : vector<128x128xf32> to vector<128x128xbf16>
    %c1_29 = arith.constant 1 : index
    %c0_30 = arith.constant 0 : index
    %c0_31 = arith.constant 0 : index
    %34 = vector.load %arg19[%c1_29, %c0_30, %c0_31] : memref<12x20x128xf32, #tpu.memory_space<vmem>>, vector<8x16x128xf32>
    %35 = vector.shape_cast %34 : vector<8x16x128xf32> to vector<128x128xf32>
    %36 = arith.truncf %35 : vector<128x128xf32> to vector<128x128xbf16>
    %c1_32 = arith.constant 1 : index
    %c1_33 = arith.constant 1 : index
    %c0_34 = arith.constant 0 : index
    %37 = vector.load %arg19[%c1_32, %c1_33, %c0_34] : memref<12x20x128xf32, #tpu.memory_space<vmem>>, vector<8x16x128xf32>
    %38 = vector.shape_cast %37 : vector<8x16x128xf32> to vector<128x128xf32>
    %39 = arith.truncf %38 : vector<128x128xf32> to vector<128x128xbf16>
    %c1_35 = arith.constant 1 : index
    %c2_36 = arith.constant 2 : index
    %c0_37 = arith.constant 0 : index
    %40 = vector.load %arg19[%c1_35, %c2_36, %c0_37] : memref<12x20x128xf32, #tpu.memory_space<vmem>>, vector<8x16x128xf32>
    %41 = vector.shape_cast %40 : vector<8x16x128xf32> to vector<128x128xf32>
    %42 = arith.truncf %41 : vector<128x128xf32> to vector<128x128xbf16>
    %c1_38 = arith.constant 1 : index
    %c3_39 = arith.constant 3 : index
    %c0_40 = arith.constant 0 : index
    %43 = vector.load %arg19[%c1_38, %c3_39, %c0_40] : memref<12x20x128xf32, #tpu.memory_space<vmem>>, vector<8x16x128xf32>
    %44 = vector.shape_cast %43 : vector<8x16x128xf32> to vector<128x128xf32>
    %45 = arith.truncf %44 : vector<128x128xf32> to vector<128x128xbf16>
    %c1_41 = arith.constant 1 : index
    %c4_42 = arith.constant 4 : index
    %c0_43 = arith.constant 0 : index
    %46 = vector.load %arg19[%c1_41, %c4_42, %c0_43] : memref<12x20x128xf32, #tpu.memory_space<vmem>>, vector<8x16x128xf32>
    %47 = vector.shape_cast %46 : vector<8x16x128xf32> to vector<128x128xf32>
    %48 = arith.truncf %47 : vector<128x128xf32> to vector<128x128xbf16>
    %c2_44 = arith.constant 2 : index
    %c0_45 = arith.constant 0 : index
    %c0_46 = arith.constant 0 : index
    %49 = vector.load %arg19[%c2_44, %c0_45, %c0_46] : memref<12x20x128xf32, #tpu.memory_space<vmem>>, vector<8x16x128xf32>
    %50 = vector.shape_cast %49 : vector<8x16x128xf32> to vector<128x128xf32>
    %51 = arith.truncf %50 : vector<128x128xf32> to vector<128x128xbf16>
    %c2_47 = arith.constant 2 : index
    %c1_48 = arith.constant 1 : index
    %c0_49 = arith.constant 0 : index
    %52 = vector.load %arg19[%c2_47, %c1_48, %c0_49] : memref<12x20x128xf32, #tpu.memory_space<vmem>>, vector<8x16x128xf32>
    %53 = vector.shape_cast %52 : vector<8x16x128xf32> to vector<128x128xf32>
    %54 = arith.truncf %53 : vector<128x128xf32> to vector<128x128xbf16>
    %c2_50 = arith.constant 2 : index
    %c2_51 = arith.constant 2 : index
    %c0_52 = arith.constant 0 : index
    %55 = vector.load %arg19[%c2_50, %c2_51, %c0_52] : memref<12x20x128xf32, #tpu.memory_space<vmem>>, vector<8x16x128xf32>
    %56 = vector.shape_cast %55 : vector<8x16x128xf32> to vector<128x128xf32>
    %57 = arith.truncf %56 : vector<128x128xf32> to vector<128x128xbf16>
    %c2_53 = arith.constant 2 : index
    %c3_54 = arith.constant 3 : index
    %c0_55 = arith.constant 0 : index
    %58 = vector.load %arg19[%c2_53, %c3_54, %c0_55] : memref<12x20x128xf32, #tpu.memory_space<vmem>>, vector<8x16x128xf32>
    %59 = vector.shape_cast %58 : vector<8x16x128xf32> to vector<128x128xf32>
    %60 = arith.truncf %59 : vector<128x128xf32> to vector<128x128xbf16>
    %c2_56 = arith.constant 2 : index
    %c4_57 = arith.constant 4 : index
    %c0_58 = arith.constant 0 : index
    %61 = vector.load %arg19[%c2_56, %c4_57, %c0_58] : memref<12x20x128xf32, #tpu.memory_space<vmem>>, vector<8x16x128xf32>
    %62 = vector.shape_cast %61 : vector<8x16x128xf32> to vector<128x128xf32>
    %63 = arith.truncf %62 : vector<128x128xf32> to vector<128x128xbf16>
    %c3_59 = arith.constant 3 : index
    %c0_60 = arith.constant 0 : index
    %c0_61 = arith.constant 0 : index
    %64 = vector.load %arg19[%c3_59, %c0_60, %c0_61] : memref<12x20x128xf32, #tpu.memory_space<vmem>>, vector<8x16x128xf32>
    %65 = vector.shape_cast %64 : vector<8x16x128xf32> to vector<128x128xf32>
    %66 = arith.truncf %65 : vector<128x128xf32> to vector<128x128xbf16>
    %c3_62 = arith.constant 3 : index
    %c1_63 = arith.constant 1 : index
    %c0_64 = arith.constant 0 : index
    %67 = vector.load %arg19[%c3_62, %c1_63, %c0_64] : memref<12x20x128xf32, #tpu.memory_space<vmem>>, vector<8x16x128xf32>
    %68 = vector.shape_cast %67 : vector<8x16x128xf32> to vector<128x128xf32>
    %69 = arith.truncf %68 : vector<128x128xf32> to vector<128x128xbf16>
    %c3_65 = arith.constant 3 : index
    %c2_66 = arith.constant 2 : index
    %c0_67 = arith.constant 0 : index
    %70 = vector.load %arg19[%c3_65, %c2_66, %c0_67] : memref<12x20x128xf32, #tpu.memory_space<vmem>>, vector<8x16x128xf32>
    %71 = vector.shape_cast %70 : vector<8x16x128xf32> to vector<128x128xf32>
    %72 = arith.truncf %71 : vector<128x128xf32> to vector<128x128xbf16>
    %c3_68 = arith.constant 3 : index
    %c3_69 = arith.constant 3 : index
    %c0_70 = arith.constant 0 : index
    %73 = vector.load %arg19[%c3_68, %c3_69, %c0_70] : memref<12x20x128xf32, #tpu.memory_space<vmem>>, vector<8x16x128xf32>
    %74 = vector.shape_cast %73 : vector<8x16x128xf32> to vector<128x128xf32>
    %75 = arith.truncf %74 : vector<128x128xf32> to vector<128x128xbf16>
    %c3_71 = arith.constant 3 : index
    %c4_72 = arith.constant 4 : index
    %c0_73 = arith.constant 0 : index
    %76 = vector.load %arg19[%c3_71, %c4_72, %c0_73] : memref<12x20x128xf32, #tpu.memory_space<vmem>>, vector<8x16x128xf32>
    %77 = vector.shape_cast %76 : vector<8x16x128xf32> to vector<128x128xf32>
    %78 = arith.truncf %77 : vector<128x128xf32> to vector<128x128xbf16>
    %c4_74 = arith.constant 4 : index
    %c0_75 = arith.constant 0 : index
    %c0_76 = arith.constant 0 : index
    %79 = vector.load %arg19[%c4_74, %c0_75, %c0_76] : memref<12x20x128xf32, #tpu.memory_space<vmem>>, vector<8x16x128xf32>
    %80 = vector.shape_cast %79 : vector<8x16x128xf32> to vector<128x128xf32>
    %81 = arith.truncf %80 : vector<128x128xf32> to vector<128x128xbf16>
    %c4_77 = arith.constant 4 : index
    %c1_78 = arith.constant 1 : index
    %c0_79 = arith.constant 0 : index
    %82 = vector.load %arg19[%c4_77, %c1_78, %c0_79] : memref<12x20x128xf32, #tpu.memory_space<vmem>>, vector<8x16x128xf32>
    %83 = vector.shape_cast %82 : vector<8x16x128xf32> to vector<128x128xf32>
    %84 = arith.truncf %83 : vector<128x128xf32> to vector<128x128xbf16>
    %c4_80 = arith.constant 4 : index
    %c2_81 = arith.constant 2 : index
    %c0_82 = arith.constant 0 : index
    %85 = vector.load %arg19[%c4_80, %c2_81, %c0_82] : memref<12x20x128xf32, #tpu.memory_space<vmem>>, vector<8x16x128xf32>
    %86 = vector.shape_cast %85 : vector<8x16x128xf32> to vector<128x128xf32>
    %87 = arith.truncf %86 : vector<128x128xf32> to vector<128x128xbf16>
    %c4_83 = arith.constant 4 : index
    %c3_84 = arith.constant 3 : index
    %c0_85 = arith.constant 0 : index
    %88 = vector.load %arg19[%c4_83, %c3_84, %c0_85] : memref<12x20x128xf32, #tpu.memory_space<vmem>>, vector<8x16x128xf32>
    %89 = vector.shape_cast %88 : vector<8x16x128xf32> to vector<128x128xf32>
    %90 = arith.truncf %89 : vector<128x128xf32> to vector<128x128xbf16>
    %c4_86 = arith.constant 4 : index
    %c4_87 = arith.constant 4 : index
    %c0_88 = arith.constant 0 : index
    %91 = vector.load %arg19[%c4_86, %c4_87, %c0_88] : memref<12x20x128xf32, #tpu.memory_space<vmem>>, vector<8x16x128xf32>
    %92 = vector.shape_cast %91 : vector<8x16x128xf32> to vector<128x128xf32>
    %93 = arith.truncf %92 : vector<128x128xf32> to vector<128x128xbf16>
    %94 = tpu.concatenate %21, %24, %27, %30, %33, %36, %39, %42, %45, %48, %51, %54, %57, %60, %63, %66 in 1 : vector<128x128xbf16>, vector<128x128xbf16>, vector<128x128xbf16>, vector<128x128xbf16>, vector<128x128xbf16>, vector<128x128xbf16>, vector<128x128xbf16>, vector<128x128xbf16>, vector<128x128xbf16>, vector<128x128xbf16>, vector<128x128xbf16>, vector<128x128xbf16>, vector<128x128xbf16>, vector<128x128xbf16>, vector<128x128xbf16>, vector<128x128xbf16> -> vector<128x2048xbf16>
    %95 = tpu.concatenate %69, %72, %75, %78, %81, %84, %87, %90, %93 in 1 : vector<128x128xbf16>, vector<128x128xbf16>, vector<128x128xbf16>, vector<128x128xbf16>, vector<128x128xbf16>, vector<128x128xbf16>, vector<128x128xbf16>, vector<128x128xbf16>, vector<128x128xbf16> -> vector<128x1152xbf16>
    %96 = tpu.concatenate %94, %95 in 1 : vector<128x2048xbf16>, vector<128x1152xbf16> -> vector<128x3200xbf16>
    %c0_89 = arith.constant 0 : index
    %c0_90 = arith.constant 0 : index
    %97 = vector.load %arg3[%c0_89, %c0_90] : memref<3200x48xbf16, #tpu.memory_space<vmem>>, vector<3200x48xbf16>
    %cst_91 = arith.constant dense<0.000000e+00> : vector<128x48xf32>
    %98 = tpu.matmul %96, %97, %cst_91 {dimension_numbers = #tpu.dot_dimension_numbers<[1], [0], [0], [1], [0, 0, 1, 1], [], []>} : vector<128x3200xbf16>, vector<3200x48xbf16>, vector<128x48xf32> -> vector<128x48xf32>
    %c0_92 = arith.constant 0 : index
    %c0_93 = arith.constant 0 : index
    %99 = vector.load %arg4[%c0_92, %c0_93] : memref<1x48xf32, #tpu.memory_space<vmem>>, vector<1x48xf32>
    %100 = vector.broadcast %99 : vector<1x48xf32> to vector<128x48xf32>
    %101 = arith.addf %98, %100 : vector<128x48xf32>
    %cst_94 = arith.constant 0.000000e+00 : f32
    %102 = vector.broadcast %cst_94 : f32 to vector<128x48xf32>
    %103 = arith.maximumf %101, %102 : vector<128x48xf32>
    %104 = arith.truncf %103 : vector<128x48xf32> to vector<128x48xbf16>
    %c0_95 = arith.constant 0 : index
    %c0_96 = arith.constant 0 : index
    %105 = vector.load %arg5[%c0_95, %c0_96] : memref<128x128xbf16, #tpu.memory_space<vmem>>, vector<32x128xbf16>
    %cst_97 = arith.constant dense<0.000000e+00> : vector<32x48xf32>
    %106 = tpu.matmul %105, %104, %cst_97 {dimension_numbers = #tpu.dot_dimension_numbers<[1], [0], [0], [1], [0, 0, 1, 1], [], []>} : vector<32x128xbf16>, vector<128x48xbf16>, vector<32x48xf32> -> vector<32x48xf32>
    %c32 = arith.constant 32 : index
    %c0_98 = arith.constant 0 : index
    %107 = vector.load %arg5[%c32, %c0_98] : memref<128x128xbf16, #tpu.memory_space<vmem>>, vector<32x128xbf16>
    %cst_99 = arith.constant dense<0.000000e+00> : vector<32x48xf32>
    %108 = tpu.matmul %107, %104, %cst_99 {dimension_numbers = #tpu.dot_dimension_numbers<[1], [0], [0], [1], [0, 0, 1, 1], [], []>} : vector<32x128xbf16>, vector<128x48xbf16>, vector<32x48xf32> -> vector<32x48xf32>
    %c64 = arith.constant 64 : index
    %c0_100 = arith.constant 0 : index
    %109 = vector.load %arg5[%c64, %c0_100] : memref<128x128xbf16, #tpu.memory_space<vmem>>, vector<32x128xbf16>
    %cst_101 = arith.constant dense<0.000000e+00> : vector<32x48xf32>
    %110 = tpu.matmul %109, %104, %cst_101 {dimension_numbers = #tpu.dot_dimension_numbers<[1], [0], [0], [1], [0, 0, 1, 1], [], []>} : vector<32x128xbf16>, vector<128x48xbf16>, vector<32x48xf32> -> vector<32x48xf32>
    %c96 = arith.constant 96 : index
    %c0_102 = arith.constant 0 : index
    %111 = vector.load %arg5[%c96, %c0_102] : memref<128x128xbf16, #tpu.memory_space<vmem>>, vector<32x128xbf16>
    %cst_103 = arith.constant dense<0.000000e+00> : vector<32x48xf32>
    %112 = tpu.matmul %111, %104, %cst_103 {dimension_numbers = #tpu.dot_dimension_numbers<[1], [0], [0], [1], [0, 0, 1, 1], [], []>} : vector<32x128xbf16>, vector<128x48xbf16>, vector<32x48xf32> -> vector<32x48xf32>
    %113 = arith.maximumf %106, %108 : vector<32x48xf32>
    %114 = arith.maximumf %110, %112 : vector<32x48xf32>
    %115 = arith.maximumf %113, %114 : vector<32x48xf32>
    %cst_104 = arith.constant 0.000000e+00 : f32
    %116 = vector.broadcast %cst_104 : f32 to vector<8x12x128xf32>
    %c0_105 = arith.constant 0 : index
    %c0_106 = arith.constant 0 : index
    %c0_107 = arith.constant 0 : index
    %117 = vector.load %arg20[%c0_105, %c0_106, %c0_107] : memref<8x12x128xf32, #tpu.memory_space<vmem>>, vector<8x12x128xf32>
    tpu.vector_store %arg20[%c0_105, %c0_106, %c0_107], %116 {strides = array<i32>} : memref<8x12x128xf32, #tpu.memory_space<vmem>>, vector<8x12x128xf32>,
    %118 = vector.shape_cast %115 : vector<32x48xf32> to vector<4x8x48xf32>
    %c2_108 = arith.constant 2 : index
    %c2_109 = arith.constant 2 : index
    %c0_110 = arith.constant 0 : index
    %119 = vector.load %arg20[%c2_108, %c2_109, %c0_110] : memref<8x12x128xf32, #tpu.memory_space<vmem>>, vector<4x8x48xf32>
    tpu.vector_store %arg20[%c2_108, %c2_109, %c0_110], %118 {strides = array<i32>} : memref<8x12x128xf32, #tpu.memory_space<vmem>>, vector<4x8x48xf32>,
    %c0_111 = arith.constant 0 : index
    %c0_112 = arith.constant 0 : index
    %c0_113 = arith.constant 0 : index
    %120 = vector.load %arg20[%c0_111, %c0_112, %c0_113] : memref<8x12x128xf32, #tpu.memory_space<vmem>>, vector<4x8x128xf32>
    %121 = vector.shape_cast %120 : vector<4x8x128xf32> to vector<32x128xf32>
    %122 = arith.truncf %121 : vector<32x128xf32> to vector<32x128xbf16>
    %c0_114 = arith.constant 0 : index
    %c1_115 = arith.constant 1 : index
    %c0_116 = arith.constant 0 : index
    %123 = vector.load %arg20[%c0_114, %c1_115, %c0_116] : memref<8x12x128xf32, #tpu.memory_space<vmem>>, vector<4x8x128xf32>
    %124 = vector.shape_cast %123 : vector<4x8x128xf32> to vector<32x128xf32>
    %125 = arith.truncf %124 : vector<32x128xf32> to vector<32x128xbf16>
    %c0_117 = arith.constant 0 : index
    %c2_118 = arith.constant 2 : index
    %c0_119 = arith.constant 0 : index
    %126 = vector.load %arg20[%c0_117, %c2_118, %c0_119] : memref<8x12x128xf32, #tpu.memory_space<vmem>>, vector<4x8x128xf32>
    %127 = vector.shape_cast %126 : vector<4x8x128xf32> to vector<32x128xf32>
    %128 = arith.truncf %127 : vector<32x128xf32> to vector<32x128xbf16>
    %c0_120 = arith.constant 0 : index
    %c3_121 = arith.constant 3 : index
    %c0_122 = arith.constant 0 : index
    %129 = vector.load %arg20[%c0_120, %c3_121, %c0_122] : memref<8x12x128xf32, #tpu.memory_space<vmem>>, vector<4x8x128xf32>
    %130 = vector.shape_cast %129 : vector<4x8x128xf32> to vector<32x128xf32>
    %131 = arith.truncf %130 : vector<32x128xf32> to vector<32x128xbf16>
    %c0_123 = arith.constant 0 : index
    %c4_124 = arith.constant 4 : index
    %c0_125 = arith.constant 0 : index
    %132 = vector.load %arg20[%c0_123, %c4_124, %c0_125] : memref<8x12x128xf32, #tpu.memory_space<vmem>>, vector<4x8x128xf32>
    %133 = vector.shape_cast %132 : vector<4x8x128xf32> to vector<32x128xf32>
    %134 = arith.truncf %133 : vector<32x128xf32> to vector<32x128xbf16>
    %c1_126 = arith.constant 1 : index
    %c0_127 = arith.constant 0 : index
    %c0_128 = arith.constant 0 : index
    %135 = vector.load %arg20[%c1_126, %c0_127, %c0_128] : memref<8x12x128xf32, #tpu.memory_space<vmem>>, vector<4x8x128xf32>
    %136 = vector.shape_cast %135 : vector<4x8x128xf32> to vector<32x128xf32>
    %137 = arith.truncf %136 : vector<32x128xf32> to vector<32x128xbf16>
    %c1_129 = arith.constant 1 : index
    %c1_130 = arith.constant 1 : index
    %c0_131 = arith.constant 0 : index
    %138 = vector.load %arg20[%c1_129, %c1_130, %c0_131] : memref<8x12x128xf32, #tpu.memory_space<vmem>>, vector<4x8x128xf32>
    %139 = vector.shape_cast %138 : vector<4x8x128xf32> to vector<32x128xf32>
    %140 = arith.truncf %139 : vector<32x128xf32> to vector<32x128xbf16>
    %c1_132 = arith.constant 1 : index
    %c2_133 = arith.constant 2 : index
    %c0_134 = arith.constant 0 : index
    %141 = vector.load %arg20[%c1_132, %c2_133, %c0_134] : memref<8x12x128xf32, #tpu.memory_space<vmem>>, vector<4x8x128xf32>
    %142 = vector.shape_cast %141 : vector<4x8x128xf32> to vector<32x128xf32>
    %143 = arith.truncf %142 : vector<32x128xf32> to vector<32x128xbf16>
    %c1_135 = arith.constant 1 : index
    %c3_136 = arith.constant 3 : index
    %c0_137 = arith.constant 0 : index
    %144 = vector.load %arg20[%c1_135, %c3_136, %c0_137] : memref<8x12x128xf32, #tpu.memory_space<vmem>>, vector<4x8x128xf32>
    %145 = vector.shape_cast %144 : vector<4x8x128xf32> to vector<32x128xf32>
    %146 = arith.truncf %145 : vector<32x128xf32> to vector<32x128xbf16>
    %c1_138 = arith.constant 1 : index
    %c4_139 = arith.constant 4 : index
    %c0_140 = arith.constant 0 : index
    %147 = vector.load %arg20[%c1_138, %c4_139, %c0_140] : memref<8x12x128xf32, #tpu.memory_space<vmem>>, vector<4x8x128xf32>
    %148 = vector.shape_cast %147 : vector<4x8x128xf32> to vector<32x128xf32>
    %149 = arith.truncf %148 : vector<32x128xf32> to vector<32x128xbf16>
    %c2_141 = arith.constant 2 : index
    %c0_142 = arith.constant 0 : index
    %c0_143 = arith.constant 0 : index
    %150 = vector.load %arg20[%c2_141, %c0_142, %c0_143] : memref<8x12x128xf32, #tpu.memory_space<vmem>>, vector<4x8x128xf32>
    %151 = vector.shape_cast %150 : vector<4x8x128xf32> to vector<32x128xf32>
    %152 = arith.truncf %151 : vector<32x128xf32> to vector<32x128xbf16>
    %c2_144 = arith.constant 2 : index
    %c1_145 = arith.constant 1 : index
    %c0_146 = arith.constant 0 : index
    %153 = vector.load %arg20[%c2_144, %c1_145, %c0_146] : memref<8x12x128xf32, #tpu.memory_space<vmem>>, vector<4x8x128xf32>
    %154 = vector.shape_cast %153 : vector<4x8x128xf32> to vector<32x128xf32>
    %155 = arith.truncf %154 : vector<32x128xf32> to vector<32x128xbf16>
    %c2_147 = arith.constant 2 : index
    %c2_148 = arith.constant 2 : index
    %c0_149 = arith.constant 0 : index
    %156 = vector.load %arg20[%c2_147, %c2_148, %c0_149] : memref<8x12x128xf32, #tpu.memory_space<vmem>>, vector<4x8x128xf32>
    %157 = vector.shape_cast %156 : vector<4x8x128xf32> to vector<32x128xf32>
    %158 = arith.truncf %157 : vector<32x128xf32> to vector<32x128xbf16>
    %c2_150 = arith.constant 2 : index
    %c3_151 = arith.constant 3 : index
    %c0_152 = arith.constant 0 : index
    %159 = vector.load %arg20[%c2_150, %c3_151, %c0_152] : memref<8x12x128xf32, #tpu.memory_space<vmem>>, vector<4x8x128xf32>
    %160 = vector.shape_cast %159 : vector<4x8x128xf32> to vector<32x128xf32>
    %161 = arith.truncf %160 : vector<32x128xf32> to vector<32x128xbf16>
    %c2_153 = arith.constant 2 : index
    %c4_154 = arith.constant 4 : index
    %c0_155 = arith.constant 0 : index
    %162 = vector.load %arg20[%c2_153, %c4_154, %c0_155] : memref<8x12x128xf32, #tpu.memory_space<vmem>>, vector<4x8x128xf32>
    %163 = vector.shape_cast %162 : vector<4x8x128xf32> to vector<32x128xf32>
    %164 = arith.truncf %163 : vector<32x128xf32> to vector<32x128xbf16>
    %c3_156 = arith.constant 3 : index
    %c0_157 = arith.constant 0 : index
    %c0_158 = arith.constant 0 : index
    %165 = vector.load %arg20[%c3_156, %c0_157, %c0_158] : memref<8x12x128xf32, #tpu.memory_space<vmem>>, vector<4x8x128xf32>
    %166 = vector.shape_cast %165 : vector<4x8x128xf32> to vector<32x128xf32>
    %167 = arith.truncf %166 : vector<32x128xf32> to vector<32x128xbf16>
    %c3_159 = arith.constant 3 : index
    %c1_160 = arith.constant 1 : index
    %c0_161 = arith.constant 0 : index
    %168 = vector.load %arg20[%c3_159, %c1_160, %c0_161] : memref<8x12x128xf32, #tpu.memory_space<vmem>>, vector<4x8x128xf32>
    %169 = vector.shape_cast %168 : vector<4x8x128xf32> to vector<32x128xf32>
    %170 = arith.truncf %169 : vector<32x128xf32> to vector<32x128xbf16>
    %c3_162 = arith.constant 3 : index
    %c2_163 = arith.constant 2 : index
    %c0_164 = arith.constant 0 : index
    %171 = vector.load %arg20[%c3_162, %c2_163, %c0_164] : memref<8x12x128xf32, #tpu.memory_space<vmem>>, vector<4x8x128xf32>
    %172 = vector.shape_cast %171 : vector<4x8x128xf32> to vector<32x128xf32>
    %173 = arith.truncf %172 : vector<32x128xf32> to vector<32x128xbf16>
    %c3_165 = arith.constant 3 : index
    %c3_166 = arith.constant 3 : index
    %c0_167 = arith.constant 0 : index
    %174 = vector.load %arg20[%c3_165, %c3_166, %c0_167] : memref<8x12x128xf32, #tpu.memory_space<vmem>>, vector<4x8x128xf32>
    %175 = vector.shape_cast %174 : vector<4x8x128xf32> to vector<32x128xf32>
    %176 = arith.truncf %175 : vector<32x128xf32> to vector<32x128xbf16>
    %c3_168 = arith.constant 3 : index
    %c4_169 = arith.constant 4 : index
    %c0_170 = arith.constant 0 : index
    %177 = vector.load %arg20[%c3_168, %c4_169, %c0_170] : memref<8x12x128xf32, #tpu.memory_space<vmem>>, vector<4x8x128xf32>
    %178 = vector.shape_cast %177 : vector<4x8x128xf32> to vector<32x128xf32>
    %179 = arith.truncf %178 : vector<32x128xf32> to vector<32x128xbf16>
    %c4_171 = arith.constant 4 : index
    %c0_172 = arith.constant 0 : index
    %c0_173 = arith.constant 0 : index
    %180 = vector.load %arg20[%c4_171, %c0_172, %c0_173] : memref<8x12x128xf32, #tpu.memory_space<vmem>>, vector<4x8x128xf32>
    %181 = vector.shape_cast %180 : vector<4x8x128xf32> to vector<32x128xf32>
    %182 = arith.truncf %181 : vector<32x128xf32> to vector<32x128xbf16>
    %c4_174 = arith.constant 4 : index
    %c1_175 = arith.constant 1 : index
    %c0_176 = arith.constant 0 : index
    %183 = vector.load %arg20[%c4_174, %c1_175, %c0_176] : memref<8x12x128xf32, #tpu.memory_space<vmem>>, vector<4x8x128xf32>
    %184 = vector.shape_cast %183 : vector<4x8x128xf32> to vector<32x128xf32>
    %185 = arith.truncf %184 : vector<32x128xf32> to vector<32x128xbf16>
    %c4_177 = arith.constant 4 : index
    %c2_178 = arith.constant 2 : index
    %c0_179 = arith.constant 0 : index
    %186 = vector.load %arg20[%c4_177, %c2_178, %c0_179] : memref<8x12x128xf32, #tpu.memory_space<vmem>>, vector<4x8x128xf32>
    %187 = vector.shape_cast %186 : vector<4x8x128xf32> to vector<32x128xf32>
    %188 = arith.truncf %187 : vector<32x128xf32> to vector<32x128xbf16>
    %c4_180 = arith.constant 4 : index
    %c3_181 = arith.constant 3 : index
    %c0_182 = arith.constant 0 : index
    %189 = vector.load %arg20[%c4_180, %c3_181, %c0_182] : memref<8x12x128xf32, #tpu.memory_space<vmem>>, vector<4x8x128xf32>
    %190 = vector.shape_cast %189 : vector<4x8x128xf32> to vector<32x128xf32>
    %191 = arith.truncf %190 : vector<32x128xf32> to vector<32x128xbf16>
    %c4_183 = arith.constant 4 : index
    %c4_184 = arith.constant 4 : index
    %c0_185 = arith.constant 0 : index
    %192 = vector.load %arg20[%c4_183, %c4_184, %c0_185] : memref<8x12x128xf32, #tpu.memory_space<vmem>>, vector<4x8x128xf32>
    %193 = vector.shape_cast %192 : vector<4x8x128xf32> to vector<32x128xf32>
    %194 = arith.truncf %193 : vector<32x128xf32> to vector<32x128xbf16>
    %195 = tpu.concatenate %122, %125, %128, %131, %134, %137, %140, %143, %146, %149, %152, %155, %158, %161, %164, %167 in 1 : vector<32x128xbf16>, vector<32x128xbf16>, vector<32x128xbf16>, vector<32x128xbf16>, vector<32x128xbf16>, vector<32x128xbf16>, vector<32x128xbf16>, vector<32x128xbf16>, vector<32x128xbf16>, vector<32x128xbf16>, vector<32x128xbf16>, vector<32x128xbf16>, vector<32x128xbf16>, vector<32x128xbf16>, vector<32x128xbf16>, vector<32x128xbf16> -> vector<32x2048xbf16>
    %196 = tpu.concatenate %170, %173, %176, %179, %182, %185, %188, %191, %194 in 1 : vector<32x128xbf16>, vector<32x128xbf16>, vector<32x128xbf16>, vector<32x128xbf16>, vector<32x128xbf16>, vector<32x128xbf16>, vector<32x128xbf16>, vector<32x128xbf16>, vector<32x128xbf16> -> vector<32x1152xbf16>
    %197 = tpu.concatenate %195, %196 in 1 : vector<32x2048xbf16>, vector<32x1152xbf16> -> vector<32x3200xbf16>
    %c0_186 = arith.constant 0 : index
    %c0_187 = arith.constant 0 : index
    %198 = vector.load %arg6[%c0_186, %c0_187] : memref<3200x24xbf16, #tpu.memory_space<vmem>>, vector<3200x24xbf16>
    %cst_188 = arith.constant dense<0.000000e+00> : vector<32x24xf32>
    %199 = tpu.matmul %197, %198, %cst_188 {dimension_numbers = #tpu.dot_dimension_numbers<[1], [0], [0], [1], [0, 0, 1, 1], [], []>} : vector<32x3200xbf16>, vector<3200x24xbf16>, vector<32x24xf32> -> vector<32x24xf32>
    %c0_189 = arith.constant 0 : index
    %c0_190 = arith.constant 0 : index
    %200 = vector.load %arg7[%c0_189, %c0_190] : memref<1x24xf32, #tpu.memory_space<vmem>>, vector<1x24xf32>
    %201 = vector.broadcast %200 : vector<1x24xf32> to vector<32x24xf32>
    %202 = arith.addf %199, %201 : vector<32x24xf32>
    %cst_191 = arith.constant 0.000000e+00 : f32
    %203 = vector.broadcast %cst_191 : f32 to vector<32x24xf32>
    %204 = arith.maximumf %202, %203 : vector<32x24xf32>
    %205 = arith.truncf %204 : vector<32x24xf32> to vector<32x24xbf16>
    %c0_192 = arith.constant 0 : index
    %c0_193 = arith.constant 0 : index
    %206 = vector.load %arg8[%c0_192, %c0_193] : memref<24x768xbf16, #tpu.memory_space<vmem>>, vector<24x768xbf16>
    %cst_194 = arith.constant dense<0.000000e+00> : vector<32x768xf32>
    %207 = tpu.matmul %205, %206, %cst_194 {dimension_numbers = #tpu.dot_dimension_numbers<[1], [0], [0], [1], [0, 0, 1, 1], [], []>} : vector<32x24xbf16>, vector<24x768xbf16>, vector<32x768xf32> -> vector<32x768xf32>
    %c0_195 = arith.constant 0 : index
    %c0_196 = arith.constant 0 : index
    %208 = vector.load %arg9[%c0_195, %c0_196] : memref<32x768xf32, #tpu.memory_space<vmem>>, vector<32x768xf32>
    %209 = arith.mulf %207, %208 : vector<32x768xf32>
    %cst_197 = arith.constant dense<0.000000e+00> : vector<768xf32>
    %210 = vector.multi_reduction <add>, %209, %cst_197 [0] : vector<32x768xf32> to vector<768xf32>
    %211 = vector.shape_cast %210 : vector<768xf32> to vector<1x768xf32>
    %212 = arith.truncf %211 : vector<1x768xf32> to vector<1x768xbf16>
    %c0_198 = arith.constant 0 : index
    %c0_199 = arith.constant 0 : index
    %213 = vector.load %arg10[%c0_198, %c0_199] : memref<768x128xbf16, #tpu.memory_space<vmem>>, vector<768x128xbf16>
    %cst_200 = arith.constant dense<0.000000e+00> : vector<1x128xf32>
    %214 = tpu.matmul %212, %213, %cst_200 {dimension_numbers = #tpu.dot_dimension_numbers<[1], [0], [0], [1], [0, 0, 1, 1], [], []>} : vector<1x768xbf16>, vector<768x128xbf16>, vector<1x128xf32> -> vector<1x128xf32>
    %c0_201 = arith.constant 0 : index
    %c0_202 = arith.constant 0 : index
    %215 = vector.load %arg11[%c0_201, %c0_202] : memref<1x128xf32, #tpu.memory_space<vmem>>, vector<1x128xf32>
    %216 = arith.addf %214, %215 : vector<1x128xf32>
    %cst_203 = arith.constant 0.000000e+00 : f32
    %217 = vector.broadcast %cst_203 : f32 to vector<1x128xf32>
    %218 = arith.maximumf %216, %217 : vector<1x128xf32>
    %219 = arith.truncf %218 : vector<1x128xf32> to vector<1x128xbf16>
    %c0_204 = arith.constant 0 : index
    %c0_205 = arith.constant 0 : index
    %220 = vector.load %arg12[%c0_204, %c0_205] : memref<128x16xbf16, #tpu.memory_space<vmem>>, vector<128x16xbf16>
    %cst_206 = arith.constant dense<0.000000e+00> : vector<1x16xf32>
    %221 = tpu.matmul %219, %220, %cst_206 {dimension_numbers = #tpu.dot_dimension_numbers<[1], [0], [0], [1], [0, 0, 1, 1], [], []>} : vector<1x128xbf16>, vector<128x16xbf16>, vector<1x16xf32> -> vector<1x16xf32>
    %c0_207 = arith.constant 0 : index
    %c0_208 = arith.constant 0 : index
    %222 = vector.load %arg13[%c0_207, %c0_208] : memref<1x16xf32, #tpu.memory_space<vmem>>, vector<1x16xf32>
    %223 = arith.addf %221, %222 : vector<1x16xf32>
    %cst_209 = arith.constant -3.000000e+00 : f32
    %224 = vector.broadcast %cst_209 : f32 to vector<1x16xf32>
    %225 = arith.mulf %224, %223 : vector<1x16xf32>
    %226 = math.exp %225 : vector<1x16xf32>
    %cst_210 = arith.constant 1.000000e+00 : f32
    %227 = vector.broadcast %cst_210 : f32 to vector<1x16xf32>
    %228 = arith.addf %227, %226 : vector<1x16xf32>
    %cst_211 = arith.constant 1.000000e+00 : f32
    %229 = vector.broadcast %cst_211 : f32 to vector<1x16xf32>
    %230 = arith.divf %229, %228 : vector<1x16xf32>
    %c0_212 = arith.constant 0 : index
    %c0_213 = arith.constant 0 : index
    %231 = vector.load %arg14[%c0_212, %c0_213] : memref<1x16xf32, #tpu.memory_space<vmem>>, vector<1x16xf32>
    %232 = arith.mulf %230, %231 : vector<1x16xf32>
    %c0_214 = arith.constant 0 : index
    %c0_215 = arith.constant 0 : index
    %c0_216 = arith.constant 0 : index
    %233 = vector.load %arg18[%c0_214, %c0_215, %c0_216] : memref<1x1x16xf32, #tpu.memory_space<vmem>>, vector<1x1x16xf32>
    %234 = vector.shape_cast %233 : vector<1x1x16xf32> to vector<1x16xf32>
    %235 = vector.shape_cast %232 : vector<1x16xf32> to vector<1x1x16xf32>
    tpu.vector_store %arg18[%c0_214, %c0_215, %c0_216], %235 {strides = array<i32>} : memref<1x1x16xf32, #tpu.memory_space<vmem>>, vector<1x1x16xf32>,
    %c0_217 = arith.constant 0 : index
    %c0_218 = arith.constant 0 : index
    %236 = vector.load %arg15[%c0_217, %c0_218] : memref<1x512xf32, #tpu.memory_space<vmem>>, vector<1x512xf32>
    %c0_219 = arith.constant 0 : index
    %c0_220 = arith.constant 0 : index
    %237 = vector.load %arg16[%c0_219, %c0_220] : memref<1x512xf32, #tpu.memory_space<vmem>>, vector<1x512xf32>
    %238 = vector.extract_strided_slice %232 {offsets = [0, 0], sizes = [1, 1], strides = [1, 1]} : vector<1x16xf32> to vector<1x1xf32>
    %cst_221 = arith.constant 0.000000e+00 : f32
    %cst_222 = arith.constant 1.500000e+01 : f32
    %239 = vector.broadcast %cst_221 : f32 to vector<1x1xf32>
    %240 = arith.maximumf %239, %238 : vector<1x1xf32>
    %241 = vector.broadcast %cst_222 : f32 to vector<1x1xf32>
    %242 = arith.minimumf %241, %240 : vector<1x1xf32>
    %243 = vector.extract_strided_slice %232 {offsets = [0, 1], sizes = [1, 1], strides = [1, 1]} : vector<1x16xf32> to vector<1x1xf32>
    %cst_223 = arith.constant 0.000000e+00 : f32
    %cst_224 = arith.constant 3.100000e+01 : f32
    %244 = vector.broadcast %cst_223 : f32 to vector<1x1xf32>
    %245 = arith.maximumf %244, %243 : vector<1x1xf32>
    %246 = vector.broadcast %cst_224 : f32 to vector<1x1xf32>
    %247 = arith.minimumf %246, %245 : vector<1x1xf32>
    %248 = math.floor %242 : vector<1x1xf32>
    %249 = math.ceil %242 : vector<1x1xf32>
    %250 = math.floor %247 : vector<1x1xf32>
    %251 = math.ceil %247 : vector<1x1xf32>
    %252 = arith.subf %242, %248 : vector<1x1xf32>
    %253 = arith.subf %247, %250 : vector<1x1xf32>
    %254 = vector.broadcast %248 : vector<1x1xf32> to vector<1x512xf32>
    %255 = arith.cmpf oeq, %236, %254 : vector<1x512xf32>
    %cst_225 = arith.constant 1.000000e+00 : f32
    %256 = vector.broadcast %cst_225 : f32 to vector<1x1xf32>
    %257 = arith.subf %256, %252 : vector<1x1xf32>
    %cst_226 = arith.constant 0.000000e+00 : f32
    %258 = vector.shape_cast %257 : vector<1x1xf32> to vector<1x1xf32>
    %259 = vector.broadcast %258 : vector<1x1xf32> to vector<1x512xf32>
    %260 = vector.broadcast %cst_226 : f32 to vector<1x512xf32>
    %261 = arith.select %255, %259, %260 : vector<1x512xi1>, vector<1x512xf32>
    %262 = vector.broadcast %249 : vector<1x1xf32> to vector<1x512xf32>
    %263 = arith.cmpf oeq, %236, %262 : vector<1x512xf32>
    %cst_227 = arith.constant 0.000000e+00 : f32
    %264 = vector.shape_cast %252 : vector<1x1xf32> to vector<1x1xf32>
    %265 = vector.broadcast %264 : vector<1x1xf32> to vector<1x512xf32>
    %266 = vector.broadcast %cst_227 : f32 to vector<1x512xf32>
    %267 = arith.select %263, %265, %266 : vector<1x512xi1>, vector<1x512xf32>
    %268 = arith.addf %261, %267 : vector<1x512xf32>
    %269 = vector.broadcast %250 : vector<1x1xf32> to vector<1x512xf32>
    %270 = arith.cmpf oeq, %237, %269 : vector<1x512xf32>
    %cst_228 = arith.constant 1.000000e+00 : f32
    %271 = vector.broadcast %cst_228 : f32 to vector<1x1xf32>
    %272 = arith.subf %271, %253 : vector<1x1xf32>
    %cst_229 = arith.constant 0.000000e+00 : f32
    %273 = vector.shape_cast %272 : vector<1x1xf32> to vector<1x1xf32>
    %274 = vector.broadcast %273 : vector<1x1xf32> to vector<1x512xf32>
    %275 = vector.broadcast %cst_229 : f32 to vector<1x512xf32>
    %276 = arith.select %270, %274, %275 : vector<1x512xi1>, vector<1x512xf32>
    %277 = vector.broadcast %251 : vector<1x1xf32> to vector<1x512xf32>
    %278 = arith.cmpf oeq, %237, %277 : vector<1x512xf32>
    %cst_230 = arith.constant 0.000000e+00 : f32
    %279 = vector.shape_cast %253 : vector<1x1xf32> to vector<1x1xf32>
    %280 = vector.broadcast %279 : vector<1x1xf32> to vector<1x512xf32>
    %281 = vector.broadcast %cst_230 : f32 to vector<1x512xf32>
    %282 = arith.select %278, %280, %281 : vector<1x512xi1>, vector<1x512xf32>
    %283 = arith.addf %276, %282 : vector<1x512xf32>
    %284 = arith.mulf %268, %283 : vector<1x512xf32>
    %c0_231 = arith.constant 0 : index
    %c0_232 = arith.constant 0 : index
    %285 = vector.load %arg21[%c0_231, %c0_232] : memref<8x512xf32, #tpu.memory_space<vmem>>, vector<1x512xf32>
    tpu.vector_store %arg21[%c0_231, %c0_232], %284 {strides = array<i32>} : memref<8x512xf32, #tpu.memory_space<vmem>>, vector<1x512xf32>,
    %286 = vector.extract_strided_slice %232 {offsets = [0, 2], sizes = [1, 1], strides = [1, 1]} : vector<1x16xf32> to vector<1x1xf32>
    %cst_233 = arith.constant 0.000000e+00 : f32
    %cst_234 = arith.constant 1.500000e+01 : f32
    %287 = vector.broadcast %cst_233 : f32 to vector<1x1xf32>
    %288 = arith.maximumf %287, %286 : vector<1x1xf32>
    %289 = vector.broadcast %cst_234 : f32 to vector<1x1xf32>
    %290 = arith.minimumf %289, %288 : vector<1x1xf32>
    %291 = vector.extract_strided_slice %232 {offsets = [0, 3], sizes = [1, 1], strides = [1, 1]} : vector<1x16xf32> to vector<1x1xf32>
    %cst_235 = arith.constant 0.000000e+00 : f32
    %cst_236 = arith.constant 3.100000e+01 : f32
    %292 = vector.broadcast %cst_235 : f32 to vector<1x1xf32>
    %293 = arith.maximumf %292, %291 : vector<1x1xf32>
    %294 = vector.broadcast %cst_236 : f32 to vector<1x1xf32>
    %295 = arith.minimumf %294, %293 : vector<1x1xf32>
    %296 = math.floor %290 : vector<1x1xf32>
    %297 = math.ceil %290 : vector<1x1xf32>
    %298 = math.floor %295 : vector<1x1xf32>
    %299 = math.ceil %295 : vector<1x1xf32>
    %300 = arith.subf %290, %296 : vector<1x1xf32>
    %301 = arith.subf %295, %298 : vector<1x1xf32>
    %302 = vector.broadcast %296 : vector<1x1xf32> to vector<1x512xf32>
    %303 = arith.cmpf oeq, %236, %302 : vector<1x512xf32>
    %cst_237 = arith.constant 1.000000e+00 : f32
    %304 = vector.broadcast %cst_237 : f32 to vector<1x1xf32>
    %305 = arith.subf %304, %300 : vector<1x1xf32>
    %cst_238 = arith.constant 0.000000e+00 : f32
    %306 = vector.shape_cast %305 : vector<1x1xf32> to vector<1x1xf32>
    %307 = vector.broadcast %306 : vector<1x1xf32> to vector<1x512xf32>
    %308 = vector.broadcast %cst_238 : f32 to vector<1x512xf32>
    %309 = arith.select %303, %307, %308 : vector<1x512xi1>, vector<1x512xf32>
    %310 = vector.broadcast %297 : vector<1x1xf32> to vector<1x512xf32>
    %311 = arith.cmpf oeq, %236, %310 : vector<1x512xf32>
    %cst_239 = arith.constant 0.000000e+00 : f32
    %312 = vector.shape_cast %300 : vector<1x1xf32> to vector<1x1xf32>
    %313 = vector.broadcast %312 : vector<1x1xf32> to vector<1x512xf32>
    %314 = vector.broadcast %cst_239 : f32 to vector<1x512xf32>
    %315 = arith.select %311, %313, %314 : vector<1x512xi1>, vector<1x512xf32>
    %316 = arith.addf %309, %315 : vector<1x512xf32>
    %317 = vector.broadcast %298 : vector<1x1xf32> to vector<1x512xf32>
    %318 = arith.cmpf oeq, %237, %317 : vector<1x512xf32>
    %cst_240 = arith.constant 1.000000e+00 : f32
    %319 = vector.broadcast %cst_240 : f32 to vector<1x1xf32>
    %320 = arith.subf %319, %301 : vector<1x1xf32>
    %cst_241 = arith.constant 0.000000e+00 : f32
    %321 = vector.shape_cast %320 : vector<1x1xf32> to vector<1x1xf32>
    %322 = vector.broadcast %321 : vector<1x1xf32> to vector<1x512xf32>
    %323 = vector.broadcast %cst_241 : f32 to vector<1x512xf32>
    %324 = arith.select %318, %322, %323 : vector<1x512xi1>, vector<1x512xf32>
    %325 = vector.broadcast %299 : vector<1x1xf32> to vector<1x512xf32>
    %326 = arith.cmpf oeq, %237, %325 : vector<1x512xf32>
    %cst_242 = arith.constant 0.000000e+00 : f32
    %327 = vector.shape_cast %301 : vector<1x1xf32> to vector<1x1xf32>
    %328 = vector.broadcast %327 : vector<1x1xf32> to vector<1x512xf32>
    %329 = vector.broadcast %cst_242 : f32 to vector<1x512xf32>
    %330 = arith.select %326, %328, %329 : vector<1x512xi1>, vector<1x512xf32>
    %331 = arith.addf %324, %330 : vector<1x512xf32>
    %332 = arith.mulf %316, %331 : vector<1x512xf32>
    %c1_243 = arith.constant 1 : index
    %c0_244 = arith.constant 0 : index
    %333 = vector.load %arg21[%c1_243, %c0_244] : memref<8x512xf32, #tpu.memory_space<vmem>>, vector<1x512xf32>
    tpu.vector_store %arg21[%c1_243, %c0_244], %332 {strides = array<i32>} : memref<8x512xf32, #tpu.memory_space<vmem>>, vector<1x512xf32>,
    %334 = vector.extract_strided_slice %232 {offsets = [0, 4], sizes = [1, 1], strides = [1, 1]} : vector<1x16xf32> to vector<1x1xf32>
    %cst_245 = arith.constant 0.000000e+00 : f32
    %cst_246 = arith.constant 1.500000e+01 : f32
    %335 = vector.broadcast %cst_245 : f32 to vector<1x1xf32>
    %336 = arith.maximumf %335, %334 : vector<1x1xf32>
    %337 = vector.broadcast %cst_246 : f32 to vector<1x1xf32>
    %338 = arith.minimumf %337, %336 : vector<1x1xf32>
    %339 = vector.extract_strided_slice %232 {offsets = [0, 5], sizes = [1, 1], strides = [1, 1]} : vector<1x16xf32> to vector<1x1xf32>
    %cst_247 = arith.constant 0.000000e+00 : f32
    %cst_248 = arith.constant 3.100000e+01 : f32
    %340 = vector.broadcast %cst_247 : f32 to vector<1x1xf32>
    %341 = arith.maximumf %340, %339 : vector<1x1xf32>
    %342 = vector.broadcast %cst_248 : f32 to vector<1x1xf32>
    %343 = arith.minimumf %342, %341 : vector<1x1xf32>
    %344 = math.floor %338 : vector<1x1xf32>
    %345 = math.ceil %338 : vector<1x1xf32>
    %346 = math.floor %343 : vector<1x1xf32>
    %347 = math.ceil %343 : vector<1x1xf32>
    %348 = arith.subf %338, %344 : vector<1x1xf32>
    %349 = arith.subf %343, %346 : vector<1x1xf32>
    %350 = vector.broadcast %344 : vector<1x1xf32> to vector<1x512xf32>
    %351 = arith.cmpf oeq, %236, %350 : vector<1x512xf32>
    %cst_249 = arith.constant 1.000000e+00 : f32
    %352 = vector.broadcast %cst_249 : f32 to vector<1x1xf32>
    %353 = arith.subf %352, %348 : vector<1x1xf32>
    %cst_250 = arith.constant 0.000000e+00 : f32
    %354 = vector.shape_cast %353 : vector<1x1xf32> to vector<1x1xf32>
    %355 = vector.broadcast %354 : vector<1x1xf32> to vector<1x512xf32>
    %356 = vector.broadcast %cst_250 : f32 to vector<1x512xf32>
    %357 = arith.select %351, %355, %356 : vector<1x512xi1>, vector<1x512xf32>
    %358 = vector.broadcast %345 : vector<1x1xf32> to vector<1x512xf32>
    %359 = arith.cmpf oeq, %236, %358 : vector<1x512xf32>
    %cst_251 = arith.constant 0.000000e+00 : f32
    %360 = vector.shape_cast %348 : vector<1x1xf32> to vector<1x1xf32>
    %361 = vector.broadcast %360 : vector<1x1xf32> to vector<1x512xf32>
    %362 = vector.broadcast %cst_251 : f32 to vector<1x512xf32>
    %363 = arith.select %359, %361, %362 : vector<1x512xi1>, vector<1x512xf32>
    %364 = arith.addf %357, %363 : vector<1x512xf32>
    %365 = vector.broadcast %346 : vector<1x1xf32> to vector<1x512xf32>
    %366 = arith.cmpf oeq, %237, %365 : vector<1x512xf32>
    %cst_252 = arith.constant 1.000000e+00 : f32
    %367 = vector.broadcast %cst_252 : f32 to vector<1x1xf32>
    %368 = arith.subf %367, %349 : vector<1x1xf32>
    %cst_253 = arith.constant 0.000000e+00 : f32
    %369 = vector.shape_cast %368 : vector<1x1xf32> to vector<1x1xf32>
    %370 = vector.broadcast %369 : vector<1x1xf32> to vector<1x512xf32>
    %371 = vector.broadcast %cst_253 : f32 to vector<1x512xf32>
    %372 = arith.select %366, %370, %371 : vector<1x512xi1>, vector<1x512xf32>
    %373 = vector.broadcast %347 : vector<1x1xf32> to vector<1x512xf32>
    %374 = arith.cmpf oeq, %237, %373 : vector<1x512xf32>
    %cst_254 = arith.constant 0.000000e+00 : f32
    %375 = vector.shape_cast %349 : vector<1x1xf32> to vector<1x1xf32>
    %376 = vector.broadcast %375 : vector<1x1xf32> to vector<1x512xf32>
    %377 = vector.broadcast %cst_254 : f32 to vector<1x512xf32>
    %378 = arith.select %374, %376, %377 : vector<1x512xi1>, vector<1x512xf32>
    %379 = arith.addf %372, %378 : vector<1x512xf32>
    %380 = arith.mulf %364, %379 : vector<1x512xf32>
    %c2_255 = arith.constant 2 : index
    %c0_256 = arith.constant 0 : index
    %381 = vector.load %arg21[%c2_255, %c0_256] : memref<8x512xf32, #tpu.memory_space<vmem>>, vector<1x512xf32>
    tpu.vector_store %arg21[%c2_255, %c0_256], %380 {strides = array<i32>} : memref<8x512xf32, #tpu.memory_space<vmem>>, vector<1x512xf32>,
    %382 = vector.extract_strided_slice %232 {offsets = [0, 6], sizes = [1, 1], strides = [1, 1]} : vector<1x16xf32> to vector<1x1xf32>
    %cst_257 = arith.constant 0.000000e+00 : f32
    %cst_258 = arith.constant 1.500000e+01 : f32
    %383 = vector.broadcast %cst_257 : f32 to vector<1x1xf32>
    %384 = arith.maximumf %383, %382 : vector<1x1xf32>
    %385 = vector.broadcast %cst_258 : f32 to vector<1x1xf32>
    %386 = arith.minimumf %385, %384 : vector<1x1xf32>
    %387 = vector.extract_strided_slice %232 {offsets = [0, 7], sizes = [1, 1], strides = [1, 1]} : vector<1x16xf32> to vector<1x1xf32>
    %cst_259 = arith.constant 0.000000e+00 : f32
    %cst_260 = arith.constant 3.100000e+01 : f32
    %388 = vector.broadcast %cst_259 : f32 to vector<1x1xf32>
    %389 = arith.maximumf %388, %387 : vector<1x1xf32>
    %390 = vector.broadcast %cst_260 : f32 to vector<1x1xf32>
    %391 = arith.minimumf %390, %389 : vector<1x1xf32>
    %392 = math.floor %386 : vector<1x1xf32>
    %393 = math.ceil %386 : vector<1x1xf32>
    %394 = math.floor %391 : vector<1x1xf32>
    %395 = math.ceil %391 : vector<1x1xf32>
    %396 = arith.subf %386, %392 : vector<1x1xf32>
    %397 = arith.subf %391, %394 : vector<1x1xf32>
    %398 = vector.broadcast %392 : vector<1x1xf32> to vector<1x512xf32>
    %399 = arith.cmpf oeq, %236, %398 : vector<1x512xf32>
    %cst_261 = arith.constant 1.000000e+00 : f32
    %400 = vector.broadcast %cst_261 : f32 to vector<1x1xf32>
    %401 = arith.subf %400, %396 : vector<1x1xf32>
    %cst_262 = arith.constant 0.000000e+00 : f32
    %402 = vector.shape_cast %401 : vector<1x1xf32> to vector<1x1xf32>
    %403 = vector.broadcast %402 : vector<1x1xf32> to vector<1x512xf32>
    %404 = vector.broadcast %cst_262 : f32 to vector<1x512xf32>
    %405 = arith.select %399, %403, %404 : vector<1x512xi1>, vector<1x512xf32>
    %406 = vector.broadcast %393 : vector<1x1xf32> to vector<1x512xf32>
    %407 = arith.cmpf oeq, %236, %406 : vector<1x512xf32>
    %cst_263 = arith.constant 0.000000e+00 : f32
    %408 = vector.shape_cast %396 : vector<1x1xf32> to vector<1x1xf32>
    %409 = vector.broadcast %408 : vector<1x1xf32> to vector<1x512xf32>
    %410 = vector.broadcast %cst_263 : f32 to vector<1x512xf32>
    %411 = arith.select %407, %409, %410 : vector<1x512xi1>, vector<1x512xf32>
    %412 = arith.addf %405, %411 : vector<1x512xf32>
    %413 = vector.broadcast %394 : vector<1x1xf32> to vector<1x512xf32>
    %414 = arith.cmpf oeq, %237, %413 : vector<1x512xf32>
    %cst_264 = arith.constant 1.000000e+00 : f32
    %415 = vector.broadcast %cst_264 : f32 to vector<1x1xf32>
    %416 = arith.subf %415, %397 : vector<1x1xf32>
    %cst_265 = arith.constant 0.000000e+00 : f32
    %417 = vector.shape_cast %416 : vector<1x1xf32> to vector<1x1xf32>
    %418 = vector.broadcast %417 : vector<1x1xf32> to vector<1x512xf32>
    %419 = vector.broadcast %cst_265 : f32 to vector<1x512xf32>
    %420 = arith.select %414, %418, %419 : vector<1x512xi1>, vector<1x512xf32>
    %421 = vector.broadcast %395 : vector<1x1xf32> to vector<1x512xf32>
    %422 = arith.cmpf oeq, %237, %421 : vector<1x512xf32>
    %cst_266 = arith.constant 0.000000e+00 : f32
    %423 = vector.shape_cast %397 : vector<1x1xf32> to vector<1x1xf32>
    %424 = vector.broadcast %423 : vector<1x1xf32> to vector<1x512xf32>
    %425 = vector.broadcast %cst_266 : f32 to vector<1x512xf32>
    %426 = arith.select %422, %424, %425 : vector<1x512xi1>, vector<1x512xf32>
    %427 = arith.addf %420, %426 : vector<1x512xf32>
    %428 = arith.mulf %412, %427 : vector<1x512xf32>
    %c3_267 = arith.constant 3 : index
    %c0_268 = arith.constant 0 : index
    %429 = vector.load %arg21[%c3_267, %c0_268] : memref<8x512xf32, #tpu.memory_space<vmem>>, vector<1x512xf32>
    tpu.vector_store %arg21[%c3_267, %c0_268], %428 {strides = array<i32>} : memref<8x512xf32, #tpu.memory_space<vmem>>, vector<1x512xf32>,
    %430 = vector.extract_strided_slice %232 {offsets = [0, 8], sizes = [1, 1], strides = [1, 1]} : vector<1x16xf32> to vector<1x1xf32>
    %cst_269 = arith.constant 0.000000e+00 : f32
    %cst_270 = arith.constant 1.500000e+01 : f32
    %431 = vector.broadcast %cst_269 : f32 to vector<1x1xf32>
    %432 = arith.maximumf %431, %430 : vector<1x1xf32>
    %433 = vector.broadcast %cst_270 : f32 to vector<1x1xf32>
    %434 = arith.minimumf %433, %432 : vector<1x1xf32>
    %435 = vector.extract_strided_slice %232 {offsets = [0, 9], sizes = [1, 1], strides = [1, 1]} : vector<1x16xf32> to vector<1x1xf32>
    %cst_271 = arith.constant 0.000000e+00 : f32
    %cst_272 = arith.constant 3.100000e+01 : f32
    %436 = vector.broadcast %cst_271 : f32 to vector<1x1xf32>
    %437 = arith.maximumf %436, %435 : vector<1x1xf32>
    %438 = vector.broadcast %cst_272 : f32 to vector<1x1xf32>
    %439 = arith.minimumf %438, %437 : vector<1x1xf32>
    %440 = math.floor %434 : vector<1x1xf32>
    %441 = math.ceil %434 : vector<1x1xf32>
    %442 = math.floor %439 : vector<1x1xf32>
    %443 = math.ceil %439 : vector<1x1xf32>
    %444 = arith.subf %434, %440 : vector<1x1xf32>
    %445 = arith.subf %439, %442 : vector<1x1xf32>
    %446 = vector.broadcast %440 : vector<1x1xf32> to vector<1x512xf32>
    %447 = arith.cmpf oeq, %236, %446 : vector<1x512xf32>
    %cst_273 = arith.constant 1.000000e+00 : f32
    %448 = vector.broadcast %cst_273 : f32 to vector<1x1xf32>
    %449 = arith.subf %448, %444 : vector<1x1xf32>
    %cst_274 = arith.constant 0.000000e+00 : f32
    %450 = vector.shape_cast %449 : vector<1x1xf32> to vector<1x1xf32>
    %451 = vector.broadcast %450 : vector<1x1xf32> to vector<1x512xf32>
    %452 = vector.broadcast %cst_274 : f32 to vector<1x512xf32>
    %453 = arith.select %447, %451, %452 : vector<1x512xi1>, vector<1x512xf32>
    %454 = vector.broadcast %441 : vector<1x1xf32> to vector<1x512xf32>
    %455 = arith.cmpf oeq, %236, %454 : vector<1x512xf32>
    %cst_275 = arith.constant 0.000000e+00 : f32
    %456 = vector.shape_cast %444 : vector<1x1xf32> to vector<1x1xf32>
    %457 = vector.broadcast %456 : vector<1x1xf32> to vector<1x512xf32>
    %458 = vector.broadcast %cst_275 : f32 to vector<1x512xf32>
    %459 = arith.select %455, %457, %458 : vector<1x512xi1>, vector<1x512xf32>
    %460 = arith.addf %453, %459 : vector<1x512xf32>
    %461 = vector.broadcast %442 : vector<1x1xf32> to vector<1x512xf32>
    %462 = arith.cmpf oeq, %237, %461 : vector<1x512xf32>
    %cst_276 = arith.constant 1.000000e+00 : f32
    %463 = vector.broadcast %cst_276 : f32 to vector<1x1xf32>
    %464 = arith.subf %463, %445 : vector<1x1xf32>
    %cst_277 = arith.constant 0.000000e+00 : f32
    %465 = vector.shape_cast %464 : vector<1x1xf32> to vector<1x1xf32>
    %466 = vector.broadcast %465 : vector<1x1xf32> to vector<1x512xf32>
    %467 = vector.broadcast %cst_277 : f32 to vector<1x512xf32>
    %468 = arith.select %462, %466, %467 : vector<1x512xi1>, vector<1x512xf32>
    %469 = vector.broadcast %443 : vector<1x1xf32> to vector<1x512xf32>
    %470 = arith.cmpf oeq, %237, %469 : vector<1x512xf32>
    %cst_278 = arith.constant 0.000000e+00 : f32
    %471 = vector.shape_cast %445 : vector<1x1xf32> to vector<1x1xf32>
    %472 = vector.broadcast %471 : vector<1x1xf32> to vector<1x512xf32>
    %473 = vector.broadcast %cst_278 : f32 to vector<1x512xf32>
    %474 = arith.select %470, %472, %473 : vector<1x512xi1>, vector<1x512xf32>
    %475 = arith.addf %468, %474 : vector<1x512xf32>
    %476 = arith.mulf %460, %475 : vector<1x512xf32>
    %c4_279 = arith.constant 4 : index
    %c0_280 = arith.constant 0 : index
    %477 = vector.load %arg21[%c4_279, %c0_280] : memref<8x512xf32, #tpu.memory_space<vmem>>, vector<1x512xf32>
    tpu.vector_store %arg21[%c4_279, %c0_280], %476 {strides = array<i32>} : memref<8x512xf32, #tpu.memory_space<vmem>>, vector<1x512xf32>,
    %478 = vector.extract_strided_slice %232 {offsets = [0, 10], sizes = [1, 1], strides = [1, 1]} : vector<1x16xf32> to vector<1x1xf32>
    %cst_281 = arith.constant 0.000000e+00 : f32
    %cst_282 = arith.constant 1.500000e+01 : f32
    %479 = vector.broadcast %cst_281 : f32 to vector<1x1xf32>
    %480 = arith.maximumf %479, %478 : vector<1x1xf32>
    %481 = vector.broadcast %cst_282 : f32 to vector<1x1xf32>
    %482 = arith.minimumf %481, %480 : vector<1x1xf32>
    %483 = vector.extract_strided_slice %232 {offsets = [0, 11], sizes = [1, 1], strides = [1, 1]} : vector<1x16xf32> to vector<1x1xf32>
    %cst_283 = arith.constant 0.000000e+00 : f32
    %cst_284 = arith.constant 3.100000e+01 : f32
    %484 = vector.broadcast %cst_283 : f32 to vector<1x1xf32>
    %485 = arith.maximumf %484, %483 : vector<1x1xf32>
    %486 = vector.broadcast %cst_284 : f32 to vector<1x1xf32>
    %487 = arith.minimumf %486, %485 : vector<1x1xf32>
    %488 = math.floor %482 : vector<1x1xf32>
    %489 = math.ceil %482 : vector<1x1xf32>
    %490 = math.floor %487 : vector<1x1xf32>
    %491 = math.ceil %487 : vector<1x1xf32>
    %492 = arith.subf %482, %488 : vector<1x1xf32>
    %493 = arith.subf %487, %490 : vector<1x1xf32>
    %494 = vector.broadcast %488 : vector<1x1xf32> to vector<1x512xf32>
    %495 = arith.cmpf oeq, %236, %494 : vector<1x512xf32>
    %cst_285 = arith.constant 1.000000e+00 : f32
    %496 = vector.broadcast %cst_285 : f32 to vector<1x1xf32>
    %497 = arith.subf %496, %492 : vector<1x1xf32>
    %cst_286 = arith.constant 0.000000e+00 : f32
    %498 = vector.shape_cast %497 : vector<1x1xf32> to vector<1x1xf32>
    %499 = vector.broadcast %498 : vector<1x1xf32> to vector<1x512xf32>
    %500 = vector.broadcast %cst_286 : f32 to vector<1x512xf32>
    %501 = arith.select %495, %499, %500 : vector<1x512xi1>, vector<1x512xf32>
    %502 = vector.broadcast %489 : vector<1x1xf32> to vector<1x512xf32>
    %503 = arith.cmpf oeq, %236, %502 : vector<1x512xf32>
    %cst_287 = arith.constant 0.000000e+00 : f32
    %504 = vector.shape_cast %492 : vector<1x1xf32> to vector<1x1xf32>
    %505 = vector.broadcast %504 : vector<1x1xf32> to vector<1x512xf32>
    %506 = vector.broadcast %cst_287 : f32 to vector<1x512xf32>
    %507 = arith.select %503, %505, %506 : vector<1x512xi1>, vector<1x512xf32>
    %508 = arith.addf %501, %507 : vector<1x512xf32>
    %509 = vector.broadcast %490 : vector<1x1xf32> to vector<1x512xf32>
    %510 = arith.cmpf oeq, %237, %509 : vector<1x512xf32>
    %cst_288 = arith.constant 1.000000e+00 : f32
    %511 = vector.broadcast %cst_288 : f32 to vector<1x1xf32>
    %512 = arith.subf %511, %493 : vector<1x1xf32>
    %cst_289 = arith.constant 0.000000e+00 : f32
    %513 = vector.shape_cast %512 : vector<1x1xf32> to vector<1x1xf32>
    %514 = vector.broadcast %513 : vector<1x1xf32> to vector<1x512xf32>
    %515 = vector.broadcast %cst_289 : f32 to vector<1x512xf32>
    %516 = arith.select %510, %514, %515 : vector<1x512xi1>, vector<1x512xf32>
    %517 = vector.broadcast %491 : vector<1x1xf32> to vector<1x512xf32>
    %518 = arith.cmpf oeq, %237, %517 : vector<1x512xf32>
    %cst_290 = arith.constant 0.000000e+00 : f32
    %519 = vector.shape_cast %493 : vector<1x1xf32> to vector<1x1xf32>
    %520 = vector.broadcast %519 : vector<1x1xf32> to vector<1x512xf32>
    %521 = vector.broadcast %cst_290 : f32 to vector<1x512xf32>
    %522 = arith.select %518, %520, %521 : vector<1x512xi1>, vector<1x512xf32>
    %523 = arith.addf %516, %522 : vector<1x512xf32>
    %524 = arith.mulf %508, %523 : vector<1x512xf32>
    %c5 = arith.constant 5 : index
    %c0_291 = arith.constant 0 : index
    %525 = vector.load %arg21[%c5, %c0_291] : memref<8x512xf32, #tpu.memory_space<vmem>>, vector<1x512xf32>
    tpu.vector_store %arg21[%c5, %c0_291], %524 {strides = array<i32>} : memref<8x512xf32, #tpu.memory_space<vmem>>, vector<1x512xf32>,
    %526 = vector.extract_strided_slice %232 {offsets = [0, 12], sizes = [1, 1], strides = [1, 1]} : vector<1x16xf32> to vector<1x1xf32>
    %cst_292 = arith.constant 0.000000e+00 : f32
    %cst_293 = arith.constant 1.500000e+01 : f32
    %527 = vector.broadcast %cst_292 : f32 to vector<1x1xf32>
    %528 = arith.maximumf %527, %526 : vector<1x1xf32>
    %529 = vector.broadcast %cst_293 : f32 to vector<1x1xf32>
    %530 = arith.minimumf %529, %528 : vector<1x1xf32>
    %531 = vector.extract_strided_slice %232 {offsets = [0, 13], sizes = [1, 1], strides = [1, 1]} : vector<1x16xf32> to vector<1x1xf32>
    %cst_294 = arith.constant 0.000000e+00 : f32
    %cst_295 = arith.constant 3.100000e+01 : f32
    %532 = vector.broadcast %cst_294 : f32 to vector<1x1xf32>
    %533 = arith.maximumf %532, %531 : vector<1x1xf32>
    %534 = vector.broadcast %cst_295 : f32 to vector<1x1xf32>
    %535 = arith.minimumf %534, %533 : vector<1x1xf32>
    %536 = math.floor %530 : vector<1x1xf32>
    %537 = math.ceil %530 : vector<1x1xf32>
    %538 = math.floor %535 : vector<1x1xf32>
    %539 = math.ceil %535 : vector<1x1xf32>
    %540 = arith.subf %530, %536 : vector<1x1xf32>
    %541 = arith.subf %535, %538 : vector<1x1xf32>
    %542 = vector.broadcast %536 : vector<1x1xf32> to vector<1x512xf32>
    %543 = arith.cmpf oeq, %236, %542 : vector<1x512xf32>
    %cst_296 = arith.constant 1.000000e+00 : f32
    %544 = vector.broadcast %cst_296 : f32 to vector<1x1xf32>
    %545 = arith.subf %544, %540 : vector<1x1xf32>
    %cst_297 = arith.constant 0.000000e+00 : f32
    %546 = vector.shape_cast %545 : vector<1x1xf32> to vector<1x1xf32>
    %547 = vector.broadcast %546 : vector<1x1xf32> to vector<1x512xf32>
    %548 = vector.broadcast %cst_297 : f32 to vector<1x512xf32>
    %549 = arith.select %543, %547, %548 : vector<1x512xi1>, vector<1x512xf32>
    %550 = vector.broadcast %537 : vector<1x1xf32> to vector<1x512xf32>
    %551 = arith.cmpf oeq, %236, %550 : vector<1x512xf32>
    %cst_298 = arith.constant 0.000000e+00 : f32
    %552 = vector.shape_cast %540 : vector<1x1xf32> to vector<1x1xf32>
    %553 = vector.broadcast %552 : vector<1x1xf32> to vector<1x512xf32>
    %554 = vector.broadcast %cst_298 : f32 to vector<1x512xf32>
    %555 = arith.select %551, %553, %554 : vector<1x512xi1>, vector<1x512xf32>
    %556 = arith.addf %549, %555 : vector<1x512xf32>
    %557 = vector.broadcast %538 : vector<1x1xf32> to vector<1x512xf32>
    %558 = arith.cmpf oeq, %237, %557 : vector<1x512xf32>
    %cst_299 = arith.constant 1.000000e+00 : f32
    %559 = vector.broadcast %cst_299 : f32 to vector<1x1xf32>
    %560 = arith.subf %559, %541 : vector<1x1xf32>
    %cst_300 = arith.constant 0.000000e+00 : f32
    %561 = vector.shape_cast %560 : vector<1x1xf32> to vector<1x1xf32>
    %562 = vector.broadcast %561 : vector<1x1xf32> to vector<1x512xf32>
    %563 = vector.broadcast %cst_300 : f32 to vector<1x512xf32>
    %564 = arith.select %558, %562, %563 : vector<1x512xi1>, vector<1x512xf32>
    %565 = vector.broadcast %539 : vector<1x1xf32> to vector<1x512xf32>
    %566 = arith.cmpf oeq, %237, %565 : vector<1x512xf32>
    %cst_301 = arith.constant 0.000000e+00 : f32
    %567 = vector.shape_cast %541 : vector<1x1xf32> to vector<1x1xf32>
    %568 = vector.broadcast %567 : vector<1x1xf32> to vector<1x512xf32>
    %569 = vector.broadcast %cst_301 : f32 to vector<1x512xf32>
    %570 = arith.select %566, %568, %569 : vector<1x512xi1>, vector<1x512xf32>
    %571 = arith.addf %564, %570 : vector<1x512xf32>
    %572 = arith.mulf %556, %571 : vector<1x512xf32>
    %c6 = arith.constant 6 : index
    %c0_302 = arith.constant 0 : index
    %573 = vector.load %arg21[%c6, %c0_302] : memref<8x512xf32, #tpu.memory_space<vmem>>, vector<1x512xf32>
    tpu.vector_store %arg21[%c6, %c0_302], %572 {strides = array<i32>} : memref<8x512xf32, #tpu.memory_space<vmem>>, vector<1x512xf32>,
    %574 = vector.extract_strided_slice %232 {offsets = [0, 14], sizes = [1, 1], strides = [1, 1]} : vector<1x16xf32> to vector<1x1xf32>
    %cst_303 = arith.constant 0.000000e+00 : f32
    %cst_304 = arith.constant 1.500000e+01 : f32
    %575 = vector.broadcast %cst_303 : f32 to vector<1x1xf32>
    %576 = arith.maximumf %575, %574 : vector<1x1xf32>
    %577 = vector.broadcast %cst_304 : f32 to vector<1x1xf32>
    %578 = arith.minimumf %577, %576 : vector<1x1xf32>
    %579 = vector.extract_strided_slice %232 {offsets = [0, 15], sizes = [1, 1], strides = [1, 1]} : vector<1x16xf32> to vector<1x1xf32>
    %cst_305 = arith.constant 0.000000e+00 : f32
    %cst_306 = arith.constant 3.100000e+01 : f32
    %580 = vector.broadcast %cst_305 : f32 to vector<1x1xf32>
    %581 = arith.maximumf %580, %579 : vector<1x1xf32>
    %582 = vector.broadcast %cst_306 : f32 to vector<1x1xf32>
    %583 = arith.minimumf %582, %581 : vector<1x1xf32>
    %584 = math.floor %578 : vector<1x1xf32>
    %585 = math.ceil %578 : vector<1x1xf32>
    %586 = math.floor %583 : vector<1x1xf32>
    %587 = math.ceil %583 : vector<1x1xf32>
    %588 = arith.subf %578, %584 : vector<1x1xf32>
    %589 = arith.subf %583, %586 : vector<1x1xf32>
    %590 = vector.broadcast %584 : vector<1x1xf32> to vector<1x512xf32>
    %591 = arith.cmpf oeq, %236, %590 : vector<1x512xf32>
    %cst_307 = arith.constant 1.000000e+00 : f32
    %592 = vector.broadcast %cst_307 : f32 to vector<1x1xf32>
    %593 = arith.subf %592, %588 : vector<1x1xf32>
    %cst_308 = arith.constant 0.000000e+00 : f32
    %594 = vector.shape_cast %593 : vector<1x1xf32> to vector<1x1xf32>
    %595 = vector.broadcast %594 : vector<1x1xf32> to vector<1x512xf32>
    %596 = vector.broadcast %cst_308 : f32 to vector<1x512xf32>
    %597 = arith.select %591, %595, %596 : vector<1x512xi1>, vector<1x512xf32>
    %598 = vector.broadcast %585 : vector<1x1xf32> to vector<1x512xf32>
    %599 = arith.cmpf oeq, %236, %598 : vector<1x512xf32>
    %cst_309 = arith.constant 0.000000e+00 : f32
    %600 = vector.shape_cast %588 : vector<1x1xf32> to vector<1x1xf32>
    %601 = vector.broadcast %600 : vector<1x1xf32> to vector<1x512xf32>
    %602 = vector.broadcast %cst_309 : f32 to vector<1x512xf32>
    %603 = arith.select %599, %601, %602 : vector<1x512xi1>, vector<1x512xf32>
    %604 = arith.addf %597, %603 : vector<1x512xf32>
    %605 = vector.broadcast %586 : vector<1x1xf32> to vector<1x512xf32>
    %606 = arith.cmpf oeq, %237, %605 : vector<1x512xf32>
    %cst_310 = arith.constant 1.000000e+00 : f32
    %607 = vector.broadcast %cst_310 : f32 to vector<1x1xf32>
    %608 = arith.subf %607, %589 : vector<1x1xf32>
    %cst_311 = arith.constant 0.000000e+00 : f32
    %609 = vector.shape_cast %608 : vector<1x1xf32> to vector<1x1xf32>
    %610 = vector.broadcast %609 : vector<1x1xf32> to vector<1x512xf32>
    %611 = vector.broadcast %cst_311 : f32 to vector<1x512xf32>
    %612 = arith.select %606, %610, %611 : vector<1x512xi1>, vector<1x512xf32>
    %613 = vector.broadcast %587 : vector<1x1xf32> to vector<1x512xf32>
    %614 = arith.cmpf oeq, %237, %613 : vector<1x512xf32>
    %cst_312 = arith.constant 0.000000e+00 : f32
    %615 = vector.shape_cast %589 : vector<1x1xf32> to vector<1x1xf32>
    %616 = vector.broadcast %615 : vector<1x1xf32> to vector<1x512xf32>
    %617 = vector.broadcast %cst_312 : f32 to vector<1x512xf32>
    %618 = arith.select %614, %616, %617 : vector<1x512xi1>, vector<1x512xf32>
    %619 = arith.addf %612, %618 : vector<1x512xf32>
    %620 = arith.mulf %604, %619 : vector<1x512xf32>
    %c7 = arith.constant 7 : index
    %c0_313 = arith.constant 0 : index
    %621 = vector.load %arg21[%c7, %c0_313] : memref<8x512xf32, #tpu.memory_space<vmem>>, vector<1x512xf32>
    tpu.vector_store %arg21[%c7, %c0_313], %620 {strides = array<i32>} : memref<8x512xf32, #tpu.memory_space<vmem>>, vector<1x512xf32>,
    %c0_314 = arith.constant 0 : index
    %c0_315 = arith.constant 0 : index
    %622 = vector.load %arg21[%c0_314, %c0_315] : memref<8x512xf32, #tpu.memory_space<vmem>>, vector<8x512xf32>
    %cst_316 = arith.constant dense<0.000000e+00> : vector<8x96xf32>
    %623 = tpu.matmul %622, %2, %cst_316 {dimension_numbers = #tpu.dot_dimension_numbers<[1], [0], [0], [1], [0, 0, 1, 1], [], []>} : vector<8x512xf32>, vector<512x96xf32>, vector<8x96xf32> -> vector<8x96xf32>
    %c0_317 = arith.constant 0 : index
    %c0_318 = arith.constant 0 : index
    %c0_319 = arith.constant 0 : index
    %624 = vector.load %arg17[%c0_317, %c0_318, %c0_319] : memref<1x8x96xf32, #tpu.memory_space<vmem>>, vector<1x8x96xf32>
    %625 = vector.shape_cast %624 : vector<1x8x96xf32> to vector<8x96xf32>
    %626 = vector.shape_cast %623 : vector<8x96xf32> to vector<1x8x96xf32>
    tpu.vector_store %arg17[%c0_317, %c0_318, %c0_319], %626 {strides = array<i32>} : memref<1x8x96xf32, #tpu.memory_space<vmem>>, vector<1x8x96xf32>,
    return
  }
  func.func @transform_0(%arg0: i32) -> (i32, i32, i32, i32) {
    %c0_i32 = arith.constant 0 : i32
    %c0_i32_0 = arith.constant 0 : i32
    %c0_i32_1 = arith.constant 0 : i32
    %c0_i32_2 = arith.constant 0 : i32
    return %arg0, %c0_i32, %c0_i32_0, %c0_i32_1 : i32, i32, i32, i32
  }
  func.func @transform_1(%arg0: i32) -> (i32, i32) {
    %c0_i32 = arith.constant 0 : i32
    %c0_i32_0 = arith.constant 0 : i32
    %c0_i32_1 = arith.constant 0 : i32
    return %c0_i32, %c0_i32_0 : i32, i32
  }
  func.func @transform_2(%arg0: i32) -> (i32, i32) {
    %c0_i32 = arith.constant 0 : i32
    %c0_i32_0 = arith.constant 0 : i32
    %c0_i32_1 = arith.constant 0 : i32
    return %c0_i32, %c0_i32_0 : i32, i32
  }
  func.func @transform_3(%arg0: i32) -> (i32, i32) {
    %c0_i32 = arith.constant 0 : i32
    %c0_i32_0 = arith.constant 0 : i32
    %c0_i32_1 = arith.constant 0 : i32
    return %c0_i32, %c0_i32_0 : i32, i32
  }
  func.func @transform_4(%arg0: i32) -> (i32, i32) {
    %c0_i32 = arith.constant 0 : i32
    %c0_i32_0 = arith.constant 0 : i32
    %c0_i32_1 = arith.constant 0 : i32
    return %c0_i32, %c0_i32_0 : i32, i32
  }
  func.func @transform_5(%arg0: i32) -> (i32, i32) {
    %c0_i32 = arith.constant 0 : i32
    %c0_i32_0 = arith.constant 0 : i32
    %c0_i32_1 = arith.constant 0 : i32
    return %c0_i32, %c0_i32_0 : i32, i32
  }
  func.func @transform_6(%arg0: i32) -> (i32, i32) {
    %c0_i32 = arith.constant 0 : i32
    %c0_i32_0 = arith.constant 0 : i32
    %c0_i32_1 = arith.constant 0 : i32
    return %c0_i32, %c0_i32_0 : i32, i32
  }
  func.func @transform_7(%arg0: i32) -> (i32, i32) {
    %c0_i32 = arith.constant 0 : i32
    %c0_i32_0 = arith.constant 0 : i32
    %c0_i32_1 = arith.constant 0 : i32
    return %c0_i32, %c0_i32_0 : i32, i32
  }
  func.func @transform_8(%arg0: i32) -> (i32, i32) {
    %c0_i32 = arith.constant 0 : i32
    %c0_i32_0 = arith.constant 0 : i32
    %c0_i32_1 = arith.constant 0 : i32
    return %c0_i32, %c0_i32_0 : i32, i32
  }
  func.func @transform_9(%arg0: i32) -> (i32, i32) {
    %c0_i32 = arith.constant 0 : i32
    %c0_i32_0 = arith.constant 0 : i32
    %c0_i32_1 = arith.constant 0 : i32
    return %c0_i32, %c0_i32_0 : i32, i32
  }
  func.func @transform_10(%arg0: i32) -> (i32, i32) {
    %c0_i32 = arith.constant 0 : i32
    %c0_i32_0 = arith.constant 0 : i32
    %c0_i32_1 = arith.constant 0 : i32
    return %c0_i32, %c0_i32_0 : i32, i32
  }
  func.func @transform_11(%arg0: i32) -> (i32, i32) {
    %c0_i32 = arith.constant 0 : i32
    %c0_i32_0 = arith.constant 0 : i32
    %c0_i32_1 = arith.constant 0 : i32
    return %c0_i32, %c0_i32_0 : i32, i32
  }
  func.func @transform_12(%arg0: i32) -> (i32, i32) {
    %c0_i32 = arith.constant 0 : i32
    %c0_i32_0 = arith.constant 0 : i32
    %c0_i32_1 = arith.constant 0 : i32
    return %c0_i32, %c0_i32_0 : i32, i32
  }
  func.func @transform_13(%arg0: i32) -> (i32, i32) {
    %c0_i32 = arith.constant 0 : i32
    %c0_i32_0 = arith.constant 0 : i32
    %c0_i32_1 = arith.constant 0 : i32
    return %c0_i32, %c0_i32_0 : i32, i32
  }
  func.func @transform_14(%arg0: i32) -> (i32, i32) {
    %c0_i32 = arith.constant 0 : i32
    %c0_i32_0 = arith.constant 0 : i32
    %c0_i32_1 = arith.constant 0 : i32
    return %c0_i32, %c0_i32_0 : i32, i32
  }
  func.func @transform_15(%arg0: i32) -> (i32, i32) {
    %c0_i32 = arith.constant 0 : i32
    %c0_i32_0 = arith.constant 0 : i32
    %c0_i32_1 = arith.constant 0 : i32
    return %c0_i32, %c0_i32_0 : i32, i32
  }
  func.func @transform_16(%arg0: i32) -> (i32, i32, i32) {
    %c0_i32 = arith.constant 0 : i32
    %c0_i32_0 = arith.constant 0 : i32
    %c0_i32_1 = arith.constant 0 : i32
    return %arg0, %c0_i32, %c0_i32_0 : i32, i32, i32
  }
  func.func @transform_17(%arg0: i32) -> (i32, i32, i32) {
    %c0_i32 = arith.constant 0 : i32
    %c0_i32_0 = arith.constant 0 : i32
    %c0_i32_1 = arith.constant 0 : i32
    return %arg0, %c0_i32, %c0_i32_0 : i32, i32, i32
  }
}

</mosaic_0001>

<llo_original>
// kernel: graph_feat_forward.1
$region0: #{graph_feat_forward.1}
  #allocation0 [shape = 'u32[]', space=smem, size = 0x4, offset = 0x4, fixed_abs, tag = 'smem constant byte address 0x4 - core index']
  #allocation1 [shape = 'u32[144,128]{1,0:T(1,128)}', space=vmem, size = 0x12000, scoped, tag = 'internal scratch']
  #allocation2 [shape = 'f32[12,20,128]{2,1,0:T(8,128)}', space=vmem, size = 0x24000, scoped, tag = 'scratch operand']
  #allocation3 [shape = 'f32[8,12,128]{2,1,0:T(8,128)}', space=vmem, size = 0x10000, scoped, tag = 'scratch operand']
  #allocation4 [shape = 'f32[8,512]{1,0:T(8,128)}', space=vmem, size = 0x4000, scoped, tag = 'scratch operand']
  %s0 = inlined_call_operand.vmem [shape: f32[2,16,32,96], index: 0, kind: input, shape index: {}]
  %s1 = inlined_call_operand.vmem [shape: bf16[512,512], index: 1, kind: input, shape index: {}]
  %s2 = inlined_call_operand.vmem [shape: bf16[3200,48], index: 2, kind: input, shape index: {}]
  %s3 = inlined_call_operand.vmem [shape: f32[1,48], index: 3, kind: input, shape index: {}]
  %s4 = inlined_call_operand.vmem [shape: bf16[128,128], index: 4, kind: input, shape index: {}]
  %s5 = inlined_call_operand.vmem [shape: bf16[3200,24], index: 5, kind: input, shape index: {}]
  %s6 = inlined_call_operand.vmem [shape: f32[1,24], index: 6, kind: input, shape index: {}]
  %s7 = inlined_call_operand.vmem [shape: bf16[24,768], index: 7, kind: input, shape index: {}]
  %s8 = inlined_call_operand.vmem [shape: f32[32,768], index: 8, kind: input, shape index: {}]
  %s9 = inlined_call_operand.vmem [shape: bf16[768,128], index: 9, kind: input, shape index: {}]
  %s10 = inlined_call_operand.vmem [shape: f32[1,128], index: 10, kind: input, shape index: {}]
  %s11 = inlined_call_operand.vmem [shape: bf16[128,16], index: 11, kind: input, shape index: {}]
  %s12 = inlined_call_operand.vmem [shape: f32[1,16], index: 12, kind: input, shape index: {}]
  %s13 = inlined_call_operand.vmem [shape: f32[1,16], index: 13, kind: input, shape index: {}]
  %s14 = inlined_call_operand.vmem [shape: f32[1,512], index: 14, kind: input, shape index: {}]
  %s15 = inlined_call_operand.vmem [shape: f32[1,512], index: 15, kind: input, shape index: {}]
  %s16 = inlined_call_operand.hbm [shape: f32[2,8,96], index: 16, kind: output, shape index: {0}]
  %s17 = inlined_call_operand.vmem [shape: f32[2,1,16], index: 17, kind: output, shape index: {1}]
  %18 = xla_tuple %s16, %s17
  %s19 = sld [smem:[#allocation0]]
  $region105: #{graph_feat_forward.1} parent=0
    _
  %s21 = ssub.s32 1, %s19
  %s22 = scalar_select 0, %s21, %s19
  $region1: #{graph_feat_forward.1} parent=0
    #allocation5 [shape = 'u8[8192]{0}', space=vmem, size = 0x2000, scoped, tag = 'output window, operand 0']
    #allocation6 [shape = 's32[2]{0}', space=sflag, size = 0x8, scoped, tag = 'scoped memory for graph_feat_forward.1']
    %23 = vsyncpa [#allocation6], 0
    %s24 = scalar_lea.sflag [#allocation6], 1
    %25 = vsyncpa %s24, 0
    loop: start=0, step=1, limit=4
    $region2: #{graph_feat_forward.1} parent=1 // loop_pre_header
      _
    $region3: #{graph_feat_forward.1} parent=1 // loop_header
      %s27 = sphi 0, %s31
      %p28 = scmp.ge.s32.totalorder %s27, 4
      %s37 = sphi 0, %s39
      %s40 = sphi 0, %s37
      %s41 = sphi 0, %s40
      %s57 = sphi 0, %s41
      %s61 = sphi 0, %s61
      %s63 = sphi 0, %s61
      %s64 = sphi 0, %s63
      %s78 = sphi 0, %s64
      %s82 = sphi 0, %s82
      %s84 = sphi 0, %s82
      %s85 = sphi 0, %s84
      %s99 = sphi 0, %s85
      %s103 = sphi 0, %s103
      %s105 = sphi 0, %s103
      %s106 = sphi 0, %s105
      %s120 = sphi 0, %s106
      %s124 = sphi 0, %s124
      %s126 = sphi 0, %s124
      %s127 = sphi 0, %s126
      %s141 = sphi 0, %s127
      %s145 = sphi 0, %s145
      %s147 = sphi 0, %s145
      %s148 = sphi 0, %s147
      %s162 = sphi 0, %s148
      %s166 = sphi 0, %s166
      %s168 = sphi 0, %s166
      %s169 = sphi 0, %s168
      %s183 = sphi 0, %s169
      %s187 = sphi 0, %s187
      %s189 = sphi 0, %s187
      %s190 = sphi 0, %s189
      %s204 = sphi 0, %s190
      %s208 = sphi 0, %s208
      %s210 = sphi 0, %s208
      %s211 = sphi 0, %s210
      %s225 = sphi 0, %s211
      %s229 = sphi 0, %s229
      %s231 = sphi 0, %s229
      %s232 = sphi 0, %s231
      %s246 = sphi 0, %s232
      %s250 = sphi 0, %s250
      %s252 = sphi 0, %s250
      %s253 = sphi 0, %s252
      %s267 = sphi 0, %s253
      %s271 = sphi 0, %s271
      %s273 = sphi 0, %s271
      %s274 = sphi 0, %s273
      %s288 = sphi 0, %s274
      %s292 = sphi 0, %s292
      %s294 = sphi 0, %s292
      %s295 = sphi 0, %s294
      %s309 = sphi 0, %s295
      %s313 = sphi 0, %s313
      %s315 = sphi 0, %s313
      %s316 = sphi 0, %s315
      %s330 = sphi 0, %s316
      %s334 = sphi 0, %s334
      %s336 = sphi 0, %s334
      %s337 = sphi 0, %s336
      %s351 = sphi 0, %s337
      %s355 = sphi 0, %s355
      %s357 = sphi 0, %s355
      %s358 = sphi 0, %s357
      %s372 = sphi 0, %s358
      %s378 = sphi 0, %s380
      %s381 = sphi 0, %s378
      %s382 = sphi 0, %s381
      %s398 = sphi 0, %s382
      %s404 = sphi 0, %s406
      %s407 = sphi 0, %s404
      %s408 = sphi 0, %s407
      %s424 = sphi 0, %s408
    $region4: #{graph_feat_forward.1} parent=1 // loop_header_branch
      %30 = sbr.rel (%p28) target = $region8
    $region5: #{graph_feat_forward.1} parent=1 // loop_body
      %s32 = ssub.s32 %s27, 1
      %s33 = ssub.s32 %s27, 2
      %s34 = sadd.s32 %s27, 1
      %s35 = ssub.s32 %s27, %s34
      %p36 = scmp.eq.s32.totalorder %s35, 0
      %s38 = sadd.s32 %s37, 1
      %s39 = scalar_select %p36, %s37, %s38
      %p42 = pneg %p36
      %p43 = scmp.eq.s32.totalorder %s27, 1
      %p44 = por %p42, %p43
      %p45 = scmp.ne.s32.totalorder %s37, %s40
      %p46 = scmp.eq.s32.totalorder %s27, 0
      %p47 = por %p45, %p46
      %p48 = scmp.ne.s32.totalorder %s37, %s40
      %p49 = scmp.eq.s32.totalorder %s32, 1
      %p50 = por %p48, %p49
      %p51 = scmp.ne.s32.totalorder %s40, %s41
      %p52 = scmp.eq.s32.totalorder %s32, 0
      %p53 = por %p51, %p52
      %p54 = scmp.ne.s32.totalorder %s40, %s41
      %p55 = scmp.eq.s32.totalorder %s33, 1
      %p56 = por %p54, %p55
      %p58 = scmp.ne.s32.totalorder %s41, %s57
      %p59 = scmp.eq.s32.totalorder %s33, 0
      %p60 = por %p58, %p59
      %s62 = sadd.s32 %s61, 1
      %p65 = scmp.eq.s32.totalorder %s27, 1
      %p66 = scmp.ne.s32.totalorder %s61, %s63
      %p67 = scmp.eq.s32.totalorder %s27, 0
      %p68 = por %p66, %p67
      %p69 = scmp.ne.s32.totalorder %s61, %s63
      %p70 = scmp.eq.s32.totalorder %s32, 1
      %p71 = por %p69, %p70
      %p72 = scmp.ne.s32.totalorder %s63, %s64
      %p73 = scmp.eq.s32.totalorder %s32, 0
      %p74 = por %p72, %p73
      %p75 = scmp.ne.s32.totalorder %s63, %s64
      %p76 = scmp.eq.s32.totalorder %s33, 1
      %p77 = por %p75, %p76
      %p79 = scmp.ne.s32.totalorder %s64, %s78
      %p80 = scmp.eq.s32.totalorder %s33, 0
      %p81 = por %p79, %p80
      %s83 = sadd.s32 %s82, 1
      %p86 = scmp.eq.s32.totalorder %s27, 1
      %p87 = scmp.ne.s32.totalorder %s82, %s84
      %p88 = scmp.eq.s32.totalorder %s27, 0
      %p89 = por %p87, %p88
      %p90 = scmp.ne.s32.totalorder %s82, %s84
      %p91 = scmp.eq.s32.totalorder %s32, 1
      %p92 = por %p90, %p91
      %p93 = scmp.ne.s32.totalorder %s84, %s85
      %p94 = scmp.eq.s32.totalorder %s32, 0
      %p95 = por %p93, %p94
      %p96 = scmp.ne.s32.totalorder %s84, %s85
      %p97 = scmp.eq.s32.totalorder %s33, 1
      %p98 = por %p96, %p97
      %p100 = scmp.ne.s32.totalorder %s85, %s99
      %p101 = scmp.eq.s32.totalorder %s33, 0
      %p102 = por %p100, %p101
      %s104 = sadd.s32 %s103, 1
      %p107 = scmp.eq.s32.totalorder %s27, 1
      %p108 = scmp.ne.s32.totalorder %s103, %s105
      %p109 = scmp.eq.s32.totalorder %s27, 0
      %p110 = por %p108, %p109
      %p111 = scmp.ne.s32.totalorder %s103, %s105
      %p112 = scmp.eq.s32.totalorder %s32, 1
      %p113 = por %p111, %p112
      %p114 = scmp.ne.s32.totalorder %s105, %s106
      %p115 = scmp.eq.s32.totalorder %s32, 0
      %p116 = por %p114, %p115
      %p117 = scmp.ne.s32.totalorder %s105, %s106
      %p118 = scmp.eq.s32.totalorder %s33, 1
      %p119 = por %p117, %p118
      %p121 = scmp.ne.s32.totalorder %s106, %s120
      %p122 = scmp.eq.s32.totalorder %s33, 0
      %p123 = por %p121, %p122
      %s125 = sadd.s32 %s124, 1
      %p128 = scmp.eq.s32.totalorder %s27, 1
      %p129 = scmp.ne.s32.totalorder %s124, %s126
      %p130 = scmp.eq.s32.totalorder %s27, 0
      %p131 = por %p129, %p130
      %p132 = scmp.ne.s32.totalorder %s124, %s126
      %p133 = scmp.eq.s32.totalorder %s32, 1
      %p134 = por %p132, %p133
      %p135 = scmp.ne.s32.totalorder %s126, %s127
      %p136 = scmp.eq.s32.totalorder %s32, 0
      %p137 = por %p135, %p136
      %p138 = scmp.ne.s32.totalorder %s126, %s127
      %p139 = scmp.eq.s32.totalorder %s33, 1
      %p140 = por %p138, %p139
      %p142 = scmp.ne.s32.totalorder %s127, %s141
      %p143 = scmp.eq.s32.totalorder %s33, 0
      %p144 = por %p142, %p143
      %s146 = sadd.s32 %s145, 1
      %p149 = scmp.eq.s32.totalorder %s27, 1
      %p150 = scmp.ne.s32.totalorder %s145, %s147
      %p151 = scmp.eq.s32.totalorder %s27, 0
      %p152 = por %p150, %p151
      %p153 = scmp.ne.s32.totalorder %s145, %s147
      %p154 = scmp.eq.s32.totalorder %s32, 1
      %p155 = por %p153, %p154
      %p156 = scmp.ne.s32.totalorder %s147, %s148
      %p157 = scmp.eq.s32.totalorder %s32, 0
      %p158 = por %p156, %p157
      %p159 = scmp.ne.s32.totalorder %s147, %s148
      %p160 = scmp.eq.s32.totalorder %s33, 1
      %p161 = por %p159, %p160
      %p163 = scmp.ne.s32.totalorder %s148, %s162
      %p164 = scmp.eq.s32.totalorder %s33, 0
      %p165 = por %p163, %p164
      %s167 = sadd.s32 %s166, 1
      %p170 = scmp.eq.s32.totalorder %s27, 1
      %p171 = scmp.ne.s32.totalorder %s166, %s168
      %p172 = scmp.eq.s32.totalorder %s27, 0
      %p173 = por %p171, %p172
      %p174 = scmp.ne.s32.totalorder %s166, %s168
      %p175 = scmp.eq.s32.totalorder %s32, 1
      %p176 = por %p174, %p175
      %p177 = scmp.ne.s32.totalorder %s168, %s169
      %p178 = scmp.eq.s32.totalorder %s32, 0
      %p179 = por %p177, %p178
      %p180 = scmp.ne.s32.totalorder %s168, %s169
      %p181 = scmp.eq.s32.totalorder %s33, 1
      %p182 = por %p180, %p181
      %p184 = scmp.ne.s32.totalorder %s169, %s183
      %p185 = scmp.eq.s32.totalorder %s33, 0
      %p186 = por %p184, %p185
      %s188 = sadd.s32 %s187, 1
      %p191 = scmp.eq.s32.totalorder %s27, 1
      %p192 = scmp.ne.s32.totalorder %s187, %s189
      %p193 = scmp.eq.s32.totalorder %s27, 0
      %p194 = por %p192, %p193
      %p195 = scmp.ne.s32.totalorder %s187, %s189
      %p196 = scmp.eq.s32.totalorder %s32, 1
      %p197 = por %p195, %p196
      %p198 = scmp.ne.s32.totalorder %s189, %s190
      %p199 = scmp.eq.s32.totalorder %s32, 0
      %p200 = por %p198, %p199
      %p201 = scmp.ne.s32.totalorder %s189, %s190
      %p202 = scmp.eq.s32.totalorder %s33, 1
      %p203 = por %p201, %p202
      %p205 = scmp.ne.s32.totalorder %s190, %s204
      %p206 = scmp.eq.s32.totalorder %s33, 0
      %p207 = por %p205, %p206
      %s209 = sadd.s32 %s208, 1
      %p212 = scmp.eq.s32.totalorder %s27, 1
      %p213 = scmp.ne.s32.totalorder %s208, %s210
      %p214 = scmp.eq.s32.totalorder %s27, 0
      %p215 = por %p213, %p214
      %p216 = scmp.ne.s32.totalorder %s208, %s210
      %p217 = scmp.eq.s32.totalorder %s32, 1
      %p218 = por %p216, %p217
      %p219 = scmp.ne.s32.totalorder %s210, %s211
      %p220 = scmp.eq.s32.totalorder %s32, 0
      %p221 = por %p219, %p220
      %p222 = scmp.ne.s32.totalorder %s210, %s211
      %p223 = scmp.eq.s32.totalorder %s33, 1
      %p224 = por %p222, %p223
      %p226 = scmp.ne.s32.totalorder %s211, %s225
      %p227 = scmp.eq.s32.totalorder %s33, 0
      %p228 = por %p226, %p227
      %s230 = sadd.s32 %s229, 1
      %p233 = scmp.eq.s32.totalorder %s27, 1
      %p234 = scmp.ne.s32.totalorder %s229, %s231
      %p235 = scmp.eq.s32.totalorder %s27, 0
      %p236 = por %p234, %p235
      %p237 = scmp.ne.s32.totalorder %s229, %s231
      %p238 = scmp.eq.s32.totalorder %s32, 1
      %p239 = por %p237, %p238
      %p240 = scmp.ne.s32.totalorder %s231, %s232
      %p241 = scmp.eq.s32.totalorder %s32, 0
      %p242 = por %p240, %p241
      %p243 = scmp.ne.s32.totalorder %s231, %s232
      %p244 = scmp.eq.s32.totalorder %s33, 1
      %p245 = por %p243, %p244
      %p247 = scmp.ne.s32.totalorder %s232, %s246
      %p248 = scmp.eq.s32.totalorder %s33, 0
      %p249 = por %p247, %p248
      %s251 = sadd.s32 %s250, 1
      %p254 = scmp.eq.s32.totalorder %s27, 1
      %p255 = scmp.ne.s32.totalorder %s250, %s252
      %p256 = scmp.eq.s32.totalorder %s27, 0
      %p257 = por %p255, %p256
      %p258 = scmp.ne.s32.totalorder %s250, %s252
      %p259 = scmp.eq.s32.totalorder %s32, 1
      %p260 = por %p258, %p259
      %p261 = scmp.ne.s32.totalorder %s252, %s253
      %p262 = scmp.eq.s32.totalorder %s32, 0
      %p263 = por %p261, %p262
      %p264 = scmp.ne.s32.totalorder %s252, %s253
      %p265 = scmp.eq.s32.totalorder %s33, 1
      %p266 = por %p264, %p265
      %p268 = scmp.ne.s32.totalorder %s253, %s267
      %p269 = scmp.eq.s32.totalorder %s33, 0
      %p270 = por %p268, %p269
      %s272 = sadd.s32 %s271, 1
      %p275 = scmp.eq.s32.totalorder %s27, 1
      %p276 = scmp.ne.s32.totalorder %s271, %s273
      %p277 = scmp.eq.s32.totalorder %s27, 0
      %p278 = por %p276, %p277
      %p279 = scmp.ne.s32.totalorder %s271, %s273
      %p280 = scmp.eq.s32.totalorder %s32, 1
      %p281 = por %p279, %p280
      %p282 = scmp.ne.s32.totalorder %s273, %s274
      %p283 = scmp.eq.s32.totalorder %s32, 0
      %p284 = por %p282, %p283
      %p285 = scmp.ne.s32.totalorder %s273, %s274
      %p286 = scmp.eq.s32.totalorder %s33, 1
      %p287 = por %p285, %p286
      %p289 = scmp.ne.s32.totalorder %s274, %s288
      %p290 = scmp.eq.s32.totalorder %s33, 0
      %p291 = por %p289, %p290
      %s293 = sadd.s32 %s292, 1
      %p296 = scmp.eq.s32.totalorder %s27, 1
      %p297 = scmp.ne.s32.totalorder %s292, %s294
      %p298 = scmp.eq.s32.totalorder %s27, 0
      %p299 = por %p297, %p298
      %p300 = scmp.ne.s32.totalorder %s292, %s294
      %p301 = scmp.eq.s32.totalorder %s32, 1
      %p302 = por %p300, %p301
      %p303 = scmp.ne.s32.totalorder %s294, %s295
      %p304 = scmp.eq.s32.totalorder %s32, 0
      %p305 = por %p303, %p304
      %p306 = scmp.ne.s32.totalorder %s294, %s295
      %p307 = scmp.eq.s32.totalorder %s33, 1
      %p308 = por %p306, %p307
      %p310 = scmp.ne.s32.totalorder %s295, %s309
      %p311 = scmp.eq.s32.totalorder %s33, 0
      %p312 = por %p310, %p311
      %s314 = sadd.s32 %s313, 1
      %p317 = scmp.eq.s32.totalorder %s27, 1
      %p318 = scmp.ne.s32.totalorder %s313, %s315
      %p319 = scmp.eq.s32.totalorder %s27, 0
      %p320 = por %p318, %p319
      %p321 = scmp.ne.s32.totalorder %s313, %s315
      %p322 = scmp.eq.s32.totalorder %s32, 1
      %p323 = por %p321, %p322
      %p324 = scmp.ne.s32.totalorder %s315, %s316
      %p325 = scmp.eq.s32.totalorder %s32, 0
      %p326 = por %p324, %p325
      %p327 = scmp.ne.s32.totalorder %s315, %s316
      %p328 = scmp.eq.s32.totalorder %s33, 1
      %p329 = por %p327, %p328
      %p331 = scmp.ne.s32.totalorder %s316, %s330
      %p332 = scmp.eq.s32.totalorder %s33, 0
      %p333 = por %p331, %p332
      %s335 = sadd.s32 %s334, 1
      %p338 = scmp.eq.s32.totalorder %s27, 1
      %p339 = scmp.ne.s32.totalorder %s334, %s336
      %p340 = scmp.eq.s32.totalorder %s27, 0
      %p341 = por %p339, %p340
      %p342 = scmp.ne.s32.totalorder %s334, %s336
      %p343 = scmp.eq.s32.totalorder %s32, 1
      %p344 = por %p342, %p343
      %p345 = scmp.ne.s32.totalorder %s336, %s337
      %p346 = scmp.eq.s32.totalorder %s32, 0
      %p347 = por %p345, %p346
      %p348 = scmp.ne.s32.totalorder %s336, %s337
      %p349 = scmp.eq.s32.totalorder %s33, 1
      %p350 = por %p348, %p349
      %p352 = scmp.ne.s32.totalorder %s337, %s351
      %p353 = scmp.eq.s32.totalorder %s33, 0
      %p354 = por %p352, %p353
      %s356 = sadd.s32 %s355, 1
      %p359 = scmp.eq.s32.totalorder %s27, 1
      %p360 = scmp.ne.s32.totalorder %s355, %s357
      %p361 = scmp.eq.s32.totalorder %s27, 0
      %p362 = por %p360, %p361
      %p363 = scmp.ne.s32.totalorder %s355, %s357
      %p364 = scmp.eq.s32.totalorder %s32, 1
      %p365 = por %p363, %p364
      %p366 = scmp.ne.s32.totalorder %s357, %s358
      %p367 = scmp.eq.s32.totalorder %s32, 0
      %p368 = por %p366, %p367
      %p369 = scmp.ne.s32.totalorder %s357, %s358
      %p370 = scmp.eq.s32.totalorder %s33, 1
      %p371 = por %p369, %p370
      %p373 = scmp.ne.s32.totalorder %s358, %s372
      %p374 = scmp.eq.s32.totalorder %s33, 0
      %p375 = por %p373, %p374
      %s376 = ssub.s32 %s27, %s34
      %p377 = scmp.eq.s32.totalorder %s376, 0
      %s379 = sadd.s32 %s378, 1
      %s380 = scalar_select %p377, %s378, %s379
      %p383 = pneg %p377
      %p384 = scmp.eq.s32.totalorder %s27, 1
      %p385 = por %p383, %p384
      %p386 = scmp.ne.s32.totalorder %s378, %s381
      %p387 = scmp.eq.s32.totalorder %s27, 0
      %p388 = por %p386, %p387
      %p389 = scmp.ne.s32.totalorder %s378, %s381
      %p390 = scmp.eq.s32.totalorder %s32, 1
      %p391 = por %p389, %p390
      %p392 = scmp.ne.s32.totalorder %s381, %s382
      %p393 = scmp.eq.s32.totalorder %s32, 0
      %p394 = por %p392, %p393
      %p395 = scmp.ne.s32.totalorder %s381, %s382
      %p396 = scmp.eq.s32.totalorder %s33, 1
      %p397 = por %p395, %p396
      %p399 = scmp.ne.s32.totalorder %s382, %s398
      %p400 = scmp.eq.s32.totalorder %s33, 0
      %p401 = por %p399, %p400
      %s402 = ssub.s32 %s27, %s34
      %p403 = scmp.eq.s32.totalorder %s402, 0
      %s405 = sadd.s32 %s404, 1
      %s406 = scalar_select %p403, %s404, %s405
      %p409 = pneg %p403
      %p410 = scmp.eq.s32.totalorder %s27, 1
      %p411 = por %p409, %p410
      %p412 = scmp.ne.s32.totalorder %s404, %s407
      %p413 = scmp.eq.s32.totalorder %s27, 0
      %p414 = por %p412, %p413
      %p415 = scmp.ne.s32.totalorder %s404, %s407
      %p416 = scmp.eq.s32.totalorder %s32, 1
      %p417 = por %p415, %p416
      %p418 = scmp.ne.s32.totalorder %s407, %s408
      %p419 = scmp.eq.s32.totalorder %s32, 0
      %p420 = por %p418, %p419
      %p421 = scmp.ne.s32.totalorder %s407, %s408
      %p422 = scmp.eq.s32.totalorder %s33, 1
      %p423 = por %p421, %p422
      %p425 = scmp.ne.s32.totalorder %s408, %s424
      %p426 = scmp.eq.s32.totalorder %s33, 0
      %p427 = por %p425, %p426
      %p428 = scmp.le.s32.totalorder 1, %s27
      %p429 = scmp.lt.s32.totalorder %s27, 3
      %p430 = pnand %p428, %p429
      %p431 = pneg %p430
      // Predicated region
      $region9: #{graph_feat_forward.1} parent=5 // pred_check
        _
      $region10: #{graph_feat_forward.1} parent=5 // pred_check_branch
        %433 = sbr.rel (%p430) target = $region12
      $region11: #{graph_feat_forward.1} parent=5 // pred_region
        %s434 = ssub.s32 %s27, 1
        // Predicated region
        $region13: #{graph_feat_forward.1} parent=11 // pred_check
          %p435 = pneg %p74
        $region14: #{graph_feat_forward.1} parent=11 // pred_check_branch
          %437 = sbr.rel (%p435) target = $region16
        $region15: #{graph_feat_forward.1} parent=11 // pred_region
          _
        $region16: #{graph_feat_forward.1} parent=11 // pred_fallthru
          _
        // Predicated region
        $region17: #{graph_feat_forward.1} parent=11 // pred_check
          %p438 = pneg %p95
        $region18: #{graph_feat_forward.1} parent=11 // pred_check_branch
          %440 = sbr.rel (%p438) target = $region20
        $region19: #{graph_feat_forward.1} parent=11 // pred_region
          _
        $region20: #{graph_feat_forward.1} parent=11 // pred_fallthru
          _
        // Predicated region
        $region21: #{graph_feat_forward.1} parent=11 // pred_check
          %p441 = pneg %p116
        $region22: #{graph_feat_forward.1} parent=11 // pred_check_branch
          %443 = sbr.rel (%p441) target = $region24
        $region23: #{graph_feat_forward.1} parent=11 // pred_region
          _
        $region24: #{graph_feat_forward.1} parent=11 // pred_fallthru
          _
        // Predicated region
        $region25: #{graph_feat_forward.1} parent=11 // pred_check
          %p444 = pneg %p137
        $region26: #{graph_feat_forward.1} parent=11 // pred_check_branch
          %446 = sbr.rel (%p444) target = $region28
        $region27: #{graph_feat_forward.1} parent=11 // pred_region
          _
        $region28: #{graph_feat_forward.1} parent=11 // pred_fallthru
          _
        // Predicated region
        $region29: #{graph_feat_forward.1} parent=11 // pred_check
          %p447 = pneg %p158
        $region30: #{graph_feat_forward.1} parent=11 // pred_check_branch
          %449 = sbr.rel (%p447) target = $region32
        $region31: #{graph_feat_forward.1} parent=11 // pred_region
          _
        $region32: #{graph_feat_forward.1} parent=11 // pred_fallthru
          _
        // Predicated region
        $region33: #{graph_feat_forward.1} parent=11 // pred_check
          %p450 = pneg %p179
        $region34: #{graph_feat_forward.1} parent=11 // pred_check_branch
          %452 = sbr.rel (%p450) target = $region36
        $region35: #{graph_feat_forward.1} parent=11 // pred_region
          _
        $region36: #{graph_feat_forward.1} parent=11 // pred_fallthru
          _
        // Predicated region
        $region37: #{graph_feat_forward.1} parent=11 // pred_check
          %p453 = pneg %p200
        $region38: #{graph_feat_forward.1} parent=11 // pred_check_branch
          %455 = sbr.rel (%p453) target = $region40
        $region39: #{graph_feat_forward.1} parent=11 // pred_region
          _
        $region40: #{graph_feat_forward.1} parent=11 // pred_fallthru
          _
        // Predicated region
        $region41: #{graph_feat_forward.1} parent=11 // pred_check
          %p456 = pneg %p221
        $region42: #{graph_feat_forward.1} parent=11 // pred_check_branch
          %458 = sbr.rel (%p456) target = $region44
        $region43: #{graph_feat_forward.1} parent=11 // pred_region
          _
        $region44: #{graph_feat_forward.1} parent=11 // pred_fallthru
          _
        // Predicated region
        $region45: #{graph_feat_forward.1} parent=11 // pred_check
          %p459 = pneg %p242
        $region46: #{graph_feat_forward.1} parent=11 // pred_check_branch
          %461 = sbr.rel (%p459) target = $region48
        $region47: #{graph_feat_forward.1} parent=11 // pred_region
          _
        $region48: #{graph_feat_forward.1} parent=11 // pred_fallthru
          _
        // Predicated region
        $region49: #{graph_feat_forward.1} parent=11 // pred_check
          %p462 = pneg %p263
        $region50: #{graph_feat_forward.1} parent=11 // pred_check_branch
          %464 = sbr.rel (%p462) target = $region52
        $region51: #{graph_feat_forward.1} parent=11 // pred_region
          _
        $region52: #{graph_feat_forward.1} parent=11 // pred_fallthru
          _
        // Predicated region
        $region53: #{graph_feat_forward.1} parent=11 // pred_check
          %p465 = pneg %p284
        $region54: #{graph_feat_forward.1} parent=11 // pred_check_branch
          %467 = sbr.rel (%p465) target = $region56
        $region55: #{graph_feat_forward.1} parent=11 // pred_region
          _
        $region56: #{graph_feat_forward.1} parent=11 // pred_fallthru
          _
        // Predicated region
        $region57: #{graph_feat_forward.1} parent=11 // pred_check
          %p468 = pneg %p305
        $region58: #{graph_feat_forward.1} parent=11 // pred_check_branch
          %470 = sbr.rel (%p468) target = $region60
        $region59: #{graph_feat_forward.1} parent=11 // pred_region
          _
        $region60: #{graph_feat_forward.1} parent=11 // pred_fallthru
          _
        // Predicated region
        $region61: #{graph_feat_forward.1} parent=11 // pred_check
          %p471 = pneg %p326
        $region62: #{graph_feat_forward.1} parent=11 // pred_check_branch
          %473 = sbr.rel (%p471) target = $region64
        $region63: #{graph_feat_forward.1} parent=11 // pred_region
          _
        $region64: #{graph_feat_forward.1} parent=11 // pred_fallthru
          _
        // Predicated region
        $region65: #{graph_feat_forward.1} parent=11 // pred_check
          %p474 = pneg %p347
        $region66: #{graph_feat_forward.1} parent=11 // pred_check_branch
          %476 = sbr.rel (%p474) target = $region68
        $region67: #{graph_feat_forward.1} parent=11 // pred_region
          _
        $region68: #{graph_feat_forward.1} parent=11 // pred_fallthru
          _
        // Predicated region
        $region69: #{graph_feat_forward.1} parent=11 // pred_check
          %p477 = pneg %p368
        $region70: #{graph_feat_forward.1} parent=11 // pred_check_branch
          %479 = sbr.rel (%p477) target = $region72
        $region71: #{graph_feat_forward.1} parent=11 // pred_region
          _
        $region72: #{graph_feat_forward.1} parent=11 // pred_fallthru
          _
      $region12: #{graph_feat_forward.1} parent=5 // pred_fallthru
        _
      %p480 = scmp.lt.s32.totalorder %s27, 2
      // Predicated region
      $region73: #{graph_feat_forward.1} parent=5 // pred_check
        %p481 = pneg %p480
      $region74: #{graph_feat_forward.1} parent=5 // pred_check_branch
        %483 = sbr.rel (%p481) target = $region76
      $region75: #{graph_feat_forward.1} parent=5 // pred_region
        // Predicated region
        $region77: #{graph_feat_forward.1} parent=75 // pred_check
          %p484 = pneg %p47
        $region78: #{graph_feat_forward.1} parent=75 // pred_check_branch
          %486 = sbr.rel (%p484) target = $region80
        $region79: #{graph_feat_forward.1} parent=75 // pred_region
          %p487 = scmp.lt.s32.totalorder %s27, 1
          %s488 = scalar_select %p487, %s27, 1
          %s489 = smul.addr %s488, 64
          %s490 = smul.addr %s489, 8
          %s491 = scalar_lea.vmem %s0, %s490
        $region80: #{graph_feat_forward.1} parent=75 // pred_fallthru
          _
      $region76: #{graph_feat_forward.1} parent=5 // pred_fallthru
        _
      %p492 = scmp.le.s32.totalorder 1, %s27
      %p493 = scmp.lt.s32.totalorder %s27, 3
      %p494 = pnand %p492, %p493
      %p495 = pneg %p494
      // Predicated region
      $region81: #{graph_feat_forward.1} parent=5 // pred_check
        _
      $region82: #{graph_feat_forward.1} parent=5 // pred_check_branch
        %497 = sbr.rel (%p494) target = $region84
      $region83: #{graph_feat_forward.1} parent=5 // pred_region
        %s498 = ssub.s32 %s27, 1
        %p499 = scmp.lt.s32.totalorder %s32, 1
        %s500 = scalar_select %p499, %s32, 1
        %s501 = smul.addr %s500, 64
        %s502 = smul.addr %s501, 8
        %s503 = scalar_lea.vmem %s0, %s502
        %p504 = pneg %p53
        %p505 = pneg %p50
        %p506 = pneg %p74
        %p507 = pneg %p71
        %p508 = pneg %p95
        %p509 = pneg %p92
        %p510 = pneg %p116
        %p511 = pneg %p113
        %p512 = pneg %p137
        %p513 = pneg %p134
        %p514 = pneg %p158
        %p515 = pneg %p155
        %p516 = pneg %p179
        %p517 = pneg %p176
        %p518 = pneg %p200
        %p519 = pneg %p197
        %p520 = pneg %p221
        %p521 = pneg %p218
        %p522 = pneg %p242
        %p523 = pneg %p239
        %p524 = pneg %p263
        %p525 = pneg %p260
        %p526 = pneg %p284
        %p527 = pneg %p281
        %p528 = pneg %p305
        %p529 = pneg %p302
        %p530 = pneg %p326
        %p531 = pneg %p323
        %p532 = pneg %p347
        %p533 = pneg %p344
        %p534 = pneg %p368
        %p535 = pneg %p365
        %p536 = pneg %p394
        %p537 = pneg %p391
        %s538 = sand.u32 %s381, 1
        %s539 = scalar_lea.sflag [#allocation6], %s538
        %s540 = sand.u32 %s381, 1
        %s541 = smul.addr %s540, 8
        %s542 = scalar_lea.vmem [#allocation5], %s541
        %p543 = pneg %p420
        %p544 = pneg %p417
        %p545 = scmp.lt.s32.totalorder %s32, 1
        %s546 = scalar_select %p545, %s32, 1
        %s547 = scalar_lea.vmem %s17, %s546
        %p548 = scmp.lt.s32.totalorder %s32, 1
        %s549 = scalar_select %p548, %s32, 1
        %s550 = smul.addr %s549, 64
        %s551 = smul.addr %s550, 8
        %s552 = scalar_lea.vmem %s0, %s551
        %p553 = scmp.lt.s32.totalorder %s32, 1
        %s554 = scalar_select %p553, %s32, 1
        %s555 = scalar_lea.vmem %s17, %s554
        %v557 = vld [vmem:[%s552] sm:$0xff]
        %v558 = vld [vmem:[%s552 + $0x8] sm:$0xff]
        %v559 = vld [vmem:[%s552 + $0x10] sm:$0xff]
        %v560 = vld [vmem:[%s552 + $0x18] sm:$0xff]
        %v561 = vld [vmem:[%s552 + $0x20] sm:$0xff]
        %v562 = vld [vmem:[%s552 + $0x28] sm:$0xff]
        %v563 = vld [vmem:[%s552 + $0x30] sm:$0xff]
        %v564 = vld [vmem:[%s552 + $0x38] sm:$0xff]
        %v565 = vld [vmem:[%s552 + $0x40] sm:$0xff]
        %v566 = vld [vmem:[%s552 + $0x48] sm:$0xff]
        %v567 = vld [vmem:[%s552 + $0x50] sm:$0xff]
        %v568 = vld [vmem:[%s552 + $0x58] sm:$0xff]
        %v569 = vld [vmem:[%s552 + $0x60] sm:$0xff]
        %v570 = vld [vmem:[%s552 + $0x68] sm:$0xff]
        %v571 = vld [vmem:[%s552 + $0x70] sm:$0xff]
        %v572 = vld [vmem:[%s552 + $0x78] sm:$0xff]
        %v573 = vld [vmem:[%s552 + $0x80] sm:$0xff]
        %v574 = vld [vmem:[%s552 + $0x88] sm:$0xff]
        %v575 = vld [vmem:[%s552 + $0x90] sm:$0xff]
        %v576 = vld [vmem:[%s552 + $0x98] sm:$0xff]
        %v577 = vld [vmem:[%s552 + $0xa0] sm:$0xff]
        %v578 = vld [vmem:[%s552 + $0xa8] sm:$0xff]
        %v579 = vld [vmem:[%s552 + $0xb0] sm:$0xff]
        %v580 = vld [vmem:[%s552 + $0xb8] sm:$0xff]
        %v581 = vld [vmem:[%s552 + $0xc0] sm:$0xff]
        %v582 = vld [vmem:[%s552 + $0xc8] sm:$0xff]
        %v583 = vld [vmem:[%s552 + $0xd0] sm:$0xff]
        %v584 = vld [vmem:[%s552 + $0xd8] sm:$0xff]
        %v585 = vld [vmem:[%s552 + $0xe0] sm:$0xff]
        %v586 = vld [vmem:[%s552 + $0xe8] sm:$0xff]
        %v587 = vld [vmem:[%s552 + $0xf0] sm:$0xff]
        %v588 = vld [vmem:[%s552 + $0xf8] sm:$0xff]
        %v589 = vld [vmem:[%s552 + $0x100] sm:$0xff]
        %v590 = vld [vmem:[%s552 + $0x108] sm:$0xff]
        %v591 = vld [vmem:[%s552 + $0x110] sm:$0xff]
        %v592 = vld [vmem:[%s552 + $0x118] sm:$0xff]
        %v593 = vld [vmem:[%s552 + $0x120] sm:$0xff]
        %v594 = vld [vmem:[%s552 + $0x128] sm:$0xff]
        %v595 = vld [vmem:[%s552 + $0x130] sm:$0xff]
        %v596 = vld [vmem:[%s552 + $0x138] sm:$0xff]
        %v597 = vld [vmem:[%s552 + $0x140] sm:$0xff]
        %v598 = vld [vmem:[%s552 + $0x148] sm:$0xff]
        %v599 = vld [vmem:[%s552 + $0x150] sm:$0xff]
        %v600 = vld [vmem:[%s552 + $0x158] sm:$0xff]
        %v601 = vld [vmem:[%s552 + $0x160] sm:$0xff]
        %v602 = vld [vmem:[%s552 + $0x168] sm:$0xff]
        %v603 = vld [vmem:[%s552 + $0x170] sm:$0xff]
        %v604 = vld [vmem:[%s552 + $0x178] sm:$0xff]
        %v605 = vld [vmem:[%s552 + $0x180] sm:$0xff]
        %v606 = vld [vmem:[%s552 + $0x188] sm:$0xff]
        %v607 = vld [vmem:[%s552 + $0x190] sm:$0xff]
        %v608 = vld [vmem:[%s552 + $0x198] sm:$0xff]
        %v609 = vld [vmem:[%s552 + $0x1a0] sm:$0xff]
        %v610 = vld [vmem:[%s552 + $0x1a8] sm:$0xff]
        %v611 = vld [vmem:[%s552 + $0x1b0] sm:$0xff]
        %v612 = vld [vmem:[%s552 + $0x1b8] sm:$0xff]
        %v613 = vld [vmem:[%s552 + $0x1c0] sm:$0xff]
        %v614 = vld [vmem:[%s552 + $0x1c8] sm:$0xff]
        %v615 = vld [vmem:[%s552 + $0x1d0] sm:$0xff]
        %v616 = vld [vmem:[%s552 + $0x1d8] sm:$0xff]
        %v617 = vld [vmem:[%s552 + $0x1e0] sm:$0xff]
        %v618 = vld [vmem:[%s552 + $0x1e8] sm:$0xff]
        %v619 = vld [vmem:[%s552 + $0x1f0] sm:$0xff]
        %v620 = vld [vmem:[%s552 + $0x1f8] sm:$0xff]
        %v621 = vpack.c.bf16 %v558, %v557
        %v622 = vpack.c.bf16 %v560, %v559
        %v623 = vpack.c.bf16 %v562, %v561
        %v624 = vpack.c.bf16 %v564, %v563
        %v625 = vpack.c.bf16 %v566, %v565
        %v626 = vpack.c.bf16 %v568, %v567
        %v627 = vpack.c.bf16 %v570, %v569
        %v628 = vpack.c.bf16 %v572, %v571
        %v629 = vpack.c.bf16 %v574, %v573
        %v630 = vpack.c.bf16 %v576, %v575
        %v631 = vpack.c.bf16 %v578, %v577
        %v632 = vpack.c.bf16 %v580, %v579
        %v633 = vpack.c.bf16 %v582, %v581
        %v634 = vpack.c.bf16 %v584, %v583
        %v635 = vpack.c.bf16 %v586, %v585
        %v636 = vpack.c.bf16 %v588, %v587
        %v637 = vpack.c.bf16 %v590, %v589
        %v638 = vpack.c.bf16 %v592, %v591
        %v639 = vpack.c.bf16 %v594, %v593
        %v640 = vpack.c.bf16 %v596, %v595
        %v641 = vpack.c.bf16 %v598, %v597
        %v642 = vpack.c.bf16 %v600, %v599
        %v643 = vpack.c.bf16 %v602, %v601
        %v644 = vpack.c.bf16 %v604, %v603
        %v645 = vpack.c.bf16 %v606, %v605
        %v646 = vpack.c.bf16 %v608, %v607
        %v647 = vpack.c.bf16 %v610, %v609
        %v648 = vpack.c.bf16 %v612, %v611
        %v649 = vpack.c.bf16 %v614, %v613
        %v650 = vpack.c.bf16 %v616, %v615
        %v651 = vpack.c.bf16 %v618, %v617
        %v652 = vpack.c.bf16 %v620, %v619
        %v653 = vld [vmem:[%s1] sm:$0xff]
        %v654 = vld [vmem:[%s1 + $0x8] sm:$0xff]
        %v655 = vld [vmem:[%s1 + $0x10] sm:$0xff]
        %v656 = vld [vmem:[%s1 + $0x18] sm:$0xff]
        %v657 = vld [vmem:[%s1 + $0x20] sm:$0xff]
        %v658 = vld [vmem:[%s1 + $0x28] sm:$0xff]
        %v659 = vld [vmem:[%s1 + $0x30] sm:$0xff]
        %v660 = vld [vmem:[%s1 + $0x38] sm:$0xff]
        %v661 = vld [vmem:[%s1 + $0x40] sm:$0xff]
        %v662 = vld [vmem:[%s1 + $0x48] sm:$0xff]
        %v663 = vld [vmem:[%s1 + $0x50] sm:$0xff]
        %v664 = vld [vmem:[%s1 + $0x58] sm:$0xff]
        %v665 = vld [vmem:[%s1 + $0x60] sm:$0xff]
        %v666 = vld [vmem:[%s1 + $0x68] sm:$0xff]
        %v667 = vld [vmem:[%s1 + $0x70] sm:$0xff]
        %v668 = vld [vmem:[%s1 + $0x78] sm:$0xff]
        %v669 = vld [vmem:[%s1 + $0x80] sm:$0xff]
        %v670 = vld [vmem:[%s1 + $0x88] sm:$0xff]
        %v671 = vld [vmem:[%s1 + $0x90] sm:$0xff]
        %v672 = vld [vmem:[%s1 + $0x98] sm:$0xff]
        %v673 = vld [vmem:[%s1 + $0xa0] sm:$0xff]
        %v674 = vld [vmem:[%s1 + $0xa8] sm:$0xff]
        %v675 = vld [vmem:[%s1 + $0xb0] sm:$0xff]
        %v676 = vld [vmem:[%s1 + $0xb8] sm:$0xff]
        %v677 = vld [vmem:[%s1 + $0xc0] sm:$0xff]
        %v678 = vld [vmem:[%s1 + $0xc8] sm:$0xff]
        %v679 = vld [vmem:[%s1 + $0xd0] sm:$0xff]
        %v680 = vld [vmem:[%s1 + $0xd8] sm:$0xff]
        %v681 = vld [vmem:[%s1 + $0xe0] sm:$0xff]
        %v682 = vld [vmem:[%s1 + $0xe8] sm:$0xff]
        %v683 = vld [vmem:[%s1 + $0xf0] sm:$0xff]
        %v684 = vld [vmem:[%s1 + $0xf8] sm:$0xff]
        %v717 = vunpack.c.l.b16 %v653
        %v718 = vunpack.c.h.b16 %v653
        %v719 = vunpack.c.l.b16 %v654
        %v720 = vunpack.c.h.b16 %v654
        %v721 = vunpack.c.l.b16 %v655
        %v722 = vunpack.c.h.b16 %v655
        %v723 = vunpack.c.l.b16 %v656
        %v724 = vunpack.c.h.b16 %v656
        %v725 = vunpack.c.l.b16 %v657
        %v726 = vunpack.c.h.b16 %v657
        %v727 = vunpack.c.l.b16 %v658
        %v728 = vunpack.c.h.b16 %v658
        %v729 = vunpack.c.l.b16 %v659
        %v730 = vunpack.c.h.b16 %v659
        %v731 = vunpack.c.l.b16 %v660
        %v732 = vunpack.c.h.b16 %v660
        %v733 = vunpack.c.l.b16 %v661
        %v734 = vunpack.c.h.b16 %v661
        %v735 = vunpack.c.l.b16 %v662
        %v736 = vunpack.c.h.b16 %v662
        %v737 = vunpack.c.l.b16 %v663
        %v738 = vunpack.c.h.b16 %v663
        %v739 = vunpack.c.l.b16 %v664
        %v740 = vunpack.c.h.b16 %v664
        %v741 = vunpack.c.l.b16 %v665
        %v742 = vunpack.c.h.b16 %v665
        %v743 = vunpack.c.l.b16 %v666
        %v744 = vunpack.c.h.b16 %v666
        %v745 = vunpack.c.l.b16 %v667
        %v746 = vunpack.c.h.b16 %v667
        %v747 = vunpack.c.l.b16 %v668
        %v748 = vunpack.c.h.b16 %v668
        %v749 = vunpack.c.l.b16 %v669
        %v750 = vunpack.c.h.b16 %v669
        %v751 = vunpack.c.l.b16 %v670
        %v752 = vunpack.c.h.b16 %v670
        %v753 = vunpack.c.l.b16 %v671
        %v754 = vunpack.c.h.b16 %v671
        %v755 = vunpack.c.l.b16 %v672
        %v756 = vunpack.c.h.b16 %v672
        %v757 = vunpack.c.l.b16 %v673
        %v758 = vunpack.c.h.b16 %v673
        %v759 = vunpack.c.l.b16 %v674
        %v760 = vunpack.c.h.b16 %v674
        %v761 = vunpack.c.l.b16 %v675
        %v762 = vunpack.c.h.b16 %v675
        %v763 = vunpack.c.l.b16 %v676
        %v764 = vunpack.c.h.b16 %v676
        %v765 = vunpack.c.l.b16 %v677
        %v766 = vunpack.c.h.b16 %v677
        %v767 = vunpack.c.l.b16 %v678
        %v768 = vunpack.c.h.b16 %v678
        %v769 = vunpack.c.l.b16 %v679
        %v770 = vunpack.c.h.b16 %v679
        %v771 = vunpack.c.l.b16 %v680
        %v772 = vunpack.c.h.b16 %v680
        %v773 = vunpack.c.l.b16 %v681
        %v774 = vunpack.c.h.b16 %v681
        %v775 = vunpack.c.l.b16 %v682
        %v776 = vunpack.c.h.b16 %v682
        %v777 = vunpack.c.l.b16 %v683
        %v778 = vunpack.c.h.b16 %v683
        %v779 = vunpack.c.l.b16 %v684
        %v780 = vunpack.c.h.b16 %v684
        %v781 = vpack.c.b16 %v721, %v717
        %v782 = vpack.c.b16 %v722, %v718
        %v783 = vpack.c.b16 %v723, %v719
        %v784 = vpack.c.b16 %v724, %v720
        %v785 = vpack.c.b16 %v729, %v725
        %v786 = vpack.c.b16 %v730, %v726
        %v787 = vpack.c.b16 %v731, %v727
        %v788 = vpack.c.b16 %v732, %v728
        %v789 = vpack.c.b16 %v737, %v733
        %v790 = vpack.c.b16 %v738, %v734
        %v791 = vpack.c.b16 %v739, %v735
        %v792 = vpack.c.b16 %v740, %v736
        %v793 = vpack.c.b16 %v745, %v741
        %v794 = vpack.c.b16 %v746, %v742
        %v795 = vpack.c.b16 %v747, %v743
        %v796 = vpack.c.b16 %v748, %v744
        %v797 = vpack.c.b16 %v753, %v749
        %v798 = vpack.c.b16 %v754, %v750
        %v799 = vpack.c.b16 %v755, %v751
        %v800 = vpack.c.b16 %v756, %v752
        %v801 = vpack.c.b16 %v761, %v757
        %v802 = vpack.c.b16 %v762, %v758
        %v803 = vpack.c.b16 %v763, %v759
        %v804 = vpack.c.b16 %v764, %v760
        %v805 = vpack.c.b16 %v769, %v765
        %v806 = vpack.c.b16 %v770, %v766
        %v807 = vpack.c.b16 %v771, %v767
        %v808 = vpack.c.b16 %v772, %v768
        %v809 = vpack.c.b16 %v777, %v773
        %v810 = vpack.c.b16 %v778, %v774
        %v811 = vpack.c.b16 %v779, %v775
        %v812 = vpack.c.b16 %v780, %v776
        %845 = vmatprep.subr.bf16.mxu0 0
        %846 = vmatpush1.bf16.msra.mxu0 %v621
        %847 = vmatprep.subr.bf16.mxu0 0
        %848 = vmatpush1.bf16.msra.mxu0 %v622
        %849 = vmatprep.subr.bf16.mxu0 0
        %850 = vmatpush1.bf16.msra.mxu0 %v623
        %851 = vmatprep.subr.bf16.mxu0 0
        %852 = vmatpush1.bf16.msra.mxu0 %v624
        %853 = vmatprep.subr.bf16.mxu0 0
        %854 = vmatpush1.bf16.msra.mxu0 %v625
        %855 = vmatprep.subr.bf16.mxu0 0
        %856 = vmatpush1.bf16.msra.mxu0 %v626
        %857 = vmatprep.subr.bf16.mxu0 0
        %858 = vmatpush1.bf16.msra.mxu0 %v627
        %859 = vmatprep.subr.bf16.mxu0 0
        %860 = vmatpush1.bf16.msra.mxu0 %v628
        %861 = vmatprep.subr.bf16.mxu0 0
        %862 = vmatpush1.bf16.msra.mxu0 %v629
        %863 = vmatprep.subr.bf16.mxu0 0
        %864 = vmatpush1.bf16.msra.mxu0 %v630
        %865 = vmatprep.subr.bf16.mxu0 0
        %866 = vmatpush1.bf16.msra.mxu0 %v631
        %867 = vmatprep.subr.bf16.mxu0 0
        %868 = vmatpush1.bf16.msra.mxu0 %v632
        %869 = vmatprep.subr.bf16.mxu0 0
        %870 = vmatpush1.bf16.msra.mxu0 %v633
        %871 = vmatprep.subr.bf16.mxu0 0
        %872 = vmatpush1.bf16.msra.mxu0 %v634
        %873 = vmatprep.subr.bf16.mxu0 0
        %874 = vmatpush1.bf16.msra.mxu0 %v635
        %875 = vmatprep.subr.bf16.mxu0 0
        %876 = vmatpush1.bf16.msra.mxu0 %v636
        %877 = vmatprep.mubr.bf16.mxu0 %v782
        %878 = vmatmul.mubr.bf16.gmra.mrb[0].mxu0 %v781
        %v879 = vpop.f32.mrb[0].mxu0
        %v880 = vadd.f32 0.0, %v879
        %v881 = vpop.f32.mrb[0].mxu0
        %v882 = vpop.f32.mrb[0].mxu0
        %v883 = vadd.f32 0.0, %v882
        %v884 = vpop.f32.mrb[0].mxu0
        %885 = vmatprep.mubr.bf16.mxu0 %v786
        %886 = vmatmul.mubr.bf16.gmra.mrb[0].mxu0 %v785
        %v887 = vpop.f32.mrb[0].mxu0
        %v888 = vadd.f32 0.0, %v887
        %v889 = vpop.f32.mrb[0].mxu0
        %v890 = vpop.f32.mrb[0].mxu0
        %v891 = vadd.f32 0.0, %v890
        %v892 = vpop.f32.mrb[0].mxu0
        %893 = vmatprep.mubr.bf16.mxu0 %v790
        %894 = vmatmul.mubr.bf16.gmra.mrb[0].mxu0 %v789
        %v895 = vpop.f32.mrb[0].mxu0
        %v896 = vadd.f32 0.0, %v895
        %v897 = vpop.f32.mrb[0].mxu0
        %v898 = vpop.f32.mrb[0].mxu0
        %v899 = vadd.f32 0.0, %v898
        %v900 = vpop.f32.mrb[0].mxu0
        %901 = vmatprep.mubr.bf16.mxu0 %v794
        %902 = vmatmul.mubr.bf16.gmra.mrb[0].mxu0 %v793
        %v903 = vpop.f32.mrb[0].mxu0
        %v904 = vadd.f32 0.0, %v903
        %v905 = vpop.f32.mrb[0].mxu0
        %v906 = vpop.f32.mrb[0].mxu0
        %v907 = vadd.f32 0.0, %v906
        %v908 = vpop.f32.mrb[0].mxu0
        %909 = vmatprep.mubr.bf16.mxu0 %v798
        %910 = vmatmul.mubr.bf16.gmra.mrb[0].mxu0 %v797
        %v911 = vpop.f32.mrb[0].mxu0
        %v912 = vadd.f32 0.0, %v911
        %v913 = vpop.f32.mrb[0].mxu0
        %v914 = vpop.f32.mrb[0].mxu0
        %v915 = vadd.f32 0.0, %v914
        %v916 = vpop.f32.mrb[0].mxu0
        %917 = vmatprep.mubr.bf16.mxu0 %v802
        %918 = vmatmul.mubr.bf16.gmra.mrb[0].mxu0 %v801
        %v919 = vpop.f32.mrb[0].mxu0
        %v920 = vadd.f32 0.0, %v919
        %v921 = vpop.f32.mrb[0].mxu0
        %v922 = vpop.f32.mrb[0].mxu0
        %v923 = vadd.f32 0.0, %v922
        %v924 = vpop.f32.mrb[0].mxu0
        %925 = vmatprep.mubr.bf16.mxu0 %v806
        %926 = vmatmul.mubr.bf16.gmra.mrb[0].mxu0 %v805
        %v927 = vpop.f32.mrb[0].mxu0
        %v928 = vadd.f32 0.0, %v927
        %v929 = vpop.f32.mrb[0].mxu0
        %v930 = vpop.f32.mrb[0].mxu0
        %v931 = vadd.f32 0.0, %v930
        %v932 = vpop.f32.mrb[0].mxu0
        %933 = vmatprep.mubr.bf16.mxu0 %v810
        %934 = vmatmul.mubr.bf16.gmra.mrb[0].mxu0 %v809
        %v935 = vpop.f32.mrb[0].mxu0
        %v936 = vadd.f32 0.0, %v935
        %v937 = vpop.f32.mrb[0].mxu0
        %v938 = vpop.f32.mrb[0].mxu0
        %v939 = vadd.f32 0.0, %v938
        %v940 = vpop.f32.mrb[0].mxu0
        %941 = vdwg.mxu0
        %942 = vmatprep.subr.bf16.mxu0 0
        %943 = vmatpush1.bf16.msra.mxu0 %v637
        %944 = vmatprep.subr.bf16.mxu0 0
        %945 = vmatpush1.bf16.msra.mxu0 %v638
        %946 = vmatprep.subr.bf16.mxu0 0
        %947 = vmatpush1.bf16.msra.mxu0 %v639
        %948 = vmatprep.subr.bf16.mxu0 0
        %949 = vmatpush1.bf16.msra.mxu0 %v640
        %950 = vmatprep.subr.bf16.mxu0 0
        %951 = vmatpush1.bf16.msra.mxu0 %v641
        %952 = vmatprep.subr.bf16.mxu0 0
        %953 = vmatpush1.bf16.msra.mxu0 %v642
        %954 = vmatprep.subr.bf16.mxu0 0
        %955 = vmatpush1.bf16.msra.mxu0 %v643
        %956 = vmatprep.subr.bf16.mxu0 0
        %957 = vmatpush1.bf16.msra.mxu0 %v644
        %958 = vmatprep.subr.bf16.mxu0 0
        %959 = vmatpush1.bf16.msra.mxu0 %v645
        %960 = vmatprep.subr.bf16.mxu0 0
        %961 = vmatpush1.bf16.msra.mxu0 %v646
        %962 = vmatprep.subr.bf16.mxu0 0
        %963 = vmatpush1.bf16.msra.mxu0 %v647
        %964 = vmatprep.subr.bf16.mxu0 0
        %965 = vmatpush1.bf16.msra.mxu0 %v648
        %966 = vmatprep.subr.bf16.mxu0 0
        %967 = vmatpush1.bf16.msra.mxu0 %v649
        %968 = vmatprep.subr.bf16.mxu0 0
        %969 = vmatpush1.bf16.msra.mxu0 %v650
        %970 = vmatprep.subr.bf16.mxu0 0
        %971 = vmatpush1.bf16.msra.mxu0 %v651
        %972 = vmatprep.subr.bf16.mxu0 0
        %973 = vmatpush1.bf16.msra.mxu0 %v652
        %974 = vmatprep.mubr.bf16.mxu0 %v784
        %975 = vmatmul.mubr.bf16.gmra.mrb[0].mxu0 %v783
        %v976 = vpop.f32.mrb[0].mxu0
        %v977 = vadd.f32 %v880, %v976
        %v978 = vpop.f32.mrb[0].mxu0
        %v979 = vpop.f32.mrb[0].mxu0
        %v980 = vadd.f32 %v883, %v979
        %v981 = vpop.f32.mrb[0].mxu0
        %982 = vmatprep.mubr.bf16.mxu0 %v788
        %983 = vmatmul.mubr.bf16.gmra.mrb[0].mxu0 %v787
        %v984 = vpop.f32.mrb[0].mxu0
        %v985 = vadd.f32 %v888, %v984
        %v986 = vpop.f32.mrb[0].mxu0
        %v987 = vpop.f32.mrb[0].mxu0
        %v988 = vadd.f32 %v891, %v987
        %v989 = vpop.f32.mrb[0].mxu0
        %990 = vmatprep.mubr.bf16.mxu0 %v792
        %991 = vmatmul.mubr.bf16.gmra.mrb[0].mxu0 %v791
        %v992 = vpop.f32.mrb[0].mxu0
        %v993 = vadd.f32 %v896, %v992
        %v994 = vpop.f32.mrb[0].mxu0
        %v995 = vpop.f32.mrb[0].mxu0
        %v996 = vadd.f32 %v899, %v995
        %v997 = vpop.f32.mrb[0].mxu0
        %998 = vmatprep.mubr.bf16.mxu0 %v796
        %999 = vmatmul.mubr.bf16.gmra.mrb[0].mxu0 %v795
        %v1000 = vpop.f32.mrb[0].mxu0
        %v1001 = vadd.f32 %v904, %v1000
        %v1002 = vpop.f32.mrb[0].mxu0
        %v1003 = vpop.f32.mrb[0].mxu0
        %v1004 = vadd.f32 %v907, %v1003
        %v1005 = vpop.f32.mrb[0].mxu0
        %1006 = vmatprep.mubr.bf16.mxu0 %v800
        %1007 = vmatmul.mubr.bf16.gmra.mrb[0].mxu0 %v799
        %v1008 = vpop.f32.mrb[0].mxu0
        %v1009 = vadd.f32 %v912, %v1008
        %v1010 = vpop.f32.mrb[0].mxu0
        %v1011 = vpop.f32.mrb[0].mxu0
        %v1012 = vadd.f32 %v915, %v1011
        %v1013 = vpop.f32.mrb[0].mxu0
        %1014 = vmatprep.mubr.bf16.mxu0 %v804
        %1015 = vmatmul.mubr.bf16.gmra.mrb[0].mxu0 %v803
        %v1016 = vpop.f32.mrb[0].mxu0
        %v1017 = vadd.f32 %v920, %v1016
        %v1018 = vpop.f32.mrb[0].mxu0
        %v1019 = vpop.f32.mrb[0].mxu0
        %v1020 = vadd.f32 %v923, %v1019
        %v1021 = vpop.f32.mrb[0].mxu0
        %1022 = vmatprep.mubr.bf16.mxu0 %v808
        %1023 = vmatmul.mubr.bf16.gmra.mrb[0].mxu0 %v807
        %v1024 = vpop.f32.mrb[0].mxu0
        %v1025 = vadd.f32 %v928, %v1024
        %v1026 = vpop.f32.mrb[0].mxu0
        %v1027 = vpop.f32.mrb[0].mxu0
        %v1028 = vadd.f32 %v931, %v1027
        %v1029 = vpop.f32.mrb[0].mxu0
        %1030 = vmatprep.mubr.bf16.mxu0 %v812
        %1031 = vmatmul.mubr.bf16.gmra.mrb[0].mxu0 %v811
        %v1032 = vpop.f32.mrb[0].mxu0
        %v1033 = vadd.f32 %v936, %v1032
        %v1034 = vpop.f32.mrb[0].mxu0
        %v1035 = vpop.f32.mrb[0].mxu0
        %v1036 = vadd.f32 %v939, %v1035
        %v1037 = vpop.f32.mrb[0].mxu0
        %1038 = vdwg.mxu0
        %v1039 = vld [vmem:[%s1 + $0x100] sm:$0xff]
        %v1040 = vld [vmem:[%s1 + $0x108] sm:$0xff]
        %v1041 = vld [vmem:[%s1 + $0x110] sm:$0xff]
        %v1042 = vld [vmem:[%s1 + $0x118] sm:$0xff]
        %v1043 = vld [vmem:[%s1 + $0x120] sm:$0xff]
        %v1044 = vld [vmem:[%s1 + $0x128] sm:$0xff]
        %v1045 = vld [vmem:[%s1 + $0x130] sm:$0xff]
        %v1046 = vld [vmem:[%s1 + $0x138] sm:$0xff]
        %v1047 = vld [vmem:[%s1 + $0x140] sm:$0xff]
        %v1048 = vld [vmem:[%s1 + $0x148] sm:$0xff]
        %v1049 = vld [vmem:[%s1 + $0x150] sm:$0xff]
        %v1050 = vld [vmem:[%s1 + $0x158] sm:$0xff]
        %v1051 = vld [vmem:[%s1 + $0x160] sm:$0xff]
        %v1052 = vld [vmem:[%s1 + $0x168] sm:$0xff]
        %v1053 = vld [vmem:[%s1 + $0x170] sm:$0xff]
        %v1054 = vld [vmem:[%s1 + $0x178] sm:$0xff]
        %v1055 = vld [vmem:[%s1 + $0x180] sm:$0xff]
        %v1056 = vld [vmem:[%s1 + $0x188] sm:$0xff]
        %v1057 = vld [vmem:[%s1 + $0x190] sm:$0xff]
        %v1058 = vld [vmem:[%s1 + $0x198] sm:$0xff]
        %v1059 = vld [vmem:[%s1 + $0x1a0] sm:$0xff]
        %v1060 = vld [vmem:[%s1 + $0x1a8] sm:$0xff]
        %v1061 = vld [vmem:[%s1 + $0x1b0] sm:$0xff]
        %v1062 = vld [vmem:[%s1 + $0x1b8] sm:$0xff]
        %v1063 = vld [vmem:[%s1 + $0x1c0] sm:$0xff]
        %v1064 = vld [vmem:[%s1 + $0x1c8] sm:$0xff]
        %v1065 = vld [vmem:[%s1 + $0x1d0] sm:$0xff]
        %v1066 = vld [vmem:[%s1 + $0x1d8] sm:$0xff]
        %v1067 = vld [vmem:[%s1 + $0x1e0] sm:$0xff]
        %v1068 = vld [vmem:[%s1 + $0x1e8] sm:$0xff]
        %v1069 = vld [vmem:[%s1 + $0x1f0] sm:$0xff]
        %v1070 = vld [vmem:[%s1 + $0x1f8] sm:$0xff]
        %v1103 = vunpack.c.l.b16 %v1039
        %v1104 = vunpack.c.h.b16 %v1039
        %v1105 = vunpack.c.l.b16 %v1040
        %v1106 = vunpack.c.h.b16 %v1040
        %v1107 = vunpack.c.l.b16 %v1041
        %v1108 = vunpack.c.h.b16 %v1041
        %v1109 = vunpack.c.l.b16 %v1042
        %v1110 = vunpack.c.h.b16 %v1042
        %v1111 = vunpack.c.l.b16 %v1043
        %v1112 = vunpack.c.h.b16 %v1043
        %v1113 = vunpack.c.l.b16 %v1044
        %v1114 = vunpack.c.h.b16 %v1044
        %v1115 = vunpack.c.l.b16 %v1045
        %v1116 = vunpack.c.h.b16 %v1045
        %v1117 = vunpack.c.l.b16 %v1046
        %v1118 = vunpack.c.h.b16 %v1046
        %v1119 = vunpack.c.l.b16 %v1047
        %v1120 = vunpack.c.h.b16 %v1047
        %v1121 = vunpack.c.l.b16 %v1048
        %v1122 = vunpack.c.h.b16 %v1048
        %v1123 = vunpack.c.l.b16 %v1049
        %v1124 = vunpack.c.h.b16 %v1049
        %v1125 = vunpack.c.l.b16 %v1050
        %v1126 = vunpack.c.h.b16 %v1050
        %v1127 = vunpack.c.l.b16 %v1051
        %v1128 = vunpack.c.h.b16 %v1051
        %v1129 = vunpack.c.l.b16 %v1052
        %v1130 = vunpack.c.h.b16 %v1052
        %v1131 = vunpack.c.l.b16 %v1053
        %v1132 = vunpack.c.h.b16 %v1053
        %v1133 = vunpack.c.l.b16 %v1054
        %v1134 = vunpack.c.h.b16 %v1054
        %v1135 = vunpack.c.l.b16 %v1055
        %v1136 = vunpack.c.h.b16 %v1055
        %v1137 = vunpack.c.l.b16 %v1056
        %v1138 = vunpack.c.h.b16 %v1056
        %v1139 = vunpack.c.l.b16 %v1057
        %v1140 = vunpack.c.h.b16 %v1057
        %v1141 = vunpack.c.l.b16 %v1058
        %v1142 = vunpack.c.h.b16 %v1058
        %v1143 = vunpack.c.l.b16 %v1059
        %v1144 = vunpack.c.h.b16 %v1059
        %v1145 = vunpack.c.l.b16 %v1060
        %v1146 = vunpack.c.h.b16 %v1060
        %v1147 = vunpack.c.l.b16 %v1061
        %v1148 = vunpack.c.h.b16 %v1061
        %v1149 = vunpack.c.l.b16 %v1062
        %v1150 = vunpack.c.h.b16 %v1062
        %v1151 = vunpack.c.l.b16 %v1063
        %v1152 = vunpack.c.h.b16 %v1063
        %v1153 = vunpack.c.l.b16 %v1064
        %v1154 = vunpack.c.h.b16 %v1064
        %v1155 = vunpack.c.l.b16 %v1065
        %v1156 = vunpack.c.h.b16 %v1065
        %v1157 = vunpack.c.l.b16 %v1066
        %v1158 = vunpack.c.h.b16 %v1066
        %v1159 = vunpack.c.l.b16 %v1067
        %v1160 = vunpack.c.h.b16 %v1067
        %v1161 = vunpack.c.l.b16 %v1068
        %v1162 = vunpack.c.h.b16 %v1068
        %v1163 = vunpack.c.l.b16 %v1069
        %v1164 = vunpack.c.h.b16 %v1069
        %v1165 = vunpack.c.l.b16 %v1070
        %v1166 = vunpack.c.h.b16 %v1070
        %v1167 = vpack.c.b16 %v1107, %v1103
        %v1168 = vpack.c.b16 %v1108, %v1104
        %v1169 = vpack.c.b16 %v1109, %v1105
        %v1170 = vpack.c.b16 %v1110, %v1106
        %v1171 = vpack.c.b16 %v1115, %v1111
        %v1172 = vpack.c.b16 %v1116, %v1112
        %v1173 = vpack.c.b16 %v1117, %v1113
        %v1174 = vpack.c.b16 %v1118, %v1114
        %v1175 = vpack.c.b16 %v1123, %v1119
        %v1176 = vpack.c.b16 %v1124, %v1120
        %v1177 = vpack.c.b16 %v1125, %v1121
        %v1178 = vpack.c.b16 %v1126, %v1122
        %v1179 = vpack.c.b16 %v1131, %v1127
        %v1180 = vpack.c.b16 %v1132, %v1128
        %v1181 = vpack.c.b16 %v1133, %v1129
        %v1182 = vpack.c.b16 %v1134, %v1130
        %v1183 = vpack.c.b16 %v1139, %v1135
        %v1184 = vpack.c.b16 %v1140, %v1136
        %v1185 = vpack.c.b16 %v1141, %v1137
        %v1186 = vpack.c.b16 %v1142, %v1138
        %v1187 = vpack.c.b16 %v1147, %v1143
        %v1188 = vpack.c.b16 %v1148, %v1144
        %v1189 = vpack.c.b16 %v1149, %v1145
        %v1190 = vpack.c.b16 %v1150, %v1146
        %v1191 = vpack.c.b16 %v1155, %v1151
        %v1192 = vpack.c.b16 %v1156, %v1152
        %v1193 = vpack.c.b16 %v1157, %v1153
        %v1194 = vpack.c.b16 %v1158, %v1154
        %v1195 = vpack.c.b16 %v1163, %v1159
        %v1196 = vpack.c.b16 %v1164, %v1160
        %v1197 = vpack.c.b16 %v1165, %v1161
        %v1198 = vpack.c.b16 %v1166, %v1162
        %1231 = vmatprep.subr.bf16.mxu0 0
        %1232 = vmatpush1.bf16.msra.mxu0 %v621
        %1233 = vmatprep.subr.bf16.mxu0 0
        %1234 = vmatpush1.bf16.msra.mxu0 %v622
        %1235 = vmatprep.subr.bf16.mxu0 0
        %1236 = vmatpush1.bf16.msra.mxu0 %v623
        %1237 = vmatprep.subr.bf16.mxu0 0
        %1238 = vmatpush1.bf16.msra.mxu0 %v624
        %1239 = vmatprep.subr.bf16.mxu0 0
        %1240 = vmatpush1.bf16.msra.mxu0 %v625
        %1241 = vmatprep.subr.bf16.mxu0 0
        %1242 = vmatpush1.bf16.msra.mxu0 %v626
        %1243 = vmatprep.subr.bf16.mxu0 0
        %1244 = vmatpush1.bf16.msra.mxu0 %v627
        %1245 = vmatprep.subr.bf16.mxu0 0
        %1246 = vmatpush1.bf16.msra.mxu0 %v628
        %1247 = vmatprep.subr.bf16.mxu0 0
        %1248 = vmatpush1.bf16.msra.mxu0 %v629
        %1249 = vmatprep.subr.bf16.mxu0 0
        %1250 = vmatpush1.bf16.msra.mxu0 %v630
        %1251 = vmatprep.subr.bf16.mxu0 0
        %1252 = vmatpush1.bf16.msra.mxu0 %v631
        %1253 = vmatprep.subr.bf16.mxu0 0
        %1254 = vmatpush1.bf16.msra.mxu0 %v632
        %1255 = vmatprep.subr.bf16.mxu0 0
        %1256 = vmatpush1.bf16.msra.mxu0 %v633
        %1257 = vmatprep.subr.bf16.mxu0 0
        %1258 = vmatpush1.bf16.msra.mxu0 %v634
        %1259 = vmatprep.subr.bf16.mxu0 0
        %1260 = vmatpush1.bf16.msra.mxu0 %v635
        %1261 = vmatprep.subr.bf16.mxu0 0
        %1262 = vmatpush1.bf16.msra.mxu0 %v636
        %1263 = vmatprep.mubr.bf16.mxu0 %v1168
        %1264 = vmatmul.mubr.bf16.gmra.mrb[0].mxu0 %v1167
        %v1265 = vpop.f32.mrb[0].mxu0
        %v1266 = vadd.f32 0.0, %v1265
        %v1267 = vpop.f32.mrb[0].mxu0
        %v1268 = vpop.f32.mrb[0].mxu0
        %v1269 = vadd.f32 0.0, %v1268
        %v1270 = vpop.f32.mrb[0].mxu0
        %1271 = vmatprep.mubr.bf16.mxu0 %v1172
        %1272 = vmatmul.mubr.bf16.gmra.mrb[0].mxu0 %v1171
        %v1273 = vpop.f32.mrb[0].mxu0
        %v1274 = vadd.f32 0.0, %v1273
        %v1275 = vpop.f32.mrb[0].mxu0
        %v1276 = vpop.f32.mrb[0].mxu0
        %v1277 = vadd.f32 0.0, %v1276
        %v1278 = vpop.f32.mrb[0].mxu0
        %1279 = vmatprep.mubr.bf16.mxu0 %v1176
        %1280 = vmatmul.mubr.bf16.gmra.mrb[0].mxu0 %v1175
        %v1281 = vpop.f32.mrb[0].mxu0
        %v1282 = vadd.f32 0.0, %v1281
        %v1283 = vpop.f32.mrb[0].mxu0
        %v1284 = vpop.f32.mrb[0].mxu0
        %v1285 = vadd.f32 0.0, %v1284
        %v1286 = vpop.f32.mrb[0].mxu0
        %1287 = vmatprep.mubr.bf16.mxu0 %v1180
        %1288 = vmatmul.mubr.bf16.gmra.mrb[0].mxu0 %v1179
        %v1289 = vpop.f32.mrb[0].mxu0
        %v1290 = vadd.f32 0.0, %v1289
        %v1291 = vpop.f32.mrb[0].mxu0
        %v1292 = vpop.f32.mrb[0].mxu0
        %v1293 = vadd.f32 0.0, %v1292
        %v1294 = vpop.f32.mrb[0].mxu0
        %1295 = vmatprep.mubr.bf16.mxu0 %v1184
        %1296 = vmatmul.mubr.bf16.gmra.mrb[0].mxu0 %v1183
        %v1297 = vpop.f32.mrb[0].mxu0
        %v1298 = vadd.f32 0.0, %v1297
        %v1299 = vpop.f32.mrb[0].mxu0
        %v1300 = vpop.f32.mrb[0].mxu0
        %v1301 = vadd.f32 0.0, %v1300
        %v1302 = vpop.f32.mrb[0].mxu0
        %1303 = vmatprep.mubr.bf16.mxu0 %v1188
        %1304 = vmatmul.mubr.bf16.gmra.mrb[0].mxu0 %v1187
        %v1305 = vpop.f32.mrb[0].mxu0
        %v1306 = vadd.f32 0.0, %v1305
        %v1307 = vpop.f32.mrb[0].mxu0
        %v1308 = vpop.f32.mrb[0].mxu0
        %v1309 = vadd.f32 0.0, %v1308
        %v1310 = vpop.f32.mrb[0].mxu0
        %1311 = vmatprep.mubr.bf16.mxu0 %v1192
        %1312 = vmatmul.mubr.bf16.gmra.mrb[0].mxu0 %v1191
        %v1313 = vpop.f32.mrb[0].mxu0
        %v1314 = vadd.f32 0.0, %v1313
        %v1315 = vpop.f32.mrb[0].mxu0
        %v1316 = vpop.f32.mrb[0].mxu0
        %v1317 = vadd.f32 0.0, %v1316
        %v1318 = vpop.f32.mrb[0].mxu0
        %1319 = vmatprep.mubr.bf16.mxu0 %v1196
        %1320 = vmatmul.mubr.bf16.gmra.mrb[0].mxu0 %v1195
        %v1321 = vpop.f32.mrb[0].mxu0
        %v1322 = vadd.f32 0.0, %v1321
        %v1323 = vpop.f32.mrb[0].mxu0
        %v1324 = vpop.f32.mrb[0].mxu0
        %v1325 = vadd.f32 0.0, %v1324
        %v1326 = vpop.f32.mrb[0].mxu0
        %1327 = vdwg.mxu0
        %1328 = vmatprep.subr.bf16.mxu0 0
        %1329 = vmatpush1.bf16.msra.mxu0 %v637
        %1330 = vmatprep.subr.bf16.mxu0 0
        %1331 = vmatpush1.bf16.msra.mxu0 %v638
        %1332 = vmatprep.subr.bf16.mxu0 0
        %1333 = vmatpush1.bf16.msra.mxu0 %v639
        %1334 = vmatprep.subr.bf16.mxu0 0
        %1335 = vmatpush1.bf16.msra.mxu0 %v640
        %1336 = vmatprep.subr.bf16.mxu0 0
        %1337 = vmatpush1.bf16.msra.mxu0 %v641
        %1338 = vmatprep.subr.bf16.mxu0 0
        %1339 = vmatpush1.bf16.msra.mxu0 %v642
        %1340 = vmatprep.subr.bf16.mxu0 0
        %1341 = vmatpush1.bf16.msra.mxu0 %v643
        %1342 = vmatprep.subr.bf16.mxu0 0
        %1343 = vmatpush1.bf16.msra.mxu0 %v644
        %1344 = vmatprep.subr.bf16.mxu0 0
        %1345 = vmatpush1.bf16.msra.mxu0 %v645
        %1346 = vmatprep.subr.bf16.mxu0 0
        %1347 = vmatpush1.bf16.msra.mxu0 %v646
        %1348 = vmatprep.subr.bf16.mxu0 0
        %1349 = vmatpush1.bf16.msra.mxu0 %v647
        %1350 = vmatprep.subr.bf16.mxu0 0
        %1351 = vmatpush1.bf16.msra.mxu0 %v648
        %1352 = vmatprep.subr.bf16.mxu0 0
        %1353 = vmatpush1.bf16.msra.mxu0 %v649
        %1354 = vmatprep.subr.bf16.mxu0 0
        %1355 = vmatpush1.bf16.msra.mxu0 %v650
        %1356 = vmatprep.subr.bf16.mxu0 0
        %1357 = vmatpush1.bf16.msra.mxu0 %v651
        %1358 = vmatprep.subr.bf16.mxu0 0
        %1359 = vmatpush1.bf16.msra.mxu0 %v652
        %1360 = vmatprep.mubr.bf16.mxu0 %v1170
        %1361 = vmatmul.mubr.bf16.gmra.mrb[0].mxu0 %v1169
        %v1362 = vpop.f32.mrb[0].mxu0
        %v1363 = vadd.f32 %v1266, %v1362
        %v1364 = vpop.f32.mrb[0].mxu0
        %v1365 = vpop.f32.mrb[0].mxu0
        %v1366 = vadd.f32 %v1269, %v1365
        %v1367 = vpop.f32.mrb[0].mxu0
        %1368 = vmatprep.mubr.bf16.mxu0 %v1174
        %1369 = vmatmul.mubr.bf16.gmra.mrb[0].mxu0 %v1173
        %v1370 = vpop.f32.mrb[0].mxu0
        %v1371 = vadd.f32 %v1274, %v1370
        %v1372 = vpop.f32.mrb[0].mxu0
        %v1373 = vpop.f32.mrb[0].mxu0
        %v1374 = vadd.f32 %v1277, %v1373
        %v1375 = vpop.f32.mrb[0].mxu0
        %1376 = vmatprep.mubr.bf16.mxu0 %v1178
        %1377 = vmatmul.mubr.bf16.gmra.mrb[0].mxu0 %v1177
        %v1378 = vpop.f32.mrb[0].mxu0
        %v1379 = vadd.f32 %v1282, %v1378
        %v1380 = vpop.f32.mrb[0].mxu0
        %v1381 = vpop.f32.mrb[0].mxu0
        %v1382 = vadd.f32 %v1285, %v1381
        %v1383 = vpop.f32.mrb[0].mxu0
        %1384 = vmatprep.mubr.bf16.mxu0 %v1182
        %1385 = vmatmul.mubr.bf16.gmra.mrb[0].mxu0 %v1181
        %v1386 = vpop.f32.mrb[0].mxu0
        %v1387 = vadd.f32 %v1290, %v1386
        %v1388 = vpop.f32.mrb[0].mxu0
        %v1389 = vpop.f32.mrb[0].mxu0
        %v1390 = vadd.f32 %v1293, %v1389
        %v1391 = vpop.f32.mrb[0].mxu0
        %1392 = vmatprep.mubr.bf16.mxu0 %v1186
        %1393 = vmatmul.mubr.bf16.gmra.mrb[0].mxu0 %v1185
        %v1394 = vpop.f32.mrb[0].mxu0
        %v1395 = vadd.f32 %v1298, %v1394
        %v1396 = vpop.f32.mrb[0].mxu0
        %v1397 = vpop.f32.mrb[0].mxu0
        %v1398 = vadd.f32 %v1301, %v1397
        %v1399 = vpop.f32.mrb[0].mxu0
        %1400 = vmatprep.mubr.bf16.mxu0 %v1190
        %1401 = vmatmul.mubr.bf16.gmra.mrb[0].mxu0 %v1189
        %v1402 = vpop.f32.mrb[0].mxu0
        %v1403 = vadd.f32 %v1306, %v1402
        %v1404 = vpop.f32.mrb[0].mxu0
        %v1405 = vpop.f32.mrb[0].mxu0
        %v1406 = vadd.f32 %v1309, %v1405
        %v1407 = vpop.f32.mrb[0].mxu0
        %1408 = vmatprep.mubr.bf16.mxu0 %v1194
        %1409 = vmatmul.mubr.bf16.gmra.mrb[0].mxu0 %v1193
        %v1410 = vpop.f32.mrb[0].mxu0
        %v1411 = vadd.f32 %v1314, %v1410
        %v1412 = vpop.f32.mrb[0].mxu0
        %v1413 = vpop.f32.mrb[0].mxu0
        %v1414 = vadd.f32 %v1317, %v1413
        %v1415 = vpop.f32.mrb[0].mxu0
        %1416 = vmatprep.mubr.bf16.mxu0 %v1198
        %1417 = vmatmul.mubr.bf16.gmra.mrb[0].mxu0 %v1197
        %v1418 = vpop.f32.mrb[0].mxu0
        %v1419 = vadd.f32 %v1322, %v1418
        %v1420 = vpop.f32.mrb[0].mxu0
        %v1421 = vpop.f32.mrb[0].mxu0
        %v1422 = vadd.f32 %v1325, %v1421
        %v1423 = vpop.f32.mrb[0].mxu0
        %1424 = vdwg.mxu0
        %v1425 = vld [vmem:[%s1 + $0x200] sm:$0xff]
        %v1426 = vld [vmem:[%s1 + $0x208] sm:$0xff]
        %v1427 = vld [vmem:[%s1 + $0x210] sm:$0xff]
        %v1428 = vld [vmem:[%s1 + $0x218] sm:$0xff]
        %v1429 = vld [vmem:[%s1 + $0x220] sm:$0xff]
        %v1430 = vld [vmem:[%s1 + $0x228] sm:$0xff]
        %v1431 = vld [vmem:[%s1 + $0x230] sm:$0xff]
        %v1432 = vld [vmem:[%s1 + $0x238] sm:$0xff]
        %v1433 = vld [vmem:[%s1 + $0x240] sm:$0xff]
        %v1434 = vld [vmem:[%s1 + $0x248] sm:$0xff]
        %v1435 = vld [vmem:[%s1 + $0x250] sm:$0xff]
        %v1436 = vld [vmem:[%s1 + $0x258] sm:$0xff]
        %v1437 = vld [vmem:[%s1 + $0x260] sm:$0xff]
        %v1438 = vld [vmem:[%s1 + $0x268] sm:$0xff]
        %v1439 = vld [vmem:[%s1 + $0x270] sm:$0xff]
        %v1440 = vld [vmem:[%s1 + $0x278] sm:$0xff]
        %v1441 = vld [vmem:[%s1 + $0x280] sm:$0xff]
        %v1442 = vld [vmem:[%s1 + $0x288] sm:$0xff]
        %v1443 = vld [vmem:[%s1 + $0x290] sm:$0xff]
        %v1444 = vld [vmem:[%s1 + $0x298] sm:$0xff]
        %v1445 = vld [vmem:[%s1 + $0x2a0] sm:$0xff]
        %v1446 = vld [vmem:[%s1 + $0x2a8] sm:$0xff]
        %v1447 = vld [vmem:[%s1 + $0x2b0] sm:$0xff]
        %v1448 = vld [vmem:[%s1 + $0x2b8] sm:$0xff]
        %v1449 = vld [vmem:[%s1 + $0x2c0] sm:$0xff]
        %v1450 = vld [vmem:[%s1 + $0x2c8] sm:$0xff]
        %v1451 = vld [vmem:[%s1 + $0x2d0] sm:$0xff]
        %v1452 = vld [vmem:[%s1 + $0x2d8] sm:$0xff]
        %v1453 = vld [vmem:[%s1 + $0x2e0] sm:$0xff]
        %v1454 = vld [vmem:[%s1 + $0x2e8] sm:$0xff]
        %v1455 = vld [vmem:[%s1 + $0x2f0] sm:$0xff]
        %v1456 = vld [vmem:[%s1 + $0x2f8] sm:$0xff]
        %v1489 = vunpack.c.l.b16 %v1425
        %v1490 = vunpack.c.h.b16 %v1425
        %v1491 = vunpack.c.l.b16 %v1426
        %v1492 = vunpack.c.h.b16 %v1426
        %v1493 = vunpack.c.l.b16 %v1427
        %v1494 = vunpack.c.h.b16 %v1427
        %v1495 = vunpack.c.l.b16 %v1428
        %v1496 = vunpack.c.h.b16 %v1428
        %v1497 = vunpack.c.l.b16 %v1429
        %v1498 = vunpack.c.h.b16 %v1429
        %v1499 = vunpack.c.l.b16 %v1430
        %v1500 = vunpack.c.h.b16 %v1430
        %v1501 = vunpack.c.l.b16 %v1431
        %v1502 = vunpack.c.h.b16 %v1431
        %v1503 = vunpack.c.l.b16 %v1432
        %v1504 = vunpack.c.h.b16 %v1432
        %v1505 = vunpack.c.l.b16 %v1433
        %v1506 = vunpack.c.h.b16 %v1433
        %v1507 = vunpack.c.l.b16 %v1434
        %v1508 = vunpack.c.h.b16 %v1434
        %v1509 = vunpack.c.l.b16 %v1435
        %v1510 = vunpack.c.h.b16 %v1435
        %v1511 = vunpack.c.l.b16 %v1436
        %v1512 = vunpack.c.h.b16 %v1436
        %v1513 = vunpack.c.l.b16 %v1437
        %v1514 = vunpack.c.h.b16 %v1437
        %v1515 = vunpack.c.l.b16 %v1438
        %v1516 = vunpack.c.h.b16 %v1438
        %v1517 = vunpack.c.l.b16 %v1439
        %v1518 = vunpack.c.h.b16 %v1439
        %v1519 = vunpack.c.l.b16 %v1440
        %v1520 = vunpack.c.h.b16 %v1440
        %v1521 = vunpack.c.l.b16 %v1441
        %v1522 = vunpack.c.h.b16 %v1441
        %v1523 = vunpack.c.l.b16 %v1442
        %v1524 = vunpack.c.h.b16 %v1442
        %v1525 = vunpack.c.l.b16 %v1443
        %v1526 = vunpack.c.h.b16 %v1443
        %v1527 = vunpack.c.l.b16 %v1444
        %v1528 = vunpack.c.h.b16 %v1444
        %v1529 = vunpack.c.l.b16 %v1445
        %v1530 = vunpack.c.h.b16 %v1445
        %v1531 = vunpack.c.l.b16 %v1446
        %v1532 = vunpack.c.h.b16 %v1446
        %v1533 = vunpack.c.l.b16 %v1447
        %v1534 = vunpack.c.h.b16 %v1447
        %v1535 = vunpack.c.l.b16 %v1448
        %v1536 = vunpack.c.h.b16 %v1448
        %v1537 = vunpack.c.l.b16 %v1449
        %v1538 = vunpack.c.h.b16 %v1449
        %v1539 = vunpack.c.l.b16 %v1450
        %v1540 = vunpack.c.h.b16 %v1450
        %v1541 = vunpack.c.l.b16 %v1451
        %v1542 = vunpack.c.h.b16 %v1451
        %v1543 = vunpack.c.l.b16 %v1452
        %v1544 = vunpack.c.h.b16 %v1452
        %v1545 = vunpack.c.l.b16 %v1453
        %v1546 = vunpack.c.h.b16 %v1453
        %v1547 = vunpack.c.l.b16 %v1454
        %v1548 = vunpack.c.h.b16 %v1454
        %v1549 = vunpack.c.l.b16 %v1455
        %v1550 = vunpack.c.h.b16 %v1455
        %v1551 = vunpack.c.l.b16 %v1456
        %v1552 = vunpack.c.h.b16 %v1456
        %v1553 = vpack.c.b16 %v1493, %v1489
        %v1554 = vpack.c.b16 %v1494, %v1490
        %v1555 = vpack.c.b16 %v1495, %v1491
        %v1556 = vpack.c.b16 %v1496, %v1492
        %v1557 = vpack.c.b16 %v1501, %v1497
        %v1558 = vpack.c.b16 %v1502, %v1498
        %v1559 = vpack.c.b16 %v1503, %v1499
        %v1560 = vpack.c.b16 %v1504, %v1500
        %v1561 = vpack.c.b16 %v1509, %v1505
        %v1562 = vpack.c.b16 %v1510, %v1506
        %v1563 = vpack.c.b16 %v1511, %v1507
        %v1564 = vpack.c.b16 %v1512, %v1508
        %v1565 = vpack.c.b16 %v1517, %v1513
        %v1566 = vpack.c.b16 %v1518, %v1514
        %v1567 = vpack.c.b16 %v1519, %v1515
        %v1568 = vpack.c.b16 %v1520, %v1516
        %v1569 = vpack.c.b16 %v1525, %v1521
        %v1570 = vpack.c.b16 %v1526, %v1522
        %v1571 = vpack.c.b16 %v1527, %v1523
        %v1572 = vpack.c.b16 %v1528, %v1524
        %v1573 = vpack.c.b16 %v1533, %v1529
        %v1574 = vpack.c.b16 %v1534, %v1530
        %v1575 = vpack.c.b16 %v1535, %v1531
        %v1576 = vpack.c.b16 %v1536, %v1532
        %v1577 = vpack.c.b16 %v1541, %v1537
        %v1578 = vpack.c.b16 %v1542, %v1538
        %v1579 = vpack.c.b16 %v1543, %v1539
        %v1580 = vpack.c.b16 %v1544, %v1540
        %v1581 = vpack.c.b16 %v1549, %v1545
        %v1582 = vpack.c.b16 %v1550, %v1546
        %v1583 = vpack.c.b16 %v1551, %v1547
        %v1584 = vpack.c.b16 %v1552, %v1548
        %1617 = vmatprep.subr.bf16.mxu0 0
        %1618 = vmatpush1.bf16.msra.mxu0 %v621
        %1619 = vmatprep.subr.bf16.mxu0 0
        %1620 = vmatpush1.bf16.msra.mxu0 %v622
        %1621 = vmatprep.subr.bf16.mxu0 0
        %1622 = vmatpush1.bf16.msra.mxu0 %v623
        %1623 = vmatprep.subr.bf16.mxu0 0
        %1624 = vmatpush1.bf16.msra.mxu0 %v624
        %1625 = vmatprep.subr.bf16.mxu0 0
        %1626 = vmatpush1.bf16.msra.mxu0 %v625
        %1627 = vmatprep.subr.bf16.mxu0 0
        %1628 = vmatpush1.bf16.msra.mxu0 %v626
        %1629 = vmatprep.subr.bf16.mxu0 0
        %1630 = vmatpush1.bf16.msra.mxu0 %v627
        %1631 = vmatprep.subr.bf16.mxu0 0
        %1632 = vmatpush1.bf16.msra.mxu0 %v628
        %1633 = vmatprep.subr.bf16.mxu0 0
        %1634 = vmatpush1.bf16.msra.mxu0 %v629
        %1635 = vmatprep.subr.bf16.mxu0 0
        %1636 = vmatpush1.bf16.msra.mxu0 %v630
        %1637 = vmatprep.subr.bf16.mxu0 0
        %1638 = vmatpush1.bf16.msra.mxu0 %v631
        %1639 = vmatprep.subr.bf16.mxu0 0
        %1640 = vmatpush1.bf16.msra.mxu0 %v632
        %1641 = vmatprep.subr.bf16.mxu0 0
        %1642 = vmatpush1.bf16.msra.mxu0 %v633
        %1643 = vmatprep.subr.bf16.mxu0 0
        %1644 = vmatpush1.bf16.msra.mxu0 %v634
        %1645 = vmatprep.subr.bf16.mxu0 0
        %1646 = vmatpush1.bf16.msra.mxu0 %v635
        %1647 = vmatprep.subr.bf16.mxu0 0
        %1648 = vmatpush1.bf16.msra.mxu0 %v636
        %1649 = vmatprep.mubr.bf16.mxu0 %v1554
        %1650 = vmatmul.mubr.bf16.gmra.mrb[0].mxu0 %v1553
        %v1651 = vpop.f32.mrb[0].mxu0
        %v1652 = vadd.f32 0.0, %v1651
        %v1653 = vpop.f32.mrb[0].mxu0
        %v1654 = vpop.f32.mrb[0].mxu0
        %v1655 = vadd.f32 0.0, %v1654
        %v1656 = vpop.f32.mrb[0].mxu0
        %1657 = vmatprep.mubr.bf16.mxu0 %v1558
        %1658 = vmatmul.mubr.bf16.gmra.mrb[0].mxu0 %v1557
        %v1659 = vpop.f32.mrb[0].mxu0
        %v1660 = vadd.f32 0.0, %v1659
        %v1661 = vpop.f32.mrb[0].mxu0
        %v1662 = vpop.f32.mrb[0].mxu0
        %v1663 = vadd.f32 0.0, %v1662
        %v1664 = vpop.f32.mrb[0].mxu0
        %1665 = vmatprep.mubr.bf16.mxu0 %v1562
        %1666 = vmatmul.mubr.bf16.gmra.mrb[0].mxu0 %v1561
        %v1667 = vpop.f32.mrb[0].mxu0
        %v1668 = vadd.f32 0.0, %v1667
        %v1669 = vpop.f32.mrb[0].mxu0
        %v1670 = vpop.f32.mrb[0].mxu0
        %v1671 = vadd.f32 0.0, %v1670
        %v1672 = vpop.f32.mrb[0].mxu0
        %1673 = vmatprep.mubr.bf16.mxu0 %v1566
        %1674 = vmatmul.mubr.bf16.gmra.mrb[0].mxu0 %v1565
        %v1675 = vpop.f32.mrb[0].mxu0
        %v1676 = vadd.f32 0.0, %v1675
        %v1677 = vpop.f32.mrb[0].mxu0
        %v1678 = vpop.f32.mrb[0].mxu0
        %v1679 = vadd.f32 0.0, %v1678
        %v1680 = vpop.f32.mrb[0].mxu0
        %1681 = vmatprep.mubr.bf16.mxu0 %v1570
        %1682 = vmatmul.mubr.bf16.gmra.mrb[0].mxu0 %v1569
        %v1683 = vpop.f32.mrb[0].mxu0
        %v1684 = vadd.f32 0.0, %v1683
        %v1685 = vpop.f32.mrb[0].mxu0
        %v1686 = vpop.f32.mrb[0].mxu0
        %v1687 = vadd.f32 0.0, %v1686
        %v1688 = vpop.f32.mrb[0].mxu0
        %1689 = vmatprep.mubr.bf16.mxu0 %v1574
        %1690 = vmatmul.mubr.bf16.gmra.mrb[0].mxu0 %v1573
        %v1691 = vpop.f32.mrb[0].mxu0
        %v1692 = vadd.f32 0.0, %v1691
        %v1693 = vpop.f32.mrb[0].mxu0
        %v1694 = vpop.f32.mrb[0].mxu0
        %v1695 = vadd.f32 0.0, %v1694
        %v1696 = vpop.f32.mrb[0].mxu0
        %1697 = vmatprep.mubr.bf16.mxu0 %v1578
        %1698 = vmatmul.mubr.bf16.gmra.mrb[0].mxu0 %v1577
        %v1699 = vpop.f32.mrb[0].mxu0
        %v1700 = vadd.f32 0.0, %v1699
        %v1701 = vpop.f32.mrb[0].mxu0
        %v1702 = vpop.f32.mrb[0].mxu0
        %v1703 = vadd.f32 0.0, %v1702
        %v1704 = vpop.f32.mrb[0].mxu0
        %1705 = vmatprep.mubr.bf16.mxu0 %v1582
        %1706 = vmatmul.mubr.bf16.gmra.mrb[0].mxu0 %v1581
        %v1707 = vpop.f32.mrb[0].mxu0
        %v1708 = vadd.f32 0.0, %v1707
        %v1709 = vpop.f32.mrb[0].mxu0
        %v1710 = vpop.f32.mrb[0].mxu0
        %v1711 = vadd.f32 0.0, %v1710
        %v1712 = vpop.f32.mrb[0].mxu0
        %1713 = vdwg.mxu0
        %1714 = vmatprep.subr.bf16.mxu0 0
        %1715 = vmatpush1.bf16.msra.mxu0 %v637
        %1716 = vmatprep.subr.bf16.mxu0 0
        %1717 = vmatpush1.bf16.msra.mxu0 %v638
        %1718 = vmatprep.subr.bf16.mxu0 0
        %1719 = vmatpush1.bf16.msra.mxu0 %v639
        %1720 = vmatprep.subr.bf16.mxu0 0
        %1721 = vmatpush1.bf16.msra.mxu0 %v640
        %1722 = vmatprep.subr.bf16.mxu0 0
        %1723 = vmatpush1.bf16.msra.mxu0 %v641
        %1724 = vmatprep.subr.bf16.mxu0 0
        %1725 = vmatpush1.bf16.msra.mxu0 %v642
        %1726 = vmatprep.subr.bf16.mxu0 0
        %1727 = vmatpush1.bf16.msra.mxu0 %v643
        %1728 = vmatprep.subr.bf16.mxu0 0
        %1729 = vmatpush1.bf16.msra.mxu0 %v644
        %1730 = vmatprep.subr.bf16.mxu0 0
        %1731 = vmatpush1.bf16.msra.mxu0 %v645
        %1732 = vmatprep.subr.bf16.mxu0 0
        %1733 = vmatpush1.bf16.msra.mxu0 %v646
        %1734 = vmatprep.subr.bf16.mxu0 0
        %1735 = vmatpush1.bf16.msra.mxu0 %v647
        %1736 = vmatprep.subr.bf16.mxu0 0
        %1737 = vmatpush1.bf16.msra.mxu0 %v648
        %1738 = vmatprep.subr.bf16.mxu0 0
        %1739 = vmatpush1.bf16.msra.mxu0 %v649
        %1740 = vmatprep.subr.bf16.mxu0 0
        %1741 = vmatpush1.bf16.msra.mxu0 %v650
        %1742 = vmatprep.subr.bf16.mxu0 0
        %1743 = vmatpush1.bf16.msra.mxu0 %v651
        %1744 = vmatprep.subr.bf16.mxu0 0
        %1745 = vmatpush1.bf16.msra.mxu0 %v652
        %1746 = vmatprep.mubr.bf16.mxu0 %v1556
        %1747 = vmatmul.mubr.bf16.gmra.mrb[0].mxu0 %v1555
        %v1748 = vpop.f32.mrb[0].mxu0
        %v1749 = vadd.f32 %v1652, %v1748
        %v1750 = vpop.f32.mrb[0].mxu0
        %v1751 = vpop.f32.mrb[0].mxu0
        %v1752 = vadd.f32 %v1655, %v1751
        %v1753 = vpop.f32.mrb[0].mxu0
        %1754 = vmatprep.mubr.bf16.mxu0 %v1560
        %1755 = vmatmul.mubr.bf16.gmra.mrb[0].mxu0 %v1559
        %v1756 = vpop.f32.mrb[0].mxu0
        %v1757 = vadd.f32 %v1660, %v1756
        %v1758 = vpop.f32.mrb[0].mxu0
        %v1759 = vpop.f32.mrb[0].mxu0
        %v1760 = vadd.f32 %v1663, %v1759
        %v1761 = vpop.f32.mrb[0].mxu0
        %1762 = vmatprep.mubr.bf16.mxu0 %v1564
        %1763 = vmatmul.mubr.bf16.gmra.mrb[0].mxu0 %v1563
        %v1764 = vpop.f32.mrb[0].mxu0
        %v1765 = vadd.f32 %v1668, %v1764
        %v1766 = vpop.f32.mrb[0].mxu0
        %v1767 = vpop.f32.mrb[0].mxu0
        %v1768 = vadd.f32 %v1671, %v1767
        %v1769 = vpop.f32.mrb[0].mxu0
        %1770 = vmatprep.mubr.bf16.mxu0 %v1568
        %1771 = vmatmul.mubr.bf16.gmra.mrb[0].mxu0 %v1567
        %v1772 = vpop.f32.mrb[0].mxu0
        %v1773 = vadd.f32 %v1676, %v1772
        %v1774 = vpop.f32.mrb[0].mxu0
        %v1775 = vpop.f32.mrb[0].mxu0
        %v1776 = vadd.f32 %v1679, %v1775
        %v1777 = vpop.f32.mrb[0].mxu0
        %1778 = vmatprep.mubr.bf16.mxu0 %v1572
        %1779 = vmatmul.mubr.bf16.gmra.mrb[0].mxu0 %v1571
        %v1780 = vpop.f32.mrb[0].mxu0
        %v1781 = vadd.f32 %v1684, %v1780
        %v1782 = vpop.f32.mrb[0].mxu0
        %v1783 = vpop.f32.mrb[0].mxu0
        %v1784 = vadd.f32 %v1687, %v1783
        %v1785 = vpop.f32.mrb[0].mxu0
        %1786 = vmatprep.mubr.bf16.mxu0 %v1576
        %1787 = vmatmul.mubr.bf16.gmra.mrb[0].mxu0 %v1575
        %v1788 = vpop.f32.mrb[0].mxu0
        %v1789 = vadd.f32 %v1692, %v1788
        %v1790 = vpop.f32.mrb[0].mxu0
        %v1791 = vpop.f32.mrb[0].mxu0
        %v1792 = vadd.f32 %v1695, %v1791
        %v1793 = vpop.f32.mrb[0].mxu0
        %1794 = vmatprep.mubr.bf16.mxu0 %v1580
        %1795 = vmatmul.mubr.bf16.gmra.mrb[0].mxu0 %v1579
        %v1796 = vpop.f32.mrb[0].mxu0
        %v1797 = vadd.f32 %v1700, %v1796
        %v1798 = vpop.f32.mrb[0].mxu0
        %v1799 = vpop.f32.mrb[0].mxu0
        %v1800 = vadd.f32 %v1703, %v1799
        %v1801 = vpop.f32.mrb[0].mxu0
        %1802 = vmatprep.mubr.bf16.mxu0 %v1584
        %1803 = vmatmul.mubr.bf16.gmra.mrb[0].mxu0 %v1583
        %v1804 = vpop.f32.mrb[0].mxu0
        %v1805 = vadd.f32 %v1708, %v1804
        %v1806 = vpop.f32.mrb[0].mxu0
        %v1807 = vpop.f32.mrb[0].mxu0
        %v1808 = vadd.f32 %v1711, %v1807
        %v1809 = vpop.f32.mrb[0].mxu0
        %1810 = vdwg.mxu0
        %v1811 = vld [vmem:[%s1 + $0x300] sm:$0xff]
        %v1812 = vld [vmem:[%s1 + $0x308] sm:$0xff]
        %v1813 = vld [vmem:[%s1 + $0x310] sm:$0xff]
        %v1814 = vld [vmem:[%s1 + $0x318] sm:$0xff]
        %v1815 = vld [vmem:[%s1 + $0x320] sm:$0xff]
        %v1816 = vld [vmem:[%s1 + $0x328] sm:$0xff]
        %v1817 = vld [vmem:[%s1 + $0x330] sm:$0xff]
        %v1818 = vld [vmem:[%s1 + $0x338] sm:$0xff]
        %v1819 = vld [vmem:[%s1 + $0x340] sm:$0xff]
        %v1820 = vld [vmem:[%s1 + $0x348] sm:$0xff]
        %v1821 = vld [vmem:[%s1 + $0x350] sm:$0xff]
        %v1822 = vld [vmem:[%s1 + $0x358] sm:$0xff]
        %v1823 = vld [vmem:[%s1 + $0x360] sm:$0xff]
        %v1824 = vld [vmem:[%s1 + $0x368] sm:$0xff]
        %v1825 = vld [vmem:[%s1 + $0x370] sm:$0xff]
        %v1826 = vld [vmem:[%s1 + $0x378] sm:$0xff]
        %v1827 = vld [vmem:[%s1 + $0x380] sm:$0xff]
        %v1828 = vld [vmem:[%s1 + $0x388] sm:$0xff]
        %v1829 = vld [vmem:[%s1 + $0x390] sm:$0xff]
        %v1830 = vld [vmem:[%s1 + $0x398] sm:$0xff]
        %v1831 = vld [vmem:[%s1 + $0x3a0] sm:$0xff]
        %v1832 = vld [vmem:[%s1 + $0x3a8] sm:$0xff]
        %v1833 = vld [vmem:[%s1 + $0x3b0] sm:$0xff]
        %v1834 = vld [vmem:[%s1 + $0x3b8] sm:$0xff]
        %v1835 = vld [vmem:[%s1 + $0x3c0] sm:$0xff]
        %v1836 = vld [vmem:[%s1 + $0x3c8] sm:$0xff]
        %v1837 = vld [vmem:[%s1 + $0x3d0] sm:$0xff]
        %v1838 = vld [vmem:[%s1 + $0x3d8] sm:$0xff]
        %v1839 = vld [vmem:[%s1 + $0x3e0] sm:$0xff]
        %v1840 = vld [vmem:[%s1 + $0x3e8] sm:$0xff]
        %v1841 = vld [vmem:[%s1 + $0x3f0] sm:$0xff]
        %v1842 = vld [vmem:[%s1 + $0x3f8] sm:$0xff]
        %v1875 = vunpack.c.l.b16 %v1811
        %v1876 = vunpack.c.h.b16 %v1811
        %v1877 = vunpack.c.l.b16 %v1812
        %v1878 = vunpack.c.h.b16 %v1812
        %v1879 = vunpack.c.l.b16 %v1813
        %v1880 = vunpack.c.h.b16 %v1813
        %v1881 = vunpack.c.l.b16 %v1814
        %v1882 = vunpack.c.h.b16 %v1814
        %v1883 = vunpack.c.l.b16 %v1815
        %v1884 = vunpack.c.h.b16 %v1815
        %v1885 = vunpack.c.l.b16 %v1816
        %v1886 = vunpack.c.h.b16 %v1816
        %v1887 = vunpack.c.l.b16 %v1817
        %v1888 = vunpack.c.h.b16 %v1817
        %v1889 = vunpack.c.l.b16 %v1818
        %v1890 = vunpack.c.h.b16 %v1818
        %v1891 = vunpack.c.l.b16 %v1819
        %v1892 = vunpack.c.h.b16 %v1819
        %v1893 = vunpack.c.l.b16 %v1820
        %v1894 = vunpack.c.h.b16 %v1820
        %v1895 = vunpack.c.l.b16 %v1821
        %v1896 = vunpack.c.h.b16 %v1821
        %v1897 = vunpack.c.l.b16 %v1822
        %v1898 = vunpack.c.h.b16 %v1822
        %v1899 = vunpack.c.l.b16 %v1823
        %v1900 = vunpack.c.h.b16 %v1823
        %v1901 = vunpack.c.l.b16 %v1824
        %v1902 = vunpack.c.h.b16 %v1824
        %v1903 = vunpack.c.l.b16 %v1825
        %v1904 = vunpack.c.h.b16 %v1825
        %v1905 = vunpack.c.l.b16 %v1826
        %v1906 = vunpack.c.h.b16 %v1826
        %v1907 = vunpack.c.l.b16 %v1827
        %v1908 = vunpack.c.h.b16 %v1827
        %v1909 = vunpack.c.l.b16 %v1828
        %v1910 = vunpack.c.h.b16 %v1828
        %v1911 = vunpack.c.l.b16 %v1829
        %v1912 = vunpack.c.h.b16 %v1829
        %v1913 = vunpack.c.l.b16 %v1830
        %v1914 = vunpack.c.h.b16 %v1830
        %v1915 = vunpack.c.l.b16 %v1831
        %v1916 = vunpack.c.h.b16 %v1831
        %v1917 = vunpack.c.l.b16 %v1832
        %v1918 = vunpack.c.h.b16 %v1832
        %v1919 = vunpack.c.l.b16 %v1833
        %v1920 = vunpack.c.h.b16 %v1833
        %v1921 = vunpack.c.l.b16 %v1834
        %v1922 = vunpack.c.h.b16 %v1834
        %v1923 = vunpack.c.l.b16 %v1835
        %v1924 = vunpack.c.h.b16 %v1835
        %v1925 = vunpack.c.l.b16 %v1836
        %v1926 = vunpack.c.h.b16 %v1836
        %v1927 = vunpack.c.l.b16 %v1837
        %v1928 = vunpack.c.h.b16 %v1837
        %v1929 = vunpack.c.l.b16 %v1838
        %v1930 = vunpack.c.h.b16 %v1838
        %v1931 = vunpack.c.l.b16 %v1839
        %v1932 = vunpack.c.h.b16 %v1839
        %v1933 = vunpack.c.l.b16 %v1840
        %v1934 = vunpack.c.h.b16 %v1840
        %v1935 = vunpack.c.l.b16 %v1841
        %v1936 = vunpack.c.h.b16 %v1841
        %v1937 = vunpack.c.l.b16 %v1842
        %v1938 = vunpack.c.h.b16 %v1842
        %v1939 = vpack.c.b16 %v1879, %v1875
        %v1940 = vpack.c.b16 %v1880, %v1876
        %v1941 = vpack.c.b16 %v1881, %v1877
        %v1942 = vpack.c.b16 %v1882, %v1878
        %v1943 = vpack.c.b16 %v1887, %v1883
        %v1944 = vpack.c.b16 %v1888, %v1884
        %v1945 = vpack.c.b16 %v1889, %v1885
        %v1946 = vpack.c.b16 %v1890, %v1886
        %v1947 = vpack.c.b16 %v1895, %v1891
        %v1948 = vpack.c.b16 %v1896, %v1892
        %v1949 = vpack.c.b16 %v1897, %v1893
        %v1950 = vpack.c.b16 %v1898, %v1894
        %v1951 = vpack.c.b16 %v1903, %v1899
        %v1952 = vpack.c.b16 %v1904, %v1900
        %v1953 = vpack.c.b16 %v1905, %v1901
        %v1954 = vpack.c.b16 %v1906, %v1902
        %v1955 = vpack.c.b16 %v1911, %v1907
        %v1956 = vpack.c.b16 %v1912, %v1908
        %v1957 = vpack.c.b16 %v1913, %v1909
        %v1958 = vpack.c.b16 %v1914, %v1910
        %v1959 = vpack.c.b16 %v1919, %v1915
        %v1960 = vpack.c.b16 %v1920, %v1916
        %v1961 = vpack.c.b16 %v1921, %v1917
        %v1962 = vpack.c.b16 %v1922, %v1918
        %v1963 = vpack.c.b16 %v1927, %v1923
        %v1964 = vpack.c.b16 %v1928, %v1924
        %v1965 = vpack.c.b16 %v1929, %v1925
        %v1966 = vpack.c.b16 %v1930, %v1926
        %v1967 = vpack.c.b16 %v1935, %v1931
        %v1968 = vpack.c.b16 %v1936, %v1932
        %v1969 = vpack.c.b16 %v1937, %v1933
        %v1970 = vpack.c.b16 %v1938, %v1934
        %2003 = vmatprep.subr.bf16.mxu0 0
        %2004 = vmatpush1.bf16.msra.mxu0 %v621
        %2005 = vmatprep.subr.bf16.mxu0 0
        %2006 = vmatpush1.bf16.msra.mxu0 %v622
        %2007 = vmatprep.subr.bf16.mxu0 0
        %2008 = vmatpush1.bf16.msra.mxu0 %v623
        %2009 = vmatprep.subr.bf16.mxu0 0
        %2010 = vmatpush1.bf16.msra.mxu0 %v624
        %2011 = vmatprep.subr.bf16.mxu0 0
        %2012 = vmatpush1.bf16.msra.mxu0 %v625
        %2013 = vmatprep.subr.bf16.mxu0 0
        %2014 = vmatpush1.bf16.msra.mxu0 %v626
        %2015 = vmatprep.subr.bf16.mxu0 0
        %2016 = vmatpush1.bf16.msra.mxu0 %v627
        %2017 = vmatprep.subr.bf16.mxu0 0
        %2018 = vmatpush1.bf16.msra.mxu0 %v628
        %2019 = vmatprep.subr.bf16.mxu0 0
        %2020 = vmatpush1.bf16.msra.mxu0 %v629
        %2021 = vmatprep.subr.bf16.mxu0 0
        %2022 = vmatpush1.bf16.msra.mxu0 %v630
        %2023 = vmatprep.subr.bf16.mxu0 0
        %2024 = vmatpush1.bf16.msra.mxu0 %v631
        %2025 = vmatprep.subr.bf16.mxu0 0
        %2026 = vmatpush1.bf16.msra.mxu0 %v632
        %2027 = vmatprep.subr.bf16.mxu0 0
        %2028 = vmatpush1.bf16.msra.mxu0 %v633
        %2029 = vmatprep.subr.bf16.mxu0 0
        %2030 = vmatpush1.bf16.msra.mxu0 %v634
        %2031 = vmatprep.subr.bf16.mxu0 0
        %2032 = vmatpush1.bf16.msra.mxu0 %v635
        %2033 = vmatprep.subr.bf16.mxu0 0
        %2034 = vmatpush1.bf16.msra.mxu0 %v636
        %2035 = vmatprep.mubr.bf16.mxu0 %v1940
        %2036 = vmatmul.mubr.bf16.gmra.mrb[0].mxu0 %v1939
        %v2037 = vpop.f32.mrb[0].mxu0
        %v2038 = vadd.f32 0.0, %v2037
        %v2039 = vpop.f32.mrb[0].mxu0
        %v2040 = vpop.f32.mrb[0].mxu0
        %v2041 = vadd.f32 0.0, %v2040
        %v2042 = vpop.f32.mrb[0].mxu0
        %2043 = vmatprep.mubr.bf16.mxu0 %v1944
        %2044 = vmatmul.mubr.bf16.gmra.mrb[0].mxu0 %v1943
        %v2045 = vpop.f32.mrb[0].mxu0
        %v2046 = vadd.f32 0.0, %v2045
        %v2047 = vpop.f32.mrb[0].mxu0
        %v2048 = vpop.f32.mrb[0].mxu0
        %v2049 = vadd.f32 0.0, %v2048
        %v2050 = vpop.f32.mrb[0].mxu0
        %2051 = vmatprep.mubr.bf16.mxu0 %v1948
        %2052 = vmatmul.mubr.bf16.gmra.mrb[0].mxu0 %v1947
        %v2053 = vpop.f32.mrb[0].mxu0
        %v2054 = vadd.f32 0.0, %v2053
        %v2055 = vpop.f32.mrb[0].mxu0
        %v2056 = vpop.f32.mrb[0].mxu0
        %v2057 = vadd.f32 0.0, %v2056
        %v2058 = vpop.f32.mrb[0].mxu0
        %2059 = vmatprep.mubr.bf16.mxu0 %v1952
        %2060 = vmatmul.mubr.bf16.gmra.mrb[0].mxu0 %v1951
        %v2061 = vpop.f32.mrb[0].mxu0
        %v2062 = vadd.f32 0.0, %v2061
        %v2063 = vpop.f32.mrb[0].mxu0
        %v2064 = vpop.f32.mrb[0].mxu0
        %v2065 = vadd.f32 0.0, %v2064
        %v2066 = vpop.f32.mrb[0].mxu0
        %2067 = vmatprep.mubr.bf16.mxu0 %v1956
        %2068 = vmatmul.mubr.bf16.gmra.mrb[0].mxu0 %v1955
        %v2069 = vpop.f32.mrb[0].mxu0
        %v2070 = vadd.f32 0.0, %v2069
        %v2071 = vpop.f32.mrb[0].mxu0
        %v2072 = vpop.f32.mrb[0].mxu0
        %v2073 = vadd.f32 0.0, %v2072
        %v2074 = vpop.f32.mrb[0].mxu0
        %2075 = vmatprep.mubr.bf16.mxu0 %v1960
        %2076 = vmatmul.mubr.bf16.gmra.mrb[0].mxu0 %v1959
        %v2077 = vpop.f32.mrb[0].mxu0
        %v2078 = vadd.f32 0.0, %v2077
        %v2079 = vpop.f32.mrb[0].mxu0
        %v2080 = vpop.f32.mrb[0].mxu0
        %v2081 = vadd.f32 0.0, %v2080
        %v2082 = vpop.f32.mrb[0].mxu0
        %2083 = vmatprep.mubr.bf16.mxu0 %v1964
        %2084 = vmatmul.mubr.bf16.gmra.mrb[0].mxu0 %v1963
        %v2085 = vpop.f32.mrb[0].mxu0
        %v2086 = vadd.f32 0.0, %v2085
        %v2087 = vpop.f32.mrb[0].mxu0
        %v2088 = vpop.f32.mrb[0].mxu0
        %v2089 = vadd.f32 0.0, %v2088
        %v2090 = vpop.f32.mrb[0].mxu0
        %2091 = vmatprep.mubr.bf16.mxu0 %v1968
        %2092 = vmatmul.mubr.bf16.gmra.mrb[0].mxu0 %v1967
        %v2093 = vpop.f32.mrb[0].mxu0
        %v2094 = vadd.f32 0.0, %v2093
        %v2095 = vpop.f32.mrb[0].mxu0
        %v2096 = vpop.f32.mrb[0].mxu0
        %v2097 = vadd.f32 0.0, %v2096
        %v2098 = vpop.f32.mrb[0].mxu0
        %2099 = vdwg.mxu0
        %2100 = vmatprep.subr.bf16.mxu0 0
        %2101 = vmatpush1.bf16.msra.mxu0 %v637
        %2102 = vmatprep.subr.bf16.mxu0 0
        %2103 = vmatpush1.bf16.msra.mxu0 %v638
        %2104 = vmatprep.subr.bf16.mxu0 0
        %2105 = vmatpush1.bf16.msra.mxu0 %v639
        %2106 = vmatprep.subr.bf16.mxu0 0
        %2107 = vmatpush1.bf16.msra.mxu0 %v640
        %2108 = vmatprep.subr.bf16.mxu0 0
        %2109 = vmatpush1.bf16.msra.mxu0 %v641
        %2110 = vmatprep.subr.bf16.mxu0 0
        %2111 = vmatpush1.bf16.msra.mxu0 %v642
        %2112 = vmatprep.subr.bf16.mxu0 0
        %2113 = vmatpush1.bf16.msra.mxu0 %v643
        %2114 = vmatprep.subr.bf16.mxu0 0
        %2115 = vmatpush1.bf16.msra.mxu0 %v644
        %2116 = vmatprep.subr.bf16.mxu0 0
        %2117 = vmatpush1.bf16.msra.mxu0 %v645
        %2118 = vmatprep.subr.bf16.mxu0 0
        %2119 = vmatpush1.bf16.msra.mxu0 %v646
        %2120 = vmatprep.subr.bf16.mxu0 0
        %2121 = vmatpush1.bf16.msra.mxu0 %v647
        %2122 = vmatprep.subr.bf16.mxu0 0
        %2123 = vmatpush1.bf16.msra.mxu0 %v648
        %2124 = vmatprep.subr.bf16.mxu0 0
        %2125 = vmatpush1.bf16.msra.mxu0 %v649
        %2126 = vmatprep.subr.bf16.mxu0 0
        %2127 = vmatpush1.bf16.msra.mxu0 %v650
        %2128 = vmatprep.subr.bf16.mxu0 0
        %2129 = vmatpush1.bf16.msra.mxu0 %v651
        %2130 = vmatprep.subr.bf16.mxu0 0
        %2131 = vmatpush1.bf16.msra.mxu0 %v652
        %2132 = vmatprep.mubr.bf16.mxu0 %v1942
        %2133 = vmatmul.mubr.bf16.gmra.mrb[0].mxu0 %v1941
        %v2134 = vpop.f32.mrb[0].mxu0
        %v2135 = vadd.f32 %v2038, %v2134
        %v2136 = vpop.f32.mrb[0].mxu0
        %v2137 = vpop.f32.mrb[0].mxu0
        %v2138 = vadd.f32 %v2041, %v2137
        %v2139 = vpop.f32.mrb[0].mxu0
        %2140 = vmatprep.mubr.bf16.mxu0 %v1946
        %2141 = vmatmul.mubr.bf16.gmra.mrb[0].mxu0 %v1945
        %v2142 = vpop.f32.mrb[0].mxu0
        %v2143 = vadd.f32 %v2046, %v2142
        %v2144 = vpop.f32.mrb[0].mxu0
        %v2145 = vpop.f32.mrb[0].mxu0
        %v2146 = vadd.f32 %v2049, %v2145
        %v2147 = vpop.f32.mrb[0].mxu0
        %2148 = vmatprep.mubr.bf16.mxu0 %v1950
        %2149 = vmatmul.mubr.bf16.gmra.mrb[0].mxu0 %v1949
        %v2150 = vpop.f32.mrb[0].mxu0
        %v2151 = vadd.f32 %v2054, %v2150
        %v2152 = vpop.f32.mrb[0].mxu0
        %v2153 = vpop.f32.mrb[0].mxu0
        %v2154 = vadd.f32 %v2057, %v2153
        %v2155 = vpop.f32.mrb[0].mxu0
        %2156 = vmatprep.mubr.bf16.mxu0 %v1954
        %2157 = vmatmul.mubr.bf16.gmra.mrb[0].mxu0 %v1953
        %v2158 = vpop.f32.mrb[0].mxu0
        %v2159 = vadd.f32 %v2062, %v2158
        %v2160 = vpop.f32.mrb[0].mxu0
        %v2161 = vpop.f32.mrb[0].mxu0
        %v2162 = vadd.f32 %v2065, %v2161
        %v2163 = vpop.f32.mrb[0].mxu0
        %2164 = vmatprep.mubr.bf16.mxu0 %v1958
        %2165 = vmatmul.mubr.bf16.gmra.mrb[0].mxu0 %v1957
        %v2166 = vpop.f32.mrb[0].mxu0
        %v2167 = vadd.f32 %v2070, %v2166
        %v2168 = vpop.f32.mrb[0].mxu0
        %v2169 = vpop.f32.mrb[0].mxu0
        %v2170 = vadd.f32 %v2073, %v2169
        %v2171 = vpop.f32.mrb[0].mxu0
        %2172 = vmatprep.mubr.bf16.mxu0 %v1962
        %2173 = vmatmul.mubr.bf16.gmra.mrb[0].mxu0 %v1961
        %v2174 = vpop.f32.mrb[0].mxu0
        %v2175 = vadd.f32 %v2078, %v2174
        %v2176 = vpop.f32.mrb[0].mxu0
        %v2177 = vpop.f32.mrb[0].mxu0
        %v2178 = vadd.f32 %v2081, %v2177
        %v2179 = vpop.f32.mrb[0].mxu0
        %2180 = vmatprep.mubr.bf16.mxu0 %v1966
        %2181 = vmatmul.mubr.bf16.gmra.mrb[0].mxu0 %v1965
        %v2182 = vpop.f32.mrb[0].mxu0
        %v2183 = vadd.f32 %v2086, %v2182
        %v2184 = vpop.f32.mrb[0].mxu0
        %v2185 = vpop.f32.mrb[0].mxu0
        %v2186 = vadd.f32 %v2089, %v2185
        %v2187 = vpop.f32.mrb[0].mxu0
        %2188 = vmatprep.mubr.bf16.mxu0 %v1970
        %2189 = vmatmul.mubr.bf16.gmra.mrb[0].mxu0 %v1969
        %v2190 = vpop.f32.mrb[0].mxu0
        %v2191 = vadd.f32 %v2094, %v2190
        %v2192 = vpop.f32.mrb[0].mxu0
        %v2193 = vpop.f32.mrb[0].mxu0
        %v2194 = vadd.f32 %v2097, %v2193
        %v2195 = vpop.f32.mrb[0].mxu0
        %2196 = vdwg.mxu0
        %v2197 = vmax.f32 %v977, %v1363
        %v2198 = vmax.f32 %v980, %v1366
        %v2199 = vmax.f32 %v985, %v1371
        %v2200 = vmax.f32 %v988, %v1374
        %v2201 = vmax.f32 %v993, %v1379
        %v2202 = vmax.f32 %v996, %v1382
        %v2203 = vmax.f32 %v1001, %v1387
        %v2204 = vmax.f32 %v1004, %v1390
        %v2205 = vmax.f32 %v1009, %v1395
        %v2206 = vmax.f32 %v1012, %v1398
        %v2207 = vmax.f32 %v1017, %v1403
        %v2208 = vmax.f32 %v1020, %v1406
        %v2209 = vmax.f32 %v1025, %v1411
        %v2210 = vmax.f32 %v1028, %v1414
        %v2211 = vmax.f32 %v1033, %v1419
        %v2212 = vmax.f32 %v1036, %v1422
        %v2213 = vmax.f32 %v1749, %v2135
        %v2214 = vmax.f32 %v1752, %v2138
        %v2215 = vmax.f32 %v1757, %v2143
        %v2216 = vmax.f32 %v1760, %v2146
        %v2217 = vmax.f32 %v1765, %v2151
        %v2218 = vmax.f32 %v1768, %v2154
        %v2219 = vmax.f32 %v1773, %v2159
        %v2220 = vmax.f32 %v1776, %v2162
        %v2221 = vmax.f32 %v1781, %v2167
        %v2222 = vmax.f32 %v1784, %v2170
        %v2223 = vmax.f32 %v1789, %v2175
        %v2224 = vmax.f32 %v1792, %v2178
        %v2225 = vmax.f32 %v1797, %v2183
        %v2226 = vmax.f32 %v1800, %v2186
        %v2227 = vmax.f32 %v1805, %v2191
        %v2228 = vmax.f32 %v1808, %v2194
        %v2229 = vmax.f32 %v2197, %v2213
        %v2230 = vmax.f32 %v2198, %v2214
        %v2231 = vmax.f32 %v2199, %v2215
        %v2232 = vmax.f32 %v2200, %v2216
        %v2233 = vmax.f32 %v2201, %v2217
        %v2234 = vmax.f32 %v2202, %v2218
        %v2235 = vmax.f32 %v2203, %v2219
        %v2236 = vmax.f32 %v2204, %v2220
        %v2237 = vmax.f32 %v2205, %v2221
        %v2238 = vmax.f32 %v2206, %v2222
        %v2239 = vmax.f32 %v2207, %v2223
        %v2240 = vmax.f32 %v2208, %v2224
        %v2241 = vmax.f32 %v2209, %v2225
        %v2242 = vmax.f32 %v2210, %v2226
        %v2243 = vmax.f32 %v2211, %v2227
        %v2244 = vmax.f32 %v2212, %v2228
        %2245 = vst [vmem:[#allocation2] sm:$0xff] 0.0
        %2246 = vst [vmem:[#allocation2 + $0x8] sm:$0xff] 0.0
        %2247 = vst [vmem:[#allocation2 + $0x10] sm:$0xf] 0.0
        %2248 = vst [vmem:[#allocation2 + $0x18] sm:$0xff] 0.0
        %2249 = vst [vmem:[#allocation2 + $0x20] sm:$0xff] 0.0
        %2250 = vst [vmem:[#allocation2 + $0x28] sm:$0xf] 0.0
        %2251 = vst [vmem:[#allocation2 + $0x30] sm:$0xff] 0.0
        %2252 = vst [vmem:[#allocation2 + $0x38] sm:$0xff] 0.0
        %2253 = vst [vmem:[#allocation2 + $0x40] sm:$0xf] 0.0
        %2254 = vst [vmem:[#allocation2 + $0x48] sm:$0xff] 0.0
        %2255 = vst [vmem:[#allocation2 + $0x50] sm:$0xff] 0.0
        %2256 = vst [vmem:[#allocation2 + $0x58] sm:$0xf] 0.0
        %2257 = vst [vmem:[#allocation2 + $0x60] sm:$0xff] 0.0
        %2258 = vst [vmem:[#allocation2 + $0x68] sm:$0xff] 0.0
        %2259 = vst [vmem:[#allocation2 + $0x70] sm:$0xf] 0.0
        %2260 = vst [vmem:[#allocation2 + $0x78] sm:$0xff] 0.0
        %2261 = vst [vmem:[#allocation2 + $0x80] sm:$0xff] 0.0
        %2262 = vst [vmem:[#allocation2 + $0x88] sm:$0xf] 0.0
        %2263 = vst [vmem:[#allocation2 + $0x90] sm:$0xff] 0.0
        %2264 = vst [vmem:[#allocation2 + $0x98] sm:$0xff] 0.0
        %2265 = vst [vmem:[#allocation2 + $0xa0] sm:$0xf] 0.0
        %2266 = vst [vmem:[#allocation2 + $0xa8] sm:$0xff] 0.0
        %2267 = vst [vmem:[#allocation2 + $0xb0] sm:$0xff] 0.0
        %2268 = vst [vmem:[#allocation2 + $0xb8] sm:$0xf] 0.0
        %2269 = vst [vmem:[#allocation2 + $0xc0] sm:$0xff] 0.0
        %2270 = vst [vmem:[#allocation2 + $0xc8] sm:$0xff] 0.0
        %2271 = vst [vmem:[#allocation2 + $0xd0] sm:$0xf] 0.0
        %2272 = vst [vmem:[#allocation2 + $0xd8] sm:$0xff] 0.0
        %2273 = vst [vmem:[#allocation2 + $0xe0] sm:$0xff] 0.0
        %2274 = vst [vmem:[#allocation2 + $0xe8] sm:$0xf] 0.0
        %2275 = vst [vmem:[#allocation2 + $0xf0] sm:$0xff] 0.0
        %2276 = vst [vmem:[#allocation2 + $0xf8] sm:$0xff] 0.0
        %2277 = vst [vmem:[#allocation2 + $0x100] sm:$0xf] 0.0
        %2278 = vst [vmem:[#allocation2 + $0x108] sm:$0xff] 0.0
        %2279 = vst [vmem:[#allocation2 + $0x110] sm:$0xff] 0.0
        %2280 = vst [vmem:[#allocation2 + $0x118] sm:$0xf] 0.0
        %s2281 = scalar_lea.vmem [#allocation2], 48
        %vm2282 = vcmask 785408
        %2283 = vst.msk [vmem:[%s2281 + $0x2] sm:$0xff] %vm2282, %v2229
        %2284 = vst.msk [vmem:[%s2281 + $0xa] sm:$0xff] %vm2282, %v2230
        %2285 = vst.msk [vmem:[%s2281 + $0x1a] sm:$0xff] %vm2282, %v2231
        %2286 = vst.msk [vmem:[%s2281 + $0x22] sm:$0xff] %vm2282, %v2232
        %2287 = vst.msk [vmem:[%s2281 + $0x32] sm:$0xff] %vm2282, %v2233
        %2288 = vst.msk [vmem:[%s2281 + $0x3a] sm:$0xff] %vm2282, %v2234
        %2289 = vst.msk [vmem:[%s2281 + $0x4a] sm:$0xff] %vm2282, %v2235
        %2290 = vst.msk [vmem:[%s2281 + $0x52] sm:$0xff] %vm2282, %v2236
        %2291 = vst.msk [vmem:[%s2281 + $0x62] sm:$0xff] %vm2282, %v2237
        %2292 = vst.msk [vmem:[%s2281 + $0x6a] sm:$0xff] %vm2282, %v2238
        %2293 = vst.msk [vmem:[%s2281 + $0x7a] sm:$0xff] %vm2282, %v2239
        %2294 = vst.msk [vmem:[%s2281 + $0x82] sm:$0xff] %vm2282, %v2240
        %2295 = vst.msk [vmem:[%s2281 + $0x92] sm:$0xff] %vm2282, %v2241
        %2296 = vst.msk [vmem:[%s2281 + $0x9a] sm:$0xff] %vm2282, %v2242
        %2297 = vst.msk [vmem:[%s2281 + $0xaa] sm:$0xff] %vm2282, %v2243
        %2298 = vst.msk [vmem:[%s2281 + $0xb2] sm:$0xff] %vm2282, %v2244
        %v2299 = vld [vmem:[#allocation2] sm:$0xff]
        %v2300 = vld [vmem:[#allocation2 + $0x8] sm:$0xff]
        %v2301 = vld [vmem:[#allocation2 + $0x18] sm:$0xff]
        %v2302 = vld [vmem:[#allocation2 + $0x20] sm:$0xff]
        %v2303 = vld [vmem:[#allocation2 + $0x30] sm:$0xff]
        %v2304 = vld [vmem:[#allocation2 + $0x38] sm:$0xff]
        %v2305 = vld [vmem:[#allocation2 + $0x48] sm:$0xff]
        %v2306 = vld [vmem:[#allocation2 + $0x50] sm:$0xff]
        %v2307 = vld [vmem:[#allocation2 + $0x60] sm:$0xff]
        %v2308 = vld [vmem:[#allocation2 + $0x68] sm:$0xff]
        %v2309 = vld [vmem:[#allocation2 + $0x78] sm:$0xff]
        %v2310 = vld [vmem:[#allocation2 + $0x80] sm:$0xff]
        %v2311 = vld [vmem:[#allocation2 + $0x90] sm:$0xff]
        %v2312 = vld [vmem:[#allocation2 + $0x98] sm:$0xff]
        %v2313 = vld [vmem:[#allocation2 + $0xa8] sm:$0xff]
        %v2314 = vld [vmem:[#allocation2 + $0xb0] sm:$0xff]
        %v2315 = vpack.c.bf16 %v2300, %v2299
        %v2316 = vpack.c.bf16 %v2302, %v2301
        %v2317 = vpack.c.bf16 %v2304, %v2303
        %v2318 = vpack.c.bf16 %v2306, %v2305
        %v2319 = vpack.c.bf16 %v2308, %v2307
        %v2320 = vpack.c.bf16 %v2310, %v2309
        %v2321 = vpack.c.bf16 %v2312, %v2311
        %v2322 = vpack.c.bf16 %v2314, %v2313
        %v2323 = vld [vmem:[#allocation2 + $0x1] sm:$0xff]
        %v2324 = vld [vmem:[#allocation2 + $0x9] sm:$0xff]
        %v2325 = vld [vmem:[#allocation2 + $0x19] sm:$0xff]
        %v2326 = vld [vmem:[#allocation2 + $0x21] sm:$0xff]
        %v2327 = vld [vmem:[#allocation2 + $0x31] sm:$0xff]
        %v2328 = vld [vmem:[#allocation2 + $0x39] sm:$0xff]
        %v2329 = vld [vmem:[#allocation2 + $0x49] sm:$0xff]
        %v2330 = vld [vmem:[#allocation2 + $0x51] sm:$0xff]
        %v2331 = vld [vmem:[#allocation2 + $0x61] sm:$0xff]
        %v2332 = vld [vmem:[#allocation2 + $0x69] sm:$0xff]
        %v2333 = vld [vmem:[#allocation2 + $0x79] sm:$0xff]
        %v2334 = vld [vmem:[#allocation2 + $0x81] sm:$0xff]
        %v2335 = vld [vmem:[#allocation2 + $0x91] sm:$0xff]
        %v2336 = vld [vmem:[#allocation2 + $0x99] sm:$0xff]
        %v2337 = vld [vmem:[#allocation2 + $0xa9] sm:$0xff]
        %v2338 = vld [vmem:[#allocation2 + $0xb1] sm:$0xff]
        %v2339 = vpack.c.bf16 %v2324, %v2323
        %v2340 = vpack.c.bf16 %v2326, %v2325
        %v2341 = vpack.c.bf16 %v2328, %v2327
        %v2342 = vpack.c.bf16 %v2330, %v2329
        %v2343 = vpack.c.bf16 %v2332, %v2331
        %v2344 = vpack.c.bf16 %v2334, %v2333
        %v2345 = vpack.c.bf16 %v2336, %v2335
        %v2346 = vpack.c.bf16 %v2338, %v2337
        %v2347 = vld [vmem:[#allocation2 + $0x2] sm:$0xff]
        %v2348 = vld [vmem:[#allocation2 + $0xa] sm:$0xff]
        %v2349 = vld [vmem:[#allocation2 + $0x1a] sm:$0xff]
        %v2350 = vld [vmem:[#allocation2 + $0x22] sm:$0xff]
        %v2351 = vld [vmem:[#allocation2 + $0x32] sm:$0xff]
        %v2352 = vld [vmem:[#allocation2 + $0x3a] sm:$0xff]
        %v2353 = vld [vmem:[#allocation2 + $0x4a] sm:$0xff]
        %v2354 = vld [vmem:[#allocation2 + $0x52] sm:$0xff]
        %v2355 = vld [vmem:[#allocation2 + $0x62] sm:$0xff]
        %v2356 = vld [vmem:[#allocation2 + $0x6a] sm:$0xff]
        %v2357 = vld [vmem:[#allocation2 + $0x7a] sm:$0xff]
        %v2358 = vld [vmem:[#allocation2 + $0x82] sm:$0xff]
        %v2359 = vld [vmem:[#allocation2 + $0x92] sm:$0xff]
        %v2360 = vld [vmem:[#allocation2 + $0x9a] sm:$0xff]
        %v2361 = vld [vmem:[#allocation2 + $0xaa] sm:$0xff]
        %v2362 = vld [vmem:[#allocation2 + $0xb2] sm:$0xff]
        %v2363 = vpack.c.bf16 %v2348, %v2347
        %v2364 = vpack.c.bf16 %v2350, %v2349
        %v2365 = vpack.c.bf16 %v2352, %v2351
        %v2366 = vpack.c.bf16 %v2354, %v2353
        %v2367 = vpack.c.bf16 %v2356, %v2355
        %v2368 = vpack.c.bf16 %v2358, %v2357
        %v2369 = vpack.c.bf16 %v2360, %v2359
        %v2370 = vpack.c.bf16 %v2362, %v2361
        %v2371 = vld [vmem:[#allocation2 + $0x3] sm:$0xff]
        %v2372 = vld [vmem:[#allocation2 + $0xb] sm:$0xff]
        %v2373 = vld [vmem:[#allocation2 + $0x1b] sm:$0xff]
        %v2374 = vld [vmem:[#allocation2 + $0x23] sm:$0xff]
        %v2375 = vld [vmem:[#allocation2 + $0x33] sm:$0xff]
        %v2376 = vld [vmem:[#allocation2 + $0x3b] sm:$0xff]
        %v2377 = vld [vmem:[#allocation2 + $0x4b] sm:$0xff]
        %v2378 = vld [vmem:[#allocation2 + $0x53] sm:$0xff]
        %v2379 = vld [vmem:[#allocation2 + $0x63] sm:$0xff]
        %v2380 = vld [vmem:[#allocation2 + $0x6b] sm:$0xff]
        %v2381 = vld [vmem:[#allocation2 + $0x7b] sm:$0xff]
        %v2382 = vld [vmem:[#allocation2 + $0x83] sm:$0xff]
        %v2383 = vld [vmem:[#allocation2 + $0x93] sm:$0xff]
        %v2384 = vld [vmem:[#allocation2 + $0x9b] sm:$0xff]
        %v2385 = vld [vmem:[#allocation2 + $0xab] sm:$0xff]
        %v2386 = vld [vmem:[#allocation2 + $0xb3] sm:$0xff]
        %v2387 = vpack.c.bf16 %v2372, %v2371
        %v2388 = vpack.c.bf16 %v2374, %v2373
        %v2389 = vpack.c.bf16 %v2376, %v2375
        %v2390 = vpack.c.bf16 %v2378, %v2377
        %v2391 = vpack.c.bf16 %v2380, %v2379
        %v2392 = vpack.c.bf16 %v2382, %v2381
        %v2393 = vpack.c.bf16 %v2384, %v2383
        %v2394 = vpack.c.bf16 %v2386, %v2385
        %v2395 = vld [vmem:[#allocation2 + $0x4] sm:$0xff]
        %v2396 = vld [vmem:[#allocation2 + $0xc] sm:$0xff]
        %v2397 = vld [vmem:[#allocation2 + $0x1c] sm:$0xff]
        %v2398 = vld [vmem:[#allocation2 + $0x24] sm:$0xff]
        %v2399 = vld [vmem:[#allocation2 + $0x34] sm:$0xff]
        %v2400 = vld [vmem:[#allocation2 + $0x3c] sm:$0xff]
        %v2401 = vld [vmem:[#allocation2 + $0x4c] sm:$0xff]
        %v2402 = vld [vmem:[#allocation2 + $0x54] sm:$0xff]
        %v2403 = vld [vmem:[#allocation2 + $0x64] sm:$0xff]
        %v2404 = vld [vmem:[#allocation2 + $0x6c] sm:$0xff]
        %v2405 = vld [vmem:[#allocation2 + $0x7c] sm:$0xff]
        %v2406 = vld [vmem:[#allocation2 + $0x84] sm:$0xff]
        %v2407 = vld [vmem:[#allocation2 + $0x94] sm:$0xff]
        %v2408 = vld [vmem:[#allocation2 + $0x9c] sm:$0xff]
        %v2409 = vld [vmem:[#allocation2 + $0xac] sm:$0xff]
        %v2410 = vld [vmem:[#allocation2 + $0xb4] sm:$0xff]
        %v2411 = vpack.c.bf16 %v2396, %v2395
        %v2412 = vpack.c.bf16 %v2398, %v2397
        %v2413 = vpack.c.bf16 %v2400, %v2399
        %v2414 = vpack.c.bf16 %v2402, %v2401
        %v2415 = vpack.c.bf16 %v2404, %v2403
        %v2416 = vpack.c.bf16 %v2406, %v2405
        %v2417 = vpack.c.bf16 %v2408, %v2407
        %v2418 = vpack.c.bf16 %v2410, %v2409
        %s2419 = scalar_lea.vmem [#allocation2], 24
        %v2420 = vld [vmem:[%s2419] sm:$0xff]
        %v2421 = vld [vmem:[%s2419 + $0x8] sm:$0xff]
        %v2422 = vld [vmem:[%s2419 + $0x18] sm:$0xff]
        %v2423 = vld [vmem:[%s2419 + $0x20] sm:$0xff]
        %v2424 = vld [vmem:[%s2419 + $0x30] sm:$0xff]
        %v2425 = vld [vmem:[%s2419 + $0x38] sm:$0xff]
        %v2426 = vld [vmem:[%s2419 + $0x48] sm:$0xff]
        %v2427 = vld [vmem:[%s2419 + $0x50] sm:$0xff]
        %v2428 = vld [vmem:[%s2419 + $0x60] sm:$0xff]
        %v2429 = vld [vmem:[%s2419 + $0x68] sm:$0xff]
        %v2430 = vld [vmem:[%s2419 + $0x78] sm:$0xff]
        %v2431 = vld [vmem:[%s2419 + $0x80] sm:$0xff]
        %v2432 = vld [vmem:[%s2419 + $0x90] sm:$0xff]
        %v2433 = vld [vmem:[%s2419 + $0x98] sm:$0xff]
        %v2434 = vld [vmem:[%s2419 + $0xa8] sm:$0xff]
        %v2435 = vld [vmem:[%s2419 + $0xb0] sm:$0xff]
        %v2436 = vpack.c.bf16 %v2421, %v2420
        %v2437 = vpack.c.bf16 %v2423, %v2422
        %v2438 = vpack.c.bf16 %v2425, %v2424
        %v2439 = vpack.c.bf16 %v2427, %v2426
        %v2440 = vpack.c.bf16 %v2429, %v2428
        %v2441 = vpack.c.bf16 %v2431, %v2430
        %v2442 = vpack.c.bf16 %v2433, %v2432
        %v2443 = vpack.c.bf16 %v2435, %v2434
        %v2444 = vld [vmem:[%s2419 + $0x1] sm:$0xff]
        %v2445 = vld [vmem:[%s2419 + $0x9] sm:$0xff]
        %v2446 = vld [vmem:[%s2419 + $0x19] sm:$0xff]
        %v2447 = vld [vmem:[%s2419 + $0x21] sm:$0xff]
        %v2448 = vld [vmem:[%s2419 + $0x31] sm:$0xff]
        %v2449 = vld [vmem:[%s2419 + $0x39] sm:$0xff]
        %v2450 = vld [vmem:[%s2419 + $0x49] sm:$0xff]
        %v2451 = vld [vmem:[%s2419 + $0x51] sm:$0xff]
        %v2452 = vld [vmem:[%s2419 + $0x61] sm:$0xff]
        %v2453 = vld [vmem:[%s2419 + $0x69] sm:$0xff]
        %v2454 = vld [vmem:[%s2419 + $0x79] sm:$0xff]
        %v2455 = vld [vmem:[%s2419 + $0x81] sm:$0xff]
        %v2456 = vld [vmem:[%s2419 + $0x91] sm:$0xff]
        %v2457 = vld [vmem:[%s2419 + $0x99] sm:$0xff]
        %v2458 = vld [vmem:[%s2419 + $0xa9] sm:$0xff]
        %v2459 = vld [vmem:[%s2419 + $0xb1] sm:$0xff]
        %v2460 = vpack.c.bf16 %v2445, %v2444
        %v2461 = vpack.c.bf16 %v2447, %v2446
        %v2462 = vpack.c.bf16 %v2449, %v2448
        %v2463 = vpack.c.bf16 %v2451, %v2450
        %v2464 = vpack.c.bf16 %v2453, %v2452
        %v2465 = vpack.c.bf16 %v2455, %v2454
        %v2466 = vpack.c.bf16 %v2457, %v2456
        %v2467 = vpack.c.bf16 %v2459, %v2458
        %v2468 = vld [vmem:[%s2419 + $0x2] sm:$0xff]
        %v2469 = vld [vmem:[%s2419 + $0xa] sm:$0xff]
        %v2470 = vld [vmem:[%s2419 + $0x1a] sm:$0xff]
        %v2471 = vld [vmem:[%s2419 + $0x22] sm:$0xff]
        %v2472 = vld [vmem:[%s2419 + $0x32] sm:$0xff]
        %v2473 = vld [vmem:[%s2419 + $0x3a] sm:$0xff]
        %v2474 = vld [vmem:[%s2419 + $0x4a] sm:$0xff]
        %v2475 = vld [vmem:[%s2419 + $0x52] sm:$0xff]
        %v2476 = vld [vmem:[%s2419 + $0x62] sm:$0xff]
        %v2477 = vld [vmem:[%s2419 + $0x6a] sm:$0xff]
        %v2478 = vld [vmem:[%s2419 + $0x7a] sm:$0xff]
        %v2479 = vld [vmem:[%s2419 + $0x82] sm:$0xff]
        %v2480 = vld [vmem:[%s2419 + $0x92] sm:$0xff]
        %v2481 = vld [vmem:[%s2419 + $0x9a] sm:$0xff]
        %v2482 = vld [vmem:[%s2419 + $0xaa] sm:$0xff]
        %v2483 = vld [vmem:[%s2419 + $0xb2] sm:$0xff]
        %v2484 = vpack.c.bf16 %v2469, %v2468
        %v2485 = vpack.c.bf16 %v2471, %v2470
        %v2486 = vpack.c.bf16 %v2473, %v2472
        %v2487 = vpack.c.bf16 %v2475, %v2474
        %v2488 = vpack.c.bf16 %v2477, %v2476
        %v2489 = vpack.c.bf16 %v2479, %v2478
        %v2490 = vpack.c.bf16 %v2481, %v2480
        %v2491 = vpack.c.bf16 %v2483, %v2482
        %v2492 = vld [vmem:[%s2419 + $0x3] sm:$0xff]
        %v2493 = vld [vmem:[%s2419 + $0xb] sm:$0xff]
        %v2494 = vld [vmem:[%s2419 + $0x1b] sm:$0xff]
        %v2495 = vld [vmem:[%s2419 + $0x23] sm:$0xff]
        %v2496 = vld [vmem:[%s2419 + $0x33] sm:$0xff]
        %v2497 = vld [vmem:[%s2419 + $0x3b] sm:$0xff]
        %v2498 = vld [vmem:[%s2419 + $0x4b] sm:$0xff]
        %v2499 = vld [vmem:[%s2419 + $0x53] sm:$0xff]
        %v2500 = vld [vmem:[%s2419 + $0x63] sm:$0xff]
        %v2501 = vld [vmem:[%s2419 + $0x6b] sm:$0xff]
        %v2502 = vld [vmem:[%s2419 + $0x7b] sm:$0xff]
        %v2503 = vld [vmem:[%s2419 + $0x83] sm:$0xff]
        %v2504 = vld [vmem:[%s2419 + $0x93] sm:$0xff]
        %v2505 = vld [vmem:[%s2419 + $0x9b] sm:$0xff]
        %v2506 = vld [vmem:[%s2419 + $0xab] sm:$0xff]
        %v2507 = vld [vmem:[%s2419 + $0xb3] sm:$0xff]
        %v2508 = vpack.c.bf16 %v2493, %v2492
        %v2509 = vpack.c.bf16 %v2495, %v2494
        %v2510 = vpack.c.bf16 %v2497, %v2496
        %v2511 = vpack.c.bf16 %v2499, %v2498
        %v2512 = vpack.c.bf16 %v2501, %v2500
        %v2513 = vpack.c.bf16 %v2503, %v2502
        %v2514 = vpack.c.bf16 %v2505, %v2504
        %v2515 = vpack.c.bf16 %v2507, %v2506
        %v2516 = vld [vmem:[%s2419 + $0x4] sm:$0xff]
        %v2517 = vld [vmem:[%s2419 + $0xc] sm:$0xff]
        %v2518 = vld [vmem:[%s2419 + $0x1c] sm:$0xff]
        %v2519 = vld [vmem:[%s2419 + $0x24] sm:$0xff]
        %v2520 = vld [vmem:[%s2419 + $0x34] sm:$0xff]
        %v2521 = vld [vmem:[%s2419 + $0x3c] sm:$0xff]
        %v2522 = vld [vmem:[%s2419 + $0x4c] sm:$0xff]
        %v2523 = vld [vmem:[%s2419 + $0x54] sm:$0xff]
        %v2524 = vld [vmem:[%s2419 + $0x64] sm:$0xff]
        %v2525 = vld [vmem:[%s2419 + $0x6c] sm:$0xff]
        %v2526 = vld [vmem:[%s2419 + $0x7c] sm:$0xff]
        %v2527 = vld [vmem:[%s2419 + $0x84] sm:$0xff]
        %v2528 = vld [vmem:[%s2419 + $0x94] sm:$0xff]
        %v2529 = vld [vmem:[%s2419 + $0x9c] sm:$0xff]
        %v2530 = vld [vmem:[%s2419 + $0xac] sm:$0xff]
        %v2531 = vld [vmem:[%s2419 + $0xb4] sm:$0xff]
        %v2532 = vpack.c.bf16 %v2517, %v2516
        %v2533 = vpack.c.bf16 %v2519, %v2518
        %v2534 = vpack.c.bf16 %v2521, %v2520
        %v2535 = vpack.c.bf16 %v2523, %v2522
        %v2536 = vpack.c.bf16 %v2525, %v2524
        %v2537 = vpack.c.bf16 %v2527, %v2526
        %v2538 = vpack.c.bf16 %v2529, %v2528
        %v2539 = vpack.c.bf16 %v2531, %v2530
        %v2540 = vld [vmem:[%s2281] sm:$0xff]
        %v2541 = vld [vmem:[%s2281 + $0x8] sm:$0xff]
        %v2542 = vld [vmem:[%s2281 + $0x18] sm:$0xff]
        %v2543 = vld [vmem:[%s2281 + $0x20] sm:$0xff]
        %v2544 = vld [vmem:[%s2281 + $0x30] sm:$0xff]
        %v2545 = vld [vmem:[%s2281 + $0x38] sm:$0xff]
        %v2546 = vld [vmem:[%s2281 + $0x48] sm:$0xff]
        %v2547 = vld [vmem:[%s2281 + $0x50] sm:$0xff]
        %v2548 = vld [vmem:[%s2281 + $0x60] sm:$0xff]
        %v2549 = vld [vmem:[%s2281 + $0x68] sm:$0xff]
        %v2550 = vld [vmem:[%s2281 + $0x78] sm:$0xff]
        %v2551 = vld [vmem:[%s2281 + $0x80] sm:$0xff]
        %v2552 = vld [vmem:[%s2281 + $0x90] sm:$0xff]
        %v2553 = vld [vmem:[%s2281 + $0x98] sm:$0xff]
        %v2554 = vld [vmem:[%s2281 + $0xa8] sm:$0xff]
        %v2555 = vld [vmem:[%s2281 + $0xb0] sm:$0xff]
        %v2556 = vpack.c.bf16 %v2541, %v2540
        %v2557 = vpack.c.bf16 %v2543, %v2542
        %v2558 = vpack.c.bf16 %v2545, %v2544
        %v2559 = vpack.c.bf16 %v2547, %v2546
        %v2560 = vpack.c.bf16 %v2549, %v2548
        %v2561 = vpack.c.bf16 %v2551, %v2550
        %v2562 = vpack.c.bf16 %v2553, %v2552
        %v2563 = vpack.c.bf16 %v2555, %v2554
        %v2564 = vld [vmem:[%s2281 + $0x1] sm:$0xff]
        %v2565 = vld [vmem:[%s2281 + $0x9] sm:$0xff]
        %v2566 = vld [vmem:[%s2281 + $0x19] sm:$0xff]
        %v2567 = vld [vmem:[%s2281 + $0x21] sm:$0xff]
        %v2568 = vld [vmem:[%s2281 + $0x31] sm:$0xff]
        %v2569 = vld [vmem:[%s2281 + $0x39] sm:$0xff]
        %v2570 = vld [vmem:[%s2281 + $0x49] sm:$0xff]
        %v2571 = vld [vmem:[%s2281 + $0x51] sm:$0xff]
        %v2572 = vld [vmem:[%s2281 + $0x61] sm:$0xff]
        %v2573 = vld [vmem:[%s2281 + $0x69] sm:$0xff]
        %v2574 = vld [vmem:[%s2281 + $0x79] sm:$0xff]
        %v2575 = vld [vmem:[%s2281 + $0x81] sm:$0xff]
        %v2576 = vld [vmem:[%s2281 + $0x91] sm:$0xff]
        %v2577 = vld [vmem:[%s2281 + $0x99] sm:$0xff]
        %v2578 = vld [vmem:[%s2281 + $0xa9] sm:$0xff]
        %v2579 = vld [vmem:[%s2281 + $0xb1] sm:$0xff]
        %v2580 = vpack.c.bf16 %v2565, %v2564
        %v2581 = vpack.c.bf16 %v2567, %v2566
        %v2582 = vpack.c.bf16 %v2569, %v2568
        %v2583 = vpack.c.bf16 %v2571, %v2570
        %v2584 = vpack.c.bf16 %v2573, %v2572
        %v2585 = vpack.c.bf16 %v2575, %v2574
        %v2586 = vpack.c.bf16 %v2577, %v2576
        %v2587 = vpack.c.bf16 %v2579, %v2578
        %v2588 = vld [vmem:[%s2281 + $0x2] sm:$0xff]
        %v2589 = vld [vmem:[%s2281 + $0xa] sm:$0xff]
        %v2590 = vld [vmem:[%s2281 + $0x1a] sm:$0xff]
        %v2591 = vld [vmem:[%s2281 + $0x22] sm:$0xff]
        %v2592 = vld [vmem:[%s2281 + $0x32] sm:$0xff]
        %v2593 = vld [vmem:[%s2281 + $0x3a] sm:$0xff]
        %v2594 = vld [vmem:[%s2281 + $0x4a] sm:$0xff]
        %v2595 = vld [vmem:[%s2281 + $0x52] sm:$0xff]
        %v2596 = vld [vmem:[%s2281 + $0x62] sm:$0xff]
        %v2597 = vld [vmem:[%s2281 + $0x6a] sm:$0xff]
        %v2598 = vld [vmem:[%s2281 + $0x7a] sm:$0xff]
        %v2599 = vld [vmem:[%s2281 + $0x82] sm:$0xff]
        %v2600 = vld [vmem:[%s2281 + $0x92] sm:$0xff]
        %v2601 = vld [vmem:[%s2281 + $0x9a] sm:$0xff]
        %v2602 = vld [vmem:[%s2281 + $0xaa] sm:$0xff]
        %v2603 = vld [vmem:[%s2281 + $0xb2] sm:$0xff]
        %v2604 = vpack.c.bf16 %v2589, %v2588
        %v2605 = vpack.c.bf16 %v2591, %v2590
        %v2606 = vpack.c.bf16 %v2593, %v2592
        %v2607 = vpack.c.bf16 %v2595, %v2594
        %v2608 = vpack.c.bf16 %v2597, %v2596
        %v2609 = vpack.c.bf16 %v2599, %v2598
        %v2610 = vpack.c.bf16 %v2601, %v2600
        %v2611 = vpack.c.bf16 %v2603, %v2602
        %v2612 = vld [vmem:[%s2281 + $0x3] sm:$0xff]
        %v2613 = vld [vmem:[%s2281 + $0xb] sm:$0xff]
        %v2614 = vld [vmem:[%s2281 + $0x1b] sm:$0xff]
        %v2615 = vld [vmem:[%s2281 + $0x23] sm:$0xff]
        %v2616 = vld [vmem:[%s2281 + $0x33] sm:$0xff]
        %v2617 = vld [vmem:[%s2281 + $0x3b] sm:$0xff]
        %v2618 = vld [vmem:[%s2281 + $0x4b] sm:$0xff]
        %v2619 = vld [vmem:[%s2281 + $0x53] sm:$0xff]
        %v2620 = vld [vmem:[%s2281 + $0x63] sm:$0xff]
        %v2621 = vld [vmem:[%s2281 + $0x6b] sm:$0xff]
        %v2622 = vld [vmem:[%s2281 + $0x7b] sm:$0xff]
        %v2623 = vld [vmem:[%s2281 + $0x83] sm:$0xff]
        %v2624 = vld [vmem:[%s2281 + $0x93] sm:$0xff]
        %v2625 = vld [vmem:[%s2281 + $0x9b] sm:$0xff]
        %v2626 = vld [vmem:[%s2281 + $0xab] sm:$0xff]
        %v2627 = vld [vmem:[%s2281 + $0xb3] sm:$0xff]
        %v2628 = vpack.c.bf16 %v2613, %v2612
        %v2629 = vpack.c.bf16 %v2615, %v2614
        %v2630 = vpack.c.bf16 %v2617, %v2616
        %v2631 = vpack.c.bf16 %v2619, %v2618
        %v2632 = vpack.c.bf16 %v2621, %v2620
        %v2633 = vpack.c.bf16 %v2623, %v2622
        %v2634 = vpack.c.bf16 %v2625, %v2624
        %v2635 = vpack.c.bf16 %v2627, %v2626
        %v2636 = vld [vmem:[%s2281 + $0x4] sm:$0xff]
        %v2637 = vld [vmem:[%s2281 + $0xc] sm:$0xff]
        %v2638 = vld [vmem:[%s2281 + $0x1c] sm:$0xff]
        %v2639 = vld [vmem:[%s2281 + $0x24] sm:$0xff]
        %v2640 = vld [vmem:[%s2281 + $0x34] sm:$0xff]
        %v2641 = vld [vmem:[%s2281 + $0x3c] sm:$0xff]
        %v2642 = vld [vmem:[%s2281 + $0x4c] sm:$0xff]
        %v2643 = vld [vmem:[%s2281 + $0x54] sm:$0xff]
        %v2644 = vld [vmem:[%s2281 + $0x64] sm:$0xff]
        %v2645 = vld [vmem:[%s2281 + $0x6c] sm:$0xff]
        %v2646 = vld [vmem:[%s2281 + $0x7c] sm:$0xff]
        %v2647 = vld [vmem:[%s2281 + $0x84] sm:$0xff]
        %v2648 = vld [vmem:[%s2281 + $0x94] sm:$0xff]
        %v2649 = vld [vmem:[%s2281 + $0x9c] sm:$0xff]
        %v2650 = vld [vmem:[%s2281 + $0xac] sm:$0xff]
        %v2651 = vld [vmem:[%s2281 + $0xb4] sm:$0xff]
        %v2652 = vpack.c.bf16 %v2637, %v2636
        %v2653 = vpack.c.bf16 %v2639, %v2638
        %v2654 = vpack.c.bf16 %v2641, %v2640
        %v2655 = vpack.c.bf16 %v2643, %v2642
        %v2656 = vpack.c.bf16 %v2645, %v2644
        %v2657 = vpack.c.bf16 %v2647, %v2646
        %v2658 = vpack.c.bf16 %v2649, %v2648
        %v2659 = vpack.c.bf16 %v2651, %v2650
        %s2660 = scalar_lea.vmem [#allocation2], 72
        %v2661 = vld [vmem:[%s2660] sm:$0xff]
        %v2662 = vld [vmem:[%s2660 + $0x8] sm:$0xff]
        %v2663 = vld [vmem:[%s2660 + $0x18] sm:$0xff]
        %v2664 = vld [vmem:[%s2660 + $0x20] sm:$0xff]
        %v2665 = vld [vmem:[%s2660 + $0x30] sm:$0xff]
        %v2666 = vld [vmem:[%s2660 + $0x38] sm:$0xff]
        %v2667 = vld [vmem:[%s2660 + $0x48] sm:$0xff]
        %v2668 = vld [vmem:[%s2660 + $0x50] sm:$0xff]
        %v2669 = vld [vmem:[%s2660 + $0x60] sm:$0xff]
        %v2670 = vld [vmem:[%s2660 + $0x68] sm:$0xff]
        %v2671 = vld [vmem:[%s2660 + $0x78] sm:$0xff]
        %v2672 = vld [vmem:[%s2660 + $0x80] sm:$0xff]
        %v2673 = vld [vmem:[%s2660 + $0x90] sm:$0xff]
        %v2674 = vld [vmem:[%s2660 + $0x98] sm:$0xff]
        %v2675 = vld [vmem:[%s2660 + $0xa8] sm:$0xff]
        %v2676 = vld [vmem:[%s2660 + $0xb0] sm:$0xff]
        %v2677 = vpack.c.bf16 %v2662, %v2661
        %v2678 = vpack.c.bf16 %v2664, %v2663
        %v2679 = vpack.c.bf16 %v2666, %v2665
        %v2680 = vpack.c.bf16 %v2668, %v2667
        %v2681 = vpack.c.bf16 %v2670, %v2669
        %v2682 = vpack.c.bf16 %v2672, %v2671
        %v2683 = vpack.c.bf16 %v2674, %v2673
        %v2684 = vpack.c.bf16 %v2676, %v2675
        %v2685 = vld [vmem:[%s2660 + $0x1] sm:$0xff]
        %v2686 = vld [vmem:[%s2660 + $0x9] sm:$0xff]
        %v2687 = vld [vmem:[%s2660 + $0x19] sm:$0xff]
        %v2688 = vld [vmem:[%s2660 + $0x21] sm:$0xff]
        %v2689 = vld [vmem:[%s2660 + $0x31] sm:$0xff]
        %v2690 = vld [vmem:[%s2660 + $0x39] sm:$0xff]
        %v2691 = vld [vmem:[%s2660 + $0x49] sm:$0xff]
        %v2692 = vld [vmem:[%s2660 + $0x51] sm:$0xff]
        %v2693 = vld [vmem:[%s2660 + $0x61] sm:$0xff]
        %v2694 = vld [vmem:[%s2660 + $0x69] sm:$0xff]
        %v2695 = vld [vmem:[%s2660 + $0x79] sm:$0xff]
        %v2696 = vld [vmem:[%s2660 + $0x81] sm:$0xff]
        %v2697 = vld [vmem:[%s2660 + $0x91] sm:$0xff]
        %v2698 = vld [vmem:[%s2660 + $0x99] sm:$0xff]
        %v2699 = vld [vmem:[%s2660 + $0xa9] sm:$0xff]
        %v2700 = vld [vmem:[%s2660 + $0xb1] sm:$0xff]
        %v2701 = vpack.c.bf16 %v2686, %v2685
        %v2702 = vpack.c.bf16 %v2688, %v2687
        %v2703 = vpack.c.bf16 %v2690, %v2689
        %v2704 = vpack.c.bf16 %v2692, %v2691
        %v2705 = vpack.c.bf16 %v2694, %v2693
        %v2706 = vpack.c.bf16 %v2696, %v2695
        %v2707 = vpack.c.bf16 %v2698, %v2697
        %v2708 = vpack.c.bf16 %v2700, %v2699
        %v2709 = vld [vmem:[%s2660 + $0x2] sm:$0xff]
        %v2710 = vld [vmem:[%s2660 + $0xa] sm:$0xff]
        %v2711 = vld [vmem:[%s2660 + $0x1a] sm:$0xff]
        %v2712 = vld [vmem:[%s2660 + $0x22] sm:$0xff]
        %v2713 = vld [vmem:[%s2660 + $0x32] sm:$0xff]
        %v2714 = vld [vmem:[%s2660 + $0x3a] sm:$0xff]
        %v2715 = vld [vmem:[%s2660 + $0x4a] sm:$0xff]
        %v2716 = vld [vmem:[%s2660 + $0x52] sm:$0xff]
        %v2717 = vld [vmem:[%s2660 + $0x62] sm:$0xff]
        %v2718 = vld [vmem:[%s2660 + $0x6a] sm:$0xff]
        %v2719 = vld [vmem:[%s2660 + $0x7a] sm:$0xff]
        %v2720 = vld [vmem:[%s2660 + $0x82] sm:$0xff]
        %v2721 = vld [vmem:[%s2660 + $0x92] sm:$0xff]
        %v2722 = vld [vmem:[%s2660 + $0x9a] sm:$0xff]
        %v2723 = vld [vmem:[%s2660 + $0xaa] sm:$0xff]
        %v2724 = vld [vmem:[%s2660 + $0xb2] sm:$0xff]
        %v2725 = vpack.c.bf16 %v2710, %v2709
        %v2726 = vpack.c.bf16 %v2712, %v2711
        %v2727 = vpack.c.bf16 %v2714, %v2713
        %v2728 = vpack.c.bf16 %v2716, %v2715
        %v2729 = vpack.c.bf16 %v2718, %v2717
        %v2730 = vpack.c.bf16 %v2720, %v2719
        %v2731 = vpack.c.bf16 %v2722, %v2721
        %v2732 = vpack.c.bf16 %v2724, %v2723
        %v2733 = vld [vmem:[%s2660 + $0x3] sm:$0xff]
        %v2734 = vld [vmem:[%s2660 + $0xb] sm:$0xff]
        %v2735 = vld [vmem:[%s2660 + $0x1b] sm:$0xff]
        %v2736 = vld [vmem:[%s2660 + $0x23] sm:$0xff]
        %v2737 = vld [vmem:[%s2660 + $0x33] sm:$0xff]
        %v2738 = vld [vmem:[%s2660 + $0x3b] sm:$0xff]
        %v2739 = vld [vmem:[%s2660 + $0x4b] sm:$0xff]
        %v2740 = vld [vmem:[%s2660 + $0x53] sm:$0xff]
        %v2741 = vld [vmem:[%s2660 + $0x63] sm:$0xff]
        %v2742 = vld [vmem:[%s2660 + $0x6b] sm:$0xff]
        %v2743 = vld [vmem:[%s2660 + $0x7b] sm:$0xff]
        %v2744 = vld [vmem:[%s2660 + $0x83] sm:$0xff]
        %v2745 = vld [vmem:[%s2660 + $0x93] sm:$0xff]
        %v2746 = vld [vmem:[%s2660 + $0x9b] sm:$0xff]
        %v2747 = vld [vmem:[%s2660 + $0xab] sm:$0xff]
        %v2748 = vld [vmem:[%s2660 + $0xb3] sm:$0xff]
        %v2749 = vpack.c.bf16 %v2734, %v2733
        %v2750 = vpack.c.bf16 %v2736, %v2735
        %v2751 = vpack.c.bf16 %v2738, %v2737
        %v2752 = vpack.c.bf16 %v2740, %v2739
        %v2753 = vpack.c.bf16 %v2742, %v2741
        %v2754 = vpack.c.bf16 %v2744, %v2743
        %v2755 = vpack.c.bf16 %v2746, %v2745
        %v2756 = vpack.c.bf16 %v2748, %v2747
        %v2757 = vld [vmem:[%s2660 + $0x4] sm:$0xff]
        %v2758 = vld [vmem:[%s2660 + $0xc] sm:$0xff]
        %v2759 = vld [vmem:[%s2660 + $0x1c] sm:$0xff]
        %v2760 = vld [vmem:[%s2660 + $0x24] sm:$0xff]
        %v2761 = vld [vmem:[%s2660 + $0x34] sm:$0xff]
        %v2762 = vld [vmem:[%s2660 + $0x3c] sm:$0xff]
        %v2763 = vld [vmem:[%s2660 + $0x4c] sm:$0xff]
        %v2764 = vld [vmem:[%s2660 + $0x54] sm:$0xff]
        %v2765 = vld [vmem:[%s2660 + $0x64] sm:$0xff]
        %v2766 = vld [vmem:[%s2660 + $0x6c] sm:$0xff]
        %v2767 = vld [vmem:[%s2660 + $0x7c] sm:$0xff]
        %v2768 = vld [vmem:[%s2660 + $0x84] sm:$0xff]
        %v2769 = vld [vmem:[%s2660 + $0x94] sm:$0xff]
        %v2770 = vld [vmem:[%s2660 + $0x9c] sm:$0xff]
        %v2771 = vld [vmem:[%s2660 + $0xac] sm:$0xff]
        %v2772 = vld [vmem:[%s2660 + $0xb4] sm:$0xff]
        %v2773 = vpack.c.bf16 %v2758, %v2757
        %v2774 = vpack.c.bf16 %v2760, %v2759
        %v2775 = vpack.c.bf16 %v2762, %v2761
        %v2776 = vpack.c.bf16 %v2764, %v2763
        %v2777 = vpack.c.bf16 %v2766, %v2765
        %v2778 = vpack.c.bf16 %v2768, %v2767
        %v2779 = vpack.c.bf16 %v2770, %v2769
        %v2780 = vpack.c.bf16 %v2772, %v2771
        %s2781 = scalar_lea.vmem [#allocation2], 96
        %v2782 = vld [vmem:[%s2781] sm:$0xff]
        %v2783 = vld [vmem:[%s2781 + $0x8] sm:$0xff]
        %v2784 = vld [vmem:[%s2781 + $0x18] sm:$0xff]
        %v2785 = vld [vmem:[%s2781 + $0x20] sm:$0xff]
        %v2786 = vld [vmem:[%s2781 + $0x30] sm:$0xff]
        %v2787 = vld [vmem:[%s2781 + $0x38] sm:$0xff]
        %v2788 = vld [vmem:[%s2781 + $0x48] sm:$0xff]
        %v2789 = vld [vmem:[%s2781 + $0x50] sm:$0xff]
        %v2790 = vld [vmem:[%s2781 + $0x60] sm:$0xff]
        %v2791 = vld [vmem:[%s2781 + $0x68] sm:$0xff]
        %v2792 = vld [vmem:[%s2781 + $0x78] sm:$0xff]
        %v2793 = vld [vmem:[%s2781 + $0x80] sm:$0xff]
        %v2794 = vld [vmem:[%s2781 + $0x90] sm:$0xff]
        %v2795 = vld [vmem:[%s2781 + $0x98] sm:$0xff]
        %v2796 = vld [vmem:[%s2781 + $0xa8] sm:$0xff]
        %v2797 = vld [vmem:[%s2781 + $0xb0] sm:$0xff]
        %v2798 = vpack.c.bf16 %v2783, %v2782
        %v2799 = vpack.c.bf16 %v2785, %v2784
        %v2800 = vpack.c.bf16 %v2787, %v2786
        %v2801 = vpack.c.bf16 %v2789, %v2788
        %v2802 = vpack.c.bf16 %v2791, %v2790
        %v2803 = vpack.c.bf16 %v2793, %v2792
        %v2804 = vpack.c.bf16 %v2795, %v2794
        %v2805 = vpack.c.bf16 %v2797, %v2796
        %v2806 = vld [vmem:[%s2781 + $0x1] sm:$0xff]
        %v2807 = vld [vmem:[%s2781 + $0x9] sm:$0xff]
        %v2808 = vld [vmem:[%s2781 + $0x19] sm:$0xff]
        %v2809 = vld [vmem:[%s2781 + $0x21] sm:$0xff]
        %v2810 = vld [vmem:[%s2781 + $0x31] sm:$0xff]
        %v2811 = vld [vmem:[%s2781 + $0x39] sm:$0xff]
        %v2812 = vld [vmem:[%s2781 + $0x49] sm:$0xff]
        %v2813 = vld [vmem:[%s2781 + $0x51] sm:$0xff]
        %v2814 = vld [vmem:[%s2781 + $0x61] sm:$0xff]
        %v2815 = vld [vmem:[%s2781 + $0x69] sm:$0xff]
        %v2816 = vld [vmem:[%s2781 + $0x79] sm:$0xff]
        %v2817 = vld [vmem:[%s2781 + $0x81] sm:$0xff]
        %v2818 = vld [vmem:[%s2781 + $0x91] sm:$0xff]
        %v2819 = vld [vmem:[%s2781 + $0x99] sm:$0xff]
        %v2820 = vld [vmem:[%s2781 + $0xa9] sm:$0xff]
        %v2821 = vld [vmem:[%s2781 + $0xb1] sm:$0xff]
        %v2822 = vpack.c.bf16 %v2807, %v2806
        %v2823 = vpack.c.bf16 %v2809, %v2808
        %v2824 = vpack.c.bf16 %v2811, %v2810
        %v2825 = vpack.c.bf16 %v2813, %v2812
        %v2826 = vpack.c.bf16 %v2815, %v2814
        %v2827 = vpack.c.bf16 %v2817, %v2816
        %v2828 = vpack.c.bf16 %v2819, %v2818
        %v2829 = vpack.c.bf16 %v2821, %v2820
        %v2830 = vld [vmem:[%s2781 + $0x2] sm:$0xff]
        %v2831 = vld [vmem:[%s2781 + $0xa] sm:$0xff]
        %v2832 = vld [vmem:[%s2781 + $0x1a] sm:$0xff]
        %v2833 = vld [vmem:[%s2781 + $0x22] sm:$0xff]
        %v2834 = vld [vmem:[%s2781 + $0x32] sm:$0xff]
        %v2835 = vld [vmem:[%s2781 + $0x3a] sm:$0xff]
        %v2836 = vld [vmem:[%s2781 + $0x4a] sm:$0xff]
        %v2837 = vld [vmem:[%s2781 + $0x52] sm:$0xff]
        %v2838 = vld [vmem:[%s2781 + $0x62] sm:$0xff]
        %v2839 = vld [vmem:[%s2781 + $0x6a] sm:$0xff]
        %v2840 = vld [vmem:[%s2781 + $0x7a] sm:$0xff]
        %v2841 = vld [vmem:[%s2781 + $0x82] sm:$0xff]
        %v2842 = vld [vmem:[%s2781 + $0x92] sm:$0xff]
        %v2843 = vld [vmem:[%s2781 + $0x9a] sm:$0xff]
        %v2844 = vld [vmem:[%s2781 + $0xaa] sm:$0xff]
        %v2845 = vld [vmem:[%s2781 + $0xb2] sm:$0xff]
        %v2846 = vpack.c.bf16 %v2831, %v2830
        %v2847 = vpack.c.bf16 %v2833, %v2832
        %v2848 = vpack.c.bf16 %v2835, %v2834
        %v2849 = vpack.c.bf16 %v2837, %v2836
        %v2850 = vpack.c.bf16 %v2839, %v2838
        %v2851 = vpack.c.bf16 %v2841, %v2840
        %v2852 = vpack.c.bf16 %v2843, %v2842
        %v2853 = vpack.c.bf16 %v2845, %v2844
        %v2854 = vld [vmem:[%s2781 + $0x3] sm:$0xff]
        %v2855 = vld [vmem:[%s2781 + $0xb] sm:$0xff]
        %v2856 = vld [vmem:[%s2781 + $0x1b] sm:$0xff]
        %v2857 = vld [vmem:[%s2781 + $0x23] sm:$0xff]
        %v2858 = vld [vmem:[%s2781 + $0x33] sm:$0xff]
        %v2859 = vld [vmem:[%s2781 + $0x3b] sm:$0xff]
        %v2860 = vld [vmem:[%s2781 + $0x4b] sm:$0xff]
        %v2861 = vld [vmem:[%s2781 + $0x53] sm:$0xff]
        %v2862 = vld [vmem:[%s2781 + $0x63] sm:$0xff]
        %v2863 = vld [vmem:[%s2781 + $0x6b] sm:$0xff]
        %v2864 = vld [vmem:[%s2781 + $0x7b] sm:$0xff]
        %v2865 = vld [vmem:[%s2781 + $0x83] sm:$0xff]
        %v2866 = vld [vmem:[%s2781 + $0x93] sm:$0xff]
        %v2867 = vld [vmem:[%s2781 + $0x9b] sm:$0xff]
        %v2868 = vld [vmem:[%s2781 + $0xab] sm:$0xff]
        %v2869 = vld [vmem:[%s2781 + $0xb3] sm:$0xff]
        %v2870 = vpack.c.bf16 %v2855, %v2854
        %v2871 = vpack.c.bf16 %v2857, %v2856
        %v2872 = vpack.c.bf16 %v2859, %v2858
        %v2873 = vpack.c.bf16 %v2861, %v2860
        %v2874 = vpack.c.bf16 %v2863, %v2862
        %v2875 = vpack.c.bf16 %v2865, %v2864
        %v2876 = vpack.c.bf16 %v2867, %v2866
        %v2877 = vpack.c.bf16 %v2869, %v2868
        %v2878 = vld [vmem:[%s2781 + $0x4] sm:$0xff]
        %v2879 = vld [vmem:[%s2781 + $0xc] sm:$0xff]
        %v2880 = vld [vmem:[%s2781 + $0x1c] sm:$0xff]
        %v2881 = vld [vmem:[%s2781 + $0x24] sm:$0xff]
        %v2882 = vld [vmem:[%s2781 + $0x34] sm:$0xff]
        %v2883 = vld [vmem:[%s2781 + $0x3c] sm:$0xff]
        %v2884 = vld [vmem:[%s2781 + $0x4c] sm:$0xff]
        %v2885 = vld [vmem:[%s2781 + $0x54] sm:$0xff]
        %v2886 = vld [vmem:[%s2781 + $0x64] sm:$0xff]
        %v2887 = vld [vmem:[%s2781 + $0x6c] sm:$0xff]
        %v2888 = vld [vmem:[%s2781 + $0x7c] sm:$0xff]
        %v2889 = vld [vmem:[%s2781 + $0x84] sm:$0xff]
        %v2890 = vld [vmem:[%s2781 + $0x94] sm:$0xff]
        %v2891 = vld [vmem:[%s2781 + $0x9c] sm:$0xff]
        %v2892 = vld [vmem:[%s2781 + $0xac] sm:$0xff]
        %v2893 = vld [vmem:[%s2781 + $0xb4] sm:$0xff]
        %v2894 = vpack.c.bf16 %v2879, %v2878
        %v2895 = vpack.c.bf16 %v2881, %v2880
        %v2896 = vpack.c.bf16 %v2883, %v2882
        %v2897 = vpack.c.bf16 %v2885, %v2884
        %v2898 = vpack.c.bf16 %v2887, %v2886
        %v2899 = vpack.c.bf16 %v2889, %v2888
        %v2900 = vpack.c.bf16 %v2891, %v2890
        %v2901 = vpack.c.bf16 %v2893, %v2892
        %v2902 = vld [vmem:[%s2] sm:$0xf]
        %v2903 = vld [vmem:[%s2 + $0x4] sm:$0xf]
        %v2904 = vld [vmem:[%s2 + $0x8] sm:$0xf]
        %v2905 = vld [vmem:[%s2 + $0xc] sm:$0xf]
        %v2906 = vld [vmem:[%s2 + $0x10] sm:$0xf]
        %v2907 = vld [vmem:[%s2 + $0x14] sm:$0xf]
        %v2908 = vld [vmem:[%s2 + $0x18] sm:$0xf]
        %v2909 = vld [vmem:[%s2 + $0x1c] sm:$0xf]
        %v2910 = vld [vmem:[%s2 + $0x20] sm:$0xf]
        %v2911 = vld [vmem:[%s2 + $0x24] sm:$0xf]
        %v2912 = vld [vmem:[%s2 + $0x28] sm:$0xf]
        %v2913 = vld [vmem:[%s2 + $0x2c] sm:$0xf]
        %v2914 = vld [vmem:[%s2 + $0x30] sm:$0xf]
        %v2915 = vld [vmem:[%s2 + $0x34] sm:$0xf]
        %v2916 = vld [vmem:[%s2 + $0x38] sm:$0xf]
        %v2917 = vld [vmem:[%s2 + $0x3c] sm:$0xf]
        %v2918 = vld [vmem:[%s2 + $0x40] sm:$0xf]
        %v2919 = vld [vmem:[%s2 + $0x44] sm:$0xf]
        %v2920 = vld [vmem:[%s2 + $0x48] sm:$0xf]
        %v2921 = vld [vmem:[%s2 + $0x4c] sm:$0xf]
        %v2922 = vld [vmem:[%s2 + $0x50] sm:$0xf]
        %v2923 = vld [vmem:[%s2 + $0x54] sm:$0xf]
        %v2924 = vld [vmem:[%s2 + $0x58] sm:$0xf]
        %v2925 = vld [vmem:[%s2 + $0x5c] sm:$0xf]
        %v2926 = vld [vmem:[%s2 + $0x60] sm:$0xf]
        %v2927 = vld [vmem:[%s2 + $0x64] sm:$0xf]
        %v2928 = vld [vmem:[%s2 + $0x68] sm:$0xf]
        %v2929 = vld [vmem:[%s2 + $0x6c] sm:$0xf]
        %v2930 = vld [vmem:[%s2 + $0x70] sm:$0xf]
        %v2931 = vld [vmem:[%s2 + $0x74] sm:$0xf]
        %v2932 = vld [vmem:[%s2 + $0x78] sm:$0xf]
        %v2933 = vld [vmem:[%s2 + $0x7c] sm:$0xf]
        %v2934 = vld [vmem:[%s2 + $0x80] sm:$0xf]
        %v2935 = vld [vmem:[%s2 + $0x84] sm:$0xf]
        %v2936 = vld [vmem:[%s2 + $0x88] sm:$0xf]
        %v2937 = vld [vmem:[%s2 + $0x8c] sm:$0xf]
        %v2938 = vld [vmem:[%s2 + $0x90] sm:$0xf]
        %v2939 = vld [vmem:[%s2 + $0x94] sm:$0xf]
        %v2940 = vld [vmem:[%s2 + $0x98] sm:$0xf]
        %v2941 = vld [vmem:[%s2 + $0x9c] sm:$0xf]
        %v2942 = vld [vmem:[%s2 + $0xa0] sm:$0xf]
        %v2943 = vld [vmem:[%s2 + $0xa4] sm:$0xf]
        %v2944 = vld [vmem:[%s2 + $0xa8] sm:$0xf]
        %v2945 = vld [vmem:[%s2 + $0xac] sm:$0xf]
        %v2946 = vld [vmem:[%s2 + $0xb0] sm:$0xf]
        %v2947 = vld [vmem:[%s2 + $0xb4] sm:$0xf]
        %v2948 = vld [vmem:[%s2 + $0xb8] sm:$0xf]
        %v2949 = vld [vmem:[%s2 + $0xbc] sm:$0xf]
        %v2950 = vld [vmem:[%s2 + $0xc0] sm:$0xf]
        %v2951 = vld [vmem:[%s2 + $0xc4] sm:$0xf]
        %v2952 = vld [vmem:[%s2 + $0xc8] sm:$0xf]
        %v2953 = vld [vmem:[%s2 + $0xcc] sm:$0xf]
        %v2954 = vld [vmem:[%s2 + $0xd0] sm:$0xf]
        %v2955 = vld [vmem:[%s2 + $0xd4] sm:$0xf]
        %v2956 = vld [vmem:[%s2 + $0xd8] sm:$0xf]
        %v2957 = vld [vmem:[%s2 + $0xdc] sm:$0xf]
        %v2958 = vld [vmem:[%s2 + $0xe0] sm:$0xf]
        %v2959 = vld [vmem:[%s2 + $0xe4] sm:$0xf]
        %v2960 = vld [vmem:[%s2 + $0xe8] sm:$0xf]
        %v2961 = vld [vmem:[%s2 + $0xec] sm:$0xf]
        %v2962 = vld [vmem:[%s2 + $0xf0] sm:$0xf]
        %v2963 = vld [vmem:[%s2 + $0xf4] sm:$0xf]
        %v2964 = vld [vmem:[%s2 + $0xf8] sm:$0xf]
        %v2965 = vld [vmem:[%s2 + $0xfc] sm:$0xf]
        %v2966 = vld [vmem:[%s2 + $0x100] sm:$0xf]
        %v2967 = vld [vmem:[%s2 + $0x104] sm:$0xf]
        %v2968 = vld [vmem:[%s2 + $0x108] sm:$0xf]
        %v2969 = vld [vmem:[%s2 + $0x10c] sm:$0xf]
        %v2970 = vld [vmem:[%s2 + $0x110] sm:$0xf]
        %v2971 = vld [vmem:[%s2 + $0x114] sm:$0xf]
        %v2972 = vld [vmem:[%s2 + $0x118] sm:$0xf]
        %v2973 = vld [vmem:[%s2 + $0x11c] sm:$0xf]
        %v2974 = vld [vmem:[%s2 + $0x120] sm:$0xf]
        %v2975 = vld [vmem:[%s2 + $0x124] sm:$0xf]
        %v2976 = vld [vmem:[%s2 + $0x128] sm:$0xf]
        %v2977 = vld [vmem:[%s2 + $0x12c] sm:$0xf]
        %v2978 = vld [vmem:[%s2 + $0x130] sm:$0xf]
        %v2979 = vld [vmem:[%s2 + $0x134] sm:$0xf]
        %v2980 = vld [vmem:[%s2 + $0x138] sm:$0xf]
        %v2981 = vld [vmem:[%s2 + $0x13c] sm:$0xf]
        %v2982 = vld [vmem:[%s2 + $0x140] sm:$0xf]
        %v2983 = vld [vmem:[%s2 + $0x144] sm:$0xf]
        %v2984 = vld [vmem:[%s2 + $0x148] sm:$0xf]
        %v2985 = vld [vmem:[%s2 + $0x14c] sm:$0xf]
        %v2986 = vld [vmem:[%s2 + $0x150] sm:$0xf]
        %v2987 = vld [vmem:[%s2 + $0x154] sm:$0xf]
        %v2988 = vld [vmem:[%s2 + $0x158] sm:$0xf]
        %v2989 = vld [vmem:[%s2 + $0x15c] sm:$0xf]
        %v2990 = vld [vmem:[%s2 + $0x160] sm:$0xf]
        %v2991 = vld [vmem:[%s2 + $0x164] sm:$0xf]
        %v2992 = vld [vmem:[%s2 + $0x168] sm:$0xf]
        %v2993 = vld [vmem:[%s2 + $0x16c] sm:$0xf]
        %v2994 = vld [vmem:[%s2 + $0x170] sm:$0xf]
        %v2995 = vld [vmem:[%s2 + $0x174] sm:$0xf]
        %v2996 = vld [vmem:[%s2 + $0x178] sm:$0xf]
        %v2997 = vld [vmem:[%s2 + $0x17c] sm:$0xf]
        %v2998 = vld [vmem:[%s2 + $0x180] sm:$0xf]
        %v2999 = vld [vmem:[%s2 + $0x184] sm:$0xf]
        %v3000 = vld [vmem:[%s2 + $0x188] sm:$0xf]
        %v3001 = vld [vmem:[%s2 + $0x18c] sm:$0xf]
        %v3002 = vld [vmem:[%s2 + $0x190] sm:$0xf]
        %v3003 = vld [vmem:[%s2 + $0x194] sm:$0xf]
        %v3004 = vld [vmem:[%s2 + $0x198] sm:$0xf]
        %v3005 = vld [vmem:[%s2 + $0x19c] sm:$0xf]
        %v3006 = vld [vmem:[%s2 + $0x1a0] sm:$0xf]
        %v3007 = vld [vmem:[%s2 + $0x1a4] sm:$0xf]
        %v3008 = vld [vmem:[%s2 + $0x1a8] sm:$0xf]
        %v3009 = vld [vmem:[%s2 + $0x1ac] sm:$0xf]
        %v3010 = vld [vmem:[%s2 + $0x1b0] sm:$0xf]
        %v3011 = vld [vmem:[%s2 + $0x1b4] sm:$0xf]
        %v3012 = vld [vmem:[%s2 + $0x1b8] sm:$0xf]
        %v3013 = vld [vmem:[%s2 + $0x1bc] sm:$0xf]
        %v3014 = vld [vmem:[%s2 + $0x1c0] sm:$0xf]
        %v3015 = vld [vmem:[%s2 + $0x1c4] sm:$0xf]
        %v3016 = vld [vmem:[%s2 + $0x1c8] sm:$0xf]
        %v3017 = vld [vmem:[%s2 + $0x1cc] sm:$0xf]
        %v3018 = vld [vmem:[%s2 + $0x1d0] sm:$0xf]
        %v3019 = vld [vmem:[%s2 + $0x1d4] sm:$0xf]
        %v3020 = vld [vmem:[%s2 + $0x1d8] sm:$0xf]
        %v3021 = vld [vmem:[%s2 + $0x1dc] sm:$0xf]
        %v3022 = vld [vmem:[%s2 + $0x1e0] sm:$0xf]
        %v3023 = vld [vmem:[%s2 + $0x1e4] sm:$0xf]
        %v3024 = vld [vmem:[%s2 + $0x1e8] sm:$0xf]
        %v3025 = vld [vmem:[%s2 + $0x1ec] sm:$0xf]
        %v3026 = vld [vmem:[%s2 + $0x1f0] sm:$0xf]
        %v3027 = vld [vmem:[%s2 + $0x1f4] sm:$0xf]
        %v3028 = vld [vmem:[%s2 + $0x1f8] sm:$0xf]
        %v3029 = vld [vmem:[%s2 + $0x1fc] sm:$0xf]
        %v3030 = vld [vmem:[%s2 + $0x200] sm:$0xf]
        %v3031 = vld [vmem:[%s2 + $0x204] sm:$0xf]
        %v3032 = vld [vmem:[%s2 + $0x208] sm:$0xf]
        %v3033 = vld [vmem:[%s2 + $0x20c] sm:$0xf]
        %v3034 = vld [vmem:[%s2 + $0x210] sm:$0xf]
        %v3035 = vld [vmem:[%s2 + $0x214] sm:$0xf]
        %v3036 = vld [vmem:[%s2 + $0x218] sm:$0xf]
        %v3037 = vld [vmem:[%s2 + $0x21c] sm:$0xf]
        %v3038 = vld [vmem:[%s2 + $0x220] sm:$0xf]
        %v3039 = vld [vmem:[%s2 + $0x224] sm:$0xf]
        %v3040 = vld [vmem:[%s2 + $0x228] sm:$0xf]
        %v3041 = vld [vmem:[%s2 + $0x22c] sm:$0xf]
        %v3042 = vld [vmem:[%s2 + $0x230] sm:$0xf]
        %v3043 = vld [vmem:[%s2 + $0x234] sm:$0xf]
        %v3044 = vld [vmem:[%s2 + $0x238] sm:$0xf]
        %v3045 = vld [vmem:[%s2 + $0x23c] sm:$0xf]
        %v3046 = vld [vmem:[%s2 + $0x240] sm:$0xf]
        %v3047 = vld [vmem:[%s2 + $0x244] sm:$0xf]
        %v3048 = vld [vmem:[%s2 + $0x248] sm:$0xf]
        %v3049 = vld [vmem:[%s2 + $0x24c] sm:$0xf]
        %v3050 = vld [vmem:[%s2 + $0x250] sm:$0xf]
        %v3051 = vld [vmem:[%s2 + $0x254] sm:$0xf]
        %v3052 = vld [vmem:[%s2 + $0x258] sm:$0xf]
        %v3053 = vld [vmem:[%s2 + $0x25c] sm:$0xf]
        %v3054 = vld [vmem:[%s2 + $0x260] sm:$0xf]
        %v3055 = vld [vmem:[%s2 + $0x264] sm:$0xf]
        %v3056 = vld [vmem:[%s2 + $0x268] sm:$0xf]
        %v3057 = vld [vmem:[%s2 + $0x26c] sm:$0xf]
        %v3058 = vld [vmem:[%s2 + $0x270] sm:$0xf]
        %v3059 = vld [vmem:[%s2 + $0x274] sm:$0xf]
        %v3060 = vld [vmem:[%s2 + $0x278] sm:$0xf]
        %v3061 = vld [vmem:[%s2 + $0x27c] sm:$0xf]
        %v3062 = vld [vmem:[%s2 + $0x280] sm:$0xf]
        %v3063 = vld [vmem:[%s2 + $0x284] sm:$0xf]
        %v3064 = vld [vmem:[%s2 + $0x288] sm:$0xf]
        %v3065 = vld [vmem:[%s2 + $0x28c] sm:$0xf]
        %v3066 = vld [vmem:[%s2 + $0x290] sm:$0xf]
        %v3067 = vld [vmem:[%s2 + $0x294] sm:$0xf]
        %v3068 = vld [vmem:[%s2 + $0x298] sm:$0xf]
        %v3069 = vld [vmem:[%s2 + $0x29c] sm:$0xf]
        %v3070 = vld [vmem:[%s2 + $0x2a0] sm:$0xf]
        %v3071 = vld [vmem:[%s2 + $0x2a4] sm:$0xf]
        %v3072 = vld [vmem:[%s2 + $0x2a8] sm:$0xf]
        %v3073 = vld [vmem:[%s2 + $0x2ac] sm:$0xf]
        %v3074 = vld [vmem:[%s2 + $0x2b0] sm:$0xf]
        %v3075 = vld [vmem:[%s2 + $0x2b4] sm:$0xf]
        %v3076 = vld [vmem:[%s2 + $0x2b8] sm:$0xf]
        %v3077 = vld [vmem:[%s2 + $0x2bc] sm:$0xf]
        %v3078 = vld [vmem:[%s2 + $0x2c0] sm:$0xf]
        %v3079 = vld [vmem:[%s2 + $0x2c4] sm:$0xf]
        %v3080 = vld [vmem:[%s2 + $0x2c8] sm:$0xf]
        %v3081 = vld [vmem:[%s2 + $0x2cc] sm:$0xf]
        %v3082 = vld [vmem:[%s2 + $0x2d0] sm:$0xf]
        %v3083 = vld [vmem:[%s2 + $0x2d4] sm:$0xf]
        %v3084 = vld [vmem:[%s2 + $0x2d8] sm:$0xf]
        %v3085 = vld [vmem:[%s2 + $0x2dc] sm:$0xf]
        %v3086 = vld [vmem:[%s2 + $0x2e0] sm:$0xf]
        %v3087 = vld [vmem:[%s2 + $0x2e4] sm:$0xf]
        %v3088 = vld [vmem:[%s2 + $0x2e8] sm:$0xf]
        %v3089 = vld [vmem:[%s2 + $0x2ec] sm:$0xf]
        %v3090 = vld [vmem:[%s2 + $0x2f0] sm:$0xf]
        %v3091 = vld [vmem:[%s2 + $0x2f4] sm:$0xf]
        %v3092 = vld [vmem:[%s2 + $0x2f8] sm:$0xf]
        %v3093 = vld [vmem:[%s2 + $0x2fc] sm:$0xf]
        %v3094 = vld [vmem:[%s2 + $0x300] sm:$0xf]
        %v3095 = vld [vmem:[%s2 + $0x304] sm:$0xf]
        %v3096 = vld [vmem:[%s2 + $0x308] sm:$0xf]
        %v3097 = vld [vmem:[%s2 + $0x30c] sm:$0xf]
        %v3098 = vld [vmem:[%s2 + $0x310] sm:$0xf]
        %v3099 = vld [vmem:[%s2 + $0x314] sm:$0xf]
        %v3100 = vld [vmem:[%s2 + $0x318] sm:$0xf]
        %v3101 = vld [vmem:[%s2 + $0x31c] sm:$0xf]
        %v3102 = vld [vmem:[%s2 + $0x320] sm:$0xf]
        %v3103 = vld [vmem:[%s2 + $0x324] sm:$0xf]
        %v3104 = vld [vmem:[%s2 + $0x328] sm:$0xf]
        %v3105 = vld [vmem:[%s2 + $0x32c] sm:$0xf]
        %v3106 = vld [vmem:[%s2 + $0x330] sm:$0xf]
        %v3107 = vld [vmem:[%s2 + $0x334] sm:$0xf]
        %v3108 = vld [vmem:[%s2 + $0x338] sm:$0xf]
        %v3109 = vld [vmem:[%s2 + $0x33c] sm:$0xf]
        %v3110 = vld [vmem:[%s2 + $0x340] sm:$0xf]
        %v3111 = vld [vmem:[%s2 + $0x344] sm:$0xf]
        %v3112 = vld [vmem:[%s2 + $0x348] sm:$0xf]
        %v3113 = vld [vmem:[%s2 + $0x34c] sm:$0xf]
        %v3114 = vld [vmem:[%s2 + $0x350] sm:$0xf]
        %v3115 = vld [vmem:[%s2 + $0x354] sm:$0xf]
        %v3116 = vld [vmem:[%s2 + $0x358] sm:$0xf]
        %v3117 = vld [vmem:[%s2 + $0x35c] sm:$0xf]
        %v3118 = vld [vmem:[%s2 + $0x360] sm:$0xf]
        %v3119 = vld [vmem:[%s2 + $0x364] sm:$0xf]
        %v3120 = vld [vmem:[%s2 + $0x368] sm:$0xf]
        %v3121 = vld [vmem:[%s2 + $0x36c] sm:$0xf]
        %v3122 = vld [vmem:[%s2 + $0x370] sm:$0xf]
        %v3123 = vld [vmem:[%s2 + $0x374] sm:$0xf]
        %v3124 = vld [vmem:[%s2 + $0x378] sm:$0xf]
        %v3125 = vld [vmem:[%s2 + $0x37c] sm:$0xf]
        %v3126 = vld [vmem:[%s2 + $0x380] sm:$0xf]
        %v3127 = vld [vmem:[%s2 + $0x384] sm:$0xf]
        %v3128 = vld [vmem:[%s2 + $0x388] sm:$0xf]
        %v3129 = vld [vmem:[%s2 + $0x38c] sm:$0xf]
        %v3130 = vld [vmem:[%s2 + $0x390] sm:$0xf]
        %v3131 = vld [vmem:[%s2 + $0x394] sm:$0xf]
        %v3132 = vld [vmem:[%s2 + $0x398] sm:$0xf]
        %v3133 = vld [vmem:[%s2 + $0x39c] sm:$0xf]
        %v3134 = vld [vmem:[%s2 + $0x3a0] sm:$0xf]
        %v3135 = vld [vmem:[%s2 + $0x3a4] sm:$0xf]
        %v3136 = vld [vmem:[%s2 + $0x3a8] sm:$0xf]
        %v3137 = vld [vmem:[%s2 + $0x3ac] sm:$0xf]
        %v3138 = vld [vmem:[%s2 + $0x3b0] sm:$0xf]
        %v3139 = vld [vmem:[%s2 + $0x3b4] sm:$0xf]
        %v3140 = vld [vmem:[%s2 + $0x3b8] sm:$0xf]
        %v3141 = vld [vmem:[%s2 + $0x3bc] sm:$0xf]
        %v3142 = vld [vmem:[%s2 + $0x3c0] sm:$0xf]
        %v3143 = vld [vmem:[%s2 + $0x3c4] sm:$0xf]
        %v3144 = vld [vmem:[%s2 + $0x3c8] sm:$0xf]
        %v3145 = vld [vmem:[%s2 + $0x3cc] sm:$0xf]
        %v3146 = vld [vmem:[%s2 + $0x3d0] sm:$0xf]
        %v3147 = vld [vmem:[%s2 + $0x3d4] sm:$0xf]
        %v3148 = vld [vmem:[%s2 + $0x3d8] sm:$0xf]
        %v3149 = vld [vmem:[%s2 + $0x3dc] sm:$0xf]
        %v3150 = vld [vmem:[%s2 + $0x3e0] sm:$0xf]
        %v3151 = vld [vmem:[%s2 + $0x3e4] sm:$0xf]
        %v3152 = vld [vmem:[%s2 + $0x3e8] sm:$0xf]
        %v3153 = vld [vmem:[%s2 + $0x3ec] sm:$0xf]
        %v3154 = vld [vmem:[%s2 + $0x3f0] sm:$0xf]
        %v3155 = vld [vmem:[%s2 + $0x3f4] sm:$0xf]
        %v3156 = vld [vmem:[%s2 + $0x3f8] sm:$0xf]
        %v3157 = vld [vmem:[%s2 + $0x3fc] sm:$0xf]
        %v3158 = vld [vmem:[%s2 + $0x400] sm:$0xf]
        %v3159 = vld [vmem:[%s2 + $0x404] sm:$0xf]
        %v3160 = vld [vmem:[%s2 + $0x408] sm:$0xf]
        %v3161 = vld [vmem:[%s2 + $0x40c] sm:$0xf]
        %v3162 = vld [vmem:[%s2 + $0x410] sm:$0xf]
        %v3163 = vld [vmem:[%s2 + $0x414] sm:$0xf]
        %v3164 = vld [vmem:[%s2 + $0x418] sm:$0xf]
        %v3165 = vld [vmem:[%s2 + $0x41c] sm:$0xf]
        %v3166 = vld [vmem:[%s2 + $0x420] sm:$0xf]
        %v3167 = vld [vmem:[%s2 + $0x424] sm:$0xf]
        %v3168 = vld [vmem:[%s2 + $0x428] sm:$0xf]
        %v3169 = vld [vmem:[%s2 + $0x42c] sm:$0xf]
        %v3170 = vld [vmem:[%s2 + $0x430] sm:$0xf]
        %v3171 = vld [vmem:[%s2 + $0x434] sm:$0xf]
        %v3172 = vld [vmem:[%s2 + $0x438] sm:$0xf]
        %v3173 = vld [vmem:[%s2 + $0x43c] sm:$0xf]
        %v3174 = vld [vmem:[%s2 + $0x440] sm:$0xf]
        %v3175 = vld [vmem:[%s2 + $0x444] sm:$0xf]
        %v3176 = vld [vmem:[%s2 + $0x448] sm:$0xf]
        %v3177 = vld [vmem:[%s2 + $0x44c] sm:$0xf]
        %v3178 = vld [vmem:[%s2 + $0x450] sm:$0xf]
        %v3179 = vld [vmem:[%s2 + $0x454] sm:$0xf]
        %v3180 = vld [vmem:[%s2 + $0x458] sm:$0xf]
        %v3181 = vld [vmem:[%s2 + $0x45c] sm:$0xf]
        %v3182 = vld [vmem:[%s2 + $0x460] sm:$0xf]
        %v3183 = vld [vmem:[%s2 + $0x464] sm:$0xf]
        %v3184 = vld [vmem:[%s2 + $0x468] sm:$0xf]
        %v3185 = vld [vmem:[%s2 + $0x46c] sm:$0xf]
        %v3186 = vld [vmem:[%s2 + $0x470] sm:$0xf]
        %v3187 = vld [vmem:[%s2 + $0x474] sm:$0xf]
        %v3188 = vld [vmem:[%s2 + $0x478] sm:$0xf]
        %v3189 = vld [vmem:[%s2 + $0x47c] sm:$0xf]
        %v3190 = vld [vmem:[%s2 + $0x480] sm:$0xf]
        %v3191 = vld [vmem:[%s2 + $0x484] sm:$0xf]
        %v3192 = vld [vmem:[%s2 + $0x488] sm:$0xf]
        %v3193 = vld [vmem:[%s2 + $0x48c] sm:$0xf]
        %v3194 = vld [vmem:[%s2 + $0x490] sm:$0xf]
        %v3195 = vld [vmem:[%s2 + $0x494] sm:$0xf]
        %v3196 = vld [vmem:[%s2 + $0x498] sm:$0xf]
        %v3197 = vld [vmem:[%s2 + $0x49c] sm:$0xf]
        %v3198 = vld [vmem:[%s2 + $0x4a0] sm:$0xf]
        %v3199 = vld [vmem:[%s2 + $0x4a4] sm:$0xf]
        %v3200 = vld [vmem:[%s2 + $0x4a8] sm:$0xf]
        %v3201 = vld [vmem:[%s2 + $0x4ac] sm:$0xf]
        %v3202 = vld [vmem:[%s2 + $0x4b0] sm:$0xf]
        %v3203 = vld [vmem:[%s2 + $0x4b4] sm:$0xf]
        %v3204 = vld [vmem:[%s2 + $0x4b8] sm:$0xf]
        %v3205 = vld [vmem:[%s2 + $0x4bc] sm:$0xf]
        %v3206 = vld [vmem:[%s2 + $0x4c0] sm:$0xf]
        %v3207 = vld [vmem:[%s2 + $0x4c4] sm:$0xf]
        %v3208 = vld [vmem:[%s2 + $0x4c8] sm:$0xf]
        %v3209 = vld [vmem:[%s2 + $0x4cc] sm:$0xf]
        %v3210 = vld [vmem:[%s2 + $0x4d0] sm:$0xf]
        %v3211 = vld [vmem:[%s2 + $0x4d4] sm:$0xf]
        %v3212 = vld [vmem:[%s2 + $0x4d8] sm:$0xf]
        %v3213 = vld [vmem:[%s2 + $0x4dc] sm:$0xf]
        %v3214 = vld [vmem:[%s2 + $0x4e0] sm:$0xf]
        %v3215 = vld [vmem:[%s2 + $0x4e4] sm:$0xf]
        %v3216 = vld [vmem:[%s2 + $0x4e8] sm:$0xf]
        %v3217 = vld [vmem:[%s2 + $0x4ec] sm:$0xf]
        %v3218 = vld [vmem:[%s2 + $0x4f0] sm:$0xf]
        %v3219 = vld [vmem:[%s2 + $0x4f4] sm:$0xf]
        %v3220 = vld [vmem:[%s2 + $0x4f8] sm:$0xf]
        %v3221 = vld [vmem:[%s2 + $0x4fc] sm:$0xf]
        %v3222 = vld [vmem:[%s2 + $0x500] sm:$0xf]
        %v3223 = vld [vmem:[%s2 + $0x504] sm:$0xf]
        %v3224 = vld [vmem:[%s2 + $0x508] sm:$0xf]
        %v3225 = vld [vmem:[%s2 + $0x50c] sm:$0xf]
        %v3226 = vld [vmem:[%s2 + $0x510] sm:$0xf]
        %v3227 = vld [vmem:[%s2 + $0x514] sm:$0xf]
        %v3228 = vld [vmem:[%s2 + $0x518] sm:$0xf]
        %v3229 = vld [vmem:[%s2 + $0x51c] sm:$0xf]
        %v3230 = vld [vmem:[%s2 + $0x520] sm:$0xf]
        %v3231 = vld [vmem:[%s2 + $0x524] sm:$0xf]
        %v3232 = vld [vmem:[%s2 + $0x528] sm:$0xf]
        %v3233 = vld [vmem:[%s2 + $0x52c] sm:$0xf]
        %v3234 = vld [vmem:[%s2 + $0x530] sm:$0xf]
        %v3235 = vld [vmem:[%s2 + $0x534] sm:$0xf]
        %v3236 = vld [vmem:[%s2 + $0x538] sm:$0xf]
        %v3237 = vld [vmem:[%s2 + $0x53c] sm:$0xf]
        %v3238 = vld [vmem:[%s2 + $0x540] sm:$0xf]
        %v3239 = vld [vmem:[%s2 + $0x544] sm:$0xf]
        %v3240 = vld [vmem:[%s2 + $0x548] sm:$0xf]
        %v3241 = vld [vmem:[%s2 + $0x54c] sm:$0xf]
        %v3242 = vld [vmem:[%s2 + $0x550] sm:$0xf]
        %v3243 = vld [vmem:[%s2 + $0x554] sm:$0xf]
        %v3244 = vld [vmem:[%s2 + $0x558] sm:$0xf]
        %v3245 = vld [vmem:[%s2 + $0x55c] sm:$0xf]
        %v3246 = vld [vmem:[%s2 + $0x560] sm:$0xf]
        %v3247 = vld [vmem:[%s2 + $0x564] sm:$0xf]
        %v3248 = vld [vmem:[%s2 + $0x568] sm:$0xf]
        %v3249 = vld [vmem:[%s2 + $0x56c] sm:$0xf]
        %v3250 = vld [vmem:[%s2 + $0x570] sm:$0xf]
        %v3251 = vld [vmem:[%s2 + $0x574] sm:$0xf]
        %v3252 = vld [vmem:[%s2 + $0x578] sm:$0xf]
        %v3253 = vld [vmem:[%s2 + $0x57c] sm:$0xf]
        %v3254 = vld [vmem:[%s2 + $0x580] sm:$0xf]
        %v3255 = vld [vmem:[%s2 + $0x584] sm:$0xf]
        %v3256 = vld [vmem:[%s2 + $0x588] sm:$0xf]
        %v3257 = vld [vmem:[%s2 + $0x58c] sm:$0xf]
        %v3258 = vld [vmem:[%s2 + $0x590] sm:$0xf]
        %v3259 = vld [vmem:[%s2 + $0x594] sm:$0xf]
        %v3260 = vld [vmem:[%s2 + $0x598] sm:$0xf]
        %v3261 = vld [vmem:[%s2 + $0x59c] sm:$0xf]
        %v3262 = vld [vmem:[%s2 + $0x5a0] sm:$0xf]
        %v3263 = vld [vmem:[%s2 + $0x5a4] sm:$0xf]
        %v3264 = vld [vmem:[%s2 + $0x5a8] sm:$0xf]
        %v3265 = vld [vmem:[%s2 + $0x5ac] sm:$0xf]
        %v3266 = vld [vmem:[%s2 + $0x5b0] sm:$0xf]
        %v3267 = vld [vmem:[%s2 + $0x5b4] sm:$0xf]
        %v3268 = vld [vmem:[%s2 + $0x5b8] sm:$0xf]
        %v3269 = vld [vmem:[%s2 + $0x5bc] sm:$0xf]
        %v3270 = vld [vmem:[%s2 + $0x5c0] sm:$0xf]
        %v3271 = vld [vmem:[%s2 + $0x5c4] sm:$0xf]
        %v3272 = vld [vmem:[%s2 + $0x5c8] sm:$0xf]
        %v3273 = vld [vmem:[%s2 + $0x5cc] sm:$0xf]
        %v3274 = vld [vmem:[%s2 + $0x5d0] sm:$0xf]
        %v3275 = vld [vmem:[%s2 + $0x5d4] sm:$0xf]
        %v3276 = vld [vmem:[%s2 + $0x5d8] sm:$0xf]
        %v3277 = vld [vmem:[%s2 + $0x5dc] sm:$0xf]
        %v3278 = vld [vmem:[%s2 + $0x5e0] sm:$0xf]
        %v3279 = vld [vmem:[%s2 + $0x5e4] sm:$0xf]
        %v3280 = vld [vmem:[%s2 + $0x5e8] sm:$0xf]
        %v3281 = vld [vmem:[%s2 + $0x5ec] sm:$0xf]
        %v3282 = vld [vmem:[%s2 + $0x5f0] sm:$0xf]
        %v3283 = vld [vmem:[%s2 + $0x5f4] sm:$0xf]
        %v3284 = vld [vmem:[%s2 + $0x5f8] sm:$0xf]
        %v3285 = vld [vmem:[%s2 + $0x5fc] sm:$0xf]
        %v3286 = vld [vmem:[%s2 + $0x600] sm:$0xf]
        %v3287 = vld [vmem:[%s2 + $0x604] sm:$0xf]
        %v3288 = vld [vmem:[%s2 + $0x608] sm:$0xf]
        %v3289 = vld [vmem:[%s2 + $0x60c] sm:$0xf]
        %v3290 = vld [vmem:[%s2 + $0x610] sm:$0xf]
        %v3291 = vld [vmem:[%s2 + $0x614] sm:$0xf]
        %v3292 = vld [vmem:[%s2 + $0x618] sm:$0xf]
        %v3293 = vld [vmem:[%s2 + $0x61c] sm:$0xf]
        %v3294 = vld [vmem:[%s2 + $0x620] sm:$0xf]
        %v3295 = vld [vmem:[%s2 + $0x624] sm:$0xf]
        %v3296 = vld [vmem:[%s2 + $0x628] sm:$0xf]
        %v3297 = vld [vmem:[%s2 + $0x62c] sm:$0xf]
        %v3298 = vld [vmem:[%s2 + $0x630] sm:$0xf]
        %v3299 = vld [vmem:[%s2 + $0x634] sm:$0xf]
        %v3300 = vld [vmem:[%s2 + $0x638] sm:$0xf]
        %v3301 = vld [vmem:[%s2 + $0x63c] sm:$0xf]
        %v3302 = vld [vmem:[%s3] sm:$0x1]
        %v3304 = vlaneseq
        %v3305 = vshrl.u32 %v3304, 7
        %v3306 = vsub.s32 0, %v3305
        %v3307 = vrot.slane %v3302, %v3306
        %v3709 = vunpack.c.l.b16 %v2902
        %v3710 = vunpack.c.l.b16 %v2903
        %v3711 = vunpack.c.l.b16 %v2904
        %v3712 = vunpack.c.l.b16 %v2905
        %v3713 = vunpack.c.l.b16 %v2906
        %v3714 = vunpack.c.l.b16 %v2907
        %v3715 = vunpack.c.l.b16 %v2908
        %v3716 = vunpack.c.l.b16 %v2909
        %v3717 = vunpack.c.l.b16 %v2910
        %v3718 = vunpack.c.l.b16 %v2911
        %v3719 = vunpack.c.l.b16 %v2912
        %v3720 = vunpack.c.l.b16 %v2913
        %v3721 = vunpack.c.l.b16 %v2914
        %v3722 = vunpack.c.l.b16 %v2915
        %v3723 = vunpack.c.l.b16 %v2916
        %v3724 = vunpack.c.l.b16 %v2917
        %v3725 = vunpack.c.l.b16 %v2918
        %v3726 = vunpack.c.l.b16 %v2919
        %v3727 = vunpack.c.l.b16 %v2920
        %v3728 = vunpack.c.l.b16 %v2921
        %v3729 = vunpack.c.l.b16 %v2922
        %v3730 = vunpack.c.l.b16 %v2923
        %v3731 = vunpack.c.l.b16 %v2924
        %v3732 = vunpack.c.l.b16 %v2925
        %v3733 = vunpack.c.l.b16 %v2926
        %v3734 = vunpack.c.l.b16 %v2927
        %v3735 = vunpack.c.l.b16 %v2928
        %v3736 = vunpack.c.l.b16 %v2929
        %v3737 = vunpack.c.l.b16 %v2930
        %v3738 = vunpack.c.l.b16 %v2931
        %v3739 = vunpack.c.l.b16 %v2932
        %v3740 = vunpack.c.l.b16 %v2933
        %v3741 = vunpack.c.l.b16 %v2934
        %v3742 = vunpack.c.l.b16 %v2935
        %v3743 = vunpack.c.l.b16 %v2936
        %v3744 = vunpack.c.l.b16 %v2937
        %v3745 = vunpack.c.l.b16 %v2938
        %v3746 = vunpack.c.l.b16 %v2939
        %v3747 = vunpack.c.l.b16 %v2940
        %v3748 = vunpack.c.l.b16 %v2941
        %v3749 = vunpack.c.l.b16 %v2942
        %v3750 = vunpack.c.l.b16 %v2943
        %v3751 = vunpack.c.l.b16 %v2944
        %v3752 = vunpack.c.l.b16 %v2945
        %v3753 = vunpack.c.l.b16 %v2946
        %v3754 = vunpack.c.l.b16 %v2947
        %v3755 = vunpack.c.l.b16 %v2948
        %v3756 = vunpack.c.l.b16 %v2949
        %v3757 = vunpack.c.l.b16 %v2950
        %v3758 = vunpack.c.l.b16 %v2951
        %v3759 = vunpack.c.l.b16 %v2952
        %v3760 = vunpack.c.l.b16 %v2953
        %v3761 = vunpack.c.l.b16 %v2954
        %v3762 = vunpack.c.l.b16 %v2955
        %v3763 = vunpack.c.l.b16 %v2956
        %v3764 = vunpack.c.l.b16 %v2957
        %v3765 = vunpack.c.l.b16 %v2958
        %v3766 = vunpack.c.l.b16 %v2959
        %v3767 = vunpack.c.l.b16 %v2960
        %v3768 = vunpack.c.l.b16 %v2961
        %v3769 = vunpack.c.l.b16 %v2962
        %v3770 = vunpack.c.l.b16 %v2963
        %v3771 = vunpack.c.l.b16 %v2964
        %v3772 = vunpack.c.l.b16 %v2965
        %v3773 = vunpack.c.l.b16 %v2966
        %v3774 = vunpack.c.l.b16 %v2967
        %v3775 = vunpack.c.l.b16 %v2968
        %v3776 = vunpack.c.l.b16 %v2969
        %v3777 = vunpack.c.l.b16 %v2970
        %v3778 = vunpack.c.l.b16 %v2971
        %v3779 = vunpack.c.l.b16 %v2972
        %v3780 = vunpack.c.l.b16 %v2973
        %v3781 = vunpack.c.l.b16 %v2974
        %v3782 = vunpack.c.l.b16 %v2975
        %v3783 = vunpack.c.l.b16 %v2976
        %v3784 = vunpack.c.l.b16 %v2977
        %v3785 = vunpack.c.l.b16 %v2978
        %v3786 = vunpack.c.l.b16 %v2979
        %v3787 = vunpack.c.l.b16 %v2980
        %v3788 = vunpack.c.l.b16 %v2981
        %v3789 = vunpack.c.l.b16 %v2982
        %v3790 = vunpack.c.l.b16 %v2983
        %v3791 = vunpack.c.l.b16 %v2984
        %v3792 = vunpack.c.l.b16 %v2985
        %v3793 = vunpack.c.l.b16 %v2986
        %v3794 = vunpack.c.l.b16 %v2987
        %v3795 = vunpack.c.l.b16 %v2988
        %v3796 = vunpack.c.l.b16 %v2989
        %v3797 = vunpack.c.l.b16 %v2990
        %v3798 = vunpack.c.l.b16 %v2991
        %v3799 = vunpack.c.l.b16 %v2992
        %v3800 = vunpack.c.l.b16 %v2993
        %v3801 = vunpack.c.l.b16 %v2994
        %v3802 = vunpack.c.l.b16 %v2995
        %v3803 = vunpack.c.l.b16 %v2996
        %v3804 = vunpack.c.l.b16 %v2997
        %v3805 = vunpack.c.l.b16 %v2998
        %v3806 = vunpack.c.l.b16 %v2999
        %v3807 = vunpack.c.l.b16 %v3000
        %v3808 = vunpack.c.l.b16 %v3001
        %v3809 = vunpack.c.l.b16 %v3002
        %v3810 = vunpack.c.l.b16 %v3003
        %v3811 = vunpack.c.l.b16 %v3004
        %v3812 = vunpack.c.l.b16 %v3005
        %v3813 = vunpack.c.l.b16 %v3006
        %v3814 = vunpack.c.l.b16 %v3007
        %v3815 = vunpack.c.l.b16 %v3008
        %v3816 = vunpack.c.l.b16 %v3009
        %v3817 = vunpack.c.l.b16 %v3010
        %v3818 = vunpack.c.l.b16 %v3011
        %v3819 = vunpack.c.l.b16 %v3012
        %v3820 = vunpack.c.l.b16 %v3013
        %v3821 = vunpack.c.l.b16 %v3014
        %v3822 = vunpack.c.l.b16 %v3015
        %v3823 = vunpack.c.l.b16 %v3016
        %v3824 = vunpack.c.l.b16 %v3017
        %v3825 = vunpack.c.l.b16 %v3018
        %v3826 = vunpack.c.l.b16 %v3019
        %v3827 = vunpack.c.l.b16 %v3020
        %v3828 = vunpack.c.l.b16 %v3021
        %v3829 = vunpack.c.l.b16 %v3022
        %v3830 = vunpack.c.l.b16 %v3023
        %v3831 = vunpack.c.l.b16 %v3024
        %v3832 = vunpack.c.l.b16 %v3025
        %v3833 = vunpack.c.l.b16 %v3026
        %v3834 = vunpack.c.l.b16 %v3027
        %v3835 = vunpack.c.l.b16 %v3028
        %v3836 = vunpack.c.l.b16 %v3029
        %v3837 = vunpack.c.l.b16 %v3030
        %v3838 = vunpack.c.l.b16 %v3031
        %v3839 = vunpack.c.l.b16 %v3032
        %v3840 = vunpack.c.l.b16 %v3033
        %v3841 = vunpack.c.l.b16 %v3034
        %v3842 = vunpack.c.l.b16 %v3035
        %v3843 = vunpack.c.l.b16 %v3036
        %v3844 = vunpack.c.l.b16 %v3037
        %v3845 = vunpack.c.l.b16 %v3038
        %v3846 = vunpack.c.l.b16 %v3039
        %v3847 = vunpack.c.l.b16 %v3040
        %v3848 = vunpack.c.l.b16 %v3041
        %v3849 = vunpack.c.l.b16 %v3042
        %v3850 = vunpack.c.l.b16 %v3043
        %v3851 = vunpack.c.l.b16 %v3044
        %v3852 = vunpack.c.l.b16 %v3045
        %v3853 = vunpack.c.l.b16 %v3046
        %v3854 = vunpack.c.l.b16 %v3047
        %v3855 = vunpack.c.l.b16 %v3048
        %v3856 = vunpack.c.l.b16 %v3049
        %v3857 = vunpack.c.l.b16 %v3050
        %v3858 = vunpack.c.l.b16 %v3051
        %v3859 = vunpack.c.l.b16 %v3052
        %v3860 = vunpack.c.l.b16 %v3053
        %v3861 = vunpack.c.l.b16 %v3054
        %v3862 = vunpack.c.l.b16 %v3055
        %v3863 = vunpack.c.l.b16 %v3056
        %v3864 = vunpack.c.l.b16 %v3057
        %v3865 = vunpack.c.l.b16 %v3058
        %v3866 = vunpack.c.l.b16 %v3059
        %v3867 = vunpack.c.l.b16 %v3060
        %v3868 = vunpack.c.l.b16 %v3061
        %v3869 = vunpack.c.l.b16 %v3062
        %v3870 = vunpack.c.l.b16 %v3063
        %v3871 = vunpack.c.l.b16 %v3064
        %v3872 = vunpack.c.l.b16 %v3065
        %v3873 = vunpack.c.l.b16 %v3066
        %v3874 = vunpack.c.l.b16 %v3067
        %v3875 = vunpack.c.l.b16 %v3068
        %v3876 = vunpack.c.l.b16 %v3069
        %v3877 = vunpack.c.l.b16 %v3070
        %v3878 = vunpack.c.l.b16 %v3071
        %v3879 = vunpack.c.l.b16 %v3072
        %v3880 = vunpack.c.l.b16 %v3073
        %v3881 = vunpack.c.l.b16 %v3074
        %v3882 = vunpack.c.l.b16 %v3075
        %v3883 = vunpack.c.l.b16 %v3076
        %v3884 = vunpack.c.l.b16 %v3077
        %v3885 = vunpack.c.l.b16 %v3078
        %v3886 = vunpack.c.l.b16 %v3079
        %v3887 = vunpack.c.l.b16 %v3080
        %v3888 = vunpack.c.l.b16 %v3081
        %v3889 = vunpack.c.l.b16 %v3082
        %v3890 = vunpack.c.l.b16 %v3083
        %v3891 = vunpack.c.l.b16 %v3084
        %v3892 = vunpack.c.l.b16 %v3085
        %v3893 = vunpack.c.l.b16 %v3086
        %v3894 = vunpack.c.l.b16 %v3087
        %v3895 = vunpack.c.l.b16 %v3088
        %v3896 = vunpack.c.l.b16 %v3089
        %v3897 = vunpack.c.l.b16 %v3090
        %v3898 = vunpack.c.l.b16 %v3091
        %v3899 = vunpack.c.l.b16 %v3092
        %v3900 = vunpack.c.l.b16 %v3093
        %v3901 = vunpack.c.l.b16 %v3094
        %v3902 = vunpack.c.l.b16 %v3095
        %v3903 = vunpack.c.l.b16 %v3096
        %v3904 = vunpack.c.l.b16 %v3097
        %v3905 = vunpack.c.l.b16 %v3098
        %v3906 = vunpack.c.l.b16 %v3099
        %v3907 = vunpack.c.l.b16 %v3100
        %v3908 = vunpack.c.l.b16 %v3101
        %v3909 = vunpack.c.l.b16 %v3102
        %v3910 = vunpack.c.l.b16 %v3103
        %v3911 = vunpack.c.l.b16 %v3104
        %v3912 = vunpack.c.l.b16 %v3105
        %v3913 = vunpack.c.l.b16 %v3106
        %v3914 = vunpack.c.l.b16 %v3107
        %v3915 = vunpack.c.l.b16 %v3108
        %v3916 = vunpack.c.l.b16 %v3109
        %v3917 = vunpack.c.l.b16 %v3110
        %v3918 = vunpack.c.l.b16 %v3111
        %v3919 = vunpack.c.l.b16 %v3112
        %v3920 = vunpack.c.l.b16 %v3113
        %v3921 = vunpack.c.l.b16 %v3114
        %v3922 = vunpack.c.l.b16 %v3115
        %v3923 = vunpack.c.l.b16 %v3116
        %v3924 = vunpack.c.l.b16 %v3117
        %v3925 = vunpack.c.l.b16 %v3118
        %v3926 = vunpack.c.l.b16 %v3119
        %v3927 = vunpack.c.l.b16 %v3120
        %v3928 = vunpack.c.l.b16 %v3121
        %v3929 = vunpack.c.l.b16 %v3122
        %v3930 = vunpack.c.l.b16 %v3123
        %v3931 = vunpack.c.l.b16 %v3124
        %v3932 = vunpack.c.l.b16 %v3125
        %v3933 = vunpack.c.l.b16 %v3126
        %v3934 = vunpack.c.l.b16 %v3127
        %v3935 = vunpack.c.l.b16 %v3128
        %v3936 = vunpack.c.l.b16 %v3129
        %v3937 = vunpack.c.l.b16 %v3130
        %v3938 = vunpack.c.l.b16 %v3131
        %v3939 = vunpack.c.l.b16 %v3132
        %v3940 = vunpack.c.l.b16 %v3133
        %v3941 = vunpack.c.l.b16 %v3134
        %v3942 = vunpack.c.l.b16 %v3135
        %v3943 = vunpack.c.l.b16 %v3136
        %v3944 = vunpack.c.l.b16 %v3137
        %v3945 = vunpack.c.l.b16 %v3138
        %v3946 = vunpack.c.l.b16 %v3139
        %v3947 = vunpack.c.l.b16 %v3140
        %v3948 = vunpack.c.l.b16 %v3141
        %v3949 = vunpack.c.l.b16 %v3142
        %v3950 = vunpack.c.l.b16 %v3143
        %v3951 = vunpack.c.l.b16 %v3144
        %v3952 = vunpack.c.l.b16 %v3145
        %v3953 = vunpack.c.l.b16 %v3146
        %v3954 = vunpack.c.l.b16 %v3147
        %v3955 = vunpack.c.l.b16 %v3148
        %v3956 = vunpack.c.l.b16 %v3149
        %v3957 = vunpack.c.l.b16 %v3150
        %v3958 = vunpack.c.l.b16 %v3151
        %v3959 = vunpack.c.l.b16 %v3152
        %v3960 = vunpack.c.l.b16 %v3153
        %v3961 = vunpack.c.l.b16 %v3154
        %v3962 = vunpack.c.l.b16 %v3155
        %v3963 = vunpack.c.l.b16 %v3156
        %v3964 = vunpack.c.l.b16 %v3157
        %v3965 = vunpack.c.l.b16 %v3158
        %v3966 = vunpack.c.l.b16 %v3159
        %v3967 = vunpack.c.l.b16 %v3160
        %v3968 = vunpack.c.l.b16 %v3161
        %v3969 = vunpack.c.l.b16 %v3162
        %v3970 = vunpack.c.l.b16 %v3163
        %v3971 = vunpack.c.l.b16 %v3164
        %v3972 = vunpack.c.l.b16 %v3165
        %v3973 = vunpack.c.l.b16 %v3166
        %v3974 = vunpack.c.l.b16 %v3167
        %v3975 = vunpack.c.l.b16 %v3168
        %v3976 = vunpack.c.l.b16 %v3169
        %v3977 = vunpack.c.l.b16 %v3170
        %v3978 = vunpack.c.l.b16 %v3171
        %v3979 = vunpack.c.l.b16 %v3172
        %v3980 = vunpack.c.l.b16 %v3173
        %v3981 = vunpack.c.l.b16 %v3174
        %v3982 = vunpack.c.l.b16 %v3175
        %v3983 = vunpack.c.l.b16 %v3176
        %v3984 = vunpack.c.l.b16 %v3177
        %v3985 = vunpack.c.l.b16 %v3178
        %v3986 = vunpack.c.l.b16 %v3179
        %v3987 = vunpack.c.l.b16 %v3180
        %v3988 = vunpack.c.l.b16 %v3181
        %v3989 = vunpack.c.l.b16 %v3182
        %v3990 = vunpack.c.l.b16 %v3183
        %v3991 = vunpack.c.l.b16 %v3184
        %v3992 = vunpack.c.l.b16 %v3185
        %v3993 = vunpack.c.l.b16 %v3186
        %v3994 = vunpack.c.l.b16 %v3187
        %v3995 = vunpack.c.l.b16 %v3188
        %v3996 = vunpack.c.l.b16 %v3189
        %v3997 = vunpack.c.l.b16 %v3190
        %v3998 = vunpack.c.l.b16 %v3191
        %v3999 = vunpack.c.l.b16 %v3192
        %v4000 = vunpack.c.l.b16 %v3193
        %v4001 = vunpack.c.l.b16 %v3194
        %v4002 = vunpack.c.l.b16 %v3195
        %v4003 = vunpack.c.l.b16 %v3196
        %v4004 = vunpack.c.l.b16 %v3197
        %v4005 = vunpack.c.l.b16 %v3198
        %v4006 = vunpack.c.l.b16 %v3199
        %v4007 = vunpack.c.l.b16 %v3200
        %v4008 = vunpack.c.l.b16 %v3201
        %v4009 = vunpack.c.l.b16 %v3202
        %v4010 = vunpack.c.l.b16 %v3203
        %v4011 = vunpack.c.l.b16 %v3204
        %v4012 = vunpack.c.l.b16 %v3205
        %v4013 = vunpack.c.l.b16 %v3206
        %v4014 = vunpack.c.l.b16 %v3207
        %v4015 = vunpack.c.l.b16 %v3208
        %v4016 = vunpack.c.l.b16 %v3209
        %v4017 = vunpack.c.l.b16 %v3210
        %v4018 = vunpack.c.l.b16 %v3211
        %v4019 = vunpack.c.l.b16 %v3212
        %v4020 = vunpack.c.l.b16 %v3213
        %v4021 = vunpack.c.l.b16 %v3214
        %v4022 = vunpack.c.l.b16 %v3215
        %v4023 = vunpack.c.l.b16 %v3216
        %v4024 = vunpack.c.l.b16 %v3217
        %v4025 = vunpack.c.l.b16 %v3218
        %v4026 = vunpack.c.l.b16 %v3219
        %v4027 = vunpack.c.l.b16 %v3220
        %v4028 = vunpack.c.l.b16 %v3221
        %v4029 = vunpack.c.l.b16 %v3222
        %v4030 = vunpack.c.l.b16 %v3223
        %v4031 = vunpack.c.l.b16 %v3224
        %v4032 = vunpack.c.l.b16 %v3225
        %v4033 = vunpack.c.l.b16 %v3226
        %v4034 = vunpack.c.l.b16 %v3227
        %v4035 = vunpack.c.l.b16 %v3228
        %v4036 = vunpack.c.l.b16 %v3229
        %v4037 = vunpack.c.l.b16 %v3230
        %v4038 = vunpack.c.l.b16 %v3231
        %v4039 = vunpack.c.l.b16 %v3232
        %v4040 = vunpack.c.l.b16 %v3233
        %v4041 = vunpack.c.l.b16 %v3234
        %v4042 = vunpack.c.l.b16 %v3235
        %v4043 = vunpack.c.l.b16 %v3236
        %v4044 = vunpack.c.l.b16 %v3237
        %v4045 = vunpack.c.l.b16 %v3238
        %v4046 = vunpack.c.l.b16 %v3239
        %v4047 = vunpack.c.l.b16 %v3240
        %v4048 = vunpack.c.l.b16 %v3241
        %v4049 = vunpack.c.l.b16 %v3242
        %v4050 = vunpack.c.l.b16 %v3243
        %v4051 = vunpack.c.l.b16 %v3244
        %v4052 = vunpack.c.l.b16 %v3245
        %v4053 = vunpack.c.l.b16 %v3246
        %v4054 = vunpack.c.l.b16 %v3247
        %v4055 = vunpack.c.l.b16 %v3248
        %v4056 = vunpack.c.l.b16 %v3249
        %v4057 = vunpack.c.l.b16 %v3250
        %v4058 = vunpack.c.l.b16 %v3251
        %v4059 = vunpack.c.l.b16 %v3252
        %v4060 = vunpack.c.l.b16 %v3253
        %v4061 = vunpack.c.l.b16 %v3254
        %v4062 = vunpack.c.l.b16 %v3255
        %v4063 = vunpack.c.l.b16 %v3256
        %v4064 = vunpack.c.l.b16 %v3257
        %v4065 = vunpack.c.l.b16 %v3258
        %v4066 = vunpack.c.l.b16 %v3259
        %v4067 = vunpack.c.l.b16 %v3260
        %v4068 = vunpack.c.l.b16 %v3261
        %v4069 = vunpack.c.l.b16 %v3262
        %v4070 = vunpack.c.l.b16 %v3263
        %v4071 = vunpack.c.l.b16 %v3264
        %v4072 = vunpack.c.l.b16 %v3265
        %v4073 = vunpack.c.l.b16 %v3266
        %v4074 = vunpack.c.l.b16 %v3267
        %v4075 = vunpack.c.l.b16 %v3268
        %v4076 = vunpack.c.l.b16 %v3269
        %v4077 = vunpack.c.l.b16 %v3270
        %v4078 = vunpack.c.l.b16 %v3271
        %v4079 = vunpack.c.l.b16 %v3272
        %v4080 = vunpack.c.l.b16 %v3273
        %v4081 = vunpack.c.l.b16 %v3274
        %v4082 = vunpack.c.l.b16 %v3275
        %v4083 = vunpack.c.l.b16 %v3276
        %v4084 = vunpack.c.l.b16 %v3277
        %v4085 = vunpack.c.l.b16 %v3278
        %v4086 = vunpack.c.l.b16 %v3279
        %v4087 = vunpack.c.l.b16 %v3280
        %v4088 = vunpack.c.l.b16 %v3281
        %v4089 = vunpack.c.l.b16 %v3282
        %v4090 = vunpack.c.l.b16 %v3283
        %v4091 = vunpack.c.l.b16 %v3284
        %v4092 = vunpack.c.l.b16 %v3285
        %v4093 = vunpack.c.l.b16 %v3286
        %v4094 = vunpack.c.l.b16 %v3287
        %v4095 = vunpack.c.l.b16 %v3288
        %v4096 = vunpack.c.l.b16 %v3289
        %v4097 = vunpack.c.l.b16 %v3290
        %v4098 = vunpack.c.l.b16 %v3291
        %v4099 = vunpack.c.l.b16 %v3292
        %v4100 = vunpack.c.l.b16 %v3293
        %v4101 = vunpack.c.l.b16 %v3294
        %v4102 = vunpack.c.l.b16 %v3295
        %v4103 = vunpack.c.l.b16 %v3296
        %v4104 = vunpack.c.l.b16 %v3297
        %v4105 = vunpack.c.l.b16 %v3298
        %v4106 = vunpack.c.l.b16 %v3299
        %v4107 = vunpack.c.l.b16 %v3300
        %v4108 = vunpack.c.l.b16 %v3301
        %v4109 = vpack.c.b16 %v3710, %v3709
        %v4110 = vpack.c.b16 %v3712, %v3711
        %v4111 = vpack.c.b16 %v3714, %v3713
        %v4112 = vpack.c.b16 %v3716, %v3715
        %v4113 = vpack.c.b16 %v3718, %v3717
        %v4114 = vpack.c.b16 %v3720, %v3719
        %v4115 = vpack.c.b16 %v3722, %v3721
        %v4116 = vpack.c.b16 %v3724, %v3723
        %v4117 = vpack.c.b16 %v3726, %v3725
        %v4118 = vpack.c.b16 %v3728, %v3727
        %v4119 = vpack.c.b16 %v3730, %v3729
        %v4120 = vpack.c.b16 %v3732, %v3731
        %v4121 = vpack.c.b16 %v3734, %v3733
        %v4122 = vpack.c.b16 %v3736, %v3735
        %v4123 = vpack.c.b16 %v3738, %v3737
        %v4124 = vpack.c.b16 %v3740, %v3739
        %v4125 = vpack.c.b16 %v3742, %v3741
        %v4126 = vpack.c.b16 %v3744, %v3743
        %v4127 = vpack.c.b16 %v3746, %v3745
        %v4128 = vpack.c.b16 %v3748, %v3747
        %v4129 = vpack.c.b16 %v3750, %v3749
        %v4130 = vpack.c.b16 %v3752, %v3751
        %v4131 = vpack.c.b16 %v3754, %v3753
        %v4132 = vpack.c.b16 %v3756, %v3755
        %v4133 = vpack.c.b16 %v3758, %v3757
        %v4134 = vpack.c.b16 %v3760, %v3759
        %v4135 = vpack.c.b16 %v3762, %v3761
        %v4136 = vpack.c.b16 %v3764, %v3763
        %v4137 = vpack.c.b16 %v3766, %v3765
        %v4138 = vpack.c.b16 %v3768, %v3767
        %v4139 = vpack.c.b16 %v3770, %v3769
        %v4140 = vpack.c.b16 %v3772, %v3771
        %v4141 = vpack.c.b16 %v3774, %v3773
        %v4142 = vpack.c.b16 %v3776, %v3775
        %v4143 = vpack.c.b16 %v3778, %v3777
        %v4144 = vpack.c.b16 %v3780, %v3779
        %v4145 = vpack.c.b16 %v3782, %v3781
        %v4146 = vpack.c.b16 %v3784, %v3783
        %v4147 = vpack.c.b16 %v3786, %v3785
        %v4148 = vpack.c.b16 %v3788, %v3787
        %v4149 = vpack.c.b16 %v3790, %v3789
        %v4150 = vpack.c.b16 %v3792, %v3791
        %v4151 = vpack.c.b16 %v3794, %v3793
        %v4152 = vpack.c.b16 %v3796, %v3795
        %v4153 = vpack.c.b16 %v3798, %v3797
        %v4154 = vpack.c.b16 %v3800, %v3799
        %v4155 = vpack.c.b16 %v3802, %v3801
        %v4156 = vpack.c.b16 %v3804, %v3803
        %v4157 = vpack.c.b16 %v3806, %v3805
        %v4158 = vpack.c.b16 %v3808, %v3807
        %v4159 = vpack.c.b16 %v3810, %v3809
        %v4160 = vpack.c.b16 %v3812, %v3811
        %v4161 = vpack.c.b16 %v3814, %v3813
        %v4162 = vpack.c.b16 %v3816, %v3815
        %v4163 = vpack.c.b16 %v3818, %v3817
        %v4164 = vpack.c.b16 %v3820, %v3819
        %v4165 = vpack.c.b16 %v3822, %v3821
        %v4166 = vpack.c.b16 %v3824, %v3823
        %v4167 = vpack.c.b16 %v3826, %v3825
        %v4168 = vpack.c.b16 %v3828, %v3827
        %v4169 = vpack.c.b16 %v3830, %v3829
        %v4170 = vpack.c.b16 %v3832, %v3831
        %v4171 = vpack.c.b16 %v3834, %v3833
        %v4172 = vpack.c.b16 %v3836, %v3835
        %v4173 = vpack.c.b16 %v3838, %v3837
        %v4174 = vpack.c.b16 %v3840, %v3839
        %v4175 = vpack.c.b16 %v3842, %v3841
        %v4176 = vpack.c.b16 %v3844, %v3843
        %v4177 = vpack.c.b16 %v3846, %v3845
        %v4178 = vpack.c.b16 %v3848, %v3847
        %v4179 = vpack.c.b16 %v3850, %v3849
        %v4180 = vpack.c.b16 %v3852, %v3851
        %v4181 = vpack.c.b16 %v3854, %v3853
        %v4182 = vpack.c.b16 %v3856, %v3855
        %v4183 = vpack.c.b16 %v3858, %v3857
        %v4184 = vpack.c.b16 %v3860, %v3859
        %v4185 = vpack.c.b16 %v3862, %v3861
        %v4186 = vpack.c.b16 %v3864, %v3863
        %v4187 = vpack.c.b16 %v3866, %v3865
        %v4188 = vpack.c.b16 %v3868, %v3867
        %v4189 = vpack.c.b16 %v3870, %v3869
        %v4190 = vpack.c.b16 %v3872, %v3871
        %v4191 = vpack.c.b16 %v3874, %v3873
        %v4192 = vpack.c.b16 %v3876, %v3875
        %v4193 = vpack.c.b16 %v3878, %v3877
        %v4194 = vpack.c.b16 %v3880, %v3879
        %v4195 = vpack.c.b16 %v3882, %v3881
        %v4196 = vpack.c.b16 %v3884, %v3883
        %v4197 = vpack.c.b16 %v3886, %v3885
        %v4198 = vpack.c.b16 %v3888, %v3887
        %v4199 = vpack.c.b16 %v3890, %v3889
        %v4200 = vpack.c.b16 %v3892, %v3891
        %v4201 = vpack.c.b16 %v3894, %v3893
        %v4202 = vpack.c.b16 %v3896, %v3895
        %v4203 = vpack.c.b16 %v3898, %v3897
        %v4204 = vpack.c.b16 %v3900, %v3899
        %v4205 = vpack.c.b16 %v3902, %v3901
        %v4206 = vpack.c.b16 %v3904, %v3903
        %v4207 = vpack.c.b16 %v3906, %v3905
        %v4208 = vpack.c.b16 %v3908, %v3907
        %v4209 = vpack.c.b16 %v3910, %v3909
        %v4210 = vpack.c.b16 %v3912, %v3911
        %v4211 = vpack.c.b16 %v3914, %v3913
        %v4212 = vpack.c.b16 %v3916, %v3915
        %v4213 = vpack.c.b16 %v3918, %v3917
        %v4214 = vpack.c.b16 %v3920, %v3919
        %v4215 = vpack.c.b16 %v3922, %v3921
        %v4216 = vpack.c.b16 %v3924, %v3923
        %v4217 = vpack.c.b16 %v3926, %v3925
        %v4218 = vpack.c.b16 %v3928, %v3927
        %v4219 = vpack.c.b16 %v3930, %v3929
        %v4220 = vpack.c.b16 %v3932, %v3931
        %v4221 = vpack.c.b16 %v3934, %v3933
        %v4222 = vpack.c.b16 %v3936, %v3935
        %v4223 = vpack.c.b16 %v3938, %v3937
        %v4224 = vpack.c.b16 %v3940, %v3939
        %v4225 = vpack.c.b16 %v3942, %v3941
        %v4226 = vpack.c.b16 %v3944, %v3943
        %v4227 = vpack.c.b16 %v3946, %v3945
        %v4228 = vpack.c.b16 %v3948, %v3947
        %v4229 = vpack.c.b16 %v3950, %v3949
        %v4230 = vpack.c.b16 %v3952, %v3951
        %v4231 = vpack.c.b16 %v3954, %v3953
        %v4232 = vpack.c.b16 %v3956, %v3955
        %v4233 = vpack.c.b16 %v3958, %v3957
        %v4234 = vpack.c.b16 %v3960, %v3959
        %v4235 = vpack.c.b16 %v3962, %v3961
        %v4236 = vpack.c.b16 %v3964, %v3963
        %v4237 = vpack.c.b16 %v3966, %v3965
        %v4238 = vpack.c.b16 %v3968, %v3967
        %v4239 = vpack.c.b16 %v3970, %v3969
        %v4240 = vpack.c.b16 %v3972, %v3971
        %v4241 = vpack.c.b16 %v3974, %v3973
        %v4242 = vpack.c.b16 %v3976, %v3975
        %v4243 = vpack.c.b16 %v3978, %v3977
        %v4244 = vpack.c.b16 %v3980, %v3979
        %v4245 = vpack.c.b16 %v3982, %v3981
        %v4246 = vpack.c.b16 %v3984, %v3983
        %v4247 = vpack.c.b16 %v3986, %v3985
        %v4248 = vpack.c.b16 %v3988, %v3987
        %v4249 = vpack.c.b16 %v3990, %v3989
        %v4250 = vpack.c.b16 %v3992, %v3991
        %v4251 = vpack.c.b16 %v3994, %v3993
        %v4252 = vpack.c.b16 %v3996, %v3995
        %v4253 = vpack.c.b16 %v3998, %v3997
        %v4254 = vpack.c.b16 %v4000, %v3999
        %v4255 = vpack.c.b16 %v4002, %v4001
        %v4256 = vpack.c.b16 %v4004, %v4003
        %v4257 = vpack.c.b16 %v4006, %v4005
        %v4258 = vpack.c.b16 %v4008, %v4007
        %v4259 = vpack.c.b16 %v4010, %v4009
        %v4260 = vpack.c.b16 %v4012, %v4011
        %v4261 = vpack.c.b16 %v4014, %v4013
        %v4262 = vpack.c.b16 %v4016, %v4015
        %v4263 = vpack.c.b16 %v4018, %v4017
        %v4264 = vpack.c.b16 %v4020, %v4019
        %v4265 = vpack.c.b16 %v4022, %v4021
        %v4266 = vpack.c.b16 %v4024, %v4023
        %v4267 = vpack.c.b16 %v4026, %v4025
        %v4268 = vpack.c.b16 %v4028, %v4027
        %v4269 = vpack.c.b16 %v4030, %v4029
        %v4270 = vpack.c.b16 %v4032, %v4031
        %v4271 = vpack.c.b16 %v4034, %v4033
        %v4272 = vpack.c.b16 %v4036, %v4035
        %v4273 = vpack.c.b16 %v4038, %v4037
        %v4274 = vpack.c.b16 %v4040, %v4039
        %v4275 = vpack.c.b16 %v4042, %v4041
        %v4276 = vpack.c.b16 %v4044, %v4043
        %v4277 = vpack.c.b16 %v4046, %v4045
        %v4278 = vpack.c.b16 %v4048, %v4047
        %v4279 = vpack.c.b16 %v4050, %v4049
        %v4280 = vpack.c.b16 %v4052, %v4051
        %v4281 = vpack.c.b16 %v4054, %v4053
        %v4282 = vpack.c.b16 %v4056, %v4055
        %v4283 = vpack.c.b16 %v4058, %v4057
        %v4284 = vpack.c.b16 %v4060, %v4059
        %v4285 = vpack.c.b16 %v4062, %v4061
        %v4286 = vpack.c.b16 %v4064, %v4063
        %v4287 = vpack.c.b16 %v4066, %v4065
        %v4288 = vpack.c.b16 %v4068, %v4067
        %v4289 = vpack.c.b16 %v4070, %v4069
        %v4290 = vpack.c.b16 %v4072, %v4071
        %v4291 = vpack.c.b16 %v4074, %v4073
        %v4292 = vpack.c.b16 %v4076, %v4075
        %v4293 = vpack.c.b16 %v4078, %v4077
        %v4294 = vpack.c.b16 %v4080, %v4079
        %v4295 = vpack.c.b16 %v4082, %v4081
        %v4296 = vpack.c.b16 %v4084, %v4083
        %v4297 = vpack.c.b16 %v4086, %v4085
        %v4298 = vpack.c.b16 %v4088, %v4087
        %v4299 = vpack.c.b16 %v4090, %v4089
        %v4300 = vpack.c.b16 %v4092, %v4091
        %v4301 = vpack.c.b16 %v4094, %v4093
        %v4302 = vpack.c.b16 %v4096, %v4095
        %v4303 = vpack.c.b16 %v4098, %v4097
        %v4304 = vpack.c.b16 %v4100, %v4099
        %v4305 = vpack.c.b16 %v4102, %v4101
        %v4306 = vpack.c.b16 %v4104, %v4103
        %v4307 = vpack.c.b16 %v4106, %v4105
        %v4308 = vpack.c.b16 %v4108, %v4107
        %4509 = vmatprep.subr.bf16.mxu0 0
        %4510 = vmatpush1.bf16.msra.mxu0 %v4109
        %4511 = vmatprep.subr.bf16.mxu0 0
        %4512 = vmatpush1.bf16.msra.mxu0 %v4110
        %4513 = vmatprep.subr.bf16.mxu0 0
        %4514 = vmatpush1.bf16.msra.mxu0 %v4111
        %4515 = vmatprep.subr.bf16.mxu0 0
        %4516 = vmatpush1.bf16.msra.mxu0 %v4112
        %4517 = vmatprep.subr.bf16.mxu0 0
        %4518 = vmatpush1.bf16.msra.mxu0 %v4113
        %4519 = vmatprep.subr.bf16.mxu0 0
        %4520 = vmatpush1.bf16.msra.mxu0 %v4114
        %4521 = vmatprep.subr.bf16.mxu0 0
        %4522 = vmatpush1.bf16.msra.mxu0 %v4115
        %4523 = vmatprep.subr.bf16.mxu0 0
        %4524 = vmatpush1.bf16.msra.mxu0 %v4116
        %4525 = vmatprep.subr.bf16.mxu0 0
        %4526 = vmatpush1.bf16.msra.mxu0 %v4117
        %4527 = vmatprep.subr.bf16.mxu0 0
        %4528 = vmatpush1.bf16.msra.mxu0 %v4118
        %4529 = vmatprep.subr.bf16.mxu0 0
        %4530 = vmatpush1.bf16.msra.mxu0 %v4119
        %4531 = vmatprep.subr.bf16.mxu0 0
        %4532 = vmatpush1.bf16.msra.mxu0 %v4120
        %4533 = vmatprep.subr.bf16.mxu0 0
        %4534 = vmatpush1.bf16.msra.mxu0 %v4121
        %4535 = vmatprep.subr.bf16.mxu0 0
        %4536 = vmatpush1.bf16.msra.mxu0 %v4122
        %4537 = vmatprep.subr.bf16.mxu0 0
        %4538 = vmatpush1.bf16.msra.mxu0 %v4123
        %4539 = vmatprep.subr.bf16.mxu0 0
        %4540 = vmatpush1.bf16.msra.mxu0 %v4124
        %4541 = vmatprep.mubr.bf16.mxu0 %v2339
        %4542 = vmatmul.mubr.bf16.gmra.mrb[0].mxu0 %v2315
        %v4543 = vpop.f32.mrb[0].mxu0
        %v4544 = vadd.f32 %v3307, %v4543
        %v4545 = vpop.f32.mrb[0].mxu0
        %v4546 = vpop.f32.mrb[0].mxu0
        %v4547 = vadd.f32 %v3307, %v4546
        %v4548 = vpop.f32.mrb[0].mxu0
        %4549 = vmatprep.mubr.bf16.mxu0 %v2340
        %4550 = vmatmul.mubr.bf16.gmra.mrb[0].mxu0 %v2316
        %v4551 = vpop.f32.mrb[0].mxu0
        %v4552 = vadd.f32 %v3307, %v4551
        %v4553 = vpop.f32.mrb[0].mxu0
        %v4554 = vpop.f32.mrb[0].mxu0
        %v4555 = vadd.f32 %v3307, %v4554
        %v4556 = vpop.f32.mrb[0].mxu0
        %4557 = vmatprep.mubr.bf16.mxu0 %v2341
        %4558 = vmatmul.mubr.bf16.gmra.mrb[0].mxu0 %v2317
        %v4559 = vpop.f32.mrb[0].mxu0
        %v4560 = vadd.f32 %v3307, %v4559
        %v4561 = vpop.f32.mrb[0].mxu0
        %v4562 = vpop.f32.mrb[0].mxu0
        %v4563 = vadd.f32 %v3307, %v4562
        %v4564 = vpop.f32.mrb[0].mxu0
        %4565 = vmatprep.mubr.bf16.mxu0 %v2342
        %4566 = vmatmul.mubr.bf16.gmra.mrb[0].mxu0 %v2318
        %v4567 = vpop.f32.mrb[0].mxu0
        %v4568 = vadd.f32 %v3307, %v4567
        %v4569 = vpop.f32.mrb[0].mxu0
        %v4570 = vpop.f32.mrb[0].mxu0
        %v4571 = vadd.f32 %v3307, %v4570
        %v4572 = vpop.f32.mrb[0].mxu0
        %4573 = vmatprep.mubr.bf16.mxu0 %v2343
        %4574 = vmatmul.mubr.bf16.gmra.mrb[0].mxu0 %v2319
        %v4575 = vpop.f32.mrb[0].mxu0
        %v4576 = vadd.f32 %v3307, %v4575
        %v4577 = vpop.f32.mrb[0].mxu0
        %v4578 = vpop.f32.mrb[0].mxu0
        %v4579 = vadd.f32 %v3307, %v4578
        %v4580 = vpop.f32.mrb[0].mxu0
        %4581 = vmatprep.mubr.bf16.mxu0 %v2344
        %4582 = vmatmul.mubr.bf16.gmra.mrb[0].mxu0 %v2320
        %v4583 = vpop.f32.mrb[0].mxu0
        %v4584 = vadd.f32 %v3307, %v4583
        %v4585 = vpop.f32.mrb[0].mxu0
        %v4586 = vpop.f32.mrb[0].mxu0
        %v4587 = vadd.f32 %v3307, %v4586
        %v4588 = vpop.f32.mrb[0].mxu0
        %4589 = vmatprep.mubr.bf16.mxu0 %v2345
        %4590 = vmatmul.mubr.bf16.gmra.mrb[0].mxu0 %v2321
        %v4591 = vpop.f32.mrb[0].mxu0
        %v4592 = vadd.f32 %v3307, %v4591
        %v4593 = vpop.f32.mrb[0].mxu0
        %v4594 = vpop.f32.mrb[0].mxu0
        %v4595 = vadd.f32 %v3307, %v4594
        %v4596 = vpop.f32.mrb[0].mxu0
        %4597 = vmatprep.mubr.bf16.mxu0 %v2346
        %4598 = vmatmul.mubr.bf16.gmra.mrb[0].mxu0 %v2322
        %v4599 = vpop.f32.mrb[0].mxu0
        %v4600 = vadd.f32 %v3307, %v4599
        %v4601 = vpop.f32.mrb[0].mxu0
        %v4602 = vpop.f32.mrb[0].mxu0
        %v4603 = vadd.f32 %v3307, %v4602
        %v4604 = vpop.f32.mrb[0].mxu0
        %4605 = vdwg.mxu0
        %4606 = vmatprep.subr.bf16.mxu0 0
        %4607 = vmatpush1.bf16.msra.mxu0 %v4125
        %4608 = vmatprep.subr.bf16.mxu0 0
        %4609 = vmatpush1.bf16.msra.mxu0 %v4126
        %4610 = vmatprep.subr.bf16.mxu0 0
        %4611 = vmatpush1.bf16.msra.mxu0 %v4127
        %4612 = vmatprep.subr.bf16.mxu0 0
        %4613 = vmatpush1.bf16.msra.mxu0 %v4128
        %4614 = vmatprep.subr.bf16.mxu0 0
        %4615 = vmatpush1.bf16.msra.mxu0 %v4129
        %4616 = vmatprep.subr.bf16.mxu0 0
        %4617 = vmatpush1.bf16.msra.mxu0 %v4130
        %4618 = vmatprep.subr.bf16.mxu0 0
        %4619 = vmatpush1.bf16.msra.mxu0 %v4131
        %4620 = vmatprep.subr.bf16.mxu0 0
        %4621 = vmatpush1.bf16.msra.mxu0 %v4132
        %4622 = vmatprep.subr.bf16.mxu0 0
        %4623 = vmatpush1.bf16.msra.mxu0 %v4133
        %4624 = vmatprep.subr.bf16.mxu0 0
        %4625 = vmatpush1.bf16.msra.mxu0 %v4134
        %4626 = vmatprep.subr.bf16.mxu0 0
        %4627 = vmatpush1.bf16.msra.mxu0 %v4135
        %4628 = vmatprep.subr.bf16.mxu0 0
        %4629 = vmatpush1.bf16.msra.mxu0 %v4136
        %4630 = vmatprep.subr.bf16.mxu0 0
        %4631 = vmatpush1.bf16.msra.mxu0 %v4137
        %4632 = vmatprep.subr.bf16.mxu0 0
        %4633 = vmatpush1.bf16.msra.mxu0 %v4138
        %4634 = vmatprep.subr.bf16.mxu0 0
        %4635 = vmatpush1.bf16.msra.mxu0 %v4139
        %4636 = vmatprep.subr.bf16.mxu0 0
        %4637 = vmatpush1.bf16.msra.mxu0 %v4140
        %4638 = vmatprep.mubr.bf16.mxu0 %v2387
        %4639 = vmatmul.mubr.bf16.gmra.mrb[0].mxu0 %v2363
        %v4640 = vpop.f32.mrb[0].mxu0
        %v4641 = vadd.f32 %v4544, %v4640
        %v4642 = vpop.f32.mrb[0].mxu0
        %v4643 = vpop.f32.mrb[0].mxu0
        %v4644 = vadd.f32 %v4547, %v4643
        %v4645 = vpop.f32.mrb[0].mxu0
        %4646 = vmatprep.mubr.bf16.mxu0 %v2388
        %4647 = vmatmul.mubr.bf16.gmra.mrb[0].mxu0 %v2364
        %v4648 = vpop.f32.mrb[0].mxu0
        %v4649 = vadd.f32 %v4552, %v4648
        %v4650 = vpop.f32.mrb[0].mxu0
        %v4651 = vpop.f32.mrb[0].mxu0
        %v4652 = vadd.f32 %v4555, %v4651
        %v4653 = vpop.f32.mrb[0].mxu0
        %4654 = vmatprep.mubr.bf16.mxu0 %v2389
        %4655 = vmatmul.mubr.bf16.gmra.mrb[0].mxu0 %v2365
        %v4656 = vpop.f32.mrb[0].mxu0
        %v4657 = vadd.f32 %v4560, %v4656
        %v4658 = vpop.f32.mrb[0].mxu0
        %v4659 = vpop.f32.mrb[0].mxu0
        %v4660 = vadd.f32 %v4563, %v4659
        %v4661 = vpop.f32.mrb[0].mxu0
        %4662 = vmatprep.mubr.bf16.mxu0 %v2390
        %4663 = vmatmul.mubr.bf16.gmra.mrb[0].mxu0 %v2366
        %v4664 = vpop.f32.mrb[0].mxu0
        %v4665 = vadd.f32 %v4568, %v4664
        %v4666 = vpop.f32.mrb[0].mxu0
        %v4667 = vpop.f32.mrb[0].mxu0
        %v4668 = vadd.f32 %v4571, %v4667
        %v4669 = vpop.f32.mrb[0].mxu0
        %4670 = vmatprep.mubr.bf16.mxu0 %v2391
        %4671 = vmatmul.mubr.bf16.gmra.mrb[0].mxu0 %v2367
        %v4672 = vpop.f32.mrb[0].mxu0
        %v4673 = vadd.f32 %v4576, %v4672
        %v4674 = vpop.f32.mrb[0].mxu0
        %v4675 = vpop.f32.mrb[0].mxu0
        %v4676 = vadd.f32 %v4579, %v4675
        %v4677 = vpop.f32.mrb[0].mxu0
        %4678 = vmatprep.mubr.bf16.mxu0 %v2392
        %4679 = vmatmul.mubr.bf16.gmra.mrb[0].mxu0 %v2368
        %v4680 = vpop.f32.mrb[0].mxu0
        %v4681 = vadd.f32 %v4584, %v4680
        %v4682 = vpop.f32.mrb[0].mxu0
        %v4683 = vpop.f32.mrb[0].mxu0
        %v4684 = vadd.f32 %v4587, %v4683
        %v4685 = vpop.f32.mrb[0].mxu0
        %4686 = vmatprep.mubr.bf16.mxu0 %v2393
        %4687 = vmatmul.mubr.bf16.gmra.mrb[0].mxu0 %v2369
        %v4688 = vpop.f32.mrb[0].mxu0
        %v4689 = vadd.f32 %v4592, %v4688
        %v4690 = vpop.f32.mrb[0].mxu0
        %v4691 = vpop.f32.mrb[0].mxu0
        %v4692 = vadd.f32 %v4595, %v4691
        %v4693 = vpop.f32.mrb[0].mxu0
        %4694 = vmatprep.mubr.bf16.mxu0 %v2394
        %4695 = vmatmul.mubr.bf16.gmra.mrb[0].mxu0 %v2370
        %v4696 = vpop.f32.mrb[0].mxu0
        %v4697 = vadd.f32 %v4600, %v4696
        %v4698 = vpop.f32.mrb[0].mxu0
        %v4699 = vpop.f32.mrb[0].mxu0
        %v4700 = vadd.f32 %v4603, %v4699
        %v4701 = vpop.f32.mrb[0].mxu0
        %4702 = vdwg.mxu0
        %4703 = vmatprep.subr.bf16.mxu0 0
        %4704 = vmatpush1.bf16.msra.mxu0 %v4141
        %4705 = vmatprep.subr.bf16.mxu0 0
        %4706 = vmatpush1.bf16.msra.mxu0 %v4142
        %4707 = vmatprep.subr.bf16.mxu0 0
        %4708 = vmatpush1.bf16.msra.mxu0 %v4143
        %4709 = vmatprep.subr.bf16.mxu0 0
        %4710 = vmatpush1.bf16.msra.mxu0 %v4144
        %4711 = vmatprep.subr.bf16.mxu0 0
        %4712 = vmatpush1.bf16.msra.mxu0 %v4145
        %4713 = vmatprep.subr.bf16.mxu0 0
        %4714 = vmatpush1.bf16.msra.mxu0 %v4146
        %4715 = vmatprep.subr.bf16.mxu0 0
        %4716 = vmatpush1.bf16.msra.mxu0 %v4147
        %4717 = vmatprep.subr.bf16.mxu0 0
        %4718 = vmatpush1.bf16.msra.mxu0 %v4148
        %4719 = vmatprep.subr.bf16.mxu0 0
        %4720 = vmatpush1.bf16.msra.mxu0 %v4149
        %4721 = vmatprep.subr.bf16.mxu0 0
        %4722 = vmatpush1.bf16.msra.mxu0 %v4150
        %4723 = vmatprep.subr.bf16.mxu0 0
        %4724 = vmatpush1.bf16.msra.mxu0 %v4151
        %4725 = vmatprep.subr.bf16.mxu0 0
        %4726 = vmatpush1.bf16.msra.mxu0 %v4152
        %4727 = vmatprep.subr.bf16.mxu0 0
        %4728 = vmatpush1.bf16.msra.mxu0 %v4153
        %4729 = vmatprep.subr.bf16.mxu0 0
        %4730 = vmatpush1.bf16.msra.mxu0 %v4154
        %4731 = vmatprep.subr.bf16.mxu0 0
        %4732 = vmatpush1.bf16.msra.mxu0 %v4155
        %4733 = vmatprep.subr.bf16.mxu0 0
        %4734 = vmatpush1.bf16.msra.mxu0 %v4156
        %4735 = vmatprep.mubr.bf16.mxu0 %v2436
        %4736 = vmatmul.mubr.bf16.gmra.mrb[0].mxu0 %v2411
        %v4737 = vpop.f32.mrb[0].mxu0
        %v4738 = vadd.f32 %v4641, %v4737
        %v4739 = vpop.f32.mrb[0].mxu0
        %v4740 = vpop.f32.mrb[0].mxu0
        %v4741 = vadd.f32 %v4644, %v4740
        %v4742 = vpop.f32.mrb[0].mxu0
        %4743 = vmatprep.mubr.bf16.mxu0 %v2437
        %4744 = vmatmul.mubr.bf16.gmra.mrb[0].mxu0 %v2412
        %v4745 = vpop.f32.mrb[0].mxu0
        %v4746 = vadd.f32 %v4649, %v4745
        %v4747 = vpop.f32.mrb[0].mxu0
        %v4748 = vpop.f32.mrb[0].mxu0
        %v4749 = vadd.f32 %v4652, %v4748
        %v4750 = vpop.f32.mrb[0].mxu0
        %4751 = vmatprep.mubr.bf16.mxu0 %v2438
        %4752 = vmatmul.mubr.bf16.gmra.mrb[0].mxu0 %v2413
        %v4753 = vpop.f32.mrb[0].mxu0
        %v4754 = vadd.f32 %v4657, %v4753
        %v4755 = vpop.f32.mrb[0].mxu0
        %v4756 = vpop.f32.mrb[0].mxu0
        %v4757 = vadd.f32 %v4660, %v4756
        %v4758 = vpop.f32.mrb[0].mxu0
        %4759 = vmatprep.mubr.bf16.mxu0 %v2439
        %4760 = vmatmul.mubr.bf16.gmra.mrb[0].mxu0 %v2414
        %v4761 = vpop.f32.mrb[0].mxu0
        %v4762 = vadd.f32 %v4665, %v4761
        %v4763 = vpop.f32.mrb[0].mxu0
        %v4764 = vpop.f32.mrb[0].mxu0
        %v4765 = vadd.f32 %v4668, %v4764
        %v4766 = vpop.f32.mrb[0].mxu0
        %4767 = vmatprep.mubr.bf16.mxu0 %v2440
        %4768 = vmatmul.mubr.bf16.gmra.mrb[0].mxu0 %v2415
        %v4769 = vpop.f32.mrb[0].mxu0
        %v4770 = vadd.f32 %v4673, %v4769
        %v4771 = vpop.f32.mrb[0].mxu0
        %v4772 = vpop.f32.mrb[0].mxu0
        %v4773 = vadd.f32 %v4676, %v4772
        %v4774 = vpop.f32.mrb[0].mxu0
        %4775 = vmatprep.mubr.bf16.mxu0 %v2441
        %4776 = vmatmul.mubr.bf16.gmra.mrb[0].mxu0 %v2416
        %v4777 = vpop.f32.mrb[0].mxu0
        %v4778 = vadd.f32 %v4681, %v4777
        %v4779 = vpop.f32.mrb[0].mxu0
        %v4780 = vpop.f32.mrb[0].mxu0
        %v4781 = vadd.f32 %v4684, %v4780
        %v4782 = vpop.f32.mrb[0].mxu0
        %4783 = vmatprep.mubr.bf16.mxu0 %v2442
        %4784 = vmatmul.mubr.bf16.gmra.mrb[0].mxu0 %v2417
        %v4785 = vpop.f32.mrb[0].mxu0
        %v4786 = vadd.f32 %v4689, %v4785
        %v4787 = vpop.f32.mrb[0].mxu0
        %v4788 = vpop.f32.mrb[0].mxu0
        %v4789 = vadd.f32 %v4692, %v4788
        %v4790 = vpop.f32.mrb[0].mxu0
        %4791 = vmatprep.mubr.bf16.mxu0 %v2443
        %4792 = vmatmul.mubr.bf16.gmra.mrb[0].mxu0 %v2418
        %v4793 = vpop.f32.mrb[0].mxu0
        %v4794 = vadd.f32 %v4697, %v4793
        %v4795 = vpop.f32.mrb[0].mxu0
        %v4796 = vpop.f32.mrb[0].mxu0
        %v4797 = vadd.f32 %v4700, %v4796
        %v4798 = vpop.f32.mrb[0].mxu0
        %4799 = vdwg.mxu0
        %4800 = vmatprep.subr.bf16.mxu0 0
        %4801 = vmatpush1.bf16.msra.mxu0 %v4157
        %4802 = vmatprep.subr.bf16.mxu0 0
        %4803 = vmatpush1.bf16.msra.mxu0 %v4158
        %4804 = vmatprep.subr.bf16.mxu0 0
        %4805 = vmatpush1.bf16.msra.mxu0 %v4159
        %4806 = vmatprep.subr.bf16.mxu0 0
        %4807 = vmatpush1.bf16.msra.mxu0 %v4160
        %4808 = vmatprep.subr.bf16.mxu0 0
        %4809 = vmatpush1.bf16.msra.mxu0 %v4161
        %4810 = vmatprep.subr.bf16.mxu0 0
        %4811 = vmatpush1.bf16.msra.mxu0 %v4162
        %4812 = vmatprep.subr.bf16.mxu0 0
        %4813 = vmatpush1.bf16.msra.mxu0 %v4163
        %4814 = vmatprep.subr.bf16.mxu0 0
        %4815 = vmatpush1.bf16.msra.mxu0 %v4164
        %4816 = vmatprep.subr.bf16.mxu0 0
        %4817 = vmatpush1.bf16.msra.mxu0 %v4165
        %4818 = vmatprep.subr.bf16.mxu0 0
        %4819 = vmatpush1.bf16.msra.mxu0 %v4166
        %4820 = vmatprep.subr.bf16.mxu0 0
        %4821 = vmatpush1.bf16.msra.mxu0 %v4167
        %4822 = vmatprep.subr.bf16.mxu0 0
        %4823 = vmatpush1.bf16.msra.mxu0 %v4168
        %4824 = vmatprep.subr.bf16.mxu0 0
        %4825 = vmatpush1.bf16.msra.mxu0 %v4169
        %4826 = vmatprep.subr.bf16.mxu0 0
        %4827 = vmatpush1.bf16.msra.mxu0 %v4170
        %4828 = vmatprep.subr.bf16.mxu0 0
        %4829 = vmatpush1.bf16.msra.mxu0 %v4171
        %4830 = vmatprep.subr.bf16.mxu0 0
        %4831 = vmatpush1.bf16.msra.mxu0 %v4172
        %4832 = vmatprep.mubr.bf16.mxu0 %v2484
        %4833 = vmatmul.mubr.bf16.gmra.mrb[0].mxu0 %v2460
        %v4834 = vpop.f32.mrb[0].mxu0
        %v4835 = vadd.f32 %v4738, %v4834
        %v4836 = vpop.f32.mrb[0].mxu0
        %v4837 = vpop.f32.mrb[0].mxu0
        %v4838 = vadd.f32 %v4741, %v4837
        %v4839 = vpop.f32.mrb[0].mxu0
        %4840 = vmatprep.mubr.bf16.mxu0 %v2485
        %4841 = vmatmul.mubr.bf16.gmra.mrb[0].mxu0 %v2461
        %v4842 = vpop.f32.mrb[0].mxu0
        %v4843 = vadd.f32 %v4746, %v4842
        %v4844 = vpop.f32.mrb[0].mxu0
        %v4845 = vpop.f32.mrb[0].mxu0
        %v4846 = vadd.f32 %v4749, %v4845
        %v4847 = vpop.f32.mrb[0].mxu0
        %4848 = vmatprep.mubr.bf16.mxu0 %v2486
        %4849 = vmatmul.mubr.bf16.gmra.mrb[0].mxu0 %v2462
        %v4850 = vpop.f32.mrb[0].mxu0
        %v4851 = vadd.f32 %v4754, %v4850
        %v4852 = vpop.f32.mrb[0].mxu0
        %v4853 = vpop.f32.mrb[0].mxu0
        %v4854 = vadd.f32 %v4757, %v4853
        %v4855 = vpop.f32.mrb[0].mxu0
        %4856 = vmatprep.mubr.bf16.mxu0 %v2487
        %4857 = vmatmul.mubr.bf16.gmra.mrb[0].mxu0 %v2463
        %v4858 = vpop.f32.mrb[0].mxu0
        %v4859 = vadd.f32 %v4762, %v4858
        %v4860 = vpop.f32.mrb[0].mxu0
        %v4861 = vpop.f32.mrb[0].mxu0
        %v4862 = vadd.f32 %v4765, %v4861
        %v4863 = vpop.f32.mrb[0].mxu0
        %4864 = vmatprep.mubr.bf16.mxu0 %v2488
        %4865 = vmatmul.mubr.bf16.gmra.mrb[0].mxu0 %v2464
        %v4866 = vpop.f32.mrb[0].mxu0
        %v4867 = vadd.f32 %v4770, %v4866
        %v4868 = vpop.f32.mrb[0].mxu0
        %v4869 = vpop.f32.mrb[0].mxu0
        %v4870 = vadd.f32 %v4773, %v4869
        %v4871 = vpop.f32.mrb[0].mxu0
        %4872 = vmatprep.mubr.bf16.mxu0 %v2489
        %4873 = vmatmul.mubr.bf16.gmra.mrb[0].mxu0 %v2465
        %v4874 = vpop.f32.mrb[0].mxu0
        %v4875 = vadd.f32 %v4778, %v4874
        %v4876 = vpop.f32.mrb[0].mxu0
        %v4877 = vpop.f32.mrb[0].mxu0
        %v4878 = vadd.f32 %v4781, %v4877
        %v4879 = vpop.f32.mrb[0].mxu0
        %4880 = vmatprep.mubr.bf16.mxu0 %v2490
        %4881 = vmatmul.mubr.bf16.gmra.mrb[0].mxu0 %v2466
        %v4882 = vpop.f32.mrb[0].mxu0
        %v4883 = vadd.f32 %v4786, %v4882
        %v4884 = vpop.f32.mrb[0].mxu0
        %v4885 = vpop.f32.mrb[0].mxu0
        %v4886 = vadd.f32 %v4789, %v4885
        %v4887 = vpop.f32.mrb[0].mxu0
        %4888 = vmatprep.mubr.bf16.mxu0 %v2491
        %4889 = vmatmul.mubr.bf16.gmra.mrb[0].mxu0 %v2467
        %v4890 = vpop.f32.mrb[0].mxu0
        %v4891 = vadd.f32 %v4794, %v4890
        %v4892 = vpop.f32.mrb[0].mxu0
        %v4893 = vpop.f32.mrb[0].mxu0
        %v4894 = vadd.f32 %v4797, %v4893
        %v4895 = vpop.f32.mrb[0].mxu0
        %4896 = vdwg.mxu0
        %4897 = vmatprep.subr.bf16.mxu0 0
        %4898 = vmatpush1.bf16.msra.mxu0 %v4173
        %4899 = vmatprep.subr.bf16.mxu0 0
        %4900 = vmatpush1.bf16.msra.mxu0 %v4174
        %4901 = vmatprep.subr.bf16.mxu0 0
        %4902 = vmatpush1.bf16.msra.mxu0 %v4175
        %4903 = vmatprep.subr.bf16.mxu0 0
        %4904 = vmatpush1.bf16.msra.mxu0 %v4176
        %4905 = vmatprep.subr.bf16.mxu0 0
        %4906 = vmatpush1.bf16.msra.mxu0 %v4177
        %4907 = vmatprep.subr.bf16.mxu0 0
        %4908 = vmatpush1.bf16.msra.mxu0 %v4178
        %4909 = vmatprep.subr.bf16.mxu0 0
        %4910 = vmatpush1.bf16.msra.mxu0 %v4179
        %4911 = vmatprep.subr.bf16.mxu0 0
        %4912 = vmatpush1.bf16.msra.mxu0 %v4180
        %4913 = vmatprep.subr.bf16.mxu0 0
        %4914 = vmatpush1.bf16.msra.mxu0 %v4181
        %4915 = vmatprep.subr.bf16.mxu0 0
        %4916 = vmatpush1.bf16.msra.mxu0 %v4182
        %4917 = vmatprep.subr.bf16.mxu0 0
        %4918 = vmatpush1.bf16.msra.mxu0 %v4183
        %4919 = vmatprep.subr.bf16.mxu0 0
        %4920 = vmatpush1.bf16.msra.mxu0 %v4184
        %4921 = vmatprep.subr.bf16.mxu0 0
        %4922 = vmatpush1.bf16.msra.mxu0 %v4185
        %4923 = vmatprep.subr.bf16.mxu0 0
        %4924 = vmatpush1.bf16.msra.mxu0 %v4186
        %4925 = vmatprep.subr.bf16.mxu0 0
        %4926 = vmatpush1.bf16.msra.mxu0 %v4187
        %4927 = vmatprep.subr.bf16.mxu0 0
        %4928 = vmatpush1.bf16.msra.mxu0 %v4188
        %4929 = vmatprep.mubr.bf16.mxu0 %v2532
        %4930 = vmatmul.mubr.bf16.gmra.mrb[0].mxu0 %v2508
        %v4931 = vpop.f32.mrb[0].mxu0
        %v4932 = vadd.f32 %v4835, %v4931
        %v4933 = vpop.f32.mrb[0].mxu0
        %v4934 = vpop.f32.mrb[0].mxu0
        %v4935 = vadd.f32 %v4838, %v4934
        %v4936 = vpop.f32.mrb[0].mxu0
        %4937 = vmatprep.mubr.bf16.mxu0 %v2533
        %4938 = vmatmul.mubr.bf16.gmra.mrb[0].mxu0 %v2509
        %v4939 = vpop.f32.mrb[0].mxu0
        %v4940 = vadd.f32 %v4843, %v4939
        %v4941 = vpop.f32.mrb[0].mxu0
        %v4942 = vpop.f32.mrb[0].mxu0
        %v4943 = vadd.f32 %v4846, %v4942
        %v4944 = vpop.f32.mrb[0].mxu0
        %4945 = vmatprep.mubr.bf16.mxu0 %v2534
        %4946 = vmatmul.mubr.bf16.gmra.mrb[0].mxu0 %v2510
        %v4947 = vpop.f32.mrb[0].mxu0
        %v4948 = vadd.f32 %v4851, %v4947
        %v4949 = vpop.f32.mrb[0].mxu0
        %v4950 = vpop.f32.mrb[0].mxu0
        %v4951 = vadd.f32 %v4854, %v4950
        %v4952 = vpop.f32.mrb[0].mxu0
        %4953 = vmatprep.mubr.bf16.mxu0 %v2535
        %4954 = vmatmul.mubr.bf16.gmra.mrb[0].mxu0 %v2511
        %v4955 = vpop.f32.mrb[0].mxu0
        %v4956 = vadd.f32 %v4859, %v4955
        %v4957 = vpop.f32.mrb[0].mxu0
        %v4958 = vpop.f32.mrb[0].mxu0
        %v4959 = vadd.f32 %v4862, %v4958
        %v4960 = vpop.f32.mrb[0].mxu0
        %4961 = vmatprep.mubr.bf16.mxu0 %v2536
        %4962 = vmatmul.mubr.bf16.gmra.mrb[0].mxu0 %v2512
        %v4963 = vpop.f32.mrb[0].mxu0
        %v4964 = vadd.f32 %v4867, %v4963
        %v4965 = vpop.f32.mrb[0].mxu0
        %v4966 = vpop.f32.mrb[0].mxu0
        %v4967 = vadd.f32 %v4870, %v4966
        %v4968 = vpop.f32.mrb[0].mxu0
        %4969 = vmatprep.mubr.bf16.mxu0 %v2537
        %4970 = vmatmul.mubr.bf16.gmra.mrb[0].mxu0 %v2513
        %v4971 = vpop.f32.mrb[0].mxu0
        %v4972 = vadd.f32 %v4875, %v4971
        %v4973 = vpop.f32.mrb[0].mxu0
        %v4974 = vpop.f32.mrb[0].mxu0
        %v4975 = vadd.f32 %v4878, %v4974
        %v4976 = vpop.f32.mrb[0].mxu0
        %4977 = vmatprep.mubr.bf16.mxu0 %v2538
        %4978 = vmatmul.mubr.bf16.gmra.mrb[0].mxu0 %v2514
        %v4979 = vpop.f32.mrb[0].mxu0
        %v4980 = vadd.f32 %v4883, %v4979
        %v4981 = vpop.f32.mrb[0].mxu0
        %v4982 = vpop.f32.mrb[0].mxu0
        %v4983 = vadd.f32 %v4886, %v4982
        %v4984 = vpop.f32.mrb[0].mxu0
        %4985 = vmatprep.mubr.bf16.mxu0 %v2539
        %4986 = vmatmul.mubr.bf16.gmra.mrb[0].mxu0 %v2515
        %v4987 = vpop.f32.mrb[0].mxu0
        %v4988 = vadd.f32 %v4891, %v4987
        %v4989 = vpop.f32.mrb[0].mxu0
        %v4990 = vpop.f32.mrb[0].mxu0
        %v4991 = vadd.f32 %v4894, %v4990
        %v4992 = vpop.f32.mrb[0].mxu0
        %4993 = vdwg.mxu0
        %4994 = vmatprep.subr.bf16.mxu0 0
        %4995 = vmatpush1.bf16.msra.mxu0 %v4189
        %4996 = vmatprep.subr.bf16.mxu0 0
        %4997 = vmatpush1.bf16.msra.mxu0 %v4190
        %4998 = vmatprep.subr.bf16.mxu0 0
        %4999 = vmatpush1.bf16.msra.mxu0 %v4191
        %5000 = vmatprep.subr.bf16.mxu0 0
        %5001 = vmatpush1.bf16.msra.mxu0 %v4192
        %5002 = vmatprep.subr.bf16.mxu0 0
        %5003 = vmatpush1.bf16.msra.mxu0 %v4193
        %5004 = vmatprep.subr.bf16.mxu0 0
        %5005 = vmatpush1.bf16.msra.mxu0 %v4194
        %5006 = vmatprep.subr.bf16.mxu0 0
        %5007 = vmatpush1.bf16.msra.mxu0 %v4195
        %5008 = vmatprep.subr.bf16.mxu0 0
        %5009 = vmatpush1.bf16.msra.mxu0 %v4196
        %5010 = vmatprep.subr.bf16.mxu0 0
        %5011 = vmatpush1.bf16.msra.mxu0 %v4197
        %5012 = vmatprep.subr.bf16.mxu0 0
        %5013 = vmatpush1.bf16.msra.mxu0 %v4198
        %5014 = vmatprep.subr.bf16.mxu0 0
        %5015 = vmatpush1.bf16.msra.mxu0 %v4199
        %5016 = vmatprep.subr.bf16.mxu0 0
        %5017 = vmatpush1.bf16.msra.mxu0 %v4200
        %5018 = vmatprep.subr.bf16.mxu0 0
        %5019 = vmatpush1.bf16.msra.mxu0 %v4201
        %5020 = vmatprep.subr.bf16.mxu0 0
        %5021 = vmatpush1.bf16.msra.mxu0 %v4202
        %5022 = vmatprep.subr.bf16.mxu0 0
        %5023 = vmatpush1.bf16.msra.mxu0 %v4203
        %5024 = vmatprep.subr.bf16.mxu0 0
        %5025 = vmatpush1.bf16.msra.mxu0 %v4204
        %5026 = vmatprep.mubr.bf16.mxu0 %v2580
        %5027 = vmatmul.mubr.bf16.gmra.mrb[0].mxu0 %v2556
        %v5028 = vpop.f32.mrb[0].mxu0
        %v5029 = vadd.f32 %v4932, %v5028
        %v5030 = vpop.f32.mrb[0].mxu0
        %v5031 = vpop.f32.mrb[0].mxu0
        %v5032 = vadd.f32 %v4935, %v5031
        %v5033 = vpop.f32.mrb[0].mxu0
        %5034 = vmatprep.mubr.bf16.mxu0 %v2581
        %5035 = vmatmul.mubr.bf16.gmra.mrb[0].mxu0 %v2557
        %v5036 = vpop.f32.mrb[0].mxu0
        %v5037 = vadd.f32 %v4940, %v5036
        %v5038 = vpop.f32.mrb[0].mxu0
        %v5039 = vpop.f32.mrb[0].mxu0
        %v5040 = vadd.f32 %v4943, %v5039
        %v5041 = vpop.f32.mrb[0].mxu0
        %5042 = vmatprep.mubr.bf16.mxu0 %v2582
        %5043 = vmatmul.mubr.bf16.gmra.mrb[0].mxu0 %v2558
        %v5044 = vpop.f32.mrb[0].mxu0
        %v5045 = vadd.f32 %v4948, %v5044
        %v5046 = vpop.f32.mrb[0].mxu0
        %v5047 = vpop.f32.mrb[0].mxu0
        %v5048 = vadd.f32 %v4951, %v5047
        %v5049 = vpop.f32.mrb[0].mxu0
        %5050 = vmatprep.mubr.bf16.mxu0 %v2583
        %5051 = vmatmul.mubr.bf16.gmra.mrb[0].mxu0 %v2559
        %v5052 = vpop.f32.mrb[0].mxu0
        %v5053 = vadd.f32 %v4956, %v5052
        %v5054 = vpop.f32.mrb[0].mxu0
        %v5055 = vpop.f32.mrb[0].mxu0
        %v5056 = vadd.f32 %v4959, %v5055
        %v5057 = vpop.f32.mrb[0].mxu0
        %5058 = vmatprep.mubr.bf16.mxu0 %v2584
        %5059 = vmatmul.mubr.bf16.gmra.mrb[0].mxu0 %v2560
        %v5060 = vpop.f32.mrb[0].mxu0
        %v5061 = vadd.f32 %v4964, %v5060
        %v5062 = vpop.f32.mrb[0].mxu0
        %v5063 = vpop.f32.mrb[0].mxu0
        %v5064 = vadd.f32 %v4967, %v5063
        %v5065 = vpop.f32.mrb[0].mxu0
        %5066 = vmatprep.mubr.bf16.mxu0 %v2585
        %5067 = vmatmul.mubr.bf16.gmra.mrb[0].mxu0 %v2561
        %v5068 = vpop.f32.mrb[0].mxu0
        %v5069 = vadd.f32 %v4972, %v5068
        %v5070 = vpop.f32.mrb[0].mxu0
        %v5071 = vpop.f32.mrb[0].mxu0
        %v5072 = vadd.f32 %v4975, %v5071
        %v5073 = vpop.f32.mrb[0].mxu0
        %5074 = vmatprep.mubr.bf16.mxu0 %v2586
        %5075 = vmatmul.mubr.bf16.gmra.mrb[0].mxu0 %v2562
        %v5076 = vpop.f32.mrb[0].mxu0
        %v5077 = vadd.f32 %v4980, %v5076
        %v5078 = vpop.f32.mrb[0].mxu0
        %v5079 = vpop.f32.mrb[0].mxu0
        %v5080 = vadd.f32 %v4983, %v5079
        %v5081 = vpop.f32.mrb[0].mxu0
        %5082 = vmatprep.mubr.bf16.mxu0 %v2587
        %5083 = vmatmul.mubr.bf16.gmra.mrb[0].mxu0 %v2563
        %v5084 = vpop.f32.mrb[0].mxu0
        %v5085 = vadd.f32 %v4988, %v5084
        %v5086 = vpop.f32.mrb[0].mxu0
        %v5087 = vpop.f32.mrb[0].mxu0
        %v5088 = vadd.f32 %v4991, %v5087
        %v5089 = vpop.f32.mrb[0].mxu0
        %5090 = vdwg.mxu0
        %5091 = vmatprep.subr.bf16.mxu0 0
        %5092 = vmatpush1.bf16.msra.mxu0 %v4205
        %5093 = vmatprep.subr.bf16.mxu0 0
        %5094 = vmatpush1.bf16.msra.mxu0 %v4206
        %5095 = vmatprep.subr.bf16.mxu0 0
        %5096 = vmatpush1.bf16.msra.mxu0 %v4207
        %5097 = vmatprep.subr.bf16.mxu0 0
        %5098 = vmatpush1.bf16.msra.mxu0 %v4208
        %5099 = vmatprep.subr.bf16.mxu0 0
        %5100 = vmatpush1.bf16.msra.mxu0 %v4209
        %5101 = vmatprep.subr.bf16.mxu0 0
        %5102 = vmatpush1.bf16.msra.mxu0 %v4210
        %5103 = vmatprep.subr.bf16.mxu0 0
        %5104 = vmatpush1.bf16.msra.mxu0 %v4211
        %5105 = vmatprep.subr.bf16.mxu0 0
        %5106 = vmatpush1.bf16.msra.mxu0 %v4212
        %5107 = vmatprep.subr.bf16.mxu0 0
        %5108 = vmatpush1.bf16.msra.mxu0 %v4213
        %5109 = vmatprep.subr.bf16.mxu0 0
        %5110 = vmatpush1.bf16.msra.mxu0 %v4214
        %5111 = vmatprep.subr.bf16.mxu0 0
        %5112 = vmatpush1.bf16.msra.mxu0 %v4215
        %5113 = vmatprep.subr.bf16.mxu0 0
        %5114 = vmatpush1.bf16.msra.mxu0 %v4216
        %5115 = vmatprep.subr.bf16.mxu0 0
        %5116 = vmatpush1.bf16.msra.mxu0 %v4217
        %5117 = vmatprep.subr.bf16.mxu0 0
        %5118 = vmatpush1.bf16.msra.mxu0 %v4218
        %5119 = vmatprep.subr.bf16.mxu0 0
        %5120 = vmatpush1.bf16.msra.mxu0 %v4219
        %5121 = vmatprep.subr.bf16.mxu0 0
        %5122 = vmatpush1.bf16.msra.mxu0 %v4220
        %5123 = vmatprep.mubr.bf16.mxu0 %v2628
        %5124 = vmatmul.mubr.bf16.gmra.mrb[0].mxu0 %v2604
        %v5125 = vpop.f32.mrb[0].mxu0
        %v5126 = vadd.f32 %v5029, %v5125
        %v5127 = vpop.f32.mrb[0].mxu0
        %v5128 = vpop.f32.mrb[0].mxu0
        %v5129 = vadd.f32 %v5032, %v5128
        %v5130 = vpop.f32.mrb[0].mxu0
        %5131 = vmatprep.mubr.bf16.mxu0 %v2629
        %5132 = vmatmul.mubr.bf16.gmra.mrb[0].mxu0 %v2605
        %v5133 = vpop.f32.mrb[0].mxu0
        %v5134 = vadd.f32 %v5037, %v5133
        %v5135 = vpop.f32.mrb[0].mxu0
        %v5136 = vpop.f32.mrb[0].mxu0
        %v5137 = vadd.f32 %v5040, %v5136
        %v5138 = vpop.f32.mrb[0].mxu0
        %5139 = vmatprep.mubr.bf16.mxu0 %v2630
        %5140 = vmatmul.mubr.bf16.gmra.mrb[0].mxu0 %v2606
        %v5141 = vpop.f32.mrb[0].mxu0
        %v5142 = vadd.f32 %v5045, %v5141
        %v5143 = vpop.f32.mrb[0].mxu0
        %v5144 = vpop.f32.mrb[0].mxu0
        %v5145 = vadd.f32 %v5048, %v5144
        %v5146 = vpop.f32.mrb[0].mxu0
        %5147 = vmatprep.mubr.bf16.mxu0 %v2631
        %5148 = vmatmul.mubr.bf16.gmra.mrb[0].mxu0 %v2607
        %v5149 = vpop.f32.mrb[0].mxu0
        %v5150 = vadd.f32 %v5053, %v5149
        %v5151 = vpop.f32.mrb[0].mxu0
        %v5152 = vpop.f32.mrb[0].mxu0
        %v5153 = vadd.f32 %v5056, %v5152
        %v5154 = vpop.f32.mrb[0].mxu0
        %5155 = vmatprep.mubr.bf16.mxu0 %v2632
        %5156 = vmatmul.mubr.bf16.gmra.mrb[0].mxu0 %v2608
        %v5157 = vpop.f32.mrb[0].mxu0
        %v5158 = vadd.f32 %v5061, %v5157
        %v5159 = vpop.f32.mrb[0].mxu0
        %v5160 = vpop.f32.mrb[0].mxu0
        %v5161 = vadd.f32 %v5064, %v5160
        %v5162 = vpop.f32.mrb[0].mxu0
        %5163 = vmatprep.mubr.bf16.mxu0 %v2633
        %5164 = vmatmul.mubr.bf16.gmra.mrb[0].mxu0 %v2609
        %v5165 = vpop.f32.mrb[0].mxu0
        %v5166 = vadd.f32 %v5069, %v5165
        %v5167 = vpop.f32.mrb[0].mxu0
        %v5168 = vpop.f32.mrb[0].mxu0
        %v5169 = vadd.f32 %v5072, %v5168
        %v5170 = vpop.f32.mrb[0].mxu0
        %5171 = vmatprep.mubr.bf16.mxu0 %v2634
        %5172 = vmatmul.mubr.bf16.gmra.mrb[0].mxu0 %v2610
        %v5173 = vpop.f32.mrb[0].mxu0
        %v5174 = vadd.f32 %v5077, %v5173
        %v5175 = vpop.f32.mrb[0].mxu0
        %v5176 = vpop.f32.mrb[0].mxu0
        %v5177 = vadd.f32 %v5080, %v5176
        %v5178 = vpop.f32.mrb[0].mxu0
        %5179 = vmatprep.mubr.bf16.mxu0 %v2635
        %5180 = vmatmul.mubr.bf16.gmra.mrb[0].mxu0 %v2611
        %v5181 = vpop.f32.mrb[0].mxu0
        %v5182 = vadd.f32 %v5085, %v5181
        %v5183 = vpop.f32.mrb[0].mxu0
        %v5184 = vpop.f32.mrb[0].mxu0
        %v5185 = vadd.f32 %v5088, %v5184
        %v5186 = vpop.f32.mrb[0].mxu0
        %5187 = vdwg.mxu0
        %5188 = vmatprep.subr.bf16.mxu0 0
        %5189 = vmatpush1.bf16.msra.mxu0 %v4221
        %5190 = vmatprep.subr.bf16.mxu0 0
        %5191 = vmatpush1.bf16.msra.mxu0 %v4222
        %5192 = vmatprep.subr.bf16.mxu0 0
        %5193 = vmatpush1.bf16.msra.mxu0 %v4223
        %5194 = vmatprep.subr.bf16.mxu0 0
        %5195 = vmatpush1.bf16.msra.mxu0 %v4224
        %5196 = vmatprep.subr.bf16.mxu0 0
        %5197 = vmatpush1.bf16.msra.mxu0 %v4225
        %5198 = vmatprep.subr.bf16.mxu0 0
        %5199 = vmatpush1.bf16.msra.mxu0 %v4226
        %5200 = vmatprep.subr.bf16.mxu0 0
        %5201 = vmatpush1.bf16.msra.mxu0 %v4227
        %5202 = vmatprep.subr.bf16.mxu0 0
        %5203 = vmatpush1.bf16.msra.mxu0 %v4228
        %5204 = vmatprep.subr.bf16.mxu0 0
        %5205 = vmatpush1.bf16.msra.mxu0 %v4229
        %5206 = vmatprep.subr.bf16.mxu0 0
        %5207 = vmatpush1.bf16.msra.mxu0 %v4230
        %5208 = vmatprep.subr.bf16.mxu0 0
        %5209 = vmatpush1.bf16.msra.mxu0 %v4231
        %5210 = vmatprep.subr.bf16.mxu0 0
        %5211 = vmatpush1.bf16.msra.mxu0 %v4232
        %5212 = vmatprep.subr.bf16.mxu0 0
        %5213 = vmatpush1.bf16.msra.mxu0 %v4233
        %5214 = vmatprep.subr.bf16.mxu0 0
        %5215 = vmatpush1.bf16.msra.mxu0 %v4234
        %5216 = vmatprep.subr.bf16.mxu0 0
        %5217 = vmatpush1.bf16.msra.mxu0 %v4235
        %5218 = vmatprep.subr.bf16.mxu0 0
        %5219 = vmatpush1.bf16.msra.mxu0 %v4236
        %5220 = vmatprep.mubr.bf16.mxu0 %v2677
        %5221 = vmatmul.mubr.bf16.gmra.mrb[0].mxu0 %v2652
        %v5222 = vpop.f32.mrb[0].mxu0
        %v5223 = vadd.f32 %v5126, %v5222
        %v5224 = vpop.f32.mrb[0].mxu0
        %v5225 = vpop.f32.mrb[0].mxu0
        %v5226 = vadd.f32 %v5129, %v5225
        %v5227 = vpop.f32.mrb[0].mxu0
        %5228 = vmatprep.mubr.bf16.mxu0 %v2678
        %5229 = vmatmul.mubr.bf16.gmra.mrb[0].mxu0 %v2653
        %v5230 = vpop.f32.mrb[0].mxu0
        %v5231 = vadd.f32 %v5134, %v5230
        %v5232 = vpop.f32.mrb[0].mxu0
        %v5233 = vpop.f32.mrb[0].mxu0
        %v5234 = vadd.f32 %v5137, %v5233
        %v5235 = vpop.f32.mrb[0].mxu0
        %5236 = vmatprep.mubr.bf16.mxu0 %v2679
        %5237 = vmatmul.mubr.bf16.gmra.mrb[0].mxu0 %v2654
        %v5238 = vpop.f32.mrb[0].mxu0
        %v5239 = vadd.f32 %v5142, %v5238
        %v5240 = vpop.f32.mrb[0].mxu0
        %v5241 = vpop.f32.mrb[0].mxu0
        %v5242 = vadd.f32 %v5145, %v5241
        %v5243 = vpop.f32.mrb[0].mxu0
        %5244 = vmatprep.mubr.bf16.mxu0 %v2680
        %5245 = vmatmul.mubr.bf16.gmra.mrb[0].mxu0 %v2655
        %v5246 = vpop.f32.mrb[0].mxu0
        %v5247 = vadd.f32 %v5150, %v5246
        %v5248 = vpop.f32.mrb[0].mxu0
        %v5249 = vpop.f32.mrb[0].mxu0
        %v5250 = vadd.f32 %v5153, %v5249
        %v5251 = vpop.f32.mrb[0].mxu0
        %5252 = vmatprep.mubr.bf16.mxu0 %v2681
        %5253 = vmatmul.mubr.bf16.gmra.mrb[0].mxu0 %v2656
        %v5254 = vpop.f32.mrb[0].mxu0
        %v5255 = vadd.f32 %v5158, %v5254
        %v5256 = vpop.f32.mrb[0].mxu0
        %v5257 = vpop.f32.mrb[0].mxu0
        %v5258 = vadd.f32 %v5161, %v5257
        %v5259 = vpop.f32.mrb[0].mxu0
        %5260 = vmatprep.mubr.bf16.mxu0 %v2682
        %5261 = vmatmul.mubr.bf16.gmra.mrb[0].mxu0 %v2657
        %v5262 = vpop.f32.mrb[0].mxu0
        %v5263 = vadd.f32 %v5166, %v5262
        %v5264 = vpop.f32.mrb[0].mxu0
        %v5265 = vpop.f32.mrb[0].mxu0
        %v5266 = vadd.f32 %v5169, %v5265
        %v5267 = vpop.f32.mrb[0].mxu0
        %5268 = vmatprep.mubr.bf16.mxu0 %v2683
        %5269 = vmatmul.mubr.bf16.gmra.mrb[0].mxu0 %v2658
        %v5270 = vpop.f32.mrb[0].mxu0
        %v5271 = vadd.f32 %v5174, %v5270
        %v5272 = vpop.f32.mrb[0].mxu0
        %v5273 = vpop.f32.mrb[0].mxu0
        %v5274 = vadd.f32 %v5177, %v5273
        %v5275 = vpop.f32.mrb[0].mxu0
        %5276 = vmatprep.mubr.bf16.mxu0 %v2684
        %5277 = vmatmul.mubr.bf16.gmra.mrb[0].mxu0 %v2659
        %v5278 = vpop.f32.mrb[0].mxu0
        %v5279 = vadd.f32 %v5182, %v5278
        %v5280 = vpop.f32.mrb[0].mxu0
        %v5281 = vpop.f32.mrb[0].mxu0
        %v5282 = vadd.f32 %v5185, %v5281
        %v5283 = vpop.f32.mrb[0].mxu0
        %5284 = vdwg.mxu0
        %5285 = vmatprep.subr.bf16.mxu0 0
        %5286 = vmatpush1.bf16.msra.mxu0 %v4237
        %5287 = vmatprep.subr.bf16.mxu0 0
        %5288 = vmatpush1.bf16.msra.mxu0 %v4238
        %5289 = vmatprep.subr.bf16.mxu0 0
        %5290 = vmatpush1.bf16.msra.mxu0 %v4239
        %5291 = vmatprep.subr.bf16.mxu0 0
        %5292 = vmatpush1.bf16.msra.mxu0 %v4240
        %5293 = vmatprep.subr.bf16.mxu0 0
        %5294 = vmatpush1.bf16.msra.mxu0 %v4241
        %5295 = vmatprep.subr.bf16.mxu0 0
        %5296 = vmatpush1.bf16.msra.mxu0 %v4242
        %5297 = vmatprep.subr.bf16.mxu0 0
        %5298 = vmatpush1.bf16.msra.mxu0 %v4243
        %5299 = vmatprep.subr.bf16.mxu0 0
        %5300 = vmatpush1.bf16.msra.mxu0 %v4244
        %5301 = vmatprep.subr.bf16.mxu0 0
        %5302 = vmatpush1.bf16.msra.mxu0 %v4245
        %5303 = vmatprep.subr.bf16.mxu0 0
        %5304 = vmatpush1.bf16.msra.mxu0 %v4246
        %5305 = vmatprep.subr.bf16.mxu0 0
        %5306 = vmatpush1.bf16.msra.mxu0 %v4247
        %5307 = vmatprep.subr.bf16.mxu0 0
        %5308 = vmatpush1.bf16.msra.mxu0 %v4248
        %5309 = vmatprep.subr.bf16.mxu0 0
        %5310 = vmatpush1.bf16.msra.mxu0 %v4249
        %5311 = vmatprep.subr.bf16.mxu0 0
        %5312 = vmatpush1.bf16.msra.mxu0 %v4250
        %5313 = vmatprep.subr.bf16.mxu0 0
        %5314 = vmatpush1.bf16.msra.mxu0 %v4251
        %5315 = vmatprep.subr.bf16.mxu0 0
        %5316 = vmatpush1.bf16.msra.mxu0 %v4252
        %5317 = vmatprep.mubr.bf16.mxu0 %v2725
        %5318 = vmatmul.mubr.bf16.gmra.mrb[0].mxu0 %v2701
        %v5319 = vpop.f32.mrb[0].mxu0
        %v5320 = vadd.f32 %v5223, %v5319
        %v5321 = vpop.f32.mrb[0].mxu0
        %v5322 = vpop.f32.mrb[0].mxu0
        %v5323 = vadd.f32 %v5226, %v5322
        %v5324 = vpop.f32.mrb[0].mxu0
        %5325 = vmatprep.mubr.bf16.mxu0 %v2726
        %5326 = vmatmul.mubr.bf16.gmra.mrb[0].mxu0 %v2702
        %v5327 = vpop.f32.mrb[0].mxu0
        %v5328 = vadd.f32 %v5231, %v5327
        %v5329 = vpop.f32.mrb[0].mxu0
        %v5330 = vpop.f32.mrb[0].mxu0
        %v5331 = vadd.f32 %v5234, %v5330
        %v5332 = vpop.f32.mrb[0].mxu0
        %5333 = vmatprep.mubr.bf16.mxu0 %v2727
        %5334 = vmatmul.mubr.bf16.gmra.mrb[0].mxu0 %v2703
        %v5335 = vpop.f32.mrb[0].mxu0
        %v5336 = vadd.f32 %v5239, %v5335
        %v5337 = vpop.f32.mrb[0].mxu0
        %v5338 = vpop.f32.mrb[0].mxu0
        %v5339 = vadd.f32 %v5242, %v5338
        %v5340 = vpop.f32.mrb[0].mxu0
        %5341 = vmatprep.mubr.bf16.mxu0 %v2728
        %5342 = vmatmul.mubr.bf16.gmra.mrb[0].mxu0 %v2704
        %v5343 = vpop.f32.mrb[0].mxu0
        %v5344 = vadd.f32 %v5247, %v5343
        %v5345 = vpop.f32.mrb[0].mxu0
        %v5346 = vpop.f32.mrb[0].mxu0
        %v5347 = vadd.f32 %v5250, %v5346
        %v5348 = vpop.f32.mrb[0].mxu0
        %5349 = vmatprep.mubr.bf16.mxu0 %v2729
        %5350 = vmatmul.mubr.bf16.gmra.mrb[0].mxu0 %v2705
        %v5351 = vpop.f32.mrb[0].mxu0
        %v5352 = vadd.f32 %v5255, %v5351
        %v5353 = vpop.f32.mrb[0].mxu0
        %v5354 = vpop.f32.mrb[0].mxu0
        %v5355 = vadd.f32 %v5258, %v5354
        %v5356 = vpop.f32.mrb[0].mxu0
        %5357 = vmatprep.mubr.bf16.mxu0 %v2730
        %5358 = vmatmul.mubr.bf16.gmra.mrb[0].mxu0 %v2706
        %v5359 = vpop.f32.mrb[0].mxu0
        %v5360 = vadd.f32 %v5263, %v5359
        %v5361 = vpop.f32.mrb[0].mxu0
        %v5362 = vpop.f32.mrb[0].mxu0
        %v5363 = vadd.f32 %v5266, %v5362
        %v5364 = vpop.f32.mrb[0].mxu0
        %5365 = vmatprep.mubr.bf16.mxu0 %v2731
        %5366 = vmatmul.mubr.bf16.gmra.mrb[0].mxu0 %v2707
        %v5367 = vpop.f32.mrb[0].mxu0
        %v5368 = vadd.f32 %v5271, %v5367
        %v5369 = vpop.f32.mrb[0].mxu0
        %v5370 = vpop.f32.mrb[0].mxu0
        %v5371 = vadd.f32 %v5274, %v5370
        %v5372 = vpop.f32.mrb[0].mxu0
        %5373 = vmatprep.mubr.bf16.mxu0 %v2732
        %5374 = vmatmul.mubr.bf16.gmra.mrb[0].mxu0 %v2708
        %v5375 = vpop.f32.mrb[0].mxu0
        %v5376 = vadd.f32 %v5279, %v5375
        %v5377 = vpop.f32.mrb[0].mxu0
        %v5378 = vpop.f32.mrb[0].mxu0
        %v5379 = vadd.f32 %v5282, %v5378
        %v5380 = vpop.f32.mrb[0].mxu0
        %5381 = vdwg.mxu0
        %5382 = vmatprep.subr.bf16.mxu0 0
        %5383 = vmatpush1.bf16.msra.mxu0 %v4253
        %5384 = vmatprep.subr.bf16.mxu0 0
        %5385 = vmatpush1.bf16.msra.mxu0 %v4254
        %5386 = vmatprep.subr.bf16.mxu0 0
        %5387 = vmatpush1.bf16.msra.mxu0 %v4255
        %5388 = vmatprep.subr.bf16.mxu0 0
        %5389 = vmatpush1.bf16.msra.mxu0 %v4256
        %5390 = vmatprep.subr.bf16.mxu0 0
        %5391 = vmatpush1.bf16.msra.mxu0 %v4257
        %5392 = vmatprep.subr.bf16.mxu0 0
        %5393 = vmatpush1.bf16.msra.mxu0 %v4258
        %5394 = vmatprep.subr.bf16.mxu0 0
        %5395 = vmatpush1.bf16.msra.mxu0 %v4259
        %5396 = vmatprep.subr.bf16.mxu0 0
        %5397 = vmatpush1.bf16.msra.mxu0 %v4260
        %5398 = vmatprep.subr.bf16.mxu0 0
        %5399 = vmatpush1.bf16.msra.mxu0 %v4261
        %5400 = vmatprep.subr.bf16.mxu0 0
        %5401 = vmatpush1.bf16.msra.mxu0 %v4262
        %5402 = vmatprep.subr.bf16.mxu0 0
        %5403 = vmatpush1.bf16.msra.mxu0 %v4263
        %5404 = vmatprep.subr.bf16.mxu0 0
        %5405 = vmatpush1.bf16.msra.mxu0 %v4264
        %5406 = vmatprep.subr.bf16.mxu0 0
        %5407 = vmatpush1.bf16.msra.mxu0 %v4265
        %5408 = vmatprep.subr.bf16.mxu0 0
        %5409 = vmatpush1.bf16.msra.mxu0 %v4266
        %5410 = vmatprep.subr.bf16.mxu0 0
        %5411 = vmatpush1.bf16.msra.mxu0 %v4267
        %5412 = vmatprep.subr.bf16.mxu0 0
        %5413 = vmatpush1.bf16.msra.mxu0 %v4268
        %5414 = vmatprep.mubr.bf16.mxu0 %v2773
        %5415 = vmatmul.mubr.bf16.gmra.mrb[0].mxu0 %v2749
        %v5416 = vpop.f32.mrb[0].mxu0
        %v5417 = vadd.f32 %v5320, %v5416
        %v5418 = vpop.f32.mrb[0].mxu0
        %v5419 = vpop.f32.mrb[0].mxu0
        %v5420 = vadd.f32 %v5323, %v5419
        %v5421 = vpop.f32.mrb[0].mxu0
        %5422 = vmatprep.mubr.bf16.mxu0 %v2774
        %5423 = vmatmul.mubr.bf16.gmra.mrb[0].mxu0 %v2750
        %v5424 = vpop.f32.mrb[0].mxu0
        %v5425 = vadd.f32 %v5328, %v5424
        %v5426 = vpop.f32.mrb[0].mxu0
        %v5427 = vpop.f32.mrb[0].mxu0
        %v5428 = vadd.f32 %v5331, %v5427
        %v5429 = vpop.f32.mrb[0].mxu0
        %5430 = vmatprep.mubr.bf16.mxu0 %v2775
        %5431 = vmatmul.mubr.bf16.gmra.mrb[0].mxu0 %v2751
        %v5432 = vpop.f32.mrb[0].mxu0
        %v5433 = vadd.f32 %v5336, %v5432
        %v5434 = vpop.f32.mrb[0].mxu0
        %v5435 = vpop.f32.mrb[0].mxu0
        %v5436 = vadd.f32 %v5339, %v5435
        %v5437 = vpop.f32.mrb[0].mxu0
        %5438 = vmatprep.mubr.bf16.mxu0 %v2776
        %5439 = vmatmul.mubr.bf16.gmra.mrb[0].mxu0 %v2752
        %v5440 = vpop.f32.mrb[0].mxu0
        %v5441 = vadd.f32 %v5344, %v5440
        %v5442 = vpop.f32.mrb[0].mxu0
        %v5443 = vpop.f32.mrb[0].mxu0
        %v5444 = vadd.f32 %v5347, %v5443
        %v5445 = vpop.f32.mrb[0].mxu0
        %5446 = vmatprep.mubr.bf16.mxu0 %v2777
        %5447 = vmatmul.mubr.bf16.gmra.mrb[0].mxu0 %v2753
        %v5448 = vpop.f32.mrb[0].mxu0
        %v5449 = vadd.f32 %v5352, %v5448
        %v5450 = vpop.f32.mrb[0].mxu0
        %v5451 = vpop.f32.mrb[0].mxu0
        %v5452 = vadd.f32 %v5355, %v5451
        %v5453 = vpop.f32.mrb[0].mxu0
        %5454 = vmatprep.mubr.bf16.mxu0 %v2778
        %5455 = vmatmul.mubr.bf16.gmra.mrb[0].mxu0 %v2754
        %v5456 = vpop.f32.mrb[0].mxu0
        %v5457 = vadd.f32 %v5360, %v5456
        %v5458 = vpop.f32.mrb[0].mxu0
        %v5459 = vpop.f32.mrb[0].mxu0
        %v5460 = vadd.f32 %v5363, %v5459
        %v5461 = vpop.f32.mrb[0].mxu0
        %5462 = vmatprep.mubr.bf16.mxu0 %v2779
        %5463 = vmatmul.mubr.bf16.gmra.mrb[0].mxu0 %v2755
        %v5464 = vpop.f32.mrb[0].mxu0
        %v5465 = vadd.f32 %v5368, %v5464
        %v5466 = vpop.f32.mrb[0].mxu0
        %v5467 = vpop.f32.mrb[0].mxu0
        %v5468 = vadd.f32 %v5371, %v5467
        %v5469 = vpop.f32.mrb[0].mxu0
        %5470 = vmatprep.mubr.bf16.mxu0 %v2780
        %5471 = vmatmul.mubr.bf16.gmra.mrb[0].mxu0 %v2756
        %v5472 = vpop.f32.mrb[0].mxu0
        %v5473 = vadd.f32 %v5376, %v5472
        %v5474 = vpop.f32.mrb[0].mxu0
        %v5475 = vpop.f32.mrb[0].mxu0
        %v5476 = vadd.f32 %v5379, %v5475
        %v5477 = vpop.f32.mrb[0].mxu0
        %5478 = vdwg.mxu0
        %5479 = vmatprep.subr.bf16.mxu0 0
        %5480 = vmatpush1.bf16.msra.mxu0 %v4269
        %5481 = vmatprep.subr.bf16.mxu0 0
        %5482 = vmatpush1.bf16.msra.mxu0 %v4270
        %5483 = vmatprep.subr.bf16.mxu0 0
        %5484 = vmatpush1.bf16.msra.mxu0 %v4271
        %5485 = vmatprep.subr.bf16.mxu0 0
        %5486 = vmatpush1.bf16.msra.mxu0 %v4272
        %5487 = vmatprep.subr.bf16.mxu0 0
        %5488 = vmatpush1.bf16.msra.mxu0 %v4273
        %5489 = vmatprep.subr.bf16.mxu0 0
        %5490 = vmatpush1.bf16.msra.mxu0 %v4274
        %5491 = vmatprep.subr.bf16.mxu0 0
        %5492 = vmatpush1.bf16.msra.mxu0 %v4275
        %5493 = vmatprep.subr.bf16.mxu0 0
        %5494 = vmatpush1.bf16.msra.mxu0 %v4276
        %5495 = vmatprep.subr.bf16.mxu0 0
        %5496 = vmatpush1.bf16.msra.mxu0 %v4277
        %5497 = vmatprep.subr.bf16.mxu0 0
        %5498 = vmatpush1.bf16.msra.mxu0 %v4278
        %5499 = vmatprep.subr.bf16.mxu0 0
        %5500 = vmatpush1.bf16.msra.mxu0 %v4279
        %5501 = vmatprep.subr.bf16.mxu0 0
        %5502 = vmatpush1.bf16.msra.mxu0 %v4280
        %5503 = vmatprep.subr.bf16.mxu0 0
        %5504 = vmatpush1.bf16.msra.mxu0 %v4281
        %5505 = vmatprep.subr.bf16.mxu0 0
        %5506 = vmatpush1.bf16.msra.mxu0 %v4282
        %5507 = vmatprep.subr.bf16.mxu0 0
        %5508 = vmatpush1.bf16.msra.mxu0 %v4283
        %5509 = vmatprep.subr.bf16.mxu0 0
        %5510 = vmatpush1.bf16.msra.mxu0 %v4284
        %5511 = vmatprep.mubr.bf16.mxu0 %v2822
        %5512 = vmatmul.mubr.bf16.gmra.mrb[0].mxu0 %v2798
        %v5513 = vpop.f32.mrb[0].mxu0
        %v5514 = vadd.f32 %v5417, %v5513
        %v5515 = vpop.f32.mrb[0].mxu0
        %v5516 = vpop.f32.mrb[0].mxu0
        %v5517 = vadd.f32 %v5420, %v5516
        %v5518 = vpop.f32.mrb[0].mxu0
        %5519 = vmatprep.mubr.bf16.mxu0 %v2823
        %5520 = vmatmul.mubr.bf16.gmra.mrb[0].mxu0 %v2799
        %v5521 = vpop.f32.mrb[0].mxu0
        %v5522 = vadd.f32 %v5425, %v5521
        %v5523 = vpop.f32.mrb[0].mxu0
        %v5524 = vpop.f32.mrb[0].mxu0
        %v5525 = vadd.f32 %v5428, %v5524
        %v5526 = vpop.f32.mrb[0].mxu0
        %5527 = vmatprep.mubr.bf16.mxu0 %v2824
        %5528 = vmatmul.mubr.bf16.gmra.mrb[0].mxu0 %v2800
        %v5529 = vpop.f32.mrb[0].mxu0
        %v5530 = vadd.f32 %v5433, %v5529
        %v5531 = vpop.f32.mrb[0].mxu0
        %v5532 = vpop.f32.mrb[0].mxu0
        %v5533 = vadd.f32 %v5436, %v5532
        %v5534 = vpop.f32.mrb[0].mxu0
        %5535 = vmatprep.mubr.bf16.mxu0 %v2825
        %5536 = vmatmul.mubr.bf16.gmra.mrb[0].mxu0 %v2801
        %v5537 = vpop.f32.mrb[0].mxu0
        %v5538 = vadd.f32 %v5441, %v5537
        %v5539 = vpop.f32.mrb[0].mxu0
        %v5540 = vpop.f32.mrb[0].mxu0
        %v5541 = vadd.f32 %v5444, %v5540
        %v5542 = vpop.f32.mrb[0].mxu0
        %5543 = vmatprep.mubr.bf16.mxu0 %v2826
        %5544 = vmatmul.mubr.bf16.gmra.mrb[0].mxu0 %v2802
        %v5545 = vpop.f32.mrb[0].mxu0
        %v5546 = vadd.f32 %v5449, %v5545
        %v5547 = vpop.f32.mrb[0].mxu0
        %v5548 = vpop.f32.mrb[0].mxu0
        %v5549 = vadd.f32 %v5452, %v5548
        %v5550 = vpop.f32.mrb[0].mxu0
        %5551 = vmatprep.mubr.bf16.mxu0 %v2827
        %5552 = vmatmul.mubr.bf16.gmra.mrb[0].mxu0 %v2803
        %v5553 = vpop.f32.mrb[0].mxu0
        %v5554 = vadd.f32 %v5457, %v5553
        %v5555 = vpop.f32.mrb[0].mxu0
        %v5556 = vpop.f32.mrb[0].mxu0
        %v5557 = vadd.f32 %v5460, %v5556
        %v5558 = vpop.f32.mrb[0].mxu0
        %5559 = vmatprep.mubr.bf16.mxu0 %v2828
        %5560 = vmatmul.mubr.bf16.gmra.mrb[0].mxu0 %v2804
        %v5561 = vpop.f32.mrb[0].mxu0
        %v5562 = vadd.f32 %v5465, %v5561
        %v5563 = vpop.f32.mrb[0].mxu0
        %v5564 = vpop.f32.mrb[0].mxu0
        %v5565 = vadd.f32 %v5468, %v5564
        %v5566 = vpop.f32.mrb[0].mxu0
        %5567 = vmatprep.mubr.bf16.mxu0 %v2829
        %5568 = vmatmul.mubr.bf16.gmra.mrb[0].mxu0 %v2805
        %v5569 = vpop.f32.mrb[0].mxu0
        %v5570 = vadd.f32 %v5473, %v5569
        %v5571 = vpop.f32.mrb[0].mxu0
        %v5572 = vpop.f32.mrb[0].mxu0
        %v5573 = vadd.f32 %v5476, %v5572
        %v5574 = vpop.f32.mrb[0].mxu0
        %5575 = vdwg.mxu0
        %5576 = vmatprep.subr.bf16.mxu0 0
        %5577 = vmatpush1.bf16.msra.mxu0 %v4285
        %5578 = vmatprep.subr.bf16.mxu0 0
        %5579 = vmatpush1.bf16.msra.mxu0 %v4286
        %5580 = vmatprep.subr.bf16.mxu0 0
        %5581 = vmatpush1.bf16.msra.mxu0 %v4287
        %5582 = vmatprep.subr.bf16.mxu0 0
        %5583 = vmatpush1.bf16.msra.mxu0 %v4288
        %5584 = vmatprep.subr.bf16.mxu0 0
        %5585 = vmatpush1.bf16.msra.mxu0 %v4289
        %5586 = vmatprep.subr.bf16.mxu0 0
        %5587 = vmatpush1.bf16.msra.mxu0 %v4290
        %5588 = vmatprep.subr.bf16.mxu0 0
        %5589 = vmatpush1.bf16.msra.mxu0 %v4291
        %5590 = vmatprep.subr.bf16.mxu0 0
        %5591 = vmatpush1.bf16.msra.mxu0 %v4292
        %5592 = vmatprep.subr.bf16.mxu0 0
        %5593 = vmatpush1.bf16.msra.mxu0 %v4293
        %5594 = vmatprep.subr.bf16.mxu0 0
        %5595 = vmatpush1.bf16.msra.mxu0 %v4294
        %5596 = vmatprep.subr.bf16.mxu0 0
        %5597 = vmatpush1.bf16.msra.mxu0 %v4295
        %5598 = vmatprep.subr.bf16.mxu0 0
        %5599 = vmatpush1.bf16.msra.mxu0 %v4296
        %5600 = vmatprep.subr.bf16.mxu0 0
        %5601 = vmatpush1.bf16.msra.mxu0 %v4297
        %5602 = vmatprep.subr.bf16.mxu0 0
        %5603 = vmatpush1.bf16.msra.mxu0 %v4298
        %5604 = vmatprep.subr.bf16.mxu0 0
        %5605 = vmatpush1.bf16.msra.mxu0 %v4299
        %5606 = vmatprep.subr.bf16.mxu0 0
        %5607 = vmatpush1.bf16.msra.mxu0 %v4300
        %5608 = vmatprep.mubr.bf16.mxu0 %v2870
        %5609 = vmatmul.mubr.bf16.gmra.mrb[0].mxu0 %v2846
        %v5610 = vpop.f32.mrb[0].mxu0
        %v5611 = vadd.f32 %v5514, %v5610
        %v5612 = vpop.f32.mrb[0].mxu0
        %v5613 = vpop.f32.mrb[0].mxu0
        %v5614 = vadd.f32 %v5517, %v5613
        %v5615 = vpop.f32.mrb[0].mxu0
        %5616 = vmatprep.mubr.bf16.mxu0 %v2871
        %5617 = vmatmul.mubr.bf16.gmra.mrb[0].mxu0 %v2847
        %v5618 = vpop.f32.mrb[0].mxu0
        %v5619 = vadd.f32 %v5522, %v5618
        %v5620 = vpop.f32.mrb[0].mxu0
        %v5621 = vpop.f32.mrb[0].mxu0
        %v5622 = vadd.f32 %v5525, %v5621
        %v5623 = vpop.f32.mrb[0].mxu0
        %5624 = vmatprep.mubr.bf16.mxu0 %v2872
        %5625 = vmatmul.mubr.bf16.gmra.mrb[0].mxu0 %v2848
        %v5626 = vpop.f32.mrb[0].mxu0
        %v5627 = vadd.f32 %v5530, %v5626
        %v5628 = vpop.f32.mrb[0].mxu0
        %v5629 = vpop.f32.mrb[0].mxu0
        %v5630 = vadd.f32 %v5533, %v5629
        %v5631 = vpop.f32.mrb[0].mxu0
        %5632 = vmatprep.mubr.bf16.mxu0 %v2873
        %5633 = vmatmul.mubr.bf16.gmra.mrb[0].mxu0 %v2849
        %v5634 = vpop.f32.mrb[0].mxu0
        %v5635 = vadd.f32 %v5538, %v5634
        %v5636 = vpop.f32.mrb[0].mxu0
        %v5637 = vpop.f32.mrb[0].mxu0
        %v5638 = vadd.f32 %v5541, %v5637
        %v5639 = vpop.f32.mrb[0].mxu0
        %5640 = vmatprep.mubr.bf16.mxu0 %v2874
        %5641 = vmatmul.mubr.bf16.gmra.mrb[0].mxu0 %v2850
        %v5642 = vpop.f32.mrb[0].mxu0
        %v5643 = vadd.f32 %v5546, %v5642
        %v5644 = vpop.f32.mrb[0].mxu0
        %v5645 = vpop.f32.mrb[0].mxu0
        %v5646 = vadd.f32 %v5549, %v5645
        %v5647 = vpop.f32.mrb[0].mxu0
        %5648 = vmatprep.mubr.bf16.mxu0 %v2875
        %5649 = vmatmul.mubr.bf16.gmra.mrb[0].mxu0 %v2851
        %v5650 = vpop.f32.mrb[0].mxu0
        %v5651 = vadd.f32 %v5554, %v5650
        %v5652 = vpop.f32.mrb[0].mxu0
        %v5653 = vpop.f32.mrb[0].mxu0
        %v5654 = vadd.f32 %v5557, %v5653
        %v5655 = vpop.f32.mrb[0].mxu0
        %5656 = vmatprep.mubr.bf16.mxu0 %v2876
        %5657 = vmatmul.mubr.bf16.gmra.mrb[0].mxu0 %v2852
        %v5658 = vpop.f32.mrb[0].mxu0
        %v5659 = vadd.f32 %v5562, %v5658
        %v5660 = vpop.f32.mrb[0].mxu0
        %v5661 = vpop.f32.mrb[0].mxu0
        %v5662 = vadd.f32 %v5565, %v5661
        %v5663 = vpop.f32.mrb[0].mxu0
        %5664 = vmatprep.mubr.bf16.mxu0 %v2877
        %5665 = vmatmul.mubr.bf16.gmra.mrb[0].mxu0 %v2853
        %v5666 = vpop.f32.mrb[0].mxu0
        %v5667 = vadd.f32 %v5570, %v5666
        %v5668 = vpop.f32.mrb[0].mxu0
        %v5669 = vpop.f32.mrb[0].mxu0
        %v5670 = vadd.f32 %v5573, %v5669
        %v5671 = vpop.f32.mrb[0].mxu0
        %5672 = vdwg.mxu0
        %5673 = vmatprep.subr.bf16.mxu0 0
        %5674 = vmatpush1.bf16.msra.mxu0 %v4301
        %5675 = vmatprep.subr.bf16.mxu0 0
        %5676 = vmatpush1.bf16.msra.mxu0 %v4302
        %5677 = vmatprep.subr.bf16.mxu0 0
        %5678 = vmatpush1.bf16.msra.mxu0 %v4303
        %5679 = vmatprep.subr.bf16.mxu0 0
        %5680 = vmatpush1.bf16.msra.mxu0 %v4304
        %5681 = vmatprep.subr.bf16.mxu0 0
        %5682 = vmatpush1.bf16.msra.mxu0 %v4305
        %5683 = vmatprep.subr.bf16.mxu0 0
        %5684 = vmatpush1.bf16.msra.mxu0 %v4306
        %5685 = vmatprep.subr.bf16.mxu0 0
        %5686 = vmatpush1.bf16.msra.mxu0 %v4307
        %5687 = vmatprep.subr.bf16.mxu0 0
        %5688 = vmatpush1.bf16.msra.mxu0 %v4308
        %5689 = vmatprep.subr.bf16.mxu0 0
        %5690 = vmatpush1.bf16.msra.mxu0 0
        %5691 = vmatprep.subr.bf16.mxu0 0
        %5692 = vmatpush1.bf16.msra.mxu0 0
        %5693 = vmatprep.subr.bf16.mxu0 0
        %5694 = vmatpush1.bf16.msra.mxu0 0
        %5695 = vmatprep.subr.bf16.mxu0 0
        %5696 = vmatpush1.bf16.msra.mxu0 0
        %5697 = vmatprep.subr.bf16.mxu0 0
        %5698 = vmatpush1.bf16.msra.mxu0 0
        %5699 = vmatprep.subr.bf16.mxu0 0
        %5700 = vmatpush1.bf16.msra.mxu0 0
        %5701 = vmatprep.subr.bf16.mxu0 0
        %5702 = vmatpush1.bf16.msra.mxu0 0
        %5703 = vmatprep.subr.bf16.mxu0 0
        %5704 = vmatpush1.bf16.msra.mxu0 0
        %5705 = vmatprep.mubr.bf16.mxu0 0
        %5706 = vmatmul.mubr.bf16.gmra.mrb[0].mxu0 %v2894
        %v5707 = vpop.f32.mrb[0].mxu0
        %v5708 = vadd.f32 %v5611, %v5707
        %v5709 = vpop.f32.mrb[0].mxu0
        %v5710 = vpop.f32.mrb[0].mxu0
        %v5711 = vadd.f32 %v5614, %v5710
        %v5712 = vpop.f32.mrb[0].mxu0
        %5713 = vmatprep.mubr.bf16.mxu0 0
        %5714 = vmatmul.mubr.bf16.gmra.mrb[0].mxu0 %v2895
        %v5715 = vpop.f32.mrb[0].mxu0
        %v5716 = vadd.f32 %v5619, %v5715
        %v5717 = vpop.f32.mrb[0].mxu0
        %v5718 = vpop.f32.mrb[0].mxu0
        %v5719 = vadd.f32 %v5622, %v5718
        %v5720 = vpop.f32.mrb[0].mxu0
        %5721 = vmatprep.mubr.bf16.mxu0 0
        %5722 = vmatmul.mubr.bf16.gmra.mrb[0].mxu0 %v2896
        %v5723 = vpop.f32.mrb[0].mxu0
        %v5724 = vadd.f32 %v5627, %v5723
        %v5725 = vpop.f32.mrb[0].mxu0
        %v5726 = vpop.f32.mrb[0].mxu0
        %v5727 = vadd.f32 %v5630, %v5726
        %v5728 = vpop.f32.mrb[0].mxu0
        %5729 = vmatprep.mubr.bf16.mxu0 0
        %5730 = vmatmul.mubr.bf16.gmra.mrb[0].mxu0 %v2897
        %v5731 = vpop.f32.mrb[0].mxu0
        %v5732 = vadd.f32 %v5635, %v5731
        %v5733 = vpop.f32.mrb[0].mxu0
        %v5734 = vpop.f32.mrb[0].mxu0
        %v5735 = vadd.f32 %v5638, %v5734
        %v5736 = vpop.f32.mrb[0].mxu0
        %5737 = vmatprep.mubr.bf16.mxu0 0
        %5738 = vmatmul.mubr.bf16.gmra.mrb[0].mxu0 %v2898
        %v5739 = vpop.f32.mrb[0].mxu0
        %v5740 = vadd.f32 %v5643, %v5739
        %v5741 = vpop.f32.mrb[0].mxu0
        %v5742 = vpop.f32.mrb[0].mxu0
        %v5743 = vadd.f32 %v5646, %v5742
        %v5744 = vpop.f32.mrb[0].mxu0
        %5745 = vmatprep.mubr.bf16.mxu0 0
        %5746 = vmatmul.mubr.bf16.gmra.mrb[0].mxu0 %v2899
        %v5747 = vpop.f32.mrb[0].mxu0
        %v5748 = vadd.f32 %v5651, %v5747
        %v5749 = vpop.f32.mrb[0].mxu0
        %v5750 = vpop.f32.mrb[0].mxu0
        %v5751 = vadd.f32 %v5654, %v5750
        %v5752 = vpop.f32.mrb[0].mxu0
        %5753 = vmatprep.mubr.bf16.mxu0 0
        %5754 = vmatmul.mubr.bf16.gmra.mrb[0].mxu0 %v2900
        %v5755 = vpop.f32.mrb[0].mxu0
        %v5756 = vadd.f32 %v5659, %v5755
        %v5757 = vpop.f32.mrb[0].mxu0
        %v5758 = vpop.f32.mrb[0].mxu0
        %v5759 = vadd.f32 %v5662, %v5758
        %v5760 = vpop.f32.mrb[0].mxu0
        %5761 = vmatprep.mubr.bf16.mxu0 0
        %5762 = vmatmul.mubr.bf16.gmra.mrb[0].mxu0 %v2901
        %v5763 = vpop.f32.mrb[0].mxu0
        %v5764 = vadd.f32 %v5667, %v5763
        %v5765 = vpop.f32.mrb[0].mxu0
        %v5766 = vpop.f32.mrb[0].mxu0
        %v5767 = vadd.f32 %v5670, %v5766
        %v5768 = vpop.f32.mrb[0].mxu0
        %5769 = vdwg.mxu0
        %v5770 = vmax.f32 %v5708, 0.0
        %v5771 = vmax.f32 %v5711, 0.0
        %v5772 = vmax.f32 %v5716, 0.0
        %v5773 = vmax.f32 %v5719, 0.0
        %v5774 = vmax.f32 %v5724, 0.0
        %v5775 = vmax.f32 %v5727, 0.0
        %v5776 = vmax.f32 %v5732, 0.0
        %v5777 = vmax.f32 %v5735, 0.0
        %v5778 = vmax.f32 %v5740, 0.0
        %v5779 = vmax.f32 %v5743, 0.0
        %v5780 = vmax.f32 %v5748, 0.0
        %v5781 = vmax.f32 %v5751, 0.0
        %v5782 = vmax.f32 %v5756, 0.0
        %v5783 = vmax.f32 %v5759, 0.0
        %v5784 = vmax.f32 %v5764, 0.0
        %v5785 = vmax.f32 %v5767, 0.0
        %v5786 = vpack.c.bf16 %v5771, %v5770
        %v5787 = vpack.c.bf16 %v5773, %v5772
        %v5788 = vpack.c.bf16 %v5775, %v5774
        %v5789 = vpack.c.bf16 %v5777, %v5776
        %v5790 = vpack.c.bf16 %v5779, %v5778
        %v5791 = vpack.c.bf16 %v5781, %v5780
        %v5792 = vpack.c.bf16 %v5783, %v5782
        %v5793 = vpack.c.bf16 %v5785, %v5784
        %v5794 = vld [vmem:[%s4] sm:$0xf]
        %v5795 = vld [vmem:[%s4 + $0x4] sm:$0xf]
        %v5796 = vld [vmem:[%s4 + $0x8] sm:$0xf]
        %v5797 = vld [vmem:[%s4 + $0xc] sm:$0xf]
        %v5802 = vunpack.c.l.b16 %v5794
        %v5803 = vunpack.c.l.b16 %v5795
        %v5804 = vunpack.c.l.b16 %v5796
        %v5805 = vunpack.c.l.b16 %v5797
        %v5806 = vpack.c.b16 %v5803, %v5802
        %v5807 = vpack.c.b16 %v5805, %v5804
        %5810 = vmatprep.subr.bf16.mxu0 0
        %5811 = vmatpush1.bf16.msra.mxu0 %v5786
        %5812 = vmatprep.subr.bf16.mxu0 0
        %5813 = vmatpush1.bf16.msra.mxu0 %v5787
        %5814 = vmatprep.subr.bf16.mxu0 0
        %5815 = vmatpush1.bf16.msra.mxu0 %v5788
        %5816 = vmatprep.subr.bf16.mxu0 0
        %5817 = vmatpush1.bf16.msra.mxu0 %v5789
        %5818 = vmatprep.subr.bf16.mxu0 0
        %5819 = vmatpush1.bf16.msra.mxu0 %v5790
        %5820 = vmatprep.subr.bf16.mxu0 0
        %5821 = vmatpush1.bf16.msra.mxu0 %v5791
        %5822 = vmatprep.subr.bf16.mxu0 0
        %5823 = vmatpush1.bf16.msra.mxu0 %v5792
        %5824 = vmatprep.subr.bf16.mxu0 0
        %5825 = vmatpush1.bf16.msra.mxu0 %v5793
        %5826 = vmatprep.subr.bf16.mxu0 0
        %5827 = vmatpush1.bf16.msra.mxu0 0
        %5828 = vmatprep.subr.bf16.mxu0 0
        %5829 = vmatpush1.bf16.msra.mxu0 0
        %5830 = vmatprep.subr.bf16.mxu0 0
        %5831 = vmatpush1.bf16.msra.mxu0 0
        %5832 = vmatprep.subr.bf16.mxu0 0
        %5833 = vmatpush1.bf16.msra.mxu0 0
        %5834 = vmatprep.subr.bf16.mxu0 0
        %5835 = vmatpush1.bf16.msra.mxu0 0
        %5836 = vmatprep.subr.bf16.mxu0 0
        %5837 = vmatpush1.bf16.msra.mxu0 0
        %5838 = vmatprep.subr.bf16.mxu0 0
        %5839 = vmatpush1.bf16.msra.mxu0 0
        %5840 = vmatprep.subr.bf16.mxu0 0
        %5841 = vmatpush1.bf16.msra.mxu0 0
        %5842 = vmatprep.mubr.bf16.mxu0 0
        %5843 = vmatmul.mubr.bf16.gmra.mrb[0].mxu0 %v5806
        %v5844 = vpop.f32.mrb[0].mxu0
        %v5845 = vadd.f32 0.0, %v5844
        %v5846 = vpop.f32.mrb[0].mxu0
        %v5847 = vpop.f32.mrb[0].mxu0
        %v5848 = vadd.f32 0.0, %v5847
        %v5849 = vpop.f32.mrb[0].mxu0
        %5850 = vmatprep.mubr.bf16.mxu0 0
        %5851 = vmatmul.mubr.bf16.gmra.mrb[0].mxu0 %v5807
        %v5852 = vpop.f32.mrb[0].mxu0
        %v5853 = vadd.f32 0.0, %v5852
        %v5854 = vpop.f32.mrb[0].mxu0
        %v5855 = vpop.f32.mrb[0].mxu0
        %v5856 = vadd.f32 0.0, %v5855
        %v5857 = vpop.f32.mrb[0].mxu0
        %5858 = vdwg.mxu0
        %v5859 = vld [vmem:[%s4 + $0x10] sm:$0xf]
        %v5860 = vld [vmem:[%s4 + $0x14] sm:$0xf]
        %v5861 = vld [vmem:[%s4 + $0x18] sm:$0xf]
        %v5862 = vld [vmem:[%s4 + $0x1c] sm:$0xf]
        %v5867 = vunpack.c.l.b16 %v5859
        %v5868 = vunpack.c.l.b16 %v5860
        %v5869 = vunpack.c.l.b16 %v5861
        %v5870 = vunpack.c.l.b16 %v5862
        %v5871 = vpack.c.b16 %v5868, %v5867
        %v5872 = vpack.c.b16 %v5870, %v5869
        %5875 = vmatprep.subr.bf16.mxu0 0
        %5876 = vmatpush1.bf16.msra.mxu0 %v5786
        %5877 = vmatprep.subr.bf16.mxu0 0
        %5878 = vmatpush1.bf16.msra.mxu0 %v5787
        %5879 = vmatprep.subr.bf16.mxu0 0
        %5880 = vmatpush1.bf16.msra.mxu0 %v5788
        %5881 = vmatprep.subr.bf16.mxu0 0
        %5882 = vmatpush1.bf16.msra.mxu0 %v5789
        %5883 = vmatprep.subr.bf16.mxu0 0
        %5884 = vmatpush1.bf16.msra.mxu0 %v5790
        %5885 = vmatprep.subr.bf16.mxu0 0
        %5886 = vmatpush1.bf16.msra.mxu0 %v5791
        %5887 = vmatprep.subr.bf16.mxu0 0
        %5888 = vmatpush1.bf16.msra.mxu0 %v5792
        %5889 = vmatprep.subr.bf16.mxu0 0
        %5890 = vmatpush1.bf16.msra.mxu0 %v5793
        %5891 = vmatprep.subr.bf16.mxu0 0
        %5892 = vmatpush1.bf16.msra.mxu0 0
        %5893 = vmatprep.subr.bf16.mxu0 0
        %5894 = vmatpush1.bf16.msra.mxu0 0
        %5895 = vmatprep.subr.bf16.mxu0 0
        %5896 = vmatpush1.bf16.msra.mxu0 0
        %5897 = vmatprep.subr.bf16.mxu0 0
        %5898 = vmatpush1.bf16.msra.mxu0 0
        %5899 = vmatprep.subr.bf16.mxu0 0
        %5900 = vmatpush1.bf16.msra.mxu0 0
        %5901 = vmatprep.subr.bf16.mxu0 0
        %5902 = vmatpush1.bf16.msra.mxu0 0
        %5903 = vmatprep.subr.bf16.mxu0 0
        %5904 = vmatpush1.bf16.msra.mxu0 0
        %5905 = vmatprep.subr.bf16.mxu0 0
        %5906 = vmatpush1.bf16.msra.mxu0 0
        %5907 = vmatprep.mubr.bf16.mxu0 0
        %5908 = vmatmul.mubr.bf16.gmra.mrb[0].mxu0 %v5871
        %v5909 = vpop.f32.mrb[0].mxu0
        %v5910 = vadd.f32 0.0, %v5909
        %v5911 = vpop.f32.mrb[0].mxu0
        %v5912 = vpop.f32.mrb[0].mxu0
        %v5913 = vadd.f32 0.0, %v5912
        %v5914 = vpop.f32.mrb[0].mxu0
        %5915 = vmatprep.mubr.bf16.mxu0 0
        %5916 = vmatmul.mubr.bf16.gmra.mrb[0].mxu0 %v5872
        %v5917 = vpop.f32.mrb[0].mxu0
        %v5918 = vadd.f32 0.0, %v5917
        %v5919 = vpop.f32.mrb[0].mxu0
        %v5920 = vpop.f32.mrb[0].mxu0
        %v5921 = vadd.f32 0.0, %v5920
        %v5922 = vpop.f32.mrb[0].mxu0
        %5923 = vdwg.mxu0
        %v5924 = vld [vmem:[%s4 + $0x20] sm:$0xf]
        %v5925 = vld [vmem:[%s4 + $0x24] sm:$0xf]
        %v5926 = vld [vmem:[%s4 + $0x28] sm:$0xf]
        %v5927 = vld [vmem:[%s4 + $0x2c] sm:$0xf]
        %v5932 = vunpack.c.l.b16 %v5924
        %v5933 = vunpack.c.l.b16 %v5925
        %v5934 = vunpack.c.l.b16 %v5926
        %v5935 = vunpack.c.l.b16 %v5927
        %v5936 = vpack.c.b16 %v5933, %v5932
        %v5937 = vpack.c.b16 %v5935, %v5934
        %5940 = vmatprep.subr.bf16.mxu0 0
        %5941 = vmatpush1.bf16.msra.mxu0 %v5786
        %5942 = vmatprep.subr.bf16.mxu0 0
        %5943 = vmatpush1.bf16.msra.mxu0 %v5787
        %5944 = vmatprep.subr.bf16.mxu0 0
        %5945 = vmatpush1.bf16.msra.mxu0 %v5788
        %5946 = vmatprep.subr.bf16.mxu0 0
        %5947 = vmatpush1.bf16.msra.mxu0 %v5789
        %5948 = vmatprep.subr.bf16.mxu0 0
        %5949 = vmatpush1.bf16.msra.mxu0 %v5790
        %5950 = vmatprep.subr.bf16.mxu0 0
        %5951 = vmatpush1.bf16.msra.mxu0 %v5791
        %5952 = vmatprep.subr.bf16.mxu0 0
        %5953 = vmatpush1.bf16.msra.mxu0 %v5792
        %5954 = vmatprep.subr.bf16.mxu0 0
        %5955 = vmatpush1.bf16.msra.mxu0 %v5793
        %5956 = vmatprep.subr.bf16.mxu0 0
        %5957 = vmatpush1.bf16.msra.mxu0 0
        %5958 = vmatprep.subr.bf16.mxu0 0
        %5959 = vmatpush1.bf16.msra.mxu0 0
        %5960 = vmatprep.subr.bf16.mxu0 0
        %5961 = vmatpush1.bf16.msra.mxu0 0
        %5962 = vmatprep.subr.bf16.mxu0 0
        %5963 = vmatpush1.bf16.msra.mxu0 0
        %5964 = vmatprep.subr.bf16.mxu0 0
        %5965 = vmatpush1.bf16.msra.mxu0 0
        %5966 = vmatprep.subr.bf16.mxu0 0
        %5967 = vmatpush1.bf16.msra.mxu0 0
        %5968 = vmatprep.subr.bf16.mxu0 0
        %5969 = vmatpush1.bf16.msra.mxu0 0
        %5970 = vmatprep.subr.bf16.mxu0 0
        %5971 = vmatpush1.bf16.msra.mxu0 0
        %5972 = vmatprep.mubr.bf16.mxu0 0
        %5973 = vmatmul.mubr.bf16.gmra.mrb[0].mxu0 %v5936
        %v5974 = vpop.f32.mrb[0].mxu0
        %v5975 = vadd.f32 0.0, %v5974
        %v5976 = vpop.f32.mrb[0].mxu0
        %v5977 = vpop.f32.mrb[0].mxu0
        %v5978 = vadd.f32 0.0, %v5977
        %v5979 = vpop.f32.mrb[0].mxu0
        %5980 = vmatprep.mubr.bf16.mxu0 0
        %5981 = vmatmul.mubr.bf16.gmra.mrb[0].mxu0 %v5937
        %v5982 = vpop.f32.mrb[0].mxu0
        %v5983 = vadd.f32 0.0, %v5982
        %v5984 = vpop.f32.mrb[0].mxu0
        %v5985 = vpop.f32.mrb[0].mxu0
        %v5986 = vadd.f32 0.0, %v5985
        %v5987 = vpop.f32.mrb[0].mxu0
        %5988 = vdwg.mxu0
        %v5989 = vld [vmem:[%s4 + $0x30] sm:$0xf]
        %v5990 = vld [vmem:[%s4 + $0x34] sm:$0xf]
        %v5991 = vld [vmem:[%s4 + $0x38] sm:$0xf]
        %v5992 = vld [vmem:[%s4 + $0x3c] sm:$0xf]
        %v5997 = vunpack.c.l.b16 %v5989
        %v5998 = vunpack.c.l.b16 %v5990
        %v5999 = vunpack.c.l.b16 %v5991
        %v6000 = vunpack.c.l.b16 %v5992
        %v6001 = vpack.c.b16 %v5998, %v5997
        %v6002 = vpack.c.b16 %v6000, %v5999
        %6005 = vmatprep.subr.bf16.mxu0 0
        %6006 = vmatpush1.bf16.msra.mxu0 %v5786
        %6007 = vmatprep.subr.bf16.mxu0 0
        %6008 = vmatpush1.bf16.msra.mxu0 %v5787
        %6009 = vmatprep.subr.bf16.mxu0 0
        %6010 = vmatpush1.bf16.msra.mxu0 %v5788
        %6011 = vmatprep.subr.bf16.mxu0 0
        %6012 = vmatpush1.bf16.msra.mxu0 %v5789
        %6013 = vmatprep.subr.bf16.mxu0 0
        %6014 = vmatpush1.bf16.msra.mxu0 %v5790
        %6015 = vmatprep.subr.bf16.mxu0 0
        %6016 = vmatpush1.bf16.msra.mxu0 %v5791
        %6017 = vmatprep.subr.bf16.mxu0 0
        %6018 = vmatpush1.bf16.msra.mxu0 %v5792
        %6019 = vmatprep.subr.bf16.mxu0 0
        %6020 = vmatpush1.bf16.msra.mxu0 %v5793
        %6021 = vmatprep.subr.bf16.mxu0 0
        %6022 = vmatpush1.bf16.msra.mxu0 0
        %6023 = vmatprep.subr.bf16.mxu0 0
        %6024 = vmatpush1.bf16.msra.mxu0 0
        %6025 = vmatprep.subr.bf16.mxu0 0
        %6026 = vmatpush1.bf16.msra.mxu0 0
        %6027 = vmatprep.subr.bf16.mxu0 0
        %6028 = vmatpush1.bf16.msra.mxu0 0
        %6029 = vmatprep.subr.bf16.mxu0 0
        %6030 = vmatpush1.bf16.msra.mxu0 0
        %6031 = vmatprep.subr.bf16.mxu0 0
        %6032 = vmatpush1.bf16.msra.mxu0 0
        %6033 = vmatprep.subr.bf16.mxu0 0
        %6034 = vmatpush1.bf16.msra.mxu0 0
        %6035 = vmatprep.subr.bf16.mxu0 0
        %6036 = vmatpush1.bf16.msra.mxu0 0
        %6037 = vmatprep.mubr.bf16.mxu0 0
        %6038 = vmatmul.mubr.bf16.gmra.mrb[0].mxu0 %v6001
        %v6039 = vpop.f32.mrb[0].mxu0
        %v6040 = vadd.f32 0.0, %v6039
        %v6041 = vpop.f32.mrb[0].mxu0
        %v6042 = vpop.f32.mrb[0].mxu0
        %v6043 = vadd.f32 0.0, %v6042
        %v6044 = vpop.f32.mrb[0].mxu0
        %6045 = vmatprep.mubr.bf16.mxu0 0
        %6046 = vmatmul.mubr.bf16.gmra.mrb[0].mxu0 %v6002
        %v6047 = vpop.f32.mrb[0].mxu0
        %v6048 = vadd.f32 0.0, %v6047
        %v6049 = vpop.f32.mrb[0].mxu0
        %v6050 = vpop.f32.mrb[0].mxu0
        %v6051 = vadd.f32 0.0, %v6050
        %v6052 = vpop.f32.mrb[0].mxu0
        %6053 = vdwg.mxu0
        %v6054 = vmax.f32 %v5845, %v5910
        %v6055 = vmax.f32 %v5848, %v5913
        %v6056 = vmax.f32 %v5853, %v5918
        %v6057 = vmax.f32 %v5856, %v5921
        %v6058 = vmax.f32 %v5975, %v6040
        %v6059 = vmax.f32 %v5978, %v6043
        %v6060 = vmax.f32 %v5983, %v6048
        %v6061 = vmax.f32 %v5986, %v6051
        %v6062 = vmax.f32 %v6054, %v6058
        %v6063 = vmax.f32 %v6055, %v6059
        %v6064 = vmax.f32 %v6056, %v6060
        %v6065 = vmax.f32 %v6057, %v6061
        %6066 = vst [vmem:[#allocation3] sm:$0xff] 0.0
        %6067 = vst [vmem:[#allocation3 + $0x8] sm:$0xf] 0.0
        %6068 = vst [vmem:[#allocation3 + $0x10] sm:$0xff] 0.0
        %6069 = vst [vmem:[#allocation3 + $0x18] sm:$0xf] 0.0
        %6070 = vst [vmem:[#allocation3 + $0x20] sm:$0xff] 0.0
        %6071 = vst [vmem:[#allocation3 + $0x28] sm:$0xf] 0.0
        %6072 = vst [vmem:[#allocation3 + $0x30] sm:$0xff] 0.0
        %6073 = vst [vmem:[#allocation3 + $0x38] sm:$0xf] 0.0
        %6074 = vst [vmem:[#allocation3 + $0x40] sm:$0xff] 0.0
        %6075 = vst [vmem:[#allocation3 + $0x48] sm:$0xf] 0.0
        %6076 = vst [vmem:[#allocation3 + $0x50] sm:$0xff] 0.0
        %6077 = vst [vmem:[#allocation3 + $0x58] sm:$0xf] 0.0
        %6078 = vst [vmem:[#allocation3 + $0x60] sm:$0xff] 0.0
        %6079 = vst [vmem:[#allocation3 + $0x68] sm:$0xf] 0.0
        %6080 = vst [vmem:[#allocation3 + $0x70] sm:$0xff] 0.0
        %6081 = vst [vmem:[#allocation3 + $0x78] sm:$0xf] 0.0
        %s6082 = scalar_lea.vmem [#allocation3], 32
        %vm6083 = vcmask 392192
        %6084 = vst.msk [vmem:[%s6082 + $0x2] sm:$0xff] %vm6083, %v6062
        %6085 = vst.msk [vmem:[%s6082 + $0x12] sm:$0xff] %vm6083, %v6063
        %6086 = vst.msk [vmem:[%s6082 + $0x22] sm:$0xff] %vm6083, %v6064
        %6087 = vst.msk [vmem:[%s6082 + $0x32] sm:$0xff] %vm6083, %v6065
        %v6088 = vld [vmem:[#allocation3] sm:$0xff]
        %v6089 = vld [vmem:[#allocation3 + $0x10] sm:$0xff]
        %v6090 = vld [vmem:[#allocation3 + $0x20] sm:$0xff]
        %v6091 = vld [vmem:[#allocation3 + $0x30] sm:$0xff]
        %v6092 = vpack.c.bf16 %v6089, %v6088
        %v6093 = vpack.c.bf16 %v6091, %v6090
        %v6094 = vld [vmem:[#allocation3 + $0x1] sm:$0xff]
        %v6095 = vld [vmem:[#allocation3 + $0x11] sm:$0xff]
        %v6096 = vld [vmem:[#allocation3 + $0x21] sm:$0xff]
        %v6097 = vld [vmem:[#allocation3 + $0x31] sm:$0xff]
        %v6098 = vpack.c.bf16 %v6095, %v6094
        %v6099 = vpack.c.bf16 %v6097, %v6096
        %v6100 = vld [vmem:[#allocation3 + $0x2] sm:$0xff]
        %v6101 = vld [vmem:[#allocation3 + $0x12] sm:$0xff]
        %v6102 = vld [vmem:[#allocation3 + $0x22] sm:$0xff]
        %v6103 = vld [vmem:[#allocation3 + $0x32] sm:$0xff]
        %v6104 = vpack.c.bf16 %v6101, %v6100
        %v6105 = vpack.c.bf16 %v6103, %v6102
        %v6106 = vld [vmem:[#allocation3 + $0x3] sm:$0xff]
        %v6107 = vld [vmem:[#allocation3 + $0x13] sm:$0xff]
        %v6108 = vld [vmem:[#allocation3 + $0x23] sm:$0xff]
        %v6109 = vld [vmem:[#allocation3 + $0x33] sm:$0xff]
        %v6110 = vpack.c.bf16 %v6107, %v6106
        %v6111 = vpack.c.bf16 %v6109, %v6108
        %v6112 = vld [vmem:[#allocation3 + $0x4] sm:$0xff]
        %v6113 = vld [vmem:[#allocation3 + $0x14] sm:$0xff]
        %v6114 = vld [vmem:[#allocation3 + $0x24] sm:$0xff]
        %v6115 = vld [vmem:[#allocation3 + $0x34] sm:$0xff]
        %v6116 = vpack.c.bf16 %v6113, %v6112
        %v6117 = vpack.c.bf16 %v6115, %v6114
        %s6118 = scalar_lea.vmem [#allocation3], 16
        %v6119 = vld [vmem:[%s6118] sm:$0xff]
        %v6120 = vld [vmem:[%s6118 + $0x10] sm:$0xff]
        %v6121 = vld [vmem:[%s6118 + $0x20] sm:$0xff]
        %v6122 = vld [vmem:[%s6118 + $0x30] sm:$0xff]
        %v6123 = vpack.c.bf16 %v6120, %v6119
        %v6124 = vpack.c.bf16 %v6122, %v6121
        %v6125 = vld [vmem:[%s6118 + $0x1] sm:$0xff]
        %v6126 = vld [vmem:[%s6118 + $0x11] sm:$0xff]
        %v6127 = vld [vmem:[%s6118 + $0x21] sm:$0xff]
        %v6128 = vld [vmem:[%s6118 + $0x31] sm:$0xff]
        %v6129 = vpack.c.bf16 %v6126, %v6125
        %v6130 = vpack.c.bf16 %v6128, %v6127
        %v6131 = vld [vmem:[%s6118 + $0x2] sm:$0xff]
        %v6132 = vld [vmem:[%s6118 + $0x12] sm:$0xff]
        %v6133 = vld [vmem:[%s6118 + $0x22] sm:$0xff]
        %v6134 = vld [vmem:[%s6118 + $0x32] sm:$0xff]
        %v6135 = vpack.c.bf16 %v6132, %v6131
        %v6136 = vpack.c.bf16 %v6134, %v6133
        %v6137 = vld [vmem:[%s6118 + $0x3] sm:$0xff]
        %v6138 = vld [vmem:[%s6118 + $0x13] sm:$0xff]
        %v6139 = vld [vmem:[%s6118 + $0x23] sm:$0xff]
        %v6140 = vld [vmem:[%s6118 + $0x33] sm:$0xff]
        %v6141 = vpack.c.bf16 %v6138, %v6137
        %v6142 = vpack.c.bf16 %v6140, %v6139
        %v6143 = vld [vmem:[%s6118 + $0x4] sm:$0xff]
        %v6144 = vld [vmem:[%s6118 + $0x14] sm:$0xff]
        %v6145 = vld [vmem:[%s6118 + $0x24] sm:$0xff]
        %v6146 = vld [vmem:[%s6118 + $0x34] sm:$0xff]
        %v6147 = vpack.c.bf16 %v6144, %v6143
        %v6148 = vpack.c.bf16 %v6146, %v6145
        %v6149 = vld [vmem:[%s6082] sm:$0xff]
        %v6150 = vld [vmem:[%s6082 + $0x10] sm:$0xff]
        %v6151 = vld [vmem:[%s6082 + $0x20] sm:$0xff]
        %v6152 = vld [vmem:[%s6082 + $0x30] sm:$0xff]
        %v6153 = vpack.c.bf16 %v6150, %v6149
        %v6154 = vpack.c.bf16 %v6152, %v6151
        %v6155 = vld [vmem:[%s6082 + $0x1] sm:$0xff]
        %v6156 = vld [vmem:[%s6082 + $0x11] sm:$0xff]
        %v6157 = vld [vmem:[%s6082 + $0x21] sm:$0xff]
        %v6158 = vld [vmem:[%s6082 + $0x31] sm:$0xff]
        %v6159 = vpack.c.bf16 %v6156, %v6155
        %v6160 = vpack.c.bf16 %v6158, %v6157
        %v6161 = vld [vmem:[%s6082 + $0x2] sm:$0xff]
        %v6162 = vld [vmem:[%s6082 + $0x12] sm:$0xff]
        %v6163 = vld [vmem:[%s6082 + $0x22] sm:$0xff]
        %v6164 = vld [vmem:[%s6082 + $0x32] sm:$0xff]
        %v6165 = vpack.c.bf16 %v6162, %v6161
        %v6166 = vpack.c.bf16 %v6164, %v6163
        %v6167 = vld [vmem:[%s6082 + $0x3] sm:$0xff]
        %v6168 = vld [vmem:[%s6082 + $0x13] sm:$0xff]
        %v6169 = vld [vmem:[%s6082 + $0x23] sm:$0xff]
        %v6170 = vld [vmem:[%s6082 + $0x33] sm:$0xff]
        %v6171 = vpack.c.bf16 %v6168, %v6167
        %v6172 = vpack.c.bf16 %v6170, %v6169
        %v6173 = vld [vmem:[%s6082 + $0x4] sm:$0xff]
        %v6174 = vld [vmem:[%s6082 + $0x14] sm:$0xff]
        %v6175 = vld [vmem:[%s6082 + $0x24] sm:$0xff]
        %v6176 = vld [vmem:[%s6082 + $0x34] sm:$0xff]
        %v6177 = vpack.c.bf16 %v6174, %v6173
        %v6178 = vpack.c.bf16 %v6176, %v6175
        %s6179 = scalar_lea.vmem [#allocation3], 48
        %v6180 = vld [vmem:[%s6179] sm:$0xff]
        %v6181 = vld [vmem:[%s6179 + $0x10] sm:$0xff]
        %v6182 = vld [vmem:[%s6179 + $0x20] sm:$0xff]
        %v6183 = vld [vmem:[%s6179 + $0x30] sm:$0xff]
        %v6184 = vpack.c.bf16 %v6181, %v6180
        %v6185 = vpack.c.bf16 %v6183, %v6182
        %v6186 = vld [vmem:[%s6179 + $0x1] sm:$0xff]
        %v6187 = vld [vmem:[%s6179 + $0x11] sm:$0xff]
        %v6188 = vld [vmem:[%s6179 + $0x21] sm:$0xff]
        %v6189 = vld [vmem:[%s6179 + $0x31] sm:$0xff]
        %v6190 = vpack.c.bf16 %v6187, %v6186
        %v6191 = vpack.c.bf16 %v6189, %v6188
        %v6192 = vld [vmem:[%s6179 + $0x2] sm:$0xff]
        %v6193 = vld [vmem:[%s6179 + $0x12] sm:$0xff]
        %v6194 = vld [vmem:[%s6179 + $0x22] sm:$0xff]
        %v6195 = vld [vmem:[%s6179 + $0x32] sm:$0xff]
        %v6196 = vpack.c.bf16 %v6193, %v6192
        %v6197 = vpack.c.bf16 %v6195, %v6194
        %v6198 = vld [vmem:[%s6179 + $0x3] sm:$0xff]
        %v6199 = vld [vmem:[%s6179 + $0x13] sm:$0xff]
        %v6200 = vld [vmem:[%s6179 + $0x23] sm:$0xff]
        %v6201 = vld [vmem:[%s6179 + $0x33] sm:$0xff]
        %v6202 = vpack.c.bf16 %v6199, %v6198
        %v6203 = vpack.c.bf16 %v6201, %v6200
        %v6204 = vld [vmem:[%s6179 + $0x4] sm:$0xff]
        %v6205 = vld [vmem:[%s6179 + $0x14] sm:$0xff]
        %v6206 = vld [vmem:[%s6179 + $0x24] sm:$0xff]
        %v6207 = vld [vmem:[%s6179 + $0x34] sm:$0xff]
        %v6208 = vpack.c.bf16 %v6205, %v6204
        %v6209 = vpack.c.bf16 %v6207, %v6206
        %s6210 = scalar_lea.vmem [#allocation3], 64
        %v6211 = vld [vmem:[%s6210] sm:$0xff]
        %v6212 = vld [vmem:[%s6210 + $0x10] sm:$0xff]
        %v6213 = vld [vmem:[%s6210 + $0x20] sm:$0xff]
        %v6214 = vld [vmem:[%s6210 + $0x30] sm:$0xff]
        %v6215 = vpack.c.bf16 %v6212, %v6211
        %v6216 = vpack.c.bf16 %v6214, %v6213
        %v6217 = vld [vmem:[%s6210 + $0x1] sm:$0xff]
        %v6218 = vld [vmem:[%s6210 + $0x11] sm:$0xff]
        %v6219 = vld [vmem:[%s6210 + $0x21] sm:$0xff]
        %v6220 = vld [vmem:[%s6210 + $0x31] sm:$0xff]
        %v6221 = vpack.c.bf16 %v6218, %v6217
        %v6222 = vpack.c.bf16 %v6220, %v6219
        %v6223 = vld [vmem:[%s6210 + $0x2] sm:$0xff]
        %v6224 = vld [vmem:[%s6210 + $0x12] sm:$0xff]
        %v6225 = vld [vmem:[%s6210 + $0x22] sm:$0xff]
        %v6226 = vld [vmem:[%s6210 + $0x32] sm:$0xff]
        %v6227 = vpack.c.bf16 %v6224, %v6223
        %v6228 = vpack.c.bf16 %v6226, %v6225
        %v6229 = vld [vmem:[%s6210 + $0x3] sm:$0xff]
        %v6230 = vld [vmem:[%s6210 + $0x13] sm:$0xff]
        %v6231 = vld [vmem:[%s6210 + $0x23] sm:$0xff]
        %v6232 = vld [vmem:[%s6210 + $0x33] sm:$0xff]
        %v6233 = vpack.c.bf16 %v6230, %v6229
        %v6234 = vpack.c.bf16 %v6232, %v6231
        %v6235 = vld [vmem:[%s6210 + $0x4] sm:$0xff]
        %v6236 = vld [vmem:[%s6210 + $0x14] sm:$0xff]
        %v6237 = vld [vmem:[%s6210 + $0x24] sm:$0xff]
        %v6238 = vld [vmem:[%s6210 + $0x34] sm:$0xff]
        %v6239 = vpack.c.bf16 %v6236, %v6235
        %v6240 = vpack.c.bf16 %v6238, %v6237
        %v6241 = vld [vmem:[%s5] sm:$0xf]
        %v6242 = vld [vmem:[%s5 + $0x4] sm:$0xf]
        %v6243 = vld [vmem:[%s5 + $0x8] sm:$0xf]
        %v6244 = vld [vmem:[%s5 + $0xc] sm:$0xf]
        %v6245 = vld [vmem:[%s5 + $0x10] sm:$0xf]
        %v6246 = vld [vmem:[%s5 + $0x14] sm:$0xf]
        %v6247 = vld [vmem:[%s5 + $0x18] sm:$0xf]
        %v6248 = vld [vmem:[%s5 + $0x1c] sm:$0xf]
        %v6249 = vld [vmem:[%s5 + $0x20] sm:$0xf]
        %v6250 = vld [vmem:[%s5 + $0x24] sm:$0xf]
        %v6251 = vld [vmem:[%s5 + $0x28] sm:$0xf]
        %v6252 = vld [vmem:[%s5 + $0x2c] sm:$0xf]
        %v6253 = vld [vmem:[%s5 + $0x30] sm:$0xf]
        %v6254 = vld [vmem:[%s5 + $0x34] sm:$0xf]
        %v6255 = vld [vmem:[%s5 + $0x38] sm:$0xf]
        %v6256 = vld [vmem:[%s5 + $0x3c] sm:$0xf]
        %v6257 = vld [vmem:[%s5 + $0x40] sm:$0xf]
        %v6258 = vld [vmem:[%s5 + $0x44] sm:$0xf]
        %v6259 = vld [vmem:[%s5 + $0x48] sm:$0xf]
        %v6260 = vld [vmem:[%s5 + $0x4c] sm:$0xf]
        %v6261 = vld [vmem:[%s5 + $0x50] sm:$0xf]
        %v6262 = vld [vmem:[%s5 + $0x54] sm:$0xf]
        %v6263 = vld [vmem:[%s5 + $0x58] sm:$0xf]
        %v6264 = vld [vmem:[%s5 + $0x5c] sm:$0xf]
        %v6265 = vld [vmem:[%s5 + $0x60] sm:$0xf]
        %v6266 = vld [vmem:[%s5 + $0x64] sm:$0xf]
        %v6267 = vld [vmem:[%s5 + $0x68] sm:$0xf]
        %v6268 = vld [vmem:[%s5 + $0x6c] sm:$0xf]
        %v6269 = vld [vmem:[%s5 + $0x70] sm:$0xf]
        %v6270 = vld [vmem:[%s5 + $0x74] sm:$0xf]
        %v6271 = vld [vmem:[%s5 + $0x78] sm:$0xf]
        %v6272 = vld [vmem:[%s5 + $0x7c] sm:$0xf]
        %v6273 = vld [vmem:[%s5 + $0x80] sm:$0xf]
        %v6274 = vld [vmem:[%s5 + $0x84] sm:$0xf]
        %v6275 = vld [vmem:[%s5 + $0x88] sm:$0xf]
        %v6276 = vld [vmem:[%s5 + $0x8c] sm:$0xf]
        %v6277 = vld [vmem:[%s5 + $0x90] sm:$0xf]
        %v6278 = vld [vmem:[%s5 + $0x94] sm:$0xf]
        %v6279 = vld [vmem:[%s5 + $0x98] sm:$0xf]
        %v6280 = vld [vmem:[%s5 + $0x9c] sm:$0xf]
        %v6281 = vld [vmem:[%s5 + $0xa0] sm:$0xf]
        %v6282 = vld [vmem:[%s5 + $0xa4] sm:$0xf]
        %v6283 = vld [vmem:[%s5 + $0xa8] sm:$0xf]
        %v6284 = vld [vmem:[%s5 + $0xac] sm:$0xf]
        %v6285 = vld [vmem:[%s5 + $0xb0] sm:$0xf]
        %v6286 = vld [vmem:[%s5 + $0xb4] sm:$0xf]
        %v6287 = vld [vmem:[%s5 + $0xb8] sm:$0xf]
        %v6288 = vld [vmem:[%s5 + $0xbc] sm:$0xf]
        %v6289 = vld [vmem:[%s5 + $0xc0] sm:$0xf]
        %v6290 = vld [vmem:[%s5 + $0xc4] sm:$0xf]
        %v6291 = vld [vmem:[%s5 + $0xc8] sm:$0xf]
        %v6292 = vld [vmem:[%s5 + $0xcc] sm:$0xf]
        %v6293 = vld [vmem:[%s5 + $0xd0] sm:$0xf]
        %v6294 = vld [vmem:[%s5 + $0xd4] sm:$0xf]
        %v6295 = vld [vmem:[%s5 + $0xd8] sm:$0xf]
        %v6296 = vld [vmem:[%s5 + $0xdc] sm:$0xf]
        %v6297 = vld [vmem:[%s5 + $0xe0] sm:$0xf]
        %v6298 = vld [vmem:[%s5 + $0xe4] sm:$0xf]
        %v6299 = vld [vmem:[%s5 + $0xe8] sm:$0xf]
        %v6300 = vld [vmem:[%s5 + $0xec] sm:$0xf]
        %v6301 = vld [vmem:[%s5 + $0xf0] sm:$0xf]
        %v6302 = vld [vmem:[%s5 + $0xf4] sm:$0xf]
        %v6303 = vld [vmem:[%s5 + $0xf8] sm:$0xf]
        %v6304 = vld [vmem:[%s5 + $0xfc] sm:$0xf]
        %v6305 = vld [vmem:[%s5 + $0x100] sm:$0xf]
        %v6306 = vld [vmem:[%s5 + $0x104] sm:$0xf]
        %v6307 = vld [vmem:[%s5 + $0x108] sm:$0xf]
        %v6308 = vld [vmem:[%s5 + $0x10c] sm:$0xf]
        %v6309 = vld [vmem:[%s5 + $0x110] sm:$0xf]
        %v6310 = vld [vmem:[%s5 + $0x114] sm:$0xf]
        %v6311 = vld [vmem:[%s5 + $0x118] sm:$0xf]
        %v6312 = vld [vmem:[%s5 + $0x11c] sm:$0xf]
        %v6313 = vld [vmem:[%s5 + $0x120] sm:$0xf]
        %v6314 = vld [vmem:[%s5 + $0x124] sm:$0xf]
        %v6315 = vld [vmem:[%s5 + $0x128] sm:$0xf]
        %v6316 = vld [vmem:[%s5 + $0x12c] sm:$0xf]
        %v6317 = vld [vmem:[%s5 + $0x130] sm:$0xf]
        %v6318 = vld [vmem:[%s5 + $0x134] sm:$0xf]
        %v6319 = vld [vmem:[%s5 + $0x138] sm:$0xf]
        %v6320 = vld [vmem:[%s5 + $0x13c] sm:$0xf]
        %v6321 = vld [vmem:[%s5 + $0x140] sm:$0xf]
        %v6322 = vld [vmem:[%s5 + $0x144] sm:$0xf]
        %v6323 = vld [vmem:[%s5 + $0x148] sm:$0xf]
        %v6324 = vld [vmem:[%s5 + $0x14c] sm:$0xf]
        %v6325 = vld [vmem:[%s5 + $0x150] sm:$0xf]
        %v6326 = vld [vmem:[%s5 + $0x154] sm:$0xf]
        %v6327 = vld [vmem:[%s5 + $0x158] sm:$0xf]
        %v6328 = vld [vmem:[%s5 + $0x15c] sm:$0xf]
        %v6329 = vld [vmem:[%s5 + $0x160] sm:$0xf]
        %v6330 = vld [vmem:[%s5 + $0x164] sm:$0xf]
        %v6331 = vld [vmem:[%s5 + $0x168] sm:$0xf]
        %v6332 = vld [vmem:[%s5 + $0x16c] sm:$0xf]
        %v6333 = vld [vmem:[%s5 + $0x170] sm:$0xf]
        %v6334 = vld [vmem:[%s5 + $0x174] sm:$0xf]
        %v6335 = vld [vmem:[%s5 + $0x178] sm:$0xf]
        %v6336 = vld [vmem:[%s5 + $0x17c] sm:$0xf]
        %v6337 = vld [vmem:[%s5 + $0x180] sm:$0xf]
        %v6338 = vld [vmem:[%s5 + $0x184] sm:$0xf]
        %v6339 = vld [vmem:[%s5 + $0x188] sm:$0xf]
        %v6340 = vld [vmem:[%s5 + $0x18c] sm:$0xf]
        %v6341 = vld [vmem:[%s5 + $0x190] sm:$0xf]
        %v6342 = vld [vmem:[%s5 + $0x194] sm:$0xf]
        %v6343 = vld [vmem:[%s5 + $0x198] sm:$0xf]
        %v6344 = vld [vmem:[%s5 + $0x19c] sm:$0xf]
        %v6345 = vld [vmem:[%s5 + $0x1a0] sm:$0xf]
        %v6346 = vld [vmem:[%s5 + $0x1a4] sm:$0xf]
        %v6347 = vld [vmem:[%s5 + $0x1a8] sm:$0xf]
        %v6348 = vld [vmem:[%s5 + $0x1ac] sm:$0xf]
        %v6349 = vld [vmem:[%s5 + $0x1b0] sm:$0xf]
        %v6350 = vld [vmem:[%s5 + $0x1b4] sm:$0xf]
        %v6351 = vld [vmem:[%s5 + $0x1b8] sm:$0xf]
        %v6352 = vld [vmem:[%s5 + $0x1bc] sm:$0xf]
        %v6353 = vld [vmem:[%s5 + $0x1c0] sm:$0xf]
        %v6354 = vld [vmem:[%s5 + $0x1c4] sm:$0xf]
        %v6355 = vld [vmem:[%s5 + $0x1c8] sm:$0xf]
        %v6356 = vld [vmem:[%s5 + $0x1cc] sm:$0xf]
        %v6357 = vld [vmem:[%s5 + $0x1d0] sm:$0xf]
        %v6358 = vld [vmem:[%s5 + $0x1d4] sm:$0xf]
        %v6359 = vld [vmem:[%s5 + $0x1d8] sm:$0xf]
        %v6360 = vld [vmem:[%s5 + $0x1dc] sm:$0xf]
        %v6361 = vld [vmem:[%s5 + $0x1e0] sm:$0xf]
        %v6362 = vld [vmem:[%s5 + $0x1e4] sm:$0xf]
        %v6363 = vld [vmem:[%s5 + $0x1e8] sm:$0xf]
        %v6364 = vld [vmem:[%s5 + $0x1ec] sm:$0xf]
        %v6365 = vld [vmem:[%s5 + $0x1f0] sm:$0xf]
        %v6366 = vld [vmem:[%s5 + $0x1f4] sm:$0xf]
        %v6367 = vld [vmem:[%s5 + $0x1f8] sm:$0xf]
        %v6368 = vld [vmem:[%s5 + $0x1fc] sm:$0xf]
        %v6369 = vld [vmem:[%s5 + $0x200] sm:$0xf]
        %v6370 = vld [vmem:[%s5 + $0x204] sm:$0xf]
        %v6371 = vld [vmem:[%s5 + $0x208] sm:$0xf]
        %v6372 = vld [vmem:[%s5 + $0x20c] sm:$0xf]
        %v6373 = vld [vmem:[%s5 + $0x210] sm:$0xf]
        %v6374 = vld [vmem:[%s5 + $0x214] sm:$0xf]
        %v6375 = vld [vmem:[%s5 + $0x218] sm:$0xf]
        %v6376 = vld [vmem:[%s5 + $0x21c] sm:$0xf]
        %v6377 = vld [vmem:[%s5 + $0x220] sm:$0xf]
        %v6378 = vld [vmem:[%s5 + $0x224] sm:$0xf]
        %v6379 = vld [vmem:[%s5 + $0x228] sm:$0xf]
        %v6380 = vld [vmem:[%s5 + $0x22c] sm:$0xf]
        %v6381 = vld [vmem:[%s5 + $0x230] sm:$0xf]
        %v6382 = vld [vmem:[%s5 + $0x234] sm:$0xf]
        %v6383 = vld [vmem:[%s5 + $0x238] sm:$0xf]
        %v6384 = vld [vmem:[%s5 + $0x23c] sm:$0xf]
        %v6385 = vld [vmem:[%s5 + $0x240] sm:$0xf]
        %v6386 = vld [vmem:[%s5 + $0x244] sm:$0xf]
        %v6387 = vld [vmem:[%s5 + $0x248] sm:$0xf]
        %v6388 = vld [vmem:[%s5 + $0x24c] sm:$0xf]
        %v6389 = vld [vmem:[%s5 + $0x250] sm:$0xf]
        %v6390 = vld [vmem:[%s5 + $0x254] sm:$0xf]
        %v6391 = vld [vmem:[%s5 + $0x258] sm:$0xf]
        %v6392 = vld [vmem:[%s5 + $0x25c] sm:$0xf]
        %v6393 = vld [vmem:[%s5 + $0x260] sm:$0xf]
        %v6394 = vld [vmem:[%s5 + $0x264] sm:$0xf]
        %v6395 = vld [vmem:[%s5 + $0x268] sm:$0xf]
        %v6396 = vld [vmem:[%s5 + $0x26c] sm:$0xf]
        %v6397 = vld [vmem:[%s5 + $0x270] sm:$0xf]
        %v6398 = vld [vmem:[%s5 + $0x274] sm:$0xf]
        %v6399 = vld [vmem:[%s5 + $0x278] sm:$0xf]
        %v6400 = vld [vmem:[%s5 + $0x27c] sm:$0xf]
        %v6401 = vld [vmem:[%s5 + $0x280] sm:$0xf]
        %v6402 = vld [vmem:[%s5 + $0x284] sm:$0xf]
        %v6403 = vld [vmem:[%s5 + $0x288] sm:$0xf]
        %v6404 = vld [vmem:[%s5 + $0x28c] sm:$0xf]
        %v6405 = vld [vmem:[%s5 + $0x290] sm:$0xf]
        %v6406 = vld [vmem:[%s5 + $0x294] sm:$0xf]
        %v6407 = vld [vmem:[%s5 + $0x298] sm:$0xf]
        %v6408 = vld [vmem:[%s5 + $0x29c] sm:$0xf]
        %v6409 = vld [vmem:[%s5 + $0x2a0] sm:$0xf]
        %v6410 = vld [vmem:[%s5 + $0x2a4] sm:$0xf]
        %v6411 = vld [vmem:[%s5 + $0x2a8] sm:$0xf]
        %v6412 = vld [vmem:[%s5 + $0x2ac] sm:$0xf]
        %v6413 = vld [vmem:[%s5 + $0x2b0] sm:$0xf]
        %v6414 = vld [vmem:[%s5 + $0x2b4] sm:$0xf]
        %v6415 = vld [vmem:[%s5 + $0x2b8] sm:$0xf]
        %v6416 = vld [vmem:[%s5 + $0x2bc] sm:$0xf]
        %v6417 = vld [vmem:[%s5 + $0x2c0] sm:$0xf]
        %v6418 = vld [vmem:[%s5 + $0x2c4] sm:$0xf]
        %v6419 = vld [vmem:[%s5 + $0x2c8] sm:$0xf]
        %v6420 = vld [vmem:[%s5 + $0x2cc] sm:$0xf]
        %v6421 = vld [vmem:[%s5 + $0x2d0] sm:$0xf]
        %v6422 = vld [vmem:[%s5 + $0x2d4] sm:$0xf]
        %v6423 = vld [vmem:[%s5 + $0x2d8] sm:$0xf]
        %v6424 = vld [vmem:[%s5 + $0x2dc] sm:$0xf]
        %v6425 = vld [vmem:[%s5 + $0x2e0] sm:$0xf]
        %v6426 = vld [vmem:[%s5 + $0x2e4] sm:$0xf]
        %v6427 = vld [vmem:[%s5 + $0x2e8] sm:$0xf]
        %v6428 = vld [vmem:[%s5 + $0x2ec] sm:$0xf]
        %v6429 = vld [vmem:[%s5 + $0x2f0] sm:$0xf]
        %v6430 = vld [vmem:[%s5 + $0x2f4] sm:$0xf]
        %v6431 = vld [vmem:[%s5 + $0x2f8] sm:$0xf]
        %v6432 = vld [vmem:[%s5 + $0x2fc] sm:$0xf]
        %v6433 = vld [vmem:[%s5 + $0x300] sm:$0xf]
        %v6434 = vld [vmem:[%s5 + $0x304] sm:$0xf]
        %v6435 = vld [vmem:[%s5 + $0x308] sm:$0xf]
        %v6436 = vld [vmem:[%s5 + $0x30c] sm:$0xf]
        %v6437 = vld [vmem:[%s5 + $0x310] sm:$0xf]
        %v6438 = vld [vmem:[%s5 + $0x314] sm:$0xf]
        %v6439 = vld [vmem:[%s5 + $0x318] sm:$0xf]
        %v6440 = vld [vmem:[%s5 + $0x31c] sm:$0xf]
        %v6441 = vld [vmem:[%s5 + $0x320] sm:$0xf]
        %v6442 = vld [vmem:[%s5 + $0x324] sm:$0xf]
        %v6443 = vld [vmem:[%s5 + $0x328] sm:$0xf]
        %v6444 = vld [vmem:[%s5 + $0x32c] sm:$0xf]
        %v6445 = vld [vmem:[%s5 + $0x330] sm:$0xf]
        %v6446 = vld [vmem:[%s5 + $0x334] sm:$0xf]
        %v6447 = vld [vmem:[%s5 + $0x338] sm:$0xf]
        %v6448 = vld [vmem:[%s5 + $0x33c] sm:$0xf]
        %v6449 = vld [vmem:[%s5 + $0x340] sm:$0xf]
        %v6450 = vld [vmem:[%s5 + $0x344] sm:$0xf]
        %v6451 = vld [vmem:[%s5 + $0x348] sm:$0xf]
        %v6452 = vld [vmem:[%s5 + $0x34c] sm:$0xf]
        %v6453 = vld [vmem:[%s5 + $0x350] sm:$0xf]
        %v6454 = vld [vmem:[%s5 + $0x354] sm:$0xf]
        %v6455 = vld [vmem:[%s5 + $0x358] sm:$0xf]
        %v6456 = vld [vmem:[%s5 + $0x35c] sm:$0xf]
        %v6457 = vld [vmem:[%s5 + $0x360] sm:$0xf]
        %v6458 = vld [vmem:[%s5 + $0x364] sm:$0xf]
        %v6459 = vld [vmem:[%s5 + $0x368] sm:$0xf]
        %v6460 = vld [vmem:[%s5 + $0x36c] sm:$0xf]
        %v6461 = vld [vmem:[%s5 + $0x370] sm:$0xf]
        %v6462 = vld [vmem:[%s5 + $0x374] sm:$0xf]
        %v6463 = vld [vmem:[%s5 + $0x378] sm:$0xf]
        %v6464 = vld [vmem:[%s5 + $0x37c] sm:$0xf]
        %v6465 = vld [vmem:[%s5 + $0x380] sm:$0xf]
        %v6466 = vld [vmem:[%s5 + $0x384] sm:$0xf]
        %v6467 = vld [vmem:[%s5 + $0x388] sm:$0xf]
        %v6468 = vld [vmem:[%s5 + $0x38c] sm:$0xf]
        %v6469 = vld [vmem:[%s5 + $0x390] sm:$0xf]
        %v6470 = vld [vmem:[%s5 + $0x394] sm:$0xf]
        %v6471 = vld [vmem:[%s5 + $0x398] sm:$0xf]
        %v6472 = vld [vmem:[%s5 + $0x39c] sm:$0xf]
        %v6473 = vld [vmem:[%s5 + $0x3a0] sm:$0xf]
        %v6474 = vld [vmem:[%s5 + $0x3a4] sm:$0xf]
        %v6475 = vld [vmem:[%s5 + $0x3a8] sm:$0xf]
        %v6476 = vld [vmem:[%s5 + $0x3ac] sm:$0xf]
        %v6477 = vld [vmem:[%s5 + $0x3b0] sm:$0xf]
        %v6478 = vld [vmem:[%s5 + $0x3b4] sm:$0xf]
        %v6479 = vld [vmem:[%s5 + $0x3b8] sm:$0xf]
        %v6480 = vld [vmem:[%s5 + $0x3bc] sm:$0xf]
        %v6481 = vld [vmem:[%s5 + $0x3c0] sm:$0xf]
        %v6482 = vld [vmem:[%s5 + $0x3c4] sm:$0xf]
        %v6483 = vld [vmem:[%s5 + $0x3c8] sm:$0xf]
        %v6484 = vld [vmem:[%s5 + $0x3cc] sm:$0xf]
        %v6485 = vld [vmem:[%s5 + $0x3d0] sm:$0xf]
        %v6486 = vld [vmem:[%s5 + $0x3d4] sm:$0xf]
        %v6487 = vld [vmem:[%s5 + $0x3d8] sm:$0xf]
        %v6488 = vld [vmem:[%s5 + $0x3dc] sm:$0xf]
        %v6489 = vld [vmem:[%s5 + $0x3e0] sm:$0xf]
        %v6490 = vld [vmem:[%s5 + $0x3e4] sm:$0xf]
        %v6491 = vld [vmem:[%s5 + $0x3e8] sm:$0xf]
        %v6492 = vld [vmem:[%s5 + $0x3ec] sm:$0xf]
        %v6493 = vld [vmem:[%s5 + $0x3f0] sm:$0xf]
        %v6494 = vld [vmem:[%s5 + $0x3f4] sm:$0xf]
        %v6495 = vld [vmem:[%s5 + $0x3f8] sm:$0xf]
        %v6496 = vld [vmem:[%s5 + $0x3fc] sm:$0xf]
        %v6497 = vld [vmem:[%s5 + $0x400] sm:$0xf]
        %v6498 = vld [vmem:[%s5 + $0x404] sm:$0xf]
        %v6499 = vld [vmem:[%s5 + $0x408] sm:$0xf]
        %v6500 = vld [vmem:[%s5 + $0x40c] sm:$0xf]
        %v6501 = vld [vmem:[%s5 + $0x410] sm:$0xf]
        %v6502 = vld [vmem:[%s5 + $0x414] sm:$0xf]
        %v6503 = vld [vmem:[%s5 + $0x418] sm:$0xf]
        %v6504 = vld [vmem:[%s5 + $0x41c] sm:$0xf]
        %v6505 = vld [vmem:[%s5 + $0x420] sm:$0xf]
        %v6506 = vld [vmem:[%s5 + $0x424] sm:$0xf]
        %v6507 = vld [vmem:[%s5 + $0x428] sm:$0xf]
        %v6508 = vld [vmem:[%s5 + $0x42c] sm:$0xf]
        %v6509 = vld [vmem:[%s5 + $0x430] sm:$0xf]
        %v6510 = vld [vmem:[%s5 + $0x434] sm:$0xf]
        %v6511 = vld [vmem:[%s5 + $0x438] sm:$0xf]
        %v6512 = vld [vmem:[%s5 + $0x43c] sm:$0xf]
        %v6513 = vld [vmem:[%s5 + $0x440] sm:$0xf]
        %v6514 = vld [vmem:[%s5 + $0x444] sm:$0xf]
        %v6515 = vld [vmem:[%s5 + $0x448] sm:$0xf]
        %v6516 = vld [vmem:[%s5 + $0x44c] sm:$0xf]
        %v6517 = vld [vmem:[%s5 + $0x450] sm:$0xf]
        %v6518 = vld [vmem:[%s5 + $0x454] sm:$0xf]
        %v6519 = vld [vmem:[%s5 + $0x458] sm:$0xf]
        %v6520 = vld [vmem:[%s5 + $0x45c] sm:$0xf]
        %v6521 = vld [vmem:[%s5 + $0x460] sm:$0xf]
        %v6522 = vld [vmem:[%s5 + $0x464] sm:$0xf]
        %v6523 = vld [vmem:[%s5 + $0x468] sm:$0xf]
        %v6524 = vld [vmem:[%s5 + $0x46c] sm:$0xf]
        %v6525 = vld [vmem:[%s5 + $0x470] sm:$0xf]
        %v6526 = vld [vmem:[%s5 + $0x474] sm:$0xf]
        %v6527 = vld [vmem:[%s5 + $0x478] sm:$0xf]
        %v6528 = vld [vmem:[%s5 + $0x47c] sm:$0xf]
        %v6529 = vld [vmem:[%s5 + $0x480] sm:$0xf]
        %v6530 = vld [vmem:[%s5 + $0x484] sm:$0xf]
        %v6531 = vld [vmem:[%s5 + $0x488] sm:$0xf]
        %v6532 = vld [vmem:[%s5 + $0x48c] sm:$0xf]
        %v6533 = vld [vmem:[%s5 + $0x490] sm:$0xf]
        %v6534 = vld [vmem:[%s5 + $0x494] sm:$0xf]
        %v6535 = vld [vmem:[%s5 + $0x498] sm:$0xf]
        %v6536 = vld [vmem:[%s5 + $0x49c] sm:$0xf]
        %v6537 = vld [vmem:[%s5 + $0x4a0] sm:$0xf]
        %v6538 = vld [vmem:[%s5 + $0x4a4] sm:$0xf]
        %v6539 = vld [vmem:[%s5 + $0x4a8] sm:$0xf]
        %v6540 = vld [vmem:[%s5 + $0x4ac] sm:$0xf]
        %v6541 = vld [vmem:[%s5 + $0x4b0] sm:$0xf]
        %v6542 = vld [vmem:[%s5 + $0x4b4] sm:$0xf]
        %v6543 = vld [vmem:[%s5 + $0x4b8] sm:$0xf]
        %v6544 = vld [vmem:[%s5 + $0x4bc] sm:$0xf]
        %v6545 = vld [vmem:[%s5 + $0x4c0] sm:$0xf]
        %v6546 = vld [vmem:[%s5 + $0x4c4] sm:$0xf]
        %v6547 = vld [vmem:[%s5 + $0x4c8] sm:$0xf]
        %v6548 = vld [vmem:[%s5 + $0x4cc] sm:$0xf]
        %v6549 = vld [vmem:[%s5 + $0x4d0] sm:$0xf]
        %v6550 = vld [vmem:[%s5 + $0x4d4] sm:$0xf]
        %v6551 = vld [vmem:[%s5 + $0x4d8] sm:$0xf]
        %v6552 = vld [vmem:[%s5 + $0x4dc] sm:$0xf]
        %v6553 = vld [vmem:[%s5 + $0x4e0] sm:$0xf]
        %v6554 = vld [vmem:[%s5 + $0x4e4] sm:$0xf]
        %v6555 = vld [vmem:[%s5 + $0x4e8] sm:$0xf]
        %v6556 = vld [vmem:[%s5 + $0x4ec] sm:$0xf]
        %v6557 = vld [vmem:[%s5 + $0x4f0] sm:$0xf]
        %v6558 = vld [vmem:[%s5 + $0x4f4] sm:$0xf]
        %v6559 = vld [vmem:[%s5 + $0x4f8] sm:$0xf]
        %v6560 = vld [vmem:[%s5 + $0x4fc] sm:$0xf]
        %v6561 = vld [vmem:[%s5 + $0x500] sm:$0xf]
        %v6562 = vld [vmem:[%s5 + $0x504] sm:$0xf]
        %v6563 = vld [vmem:[%s5 + $0x508] sm:$0xf]
        %v6564 = vld [vmem:[%s5 + $0x50c] sm:$0xf]
        %v6565 = vld [vmem:[%s5 + $0x510] sm:$0xf]
        %v6566 = vld [vmem:[%s5 + $0x514] sm:$0xf]
        %v6567 = vld [vmem:[%s5 + $0x518] sm:$0xf]
        %v6568 = vld [vmem:[%s5 + $0x51c] sm:$0xf]
        %v6569 = vld [vmem:[%s5 + $0x520] sm:$0xf]
        %v6570 = vld [vmem:[%s5 + $0x524] sm:$0xf]
        %v6571 = vld [vmem:[%s5 + $0x528] sm:$0xf]
        %v6572 = vld [vmem:[%s5 + $0x52c] sm:$0xf]
        %v6573 = vld [vmem:[%s5 + $0x530] sm:$0xf]
        %v6574 = vld [vmem:[%s5 + $0x534] sm:$0xf]
        %v6575 = vld [vmem:[%s5 + $0x538] sm:$0xf]
        %v6576 = vld [vmem:[%s5 + $0x53c] sm:$0xf]
        %v6577 = vld [vmem:[%s5 + $0x540] sm:$0xf]
        %v6578 = vld [vmem:[%s5 + $0x544] sm:$0xf]
        %v6579 = vld [vmem:[%s5 + $0x548] sm:$0xf]
        %v6580 = vld [vmem:[%s5 + $0x54c] sm:$0xf]
        %v6581 = vld [vmem:[%s5 + $0x550] sm:$0xf]
        %v6582 = vld [vmem:[%s5 + $0x554] sm:$0xf]
        %v6583 = vld [vmem:[%s5 + $0x558] sm:$0xf]
        %v6584 = vld [vmem:[%s5 + $0x55c] sm:$0xf]
        %v6585 = vld [vmem:[%s5 + $0x560] sm:$0xf]
        %v6586 = vld [vmem:[%s5 + $0x564] sm:$0xf]
        %v6587 = vld [vmem:[%s5 + $0x568] sm:$0xf]
        %v6588 = vld [vmem:[%s5 + $0x56c] sm:$0xf]
        %v6589 = vld [vmem:[%s5 + $0x570] sm:$0xf]
        %v6590 = vld [vmem:[%s5 + $0x574] sm:$0xf]
        %v6591 = vld [vmem:[%s5 + $0x578] sm:$0xf]
        %v6592 = vld [vmem:[%s5 + $0x57c] sm:$0xf]
        %v6593 = vld [vmem:[%s5 + $0x580] sm:$0xf]
        %v6594 = vld [vmem:[%s5 + $0x584] sm:$0xf]
        %v6595 = vld [vmem:[%s5 + $0x588] sm:$0xf]
        %v6596 = vld [vmem:[%s5 + $0x58c] sm:$0xf]
        %v6597 = vld [vmem:[%s5 + $0x590] sm:$0xf]
        %v6598 = vld [vmem:[%s5 + $0x594] sm:$0xf]
        %v6599 = vld [vmem:[%s5 + $0x598] sm:$0xf]
        %v6600 = vld [vmem:[%s5 + $0x59c] sm:$0xf]
        %v6601 = vld [vmem:[%s5 + $0x5a0] sm:$0xf]
        %v6602 = vld [vmem:[%s5 + $0x5a4] sm:$0xf]
        %v6603 = vld [vmem:[%s5 + $0x5a8] sm:$0xf]
        %v6604 = vld [vmem:[%s5 + $0x5ac] sm:$0xf]
        %v6605 = vld [vmem:[%s5 + $0x5b0] sm:$0xf]
        %v6606 = vld [vmem:[%s5 + $0x5b4] sm:$0xf]
        %v6607 = vld [vmem:[%s5 + $0x5b8] sm:$0xf]
        %v6608 = vld [vmem:[%s5 + $0x5bc] sm:$0xf]
        %v6609 = vld [vmem:[%s5 + $0x5c0] sm:$0xf]
        %v6610 = vld [vmem:[%s5 + $0x5c4] sm:$0xf]
        %v6611 = vld [vmem:[%s5 + $0x5c8] sm:$0xf]
        %v6612 = vld [vmem:[%s5 + $0x5cc] sm:$0xf]
        %v6613 = vld [vmem:[%s5 + $0x5d0] sm:$0xf]
        %v6614 = vld [vmem:[%s5 + $0x5d4] sm:$0xf]
        %v6615 = vld [vmem:[%s5 + $0x5d8] sm:$0xf]
        %v6616 = vld [vmem:[%s5 + $0x5dc] sm:$0xf]
        %v6617 = vld [vmem:[%s5 + $0x5e0] sm:$0xf]
        %v6618 = vld [vmem:[%s5 + $0x5e4] sm:$0xf]
        %v6619 = vld [vmem:[%s5 + $0x5e8] sm:$0xf]
        %v6620 = vld [vmem:[%s5 + $0x5ec] sm:$0xf]
        %v6621 = vld [vmem:[%s5 + $0x5f0] sm:$0xf]
        %v6622 = vld [vmem:[%s5 + $0x5f4] sm:$0xf]
        %v6623 = vld [vmem:[%s5 + $0x5f8] sm:$0xf]
        %v6624 = vld [vmem:[%s5 + $0x5fc] sm:$0xf]
        %v6625 = vld [vmem:[%s5 + $0x600] sm:$0xf]
        %v6626 = vld [vmem:[%s5 + $0x604] sm:$0xf]
        %v6627 = vld [vmem:[%s5 + $0x608] sm:$0xf]
        %v6628 = vld [vmem:[%s5 + $0x60c] sm:$0xf]
        %v6629 = vld [vmem:[%s5 + $0x610] sm:$0xf]
        %v6630 = vld [vmem:[%s5 + $0x614] sm:$0xf]
        %v6631 = vld [vmem:[%s5 + $0x618] sm:$0xf]
        %v6632 = vld [vmem:[%s5 + $0x61c] sm:$0xf]
        %v6633 = vld [vmem:[%s5 + $0x620] sm:$0xf]
        %v6634 = vld [vmem:[%s5 + $0x624] sm:$0xf]
        %v6635 = vld [vmem:[%s5 + $0x628] sm:$0xf]
        %v6636 = vld [vmem:[%s5 + $0x62c] sm:$0xf]
        %v6637 = vld [vmem:[%s5 + $0x630] sm:$0xf]
        %v6638 = vld [vmem:[%s5 + $0x634] sm:$0xf]
        %v6639 = vld [vmem:[%s5 + $0x638] sm:$0xf]
        %v6640 = vld [vmem:[%s5 + $0x63c] sm:$0xf]
        %v6641 = vld [vmem:[%s6] sm:$0x1]
        %v6643 = vlaneseq
        %v6644 = vshrl.u32 %v6643, 7
        %v6645 = vsub.s32 0, %v6644
        %v6646 = vrot.slane %v6641, %v6645
        %v7048 = vunpack.c.l.b16 %v6241
        %v7049 = vunpack.c.l.b16 %v6242
        %v7050 = vunpack.c.l.b16 %v6243
        %v7051 = vunpack.c.l.b16 %v6244
        %v7052 = vunpack.c.l.b16 %v6245
        %v7053 = vunpack.c.l.b16 %v6246
        %v7054 = vunpack.c.l.b16 %v6247
        %v7055 = vunpack.c.l.b16 %v6248
        %v7056 = vunpack.c.l.b16 %v6249
        %v7057 = vunpack.c.l.b16 %v6250
        %v7058 = vunpack.c.l.b16 %v6251
        %v7059 = vunpack.c.l.b16 %v6252
        %v7060 = vunpack.c.l.b16 %v6253
        %v7061 = vunpack.c.l.b16 %v6254
        %v7062 = vunpack.c.l.b16 %v6255
        %v7063 = vunpack.c.l.b16 %v6256
        %v7064 = vunpack.c.l.b16 %v6257
        %v7065 = vunpack.c.l.b16 %v6258
        %v7066 = vunpack.c.l.b16 %v6259
        %v7067 = vunpack.c.l.b16 %v6260
        %v7068 = vunpack.c.l.b16 %v6261
        %v7069 = vunpack.c.l.b16 %v6262
        %v7070 = vunpack.c.l.b16 %v6263
        %v7071 = vunpack.c.l.b16 %v6264
        %v7072 = vunpack.c.l.b16 %v6265
        %v7073 = vunpack.c.l.b16 %v6266
        %v7074 = vunpack.c.l.b16 %v6267
        %v7075 = vunpack.c.l.b16 %v6268
        %v7076 = vunpack.c.l.b16 %v6269
        %v7077 = vunpack.c.l.b16 %v6270
        %v7078 = vunpack.c.l.b16 %v6271
        %v7079 = vunpack.c.l.b16 %v6272
        %v7080 = vunpack.c.l.b16 %v6273
        %v7081 = vunpack.c.l.b16 %v6274
        %v7082 = vunpack.c.l.b16 %v6275
        %v7083 = vunpack.c.l.b16 %v6276
        %v7084 = vunpack.c.l.b16 %v6277
        %v7085 = vunpack.c.l.b16 %v6278
        %v7086 = vunpack.c.l.b16 %v6279
        %v7087 = vunpack.c.l.b16 %v6280
        %v7088 = vunpack.c.l.b16 %v6281
        %v7089 = vunpack.c.l.b16 %v6282
        %v7090 = vunpack.c.l.b16 %v6283
        %v7091 = vunpack.c.l.b16 %v6284
        %v7092 = vunpack.c.l.b16 %v6285
        %v7093 = vunpack.c.l.b16 %v6286
        %v7094 = vunpack.c.l.b16 %v6287
        %v7095 = vunpack.c.l.b16 %v6288
        %v7096 = vunpack.c.l.b16 %v6289
        %v7097 = vunpack.c.l.b16 %v6290
        %v7098 = vunpack.c.l.b16 %v6291
        %v7099 = vunpack.c.l.b16 %v6292
        %v7100 = vunpack.c.l.b16 %v6293
        %v7101 = vunpack.c.l.b16 %v6294
        %v7102 = vunpack.c.l.b16 %v6295
        %v7103 = vunpack.c.l.b16 %v6296
        %v7104 = vunpack.c.l.b16 %v6297
        %v7105 = vunpack.c.l.b16 %v6298
        %v7106 = vunpack.c.l.b16 %v6299
        %v7107 = vunpack.c.l.b16 %v6300
        %v7108 = vunpack.c.l.b16 %v6301
        %v7109 = vunpack.c.l.b16 %v6302
        %v7110 = vunpack.c.l.b16 %v6303
        %v7111 = vunpack.c.l.b16 %v6304
        %v7112 = vunpack.c.l.b16 %v6305
        %v7113 = vunpack.c.l.b16 %v6306
        %v7114 = vunpack.c.l.b16 %v6307
        %v7115 = vunpack.c.l.b16 %v6308
        %v7116 = vunpack.c.l.b16 %v6309
        %v7117 = vunpack.c.l.b16 %v6310
        %v7118 = vunpack.c.l.b16 %v6311
        %v7119 = vunpack.c.l.b16 %v6312
        %v7120 = vunpack.c.l.b16 %v6313
        %v7121 = vunpack.c.l.b16 %v6314
        %v7122 = vunpack.c.l.b16 %v6315
        %v7123 = vunpack.c.l.b16 %v6316
        %v7124 = vunpack.c.l.b16 %v6317
        %v7125 = vunpack.c.l.b16 %v6318
        %v7126 = vunpack.c.l.b16 %v6319
        %v7127 = vunpack.c.l.b16 %v6320
        %v7128 = vunpack.c.l.b16 %v6321
        %v7129 = vunpack.c.l.b16 %v6322
        %v7130 = vunpack.c.l.b16 %v6323
        %v7131 = vunpack.c.l.b16 %v6324
        %v7132 = vunpack.c.l.b16 %v6325
        %v7133 = vunpack.c.l.b16 %v6326
        %v7134 = vunpack.c.l.b16 %v6327
        %v7135 = vunpack.c.l.b16 %v6328
        %v7136 = vunpack.c.l.b16 %v6329
        %v7137 = vunpack.c.l.b16 %v6330
        %v7138 = vunpack.c.l.b16 %v6331
        %v7139 = vunpack.c.l.b16 %v6332
        %v7140 = vunpack.c.l.b16 %v6333
        %v7141 = vunpack.c.l.b16 %v6334
        %v7142 = vunpack.c.l.b16 %v6335
        %v7143 = vunpack.c.l.b16 %v6336
        %v7144 = vunpack.c.l.b16 %v6337
        %v7145 = vunpack.c.l.b16 %v6338
        %v7146 = vunpack.c.l.b16 %v6339
        %v7147 = vunpack.c.l.b16 %v6340
        %v7148 = vunpack.c.l.b16 %v6341
        %v7149 = vunpack.c.l.b16 %v6342
        %v7150 = vunpack.c.l.b16 %v6343
        %v7151 = vunpack.c.l.b16 %v6344
        %v7152 = vunpack.c.l.b16 %v6345
        %v7153 = vunpack.c.l.b16 %v6346
        %v7154 = vunpack.c.l.b16 %v6347
        %v7155 = vunpack.c.l.b16 %v6348
        %v7156 = vunpack.c.l.b16 %v6349
        %v7157 = vunpack.c.l.b16 %v6350
        %v7158 = vunpack.c.l.b16 %v6351
        %v7159 = vunpack.c.l.b16 %v6352
        %v7160 = vunpack.c.l.b16 %v6353
        %v7161 = vunpack.c.l.b16 %v6354
        %v7162 = vunpack.c.l.b16 %v6355
        %v7163 = vunpack.c.l.b16 %v6356
        %v7164 = vunpack.c.l.b16 %v6357
        %v7165 = vunpack.c.l.b16 %v6358
        %v7166 = vunpack.c.l.b16 %v6359
        %v7167 = vunpack.c.l.b16 %v6360
        %v7168 = vunpack.c.l.b16 %v6361
        %v7169 = vunpack.c.l.b16 %v6362
        %v7170 = vunpack.c.l.b16 %v6363
        %v7171 = vunpack.c.l.b16 %v6364
        %v7172 = vunpack.c.l.b16 %v6365
        %v7173 = vunpack.c.l.b16 %v6366
        %v7174 = vunpack.c.l.b16 %v6367
        %v7175 = vunpack.c.l.b16 %v6368
        %v7176 = vunpack.c.l.b16 %v6369
        %v7177 = vunpack.c.l.b16 %v6370
        %v7178 = vunpack.c.l.b16 %v6371
        %v7179 = vunpack.c.l.b16 %v6372
        %v7180 = vunpack.c.l.b16 %v6373
        %v7181 = vunpack.c.l.b16 %v6374
        %v7182 = vunpack.c.l.b16 %v6375
        %v7183 = vunpack.c.l.b16 %v6376
        %v7184 = vunpack.c.l.b16 %v6377
        %v7185 = vunpack.c.l.b16 %v6378
        %v7186 = vunpack.c.l.b16 %v6379
        %v7187 = vunpack.c.l.b16 %v6380
        %v7188 = vunpack.c.l.b16 %v6381
        %v7189 = vunpack.c.l.b16 %v6382
        %v7190 = vunpack.c.l.b16 %v6383
        %v7191 = vunpack.c.l.b16 %v6384
        %v7192 = vunpack.c.l.b16 %v6385
        %v7193 = vunpack.c.l.b16 %v6386
        %v7194 = vunpack.c.l.b16 %v6387
        %v7195 = vunpack.c.l.b16 %v6388
        %v7196 = vunpack.c.l.b16 %v6389
        %v7197 = vunpack.c.l.b16 %v6390
        %v7198 = vunpack.c.l.b16 %v6391
        %v7199 = vunpack.c.l.b16 %v6392
        %v7200 = vunpack.c.l.b16 %v6393
        %v7201 = vunpack.c.l.b16 %v6394
        %v7202 = vunpack.c.l.b16 %v6395
        %v7203 = vunpack.c.l.b16 %v6396
        %v7204 = vunpack.c.l.b16 %v6397
        %v7205 = vunpack.c.l.b16 %v6398
        %v7206 = vunpack.c.l.b16 %v6399
        %v7207 = vunpack.c.l.b16 %v6400
        %v7208 = vunpack.c.l.b16 %v6401
        %v7209 = vunpack.c.l.b16 %v6402
        %v7210 = vunpack.c.l.b16 %v6403
        %v7211 = vunpack.c.l.b16 %v6404
        %v7212 = vunpack.c.l.b16 %v6405
        %v7213 = vunpack.c.l.b16 %v6406
        %v7214 = vunpack.c.l.b16 %v6407
        %v7215 = vunpack.c.l.b16 %v6408
        %v7216 = vunpack.c.l.b16 %v6409
        %v7217 = vunpack.c.l.b16 %v6410
        %v7218 = vunpack.c.l.b16 %v6411
        %v7219 = vunpack.c.l.b16 %v6412
        %v7220 = vunpack.c.l.b16 %v6413
        %v7221 = vunpack.c.l.b16 %v6414
        %v7222 = vunpack.c.l.b16 %v6415
        %v7223 = vunpack.c.l.b16 %v6416
        %v7224 = vunpack.c.l.b16 %v6417
        %v7225 = vunpack.c.l.b16 %v6418
        %v7226 = vunpack.c.l.b16 %v6419
        %v7227 = vunpack.c.l.b16 %v6420
        %v7228 = vunpack.c.l.b16 %v6421
        %v7229 = vunpack.c.l.b16 %v6422
        %v7230 = vunpack.c.l.b16 %v6423
        %v7231 = vunpack.c.l.b16 %v6424
        %v7232 = vunpack.c.l.b16 %v6425
        %v7233 = vunpack.c.l.b16 %v6426
        %v7234 = vunpack.c.l.b16 %v6427
        %v7235 = vunpack.c.l.b16 %v6428
        %v7236 = vunpack.c.l.b16 %v6429
        %v7237 = vunpack.c.l.b16 %v6430
        %v7238 = vunpack.c.l.b16 %v6431
        %v7239 = vunpack.c.l.b16 %v6432
        %v7240 = vunpack.c.l.b16 %v6433
        %v7241 = vunpack.c.l.b16 %v6434
        %v7242 = vunpack.c.l.b16 %v6435
        %v7243 = vunpack.c.l.b16 %v6436
        %v7244 = vunpack.c.l.b16 %v6437
        %v7245 = vunpack.c.l.b16 %v6438
        %v7246 = vunpack.c.l.b16 %v6439
        %v7247 = vunpack.c.l.b16 %v6440
        %v7248 = vunpack.c.l.b16 %v6441
        %v7249 = vunpack.c.l.b16 %v6442
        %v7250 = vunpack.c.l.b16 %v6443
        %v7251 = vunpack.c.l.b16 %v6444
        %v7252 = vunpack.c.l.b16 %v6445
        %v7253 = vunpack.c.l.b16 %v6446
        %v7254 = vunpack.c.l.b16 %v6447
        %v7255 = vunpack.c.l.b16 %v6448
        %v7256 = vunpack.c.l.b16 %v6449
        %v7257 = vunpack.c.l.b16 %v6450
        %v7258 = vunpack.c.l.b16 %v6451
        %v7259 = vunpack.c.l.b16 %v6452
        %v7260 = vunpack.c.l.b16 %v6453
        %v7261 = vunpack.c.l.b16 %v6454
        %v7262 = vunpack.c.l.b16 %v6455
        %v7263 = vunpack.c.l.b16 %v6456
        %v7264 = vunpack.c.l.b16 %v6457
        %v7265 = vunpack.c.l.b16 %v6458
        %v7266 = vunpack.c.l.b16 %v6459
        %v7267 = vunpack.c.l.b16 %v6460
        %v7268 = vunpack.c.l.b16 %v6461
        %v7269 = vunpack.c.l.b16 %v6462
        %v7270 = vunpack.c.l.b16 %v6463
        %v7271 = vunpack.c.l.b16 %v6464
        %v7272 = vunpack.c.l.b16 %v6465
        %v7273 = vunpack.c.l.b16 %v6466
        %v7274 = vunpack.c.l.b16 %v6467
        %v7275 = vunpack.c.l.b16 %v6468
        %v7276 = vunpack.c.l.b16 %v6469
        %v7277 = vunpack.c.l.b16 %v6470
        %v7278 = vunpack.c.l.b16 %v6471
        %v7279 = vunpack.c.l.b16 %v6472
        %v7280 = vunpack.c.l.b16 %v6473
        %v7281 = vunpack.c.l.b16 %v6474
        %v7282 = vunpack.c.l.b16 %v6475
        %v7283 = vunpack.c.l.b16 %v6476
        %v7284 = vunpack.c.l.b16 %v6477
        %v7285 = vunpack.c.l.b16 %v6478
        %v7286 = vunpack.c.l.b16 %v6479
        %v7287 = vunpack.c.l.b16 %v6480
        %v7288 = vunpack.c.l.b16 %v6481
        %v7289 = vunpack.c.l.b16 %v6482
        %v7290 = vunpack.c.l.b16 %v6483
        %v7291 = vunpack.c.l.b16 %v6484
        %v7292 = vunpack.c.l.b16 %v6485
        %v7293 = vunpack.c.l.b16 %v6486
        %v7294 = vunpack.c.l.b16 %v6487
        %v7295 = vunpack.c.l.b16 %v6488
        %v7296 = vunpack.c.l.b16 %v6489
        %v7297 = vunpack.c.l.b16 %v6490
        %v7298 = vunpack.c.l.b16 %v6491
        %v7299 = vunpack.c.l.b16 %v6492
        %v7300 = vunpack.c.l.b16 %v6493
        %v7301 = vunpack.c.l.b16 %v6494
        %v7302 = vunpack.c.l.b16 %v6495
        %v7303 = vunpack.c.l.b16 %v6496
        %v7304 = vunpack.c.l.b16 %v6497
        %v7305 = vunpack.c.l.b16 %v6498
        %v7306 = vunpack.c.l.b16 %v6499
        %v7307 = vunpack.c.l.b16 %v6500
        %v7308 = vunpack.c.l.b16 %v6501
        %v7309 = vunpack.c.l.b16 %v6502
        %v7310 = vunpack.c.l.b16 %v6503
        %v7311 = vunpack.c.l.b16 %v6504
        %v7312 = vunpack.c.l.b16 %v6505
        %v7313 = vunpack.c.l.b16 %v6506
        %v7314 = vunpack.c.l.b16 %v6507
        %v7315 = vunpack.c.l.b16 %v6508
        %v7316 = vunpack.c.l.b16 %v6509
        %v7317 = vunpack.c.l.b16 %v6510
        %v7318 = vunpack.c.l.b16 %v6511
        %v7319 = vunpack.c.l.b16 %v6512
        %v7320 = vunpack.c.l.b16 %v6513
        %v7321 = vunpack.c.l.b16 %v6514
        %v7322 = vunpack.c.l.b16 %v6515
        %v7323 = vunpack.c.l.b16 %v6516
        %v7324 = vunpack.c.l.b16 %v6517
        %v7325 = vunpack.c.l.b16 %v6518
        %v7326 = vunpack.c.l.b16 %v6519
        %v7327 = vunpack.c.l.b16 %v6520
        %v7328 = vunpack.c.l.b16 %v6521
        %v7329 = vunpack.c.l.b16 %v6522
        %v7330 = vunpack.c.l.b16 %v6523
        %v7331 = vunpack.c.l.b16 %v6524
        %v7332 = vunpack.c.l.b16 %v6525
        %v7333 = vunpack.c.l.b16 %v6526
        %v7334 = vunpack.c.l.b16 %v6527
        %v7335 = vunpack.c.l.b16 %v6528
        %v7336 = vunpack.c.l.b16 %v6529
        %v7337 = vunpack.c.l.b16 %v6530
        %v7338 = vunpack.c.l.b16 %v6531
        %v7339 = vunpack.c.l.b16 %v6532
        %v7340 = vunpack.c.l.b16 %v6533
        %v7341 = vunpack.c.l.b16 %v6534
        %v7342 = vunpack.c.l.b16 %v6535
        %v7343 = vunpack.c.l.b16 %v6536
        %v7344 = vunpack.c.l.b16 %v6537
        %v7345 = vunpack.c.l.b16 %v6538
        %v7346 = vunpack.c.l.b16 %v6539
        %v7347 = vunpack.c.l.b16 %v6540
        %v7348 = vunpack.c.l.b16 %v6541
        %v7349 = vunpack.c.l.b16 %v6542
        %v7350 = vunpack.c.l.b16 %v6543
        %v7351 = vunpack.c.l.b16 %v6544
        %v7352 = vunpack.c.l.b16 %v6545
        %v7353 = vunpack.c.l.b16 %v6546
        %v7354 = vunpack.c.l.b16 %v6547
        %v7355 = vunpack.c.l.b16 %v6548
        %v7356 = vunpack.c.l.b16 %v6549
        %v7357 = vunpack.c.l.b16 %v6550
        %v7358 = vunpack.c.l.b16 %v6551
        %v7359 = vunpack.c.l.b16 %v6552
        %v7360 = vunpack.c.l.b16 %v6553
        %v7361 = vunpack.c.l.b16 %v6554
        %v7362 = vunpack.c.l.b16 %v6555
        %v7363 = vunpack.c.l.b16 %v6556
        %v7364 = vunpack.c.l.b16 %v6557
        %v7365 = vunpack.c.l.b16 %v6558
        %v7366 = vunpack.c.l.b16 %v6559
        %v7367 = vunpack.c.l.b16 %v6560
        %v7368 = vunpack.c.l.b16 %v6561
        %v7369 = vunpack.c.l.b16 %v6562
        %v7370 = vunpack.c.l.b16 %v6563
        %v7371 = vunpack.c.l.b16 %v6564
        %v7372 = vunpack.c.l.b16 %v6565
        %v7373 = vunpack.c.l.b16 %v6566
        %v7374 = vunpack.c.l.b16 %v6567
        %v7375 = vunpack.c.l.b16 %v6568
        %v7376 = vunpack.c.l.b16 %v6569
        %v7377 = vunpack.c.l.b16 %v6570
        %v7378 = vunpack.c.l.b16 %v6571
        %v7379 = vunpack.c.l.b16 %v6572
        %v7380 = vunpack.c.l.b16 %v6573
        %v7381 = vunpack.c.l.b16 %v6574
        %v7382 = vunpack.c.l.b16 %v6575
        %v7383 = vunpack.c.l.b16 %v6576
        %v7384 = vunpack.c.l.b16 %v6577
        %v7385 = vunpack.c.l.b16 %v6578
        %v7386 = vunpack.c.l.b16 %v6579
        %v7387 = vunpack.c.l.b16 %v6580
        %v7388 = vunpack.c.l.b16 %v6581
        %v7389 = vunpack.c.l.b16 %v6582
        %v7390 = vunpack.c.l.b16 %v6583
        %v7391 = vunpack.c.l.b16 %v6584
        %v7392 = vunpack.c.l.b16 %v6585
        %v7393 = vunpack.c.l.b16 %v6586
        %v7394 = vunpack.c.l.b16 %v6587
        %v7395 = vunpack.c.l.b16 %v6588
        %v7396 = vunpack.c.l.b16 %v6589
        %v7397 = vunpack.c.l.b16 %v6590
        %v7398 = vunpack.c.l.b16 %v6591
        %v7399 = vunpack.c.l.b16 %v6592
        %v7400 = vunpack.c.l.b16 %v6593
        %v7401 = vunpack.c.l.b16 %v6594
        %v7402 = vunpack.c.l.b16 %v6595
        %v7403 = vunpack.c.l.b16 %v6596
        %v7404 = vunpack.c.l.b16 %v6597
        %v7405 = vunpack.c.l.b16 %v6598
        %v7406 = vunpack.c.l.b16 %v6599
        %v7407 = vunpack.c.l.b16 %v6600
        %v7408 = vunpack.c.l.b16 %v6601
        %v7409 = vunpack.c.l.b16 %v6602
        %v7410 = vunpack.c.l.b16 %v6603
        %v7411 = vunpack.c.l.b16 %v6604
        %v7412 = vunpack.c.l.b16 %v6605
        %v7413 = vunpack.c.l.b16 %v6606
        %v7414 = vunpack.c.l.b16 %v6607
        %v7415 = vunpack.c.l.b16 %v6608
        %v7416 = vunpack.c.l.b16 %v6609
        %v7417 = vunpack.c.l.b16 %v6610
        %v7418 = vunpack.c.l.b16 %v6611
        %v7419 = vunpack.c.l.b16 %v6612
        %v7420 = vunpack.c.l.b16 %v6613
        %v7421 = vunpack.c.l.b16 %v6614
        %v7422 = vunpack.c.l.b16 %v6615
        %v7423 = vunpack.c.l.b16 %v6616
        %v7424 = vunpack.c.l.b16 %v6617
        %v7425 = vunpack.c.l.b16 %v6618
        %v7426 = vunpack.c.l.b16 %v6619
        %v7427 = vunpack.c.l.b16 %v6620
        %v7428 = vunpack.c.l.b16 %v6621
        %v7429 = vunpack.c.l.b16 %v6622
        %v7430 = vunpack.c.l.b16 %v6623
        %v7431 = vunpack.c.l.b16 %v6624
        %v7432 = vunpack.c.l.b16 %v6625
        %v7433 = vunpack.c.l.b16 %v6626
        %v7434 = vunpack.c.l.b16 %v6627
        %v7435 = vunpack.c.l.b16 %v6628
        %v7436 = vunpack.c.l.b16 %v6629
        %v7437 = vunpack.c.l.b16 %v6630
        %v7438 = vunpack.c.l.b16 %v6631
        %v7439 = vunpack.c.l.b16 %v6632
        %v7440 = vunpack.c.l.b16 %v6633
        %v7441 = vunpack.c.l.b16 %v6634
        %v7442 = vunpack.c.l.b16 %v6635
        %v7443 = vunpack.c.l.b16 %v6636
        %v7444 = vunpack.c.l.b16 %v6637
        %v7445 = vunpack.c.l.b16 %v6638
        %v7446 = vunpack.c.l.b16 %v6639
        %v7447 = vunpack.c.l.b16 %v6640
        %v7448 = vpack.c.b16 %v7049, %v7048
        %v7449 = vpack.c.b16 %v7051, %v7050
        %v7450 = vpack.c.b16 %v7053, %v7052
        %v7451 = vpack.c.b16 %v7055, %v7054
        %v7452 = vpack.c.b16 %v7057, %v7056
        %v7453 = vpack.c.b16 %v7059, %v7058
        %v7454 = vpack.c.b16 %v7061, %v7060
        %v7455 = vpack.c.b16 %v7063, %v7062
        %v7456 = vpack.c.b16 %v7065, %v7064
        %v7457 = vpack.c.b16 %v7067, %v7066
        %v7458 = vpack.c.b16 %v7069, %v7068
        %v7459 = vpack.c.b16 %v7071, %v7070
        %v7460 = vpack.c.b16 %v7073, %v7072
        %v7461 = vpack.c.b16 %v7075, %v7074
        %v7462 = vpack.c.b16 %v7077, %v7076
        %v7463 = vpack.c.b16 %v7079, %v7078
        %v7464 = vpack.c.b16 %v7081, %v7080
        %v7465 = vpack.c.b16 %v7083, %v7082
        %v7466 = vpack.c.b16 %v7085, %v7084
        %v7467 = vpack.c.b16 %v7087, %v7086
        %v7468 = vpack.c.b16 %v7089, %v7088
        %v7469 = vpack.c.b16 %v7091, %v7090
        %v7470 = vpack.c.b16 %v7093, %v7092
        %v7471 = vpack.c.b16 %v7095, %v7094
        %v7472 = vpack.c.b16 %v7097, %v7096
        %v7473 = vpack.c.b16 %v7099, %v7098
        %v7474 = vpack.c.b16 %v7101, %v7100
        %v7475 = vpack.c.b16 %v7103, %v7102
        %v7476 = vpack.c.b16 %v7105, %v7104
        %v7477 = vpack.c.b16 %v7107, %v7106
        %v7478 = vpack.c.b16 %v7109, %v7108
        %v7479 = vpack.c.b16 %v7111, %v7110
        %v7480 = vpack.c.b16 %v7113, %v7112
        %v7481 = vpack.c.b16 %v7115, %v7114
        %v7482 = vpack.c.b16 %v7117, %v7116
        %v7483 = vpack.c.b16 %v7119, %v7118
        %v7484 = vpack.c.b16 %v7121, %v7120
        %v7485 = vpack.c.b16 %v7123, %v7122
        %v7486 = vpack.c.b16 %v7125, %v7124
        %v7487 = vpack.c.b16 %v7127, %v7126
        %v7488 = vpack.c.b16 %v7129, %v7128
        %v7489 = vpack.c.b16 %v7131, %v7130
        %v7490 = vpack.c.b16 %v7133, %v7132
        %v7491 = vpack.c.b16 %v7135, %v7134
        %v7492 = vpack.c.b16 %v7137, %v7136
        %v7493 = vpack.c.b16 %v7139, %v7138
        %v7494 = vpack.c.b16 %v7141, %v7140
        %v7495 = vpack.c.b16 %v7143, %v7142
        %v7496 = vpack.c.b16 %v7145, %v7144
        %v7497 = vpack.c.b16 %v7147, %v7146
        %v7498 = vpack.c.b16 %v7149, %v7148
        %v7499 = vpack.c.b16 %v7151, %v7150
        %v7500 = vpack.c.b16 %v7153, %v7152
        %v7501 = vpack.c.b16 %v7155, %v7154
        %v7502 = vpack.c.b16 %v7157, %v7156
        %v7503 = vpack.c.b16 %v7159, %v7158
        %v7504 = vpack.c.b16 %v7161, %v7160
        %v7505 = vpack.c.b16 %v7163, %v7162
        %v7506 = vpack.c.b16 %v7165, %v7164
        %v7507 = vpack.c.b16 %v7167, %v7166
        %v7508 = vpack.c.b16 %v7169, %v7168
        %v7509 = vpack.c.b16 %v7171, %v7170
        %v7510 = vpack.c.b16 %v7173, %v7172
        %v7511 = vpack.c.b16 %v7175, %v7174
        %v7512 = vpack.c.b16 %v7177, %v7176
        %v7513 = vpack.c.b16 %v7179, %v7178
        %v7514 = vpack.c.b16 %v7181, %v7180
        %v7515 = vpack.c.b16 %v7183, %v7182
        %v7516 = vpack.c.b16 %v7185, %v7184
        %v7517 = vpack.c.b16 %v7187, %v7186
        %v7518 = vpack.c.b16 %v7189, %v7188
        %v7519 = vpack.c.b16 %v7191, %v7190
        %v7520 = vpack.c.b16 %v7193, %v7192
        %v7521 = vpack.c.b16 %v7195, %v7194
        %v7522 = vpack.c.b16 %v7197, %v7196
        %v7523 = vpack.c.b16 %v7199, %v7198
        %v7524 = vpack.c.b16 %v7201, %v7200
        %v7525 = vpack.c.b16 %v7203, %v7202
        %v7526 = vpack.c.b16 %v7205, %v7204
        %v7527 = vpack.c.b16 %v7207, %v7206
        %v7528 = vpack.c.b16 %v7209, %v7208
        %v7529 = vpack.c.b16 %v7211, %v7210
        %v7530 = vpack.c.b16 %v7213, %v7212
        %v7531 = vpack.c.b16 %v7215, %v7214
        %v7532 = vpack.c.b16 %v7217, %v7216
        %v7533 = vpack.c.b16 %v7219, %v7218
        %v7534 = vpack.c.b16 %v7221, %v7220
        %v7535 = vpack.c.b16 %v7223, %v7222
        %v7536 = vpack.c.b16 %v7225, %v7224
        %v7537 = vpack.c.b16 %v7227, %v7226
        %v7538 = vpack.c.b16 %v7229, %v7228
        %v7539 = vpack.c.b16 %v7231, %v7230
        %v7540 = vpack.c.b16 %v7233, %v7232
        %v7541 = vpack.c.b16 %v7235, %v7234
        %v7542 = vpack.c.b16 %v7237, %v7236
        %v7543 = vpack.c.b16 %v7239, %v7238
        %v7544 = vpack.c.b16 %v7241, %v7240
        %v7545 = vpack.c.b16 %v7243, %v7242
        %v7546 = vpack.c.b16 %v7245, %v7244
        %v7547 = vpack.c.b16 %v7247, %v7246
        %v7548 = vpack.c.b16 %v7249, %v7248
        %v7549 = vpack.c.b16 %v7251, %v7250
        %v7550 = vpack.c.b16 %v7253, %v7252
        %v7551 = vpack.c.b16 %v7255, %v7254
        %v7552 = vpack.c.b16 %v7257, %v7256
        %v7553 = vpack.c.b16 %v7259, %v7258
        %v7554 = vpack.c.b16 %v7261, %v7260
        %v7555 = vpack.c.b16 %v7263, %v7262
        %v7556 = vpack.c.b16 %v7265, %v7264
        %v7557 = vpack.c.b16 %v7267, %v7266
        %v7558 = vpack.c.b16 %v7269, %v7268
        %v7559 = vpack.c.b16 %v7271, %v7270
        %v7560 = vpack.c.b16 %v7273, %v7272
        %v7561 = vpack.c.b16 %v7275, %v7274
        %v7562 = vpack.c.b16 %v7277, %v7276
        %v7563 = vpack.c.b16 %v7279, %v7278
        %v7564 = vpack.c.b16 %v7281, %v7280
        %v7565 = vpack.c.b16 %v7283, %v7282
        %v7566 = vpack.c.b16 %v7285, %v7284
        %v7567 = vpack.c.b16 %v7287, %v7286
        %v7568 = vpack.c.b16 %v7289, %v7288
        %v7569 = vpack.c.b16 %v7291, %v7290
        %v7570 = vpack.c.b16 %v7293, %v7292
        %v7571 = vpack.c.b16 %v7295, %v7294
        %v7572 = vpack.c.b16 %v7297, %v7296
        %v7573 = vpack.c.b16 %v7299, %v7298
        %v7574 = vpack.c.b16 %v7301, %v7300
        %v7575 = vpack.c.b16 %v7303, %v7302
        %v7576 = vpack.c.b16 %v7305, %v7304
        %v7577 = vpack.c.b16 %v7307, %v7306
        %v7578 = vpack.c.b16 %v7309, %v7308
        %v7579 = vpack.c.b16 %v7311, %v7310
        %v7580 = vpack.c.b16 %v7313, %v7312
        %v7581 = vpack.c.b16 %v7315, %v7314
        %v7582 = vpack.c.b16 %v7317, %v7316
        %v7583 = vpack.c.b16 %v7319, %v7318
        %v7584 = vpack.c.b16 %v7321, %v7320
        %v7585 = vpack.c.b16 %v7323, %v7322
        %v7586 = vpack.c.b16 %v7325, %v7324
        %v7587 = vpack.c.b16 %v7327, %v7326
        %v7588 = vpack.c.b16 %v7329, %v7328
        %v7589 = vpack.c.b16 %v7331, %v7330
        %v7590 = vpack.c.b16 %v7333, %v7332
        %v7591 = vpack.c.b16 %v7335, %v7334
        %v7592 = vpack.c.b16 %v7337, %v7336
        %v7593 = vpack.c.b16 %v7339, %v7338
        %v7594 = vpack.c.b16 %v7341, %v7340
        %v7595 = vpack.c.b16 %v7343, %v7342
        %v7596 = vpack.c.b16 %v7345, %v7344
        %v7597 = vpack.c.b16 %v7347, %v7346
        %v7598 = vpack.c.b16 %v7349, %v7348
        %v7599 = vpack.c.b16 %v7351, %v7350
        %v7600 = vpack.c.b16 %v7353, %v7352
        %v7601 = vpack.c.b16 %v7355, %v7354
        %v7602 = vpack.c.b16 %v7357, %v7356
        %v7603 = vpack.c.b16 %v7359, %v7358
        %v7604 = vpack.c.b16 %v7361, %v7360
        %v7605 = vpack.c.b16 %v7363, %v7362
        %v7606 = vpack.c.b16 %v7365, %v7364
        %v7607 = vpack.c.b16 %v7367, %v7366
        %v7608 = vpack.c.b16 %v7369, %v7368
        %v7609 = vpack.c.b16 %v7371, %v7370
        %v7610 = vpack.c.b16 %v7373, %v7372
        %v7611 = vpack.c.b16 %v7375, %v7374
        %v7612 = vpack.c.b16 %v7377, %v7376
        %v7613 = vpack.c.b16 %v7379, %v7378
        %v7614 = vpack.c.b16 %v7381, %v7380
        %v7615 = vpack.c.b16 %v7383, %v7382
        %v7616 = vpack.c.b16 %v7385, %v7384
        %v7617 = vpack.c.b16 %v7387, %v7386
        %v7618 = vpack.c.b16 %v7389, %v7388
        %v7619 = vpack.c.b16 %v7391, %v7390
        %v7620 = vpack.c.b16 %v7393, %v7392
        %v7621 = vpack.c.b16 %v7395, %v7394
        %v7622 = vpack.c.b16 %v7397, %v7396
        %v7623 = vpack.c.b16 %v7399, %v7398
        %v7624 = vpack.c.b16 %v7401, %v7400
        %v7625 = vpack.c.b16 %v7403, %v7402
        %v7626 = vpack.c.b16 %v7405, %v7404
        %v7627 = vpack.c.b16 %v7407, %v7406
        %v7628 = vpack.c.b16 %v7409, %v7408
        %v7629 = vpack.c.b16 %v7411, %v7410
        %v7630 = vpack.c.b16 %v7413, %v7412
        %v7631 = vpack.c.b16 %v7415, %v7414
        %v7632 = vpack.c.b16 %v7417, %v7416
        %v7633 = vpack.c.b16 %v7419, %v7418
        %v7634 = vpack.c.b16 %v7421, %v7420
        %v7635 = vpack.c.b16 %v7423, %v7422
        %v7636 = vpack.c.b16 %v7425, %v7424
        %v7637 = vpack.c.b16 %v7427, %v7426
        %v7638 = vpack.c.b16 %v7429, %v7428
        %v7639 = vpack.c.b16 %v7431, %v7430
        %v7640 = vpack.c.b16 %v7433, %v7432
        %v7641 = vpack.c.b16 %v7435, %v7434
        %v7642 = vpack.c.b16 %v7437, %v7436
        %v7643 = vpack.c.b16 %v7439, %v7438
        %v7644 = vpack.c.b16 %v7441, %v7440
        %v7645 = vpack.c.b16 %v7443, %v7442
        %v7646 = vpack.c.b16 %v7445, %v7444
        %v7647 = vpack.c.b16 %v7447, %v7446
        %7848 = vmatprep.subr.bf16.mxu0 0
        %7849 = vmatpush1.bf16.msra.mxu0 %v7448
        %7850 = vmatprep.subr.bf16.mxu0 0
        %7851 = vmatpush1.bf16.msra.mxu0 %v7449
        %7852 = vmatprep.subr.bf16.mxu0 0
        %7853 = vmatpush1.bf16.msra.mxu0 %v7450
        %7854 = vmatprep.subr.bf16.mxu0 0
        %7855 = vmatpush1.bf16.msra.mxu0 %v7451
        %7856 = vmatprep.subr.bf16.mxu0 0
        %7857 = vmatpush1.bf16.msra.mxu0 %v7452
        %7858 = vmatprep.subr.bf16.mxu0 0
        %7859 = vmatpush1.bf16.msra.mxu0 %v7453
        %7860 = vmatprep.subr.bf16.mxu0 0
        %7861 = vmatpush1.bf16.msra.mxu0 %v7454
        %7862 = vmatprep.subr.bf16.mxu0 0
        %7863 = vmatpush1.bf16.msra.mxu0 %v7455
        %7864 = vmatprep.subr.bf16.mxu0 0
        %7865 = vmatpush1.bf16.msra.mxu0 %v7456
        %7866 = vmatprep.subr.bf16.mxu0 0
        %7867 = vmatpush1.bf16.msra.mxu0 %v7457
        %7868 = vmatprep.subr.bf16.mxu0 0
        %7869 = vmatpush1.bf16.msra.mxu0 %v7458
        %7870 = vmatprep.subr.bf16.mxu0 0
        %7871 = vmatpush1.bf16.msra.mxu0 %v7459
        %7872 = vmatprep.subr.bf16.mxu0 0
        %7873 = vmatpush1.bf16.msra.mxu0 %v7460
        %7874 = vmatprep.subr.bf16.mxu0 0
        %7875 = vmatpush1.bf16.msra.mxu0 %v7461
        %7876 = vmatprep.subr.bf16.mxu0 0
        %7877 = vmatpush1.bf16.msra.mxu0 %v7462
        %7878 = vmatprep.subr.bf16.mxu0 0
        %7879 = vmatpush1.bf16.msra.mxu0 %v7463
        %7880 = vmatprep.mubr.bf16.mxu0 %v6098
        %7881 = vmatmul.mubr.bf16.gmra.mrb[0].mxu0 %v6092
        %v7882 = vpop.f32.mrb[0].mxu0
        %v7883 = vadd.f32 %v6646, %v7882
        %v7884 = vpop.f32.mrb[0].mxu0
        %v7885 = vpop.f32.mrb[0].mxu0
        %v7886 = vadd.f32 %v6646, %v7885
        %v7887 = vpop.f32.mrb[0].mxu0
        %7888 = vmatprep.mubr.bf16.mxu0 %v6099
        %7889 = vmatmul.mubr.bf16.gmra.mrb[0].mxu0 %v6093
        %v7890 = vpop.f32.mrb[0].mxu0
        %v7891 = vadd.f32 %v6646, %v7890
        %v7892 = vpop.f32.mrb[0].mxu0
        %v7893 = vpop.f32.mrb[0].mxu0
        %v7894 = vadd.f32 %v6646, %v7893
        %v7895 = vpop.f32.mrb[0].mxu0
        %7896 = vdwg.mxu0
        %7897 = vmatprep.subr.bf16.mxu0 0
        %7898 = vmatpush1.bf16.msra.mxu0 %v7464
        %7899 = vmatprep.subr.bf16.mxu0 0
        %7900 = vmatpush1.bf16.msra.mxu0 %v7465
        %7901 = vmatprep.subr.bf16.mxu0 0
        %7902 = vmatpush1.bf16.msra.mxu0 %v7466
        %7903 = vmatprep.subr.bf16.mxu0 0
        %7904 = vmatpush1.bf16.msra.mxu0 %v7467
        %7905 = vmatprep.subr.bf16.mxu0 0
        %7906 = vmatpush1.bf16.msra.mxu0 %v7468
        %7907 = vmatprep.subr.bf16.mxu0 0
        %7908 = vmatpush1.bf16.msra.mxu0 %v7469
        %7909 = vmatprep.subr.bf16.mxu0 0
        %7910 = vmatpush1.bf16.msra.mxu0 %v7470
        %7911 = vmatprep.subr.bf16.mxu0 0
        %7912 = vmatpush1.bf16.msra.mxu0 %v7471
        %7913 = vmatprep.subr.bf16.mxu0 0
        %7914 = vmatpush1.bf16.msra.mxu0 %v7472
        %7915 = vmatprep.subr.bf16.mxu0 0
        %7916 = vmatpush1.bf16.msra.mxu0 %v7473
        %7917 = vmatprep.subr.bf16.mxu0 0
        %7918 = vmatpush1.bf16.msra.mxu0 %v7474
        %7919 = vmatprep.subr.bf16.mxu0 0
        %7920 = vmatpush1.bf16.msra.mxu0 %v7475
        %7921 = vmatprep.subr.bf16.mxu0 0
        %7922 = vmatpush1.bf16.msra.mxu0 %v7476
        %7923 = vmatprep.subr.bf16.mxu0 0
        %7924 = vmatpush1.bf16.msra.mxu0 %v7477
        %7925 = vmatprep.subr.bf16.mxu0 0
        %7926 = vmatpush1.bf16.msra.mxu0 %v7478
        %7927 = vmatprep.subr.bf16.mxu0 0
        %7928 = vmatpush1.bf16.msra.mxu0 %v7479
        %7929 = vmatprep.mubr.bf16.mxu0 %v6110
        %7930 = vmatmul.mubr.bf16.gmra.mrb[0].mxu0 %v6104
        %v7931 = vpop.f32.mrb[0].mxu0
        %v7932 = vadd.f32 %v7883, %v7931
        %v7933 = vpop.f32.mrb[0].mxu0
        %v7934 = vpop.f32.mrb[0].mxu0
        %v7935 = vadd.f32 %v7886, %v7934
        %v7936 = vpop.f32.mrb[0].mxu0
        %7937 = vmatprep.mubr.bf16.mxu0 %v6111
        %7938 = vmatmul.mubr.bf16.gmra.mrb[0].mxu0 %v6105
        %v7939 = vpop.f32.mrb[0].mxu0
        %v7940 = vadd.f32 %v7891, %v7939
        %v7941 = vpop.f32.mrb[0].mxu0
        %v7942 = vpop.f32.mrb[0].mxu0
        %v7943 = vadd.f32 %v7894, %v7942
        %v7944 = vpop.f32.mrb[0].mxu0
        %7945 = vdwg.mxu0
        %7946 = vmatprep.subr.bf16.mxu0 0
        %7947 = vmatpush1.bf16.msra.mxu0 %v7480
        %7948 = vmatprep.subr.bf16.mxu0 0
        %7949 = vmatpush1.bf16.msra.mxu0 %v7481
        %7950 = vmatprep.subr.bf16.mxu0 0
        %7951 = vmatpush1.bf16.msra.mxu0 %v7482
        %7952 = vmatprep.subr.bf16.mxu0 0
        %7953 = vmatpush1.bf16.msra.mxu0 %v7483
        %7954 = vmatprep.subr.bf16.mxu0 0
        %7955 = vmatpush1.bf16.msra.mxu0 %v7484
        %7956 = vmatprep.subr.bf16.mxu0 0
        %7957 = vmatpush1.bf16.msra.mxu0 %v7485
        %7958 = vmatprep.subr.bf16.mxu0 0
        %7959 = vmatpush1.bf16.msra.mxu0 %v7486
        %7960 = vmatprep.subr.bf16.mxu0 0
        %7961 = vmatpush1.bf16.msra.mxu0 %v7487
        %7962 = vmatprep.subr.bf16.mxu0 0
        %7963 = vmatpush1.bf16.msra.mxu0 %v7488
        %7964 = vmatprep.subr.bf16.mxu0 0
        %7965 = vmatpush1.bf16.msra.mxu0 %v7489
        %7966 = vmatprep.subr.bf16.mxu0 0
        %7967 = vmatpush1.bf16.msra.mxu0 %v7490
        %7968 = vmatprep.subr.bf16.mxu0 0
        %7969 = vmatpush1.bf16.msra.mxu0 %v7491
        %7970 = vmatprep.subr.bf16.mxu0 0
        %7971 = vmatpush1.bf16.msra.mxu0 %v7492
        %7972 = vmatprep.subr.bf16.mxu0 0
        %7973 = vmatpush1.bf16.msra.mxu0 %v7493
        %7974 = vmatprep.subr.bf16.mxu0 0
        %7975 = vmatpush1.bf16.msra.mxu0 %v7494
        %7976 = vmatprep.subr.bf16.mxu0 0
        %7977 = vmatpush1.bf16.msra.mxu0 %v7495
        %7978 = vmatprep.mubr.bf16.mxu0 %v6123
        %7979 = vmatmul.mubr.bf16.gmra.mrb[0].mxu0 %v6116
        %v7980 = vpop.f32.mrb[0].mxu0
        %v7981 = vadd.f32 %v7932, %v7980
        %v7982 = vpop.f32.mrb[0].mxu0
        %v7983 = vpop.f32.mrb[0].mxu0
        %v7984 = vadd.f32 %v7935, %v7983
        %v7985 = vpop.f32.mrb[0].mxu0
        %7986 = vmatprep.mubr.bf16.mxu0 %v6124
        %7987 = vmatmul.mubr.bf16.gmra.mrb[0].mxu0 %v6117
        %v7988 = vpop.f32.mrb[0].mxu0
        %v7989 = vadd.f32 %v7940, %v7988
        %v7990 = vpop.f32.mrb[0].mxu0
        %v7991 = vpop.f32.mrb[0].mxu0
        %v7992 = vadd.f32 %v7943, %v7991
        %v7993 = vpop.f32.mrb[0].mxu0
        %7994 = vdwg.mxu0
        %7995 = vmatprep.subr.bf16.mxu0 0
        %7996 = vmatpush1.bf16.msra.mxu0 %v7496
        %7997 = vmatprep.subr.bf16.mxu0 0
        %7998 = vmatpush1.bf16.msra.mxu0 %v7497
        %7999 = vmatprep.subr.bf16.mxu0 0
        %8000 = vmatpush1.bf16.msra.mxu0 %v7498
        %8001 = vmatprep.subr.bf16.mxu0 0
        %8002 = vmatpush1.bf16.msra.mxu0 %v7499
        %8003 = vmatprep.subr.bf16.mxu0 0
        %8004 = vmatpush1.bf16.msra.mxu0 %v7500
        %8005 = vmatprep.subr.bf16.mxu0 0
        %8006 = vmatpush1.bf16.msra.mxu0 %v7501
        %8007 = vmatprep.subr.bf16.mxu0 0
        %8008 = vmatpush1.bf16.msra.mxu0 %v7502
        %8009 = vmatprep.subr.bf16.mxu0 0
        %8010 = vmatpush1.bf16.msra.mxu0 %v7503
        %8011 = vmatprep.subr.bf16.mxu0 0
        %8012 = vmatpush1.bf16.msra.mxu0 %v7504
        %8013 = vmatprep.subr.bf16.mxu0 0
        %8014 = vmatpush1.bf16.msra.mxu0 %v7505
        %8015 = vmatprep.subr.bf16.mxu0 0
        %8016 = vmatpush1.bf16.msra.mxu0 %v7506
        %8017 = vmatprep.subr.bf16.mxu0 0
        %8018 = vmatpush1.bf16.msra.mxu0 %v7507
        %8019 = vmatprep.subr.bf16.mxu0 0
        %8020 = vmatpush1.bf16.msra.mxu0 %v7508
        %8021 = vmatprep.subr.bf16.mxu0 0
        %8022 = vmatpush1.bf16.msra.mxu0 %v7509
        %8023 = vmatprep.subr.bf16.mxu0 0
        %8024 = vmatpush1.bf16.msra.mxu0 %v7510
        %8025 = vmatprep.subr.bf16.mxu0 0
        %8026 = vmatpush1.bf16.msra.mxu0 %v7511
        %8027 = vmatprep.mubr.bf16.mxu0 %v6135
        %8028 = vmatmul.mubr.bf16.gmra.mrb[0].mxu0 %v6129
        %v8029 = vpop.f32.mrb[0].mxu0
        %v8030 = vadd.f32 %v7981, %v8029
        %v8031 = vpop.f32.mrb[0].mxu0
        %v8032 = vpop.f32.mrb[0].mxu0
        %v8033 = vadd.f32 %v7984, %v8032
        %v8034 = vpop.f32.mrb[0].mxu0
        %8035 = vmatprep.mubr.bf16.mxu0 %v6136
        %8036 = vmatmul.mubr.bf16.gmra.mrb[0].mxu0 %v6130
        %v8037 = vpop.f32.mrb[0].mxu0
        %v8038 = vadd.f32 %v7989, %v8037
        %v8039 = vpop.f32.mrb[0].mxu0
        %v8040 = vpop.f32.mrb[0].mxu0
        %v8041 = vadd.f32 %v7992, %v8040
        %v8042 = vpop.f32.mrb[0].mxu0
        %8043 = vdwg.mxu0
        %8044 = vmatprep.subr.bf16.mxu0 0
        %8045 = vmatpush1.bf16.msra.mxu0 %v7512
        %8046 = vmatprep.subr.bf16.mxu0 0
        %8047 = vmatpush1.bf16.msra.mxu0 %v7513
        %8048 = vmatprep.subr.bf16.mxu0 0
        %8049 = vmatpush1.bf16.msra.mxu0 %v7514
        %8050 = vmatprep.subr.bf16.mxu0 0
        %8051 = vmatpush1.bf16.msra.mxu0 %v7515
        %8052 = vmatprep.subr.bf16.mxu0 0
        %8053 = vmatpush1.bf16.msra.mxu0 %v7516
        %8054 = vmatprep.subr.bf16.mxu0 0
        %8055 = vmatpush1.bf16.msra.mxu0 %v7517
        %8056 = vmatprep.subr.bf16.mxu0 0
        %8057 = vmatpush1.bf16.msra.mxu0 %v7518
        %8058 = vmatprep.subr.bf16.mxu0 0
        %8059 = vmatpush1.bf16.msra.mxu0 %v7519
        %8060 = vmatprep.subr.bf16.mxu0 0
        %8061 = vmatpush1.bf16.msra.mxu0 %v7520
        %8062 = vmatprep.subr.bf16.mxu0 0
        %8063 = vmatpush1.bf16.msra.mxu0 %v7521
        %8064 = vmatprep.subr.bf16.mxu0 0
        %8065 = vmatpush1.bf16.msra.mxu0 %v7522
        %8066 = vmatprep.subr.bf16.mxu0 0
        %8067 = vmatpush1.bf16.msra.mxu0 %v7523
        %8068 = vmatprep.subr.bf16.mxu0 0
        %8069 = vmatpush1.bf16.msra.mxu0 %v7524
        %8070 = vmatprep.subr.bf16.mxu0 0
        %8071 = vmatpush1.bf16.msra.mxu0 %v7525
        %8072 = vmatprep.subr.bf16.mxu0 0
        %8073 = vmatpush1.bf16.msra.mxu0 %v7526
        %8074 = vmatprep.subr.bf16.mxu0 0
        %8075 = vmatpush1.bf16.msra.mxu0 %v7527
        %8076 = vmatprep.mubr.bf16.mxu0 %v6147
        %8077 = vmatmul.mubr.bf16.gmra.mrb[0].mxu0 %v6141
        %v8078 = vpop.f32.mrb[0].mxu0
        %v8079 = vadd.f32 %v8030, %v8078
        %v8080 = vpop.f32.mrb[0].mxu0
        %v8081 = vpop.f32.mrb[0].mxu0
        %v8082 = vadd.f32 %v8033, %v8081
        %v8083 = vpop.f32.mrb[0].mxu0
        %8084 = vmatprep.mubr.bf16.mxu0 %v6148
        %8085 = vmatmul.mubr.bf16.gmra.mrb[0].mxu0 %v6142
        %v8086 = vpop.f32.mrb[0].mxu0
        %v8087 = vadd.f32 %v8038, %v8086
        %v8088 = vpop.f32.mrb[0].mxu0
        %v8089 = vpop.f32.mrb[0].mxu0
        %v8090 = vadd.f32 %v8041, %v8089
        %v8091 = vpop.f32.mrb[0].mxu0
        %8092 = vdwg.mxu0
        %8093 = vmatprep.subr.bf16.mxu0 0
        %8094 = vmatpush1.bf16.msra.mxu0 %v7528
        %8095 = vmatprep.subr.bf16.mxu0 0
        %8096 = vmatpush1.bf16.msra.mxu0 %v7529
        %8097 = vmatprep.subr.bf16.mxu0 0
        %8098 = vmatpush1.bf16.msra.mxu0 %v7530
        %8099 = vmatprep.subr.bf16.mxu0 0
        %8100 = vmatpush1.bf16.msra.mxu0 %v7531
        %8101 = vmatprep.subr.bf16.mxu0 0
        %8102 = vmatpush1.bf16.msra.mxu0 %v7532
        %8103 = vmatprep.subr.bf16.mxu0 0
        %8104 = vmatpush1.bf16.msra.mxu0 %v7533
        %8105 = vmatprep.subr.bf16.mxu0 0
        %8106 = vmatpush1.bf16.msra.mxu0 %v7534
        %8107 = vmatprep.subr.bf16.mxu0 0
        %8108 = vmatpush1.bf16.msra.mxu0 %v7535
        %8109 = vmatprep.subr.bf16.mxu0 0
        %8110 = vmatpush1.bf16.msra.mxu0 %v7536
        %8111 = vmatprep.subr.bf16.mxu0 0
        %8112 = vmatpush1.bf16.msra.mxu0 %v7537
        %8113 = vmatprep.subr.bf16.mxu0 0
        %8114 = vmatpush1.bf16.msra.mxu0 %v7538
        %8115 = vmatprep.subr.bf16.mxu0 0
        %8116 = vmatpush1.bf16.msra.mxu0 %v7539
        %8117 = vmatprep.subr.bf16.mxu0 0
        %8118 = vmatpush1.bf16.msra.mxu0 %v7540
        %8119 = vmatprep.subr.bf16.mxu0 0
        %8120 = vmatpush1.bf16.msra.mxu0 %v7541
        %8121 = vmatprep.subr.bf16.mxu0 0
        %8122 = vmatpush1.bf16.msra.mxu0 %v7542
        %8123 = vmatprep.subr.bf16.mxu0 0
        %8124 = vmatpush1.bf16.msra.mxu0 %v7543
        %8125 = vmatprep.mubr.bf16.mxu0 %v6159
        %8126 = vmatmul.mubr.bf16.gmra.mrb[0].mxu0 %v6153
        %v8127 = vpop.f32.mrb[0].mxu0
        %v8128 = vadd.f32 %v8079, %v8127
        %v8129 = vpop.f32.mrb[0].mxu0
        %v8130 = vpop.f32.mrb[0].mxu0
        %v8131 = vadd.f32 %v8082, %v8130
        %v8132 = vpop.f32.mrb[0].mxu0
        %8133 = vmatprep.mubr.bf16.mxu0 %v6160
        %8134 = vmatmul.mubr.bf16.gmra.mrb[0].mxu0 %v6154
        %v8135 = vpop.f32.mrb[0].mxu0
        %v8136 = vadd.f32 %v8087, %v8135
        %v8137 = vpop.f32.mrb[0].mxu0
        %v8138 = vpop.f32.mrb[0].mxu0
        %v8139 = vadd.f32 %v8090, %v8138
        %v8140 = vpop.f32.mrb[0].mxu0
        %8141 = vdwg.mxu0
        %8142 = vmatprep.subr.bf16.mxu0 0
        %8143 = vmatpush1.bf16.msra.mxu0 %v7544
        %8144 = vmatprep.subr.bf16.mxu0 0
        %8145 = vmatpush1.bf16.msra.mxu0 %v7545
        %8146 = vmatprep.subr.bf16.mxu0 0
        %8147 = vmatpush1.bf16.msra.mxu0 %v7546
        %8148 = vmatprep.subr.bf16.mxu0 0
        %8149 = vmatpush1.bf16.msra.mxu0 %v7547
        %8150 = vmatprep.subr.bf16.mxu0 0
        %8151 = vmatpush1.bf16.msra.mxu0 %v7548
        %8152 = vmatprep.subr.bf16.mxu0 0
        %8153 = vmatpush1.bf16.msra.mxu0 %v7549
        %8154 = vmatprep.subr.bf16.mxu0 0
        %8155 = vmatpush1.bf16.msra.mxu0 %v7550
        %8156 = vmatprep.subr.bf16.mxu0 0
        %8157 = vmatpush1.bf16.msra.mxu0 %v7551
        %8158 = vmatprep.subr.bf16.mxu0 0
        %8159 = vmatpush1.bf16.msra.mxu0 %v7552
        %8160 = vmatprep.subr.bf16.mxu0 0
        %8161 = vmatpush1.bf16.msra.mxu0 %v7553
        %8162 = vmatprep.subr.bf16.mxu0 0
        %8163 = vmatpush1.bf16.msra.mxu0 %v7554
        %8164 = vmatprep.subr.bf16.mxu0 0
        %8165 = vmatpush1.bf16.msra.mxu0 %v7555
        %8166 = vmatprep.subr.bf16.mxu0 0
        %8167 = vmatpush1.bf16.msra.mxu0 %v7556
        %8168 = vmatprep.subr.bf16.mxu0 0
        %8169 = vmatpush1.bf16.msra.mxu0 %v7557
        %8170 = vmatprep.subr.bf16.mxu0 0
        %8171 = vmatpush1.bf16.msra.mxu0 %v7558
        %8172 = vmatprep.subr.bf16.mxu0 0
        %8173 = vmatpush1.bf16.msra.mxu0 %v7559
        %8174 = vmatprep.mubr.bf16.mxu0 %v6171
        %8175 = vmatmul.mubr.bf16.gmra.mrb[0].mxu0 %v6165
        %v8176 = vpop.f32.mrb[0].mxu0
        %v8177 = vadd.f32 %v8128, %v8176
        %v8178 = vpop.f32.mrb[0].mxu0
        %v8179 = vpop.f32.mrb[0].mxu0
        %v8180 = vadd.f32 %v8131, %v8179
        %v8181 = vpop.f32.mrb[0].mxu0
        %8182 = vmatprep.mubr.bf16.mxu0 %v6172
        %8183 = vmatmul.mubr.bf16.gmra.mrb[0].mxu0 %v6166
        %v8184 = vpop.f32.mrb[0].mxu0
        %v8185 = vadd.f32 %v8136, %v8184
        %v8186 = vpop.f32.mrb[0].mxu0
        %v8187 = vpop.f32.mrb[0].mxu0
        %v8188 = vadd.f32 %v8139, %v8187
        %v8189 = vpop.f32.mrb[0].mxu0
        %8190 = vdwg.mxu0
        %8191 = vmatprep.subr.bf16.mxu0 0
        %8192 = vmatpush1.bf16.msra.mxu0 %v7560
        %8193 = vmatprep.subr.bf16.mxu0 0
        %8194 = vmatpush1.bf16.msra.mxu0 %v7561
        %8195 = vmatprep.subr.bf16.mxu0 0
        %8196 = vmatpush1.bf16.msra.mxu0 %v7562
        %8197 = vmatprep.subr.bf16.mxu0 0
        %8198 = vmatpush1.bf16.msra.mxu0 %v7563
        %8199 = vmatprep.subr.bf16.mxu0 0
        %8200 = vmatpush1.bf16.msra.mxu0 %v7564
        %8201 = vmatprep.subr.bf16.mxu0 0
        %8202 = vmatpush1.bf16.msra.mxu0 %v7565
        %8203 = vmatprep.subr.bf16.mxu0 0
        %8204 = vmatpush1.bf16.msra.mxu0 %v7566
        %8205 = vmatprep.subr.bf16.mxu0 0
        %8206 = vmatpush1.bf16.msra.mxu0 %v7567
        %8207 = vmatprep.subr.bf16.mxu0 0
        %8208 = vmatpush1.bf16.msra.mxu0 %v7568
        %8209 = vmatprep.subr.bf16.mxu0 0
        %8210 = vmatpush1.bf16.msra.mxu0 %v7569
        %8211 = vmatprep.subr.bf16.mxu0 0
        %8212 = vmatpush1.bf16.msra.mxu0 %v7570
        %8213 = vmatprep.subr.bf16.mxu0 0
        %8214 = vmatpush1.bf16.msra.mxu0 %v7571
        %8215 = vmatprep.subr.bf16.mxu0 0
        %8216 = vmatpush1.bf16.msra.mxu0 %v7572
        %8217 = vmatprep.subr.bf16.mxu0 0
        %8218 = vmatpush1.bf16.msra.mxu0 %v7573
        %8219 = vmatprep.subr.bf16.mxu0 0
        %8220 = vmatpush1.bf16.msra.mxu0 %v7574
        %8221 = vmatprep.subr.bf16.mxu0 0
        %8222 = vmatpush1.bf16.msra.mxu0 %v7575
        %8223 = vmatprep.mubr.bf16.mxu0 %v6184
        %8224 = vmatmul.mubr.bf16.gmra.mrb[0].mxu0 %v6177
        %v8225 = vpop.f32.mrb[0].mxu0
        %v8226 = vadd.f32 %v8177, %v8225
        %v8227 = vpop.f32.mrb[0].mxu0
        %v8228 = vpop.f32.mrb[0].mxu0
        %v8229 = vadd.f32 %v8180, %v8228
        %v8230 = vpop.f32.mrb[0].mxu0
        %8231 = vmatprep.mubr.bf16.mxu0 %v6185
        %8232 = vmatmul.mubr.bf16.gmra.mrb[0].mxu0 %v6178
        %v8233 = vpop.f32.mrb[0].mxu0
        %v8234 = vadd.f32 %v8185, %v8233
        %v8235 = vpop.f32.mrb[0].mxu0
        %v8236 = vpop.f32.mrb[0].mxu0
        %v8237 = vadd.f32 %v8188, %v8236
        %v8238 = vpop.f32.mrb[0].mxu0
        %8239 = vdwg.mxu0
        %8240 = vmatprep.subr.bf16.mxu0 0
        %8241 = vmatpush1.bf16.msra.mxu0 %v7576
        %8242 = vmatprep.subr.bf16.mxu0 0
        %8243 = vmatpush1.bf16.msra.mxu0 %v7577
        %8244 = vmatprep.subr.bf16.mxu0 0
        %8245 = vmatpush1.bf16.msra.mxu0 %v7578
        %8246 = vmatprep.subr.bf16.mxu0 0
        %8247 = vmatpush1.bf16.msra.mxu0 %v7579
        %8248 = vmatprep.subr.bf16.mxu0 0
        %8249 = vmatpush1.bf16.msra.mxu0 %v7580
        %8250 = vmatprep.subr.bf16.mxu0 0
        %8251 = vmatpush1.bf16.msra.mxu0 %v7581
        %8252 = vmatprep.subr.bf16.mxu0 0
        %8253 = vmatpush1.bf16.msra.mxu0 %v7582
        %8254 = vmatprep.subr.bf16.mxu0 0
        %8255 = vmatpush1.bf16.msra.mxu0 %v7583
        %8256 = vmatprep.subr.bf16.mxu0 0
        %8257 = vmatpush1.bf16.msra.mxu0 %v7584
        %8258 = vmatprep.subr.bf16.mxu0 0
        %8259 = vmatpush1.bf16.msra.mxu0 %v7585
        %8260 = vmatprep.subr.bf16.mxu0 0
        %8261 = vmatpush1.bf16.msra.mxu0 %v7586
        %8262 = vmatprep.subr.bf16.mxu0 0
        %8263 = vmatpush1.bf16.msra.mxu0 %v7587
        %8264 = vmatprep.subr.bf16.mxu0 0
        %8265 = vmatpush1.bf16.msra.mxu0 %v7588
        %8266 = vmatprep.subr.bf16.mxu0 0
        %8267 = vmatpush1.bf16.msra.mxu0 %v7589
        %8268 = vmatprep.subr.bf16.mxu0 0
        %8269 = vmatpush1.bf16.msra.mxu0 %v7590
        %8270 = vmatprep.subr.bf16.mxu0 0
        %8271 = vmatpush1.bf16.msra.mxu0 %v7591
        %8272 = vmatprep.mubr.bf16.mxu0 %v6196
        %8273 = vmatmul.mubr.bf16.gmra.mrb[0].mxu0 %v6190
        %v8274 = vpop.f32.mrb[0].mxu0
        %v8275 = vadd.f32 %v8226, %v8274
        %v8276 = vpop.f32.mrb[0].mxu0
        %v8277 = vpop.f32.mrb[0].mxu0
        %v8278 = vadd.f32 %v8229, %v8277
        %v8279 = vpop.f32.mrb[0].mxu0
        %8280 = vmatprep.mubr.bf16.mxu0 %v6197
        %8281 = vmatmul.mubr.bf16.gmra.mrb[0].mxu0 %v6191
        %v8282 = vpop.f32.mrb[0].mxu0
        %v8283 = vadd.f32 %v8234, %v8282
        %v8284 = vpop.f32.mrb[0].mxu0
        %v8285 = vpop.f32.mrb[0].mxu0
        %v8286 = vadd.f32 %v8237, %v8285
        %v8287 = vpop.f32.mrb[0].mxu0
        %8288 = vdwg.mxu0
        %8289 = vmatprep.subr.bf16.mxu0 0
        %8290 = vmatpush1.bf16.msra.mxu0 %v7592
        %8291 = vmatprep.subr.bf16.mxu0 0
        %8292 = vmatpush1.bf16.msra.mxu0 %v7593
        %8293 = vmatprep.subr.bf16.mxu0 0
        %8294 = vmatpush1.bf16.msra.mxu0 %v7594
        %8295 = vmatprep.subr.bf16.mxu0 0
        %8296 = vmatpush1.bf16.msra.mxu0 %v7595
        %8297 = vmatprep.subr.bf16.mxu0 0
        %8298 = vmatpush1.bf16.msra.mxu0 %v7596
        %8299 = vmatprep.subr.bf16.mxu0 0
        %8300 = vmatpush1.bf16.msra.mxu0 %v7597
        %8301 = vmatprep.subr.bf16.mxu0 0
        %8302 = vmatpush1.bf16.msra.mxu0 %v7598
        %8303 = vmatprep.subr.bf16.mxu0 0
        %8304 = vmatpush1.bf16.msra.mxu0 %v7599
        %8305 = vmatprep.subr.bf16.mxu0 0
        %8306 = vmatpush1.bf16.msra.mxu0 %v7600
        %8307 = vmatprep.subr.bf16.mxu0 0
        %8308 = vmatpush1.bf16.msra.mxu0 %v7601
        %8309 = vmatprep.subr.bf16.mxu0 0
        %8310 = vmatpush1.bf16.msra.mxu0 %v7602
        %8311 = vmatprep.subr.bf16.mxu0 0
        %8312 = vmatpush1.bf16.msra.mxu0 %v7603
        %8313 = vmatprep.subr.bf16.mxu0 0
        %8314 = vmatpush1.bf16.msra.mxu0 %v7604
        %8315 = vmatprep.subr.bf16.mxu0 0
        %8316 = vmatpush1.bf16.msra.mxu0 %v7605
        %8317 = vmatprep.subr.bf16.mxu0 0
        %8318 = vmatpush1.bf16.msra.mxu0 %v7606
        %8319 = vmatprep.subr.bf16.mxu0 0
        %8320 = vmatpush1.bf16.msra.mxu0 %v7607
        %8321 = vmatprep.mubr.bf16.mxu0 %v6208
        %8322 = vmatmul.mubr.bf16.gmra.mrb[0].mxu0 %v6202
        %v8323 = vpop.f32.mrb[0].mxu0
        %v8324 = vadd.f32 %v8275, %v8323
        %v8325 = vpop.f32.mrb[0].mxu0
        %v8326 = vpop.f32.mrb[0].mxu0
        %v8327 = vadd.f32 %v8278, %v8326
        %v8328 = vpop.f32.mrb[0].mxu0
        %8329 = vmatprep.mubr.bf16.mxu0 %v6209
        %8330 = vmatmul.mubr.bf16.gmra.mrb[0].mxu0 %v6203
        %v8331 = vpop.f32.mrb[0].mxu0
        %v8332 = vadd.f32 %v8283, %v8331
        %v8333 = vpop.f32.mrb[0].mxu0
        %v8334 = vpop.f32.mrb[0].mxu0
        %v8335 = vadd.f32 %v8286, %v8334
        %v8336 = vpop.f32.mrb[0].mxu0
        %8337 = vdwg.mxu0
        %8338 = vmatprep.subr.bf16.mxu0 0
        %8339 = vmatpush1.bf16.msra.mxu0 %v7608
        %8340 = vmatprep.subr.bf16.mxu0 0
        %8341 = vmatpush1.bf16.msra.mxu0 %v7609
        %8342 = vmatprep.subr.bf16.mxu0 0
        %8343 = vmatpush1.bf16.msra.mxu0 %v7610
        %8344 = vmatprep.subr.bf16.mxu0 0
        %8345 = vmatpush1.bf16.msra.mxu0 %v7611
        %8346 = vmatprep.subr.bf16.mxu0 0
        %8347 = vmatpush1.bf16.msra.mxu0 %v7612
        %8348 = vmatprep.subr.bf16.mxu0 0
        %8349 = vmatpush1.bf16.msra.mxu0 %v7613
        %8350 = vmatprep.subr.bf16.mxu0 0
        %8351 = vmatpush1.bf16.msra.mxu0 %v7614
        %8352 = vmatprep.subr.bf16.mxu0 0
        %8353 = vmatpush1.bf16.msra.mxu0 %v7615
        %8354 = vmatprep.subr.bf16.mxu0 0
        %8355 = vmatpush1.bf16.msra.mxu0 %v7616
        %8356 = vmatprep.subr.bf16.mxu0 0
        %8357 = vmatpush1.bf16.msra.mxu0 %v7617
        %8358 = vmatprep.subr.bf16.mxu0 0
        %8359 = vmatpush1.bf16.msra.mxu0 %v7618
        %8360 = vmatprep.subr.bf16.mxu0 0
        %8361 = vmatpush1.bf16.msra.mxu0 %v7619
        %8362 = vmatprep.subr.bf16.mxu0 0
        %8363 = vmatpush1.bf16.msra.mxu0 %v7620
        %8364 = vmatprep.subr.bf16.mxu0 0
        %8365 = vmatpush1.bf16.msra.mxu0 %v7621
        %8366 = vmatprep.subr.bf16.mxu0 0
        %8367 = vmatpush1.bf16.msra.mxu0 %v7622
        %8368 = vmatprep.subr.bf16.mxu0 0
        %8369 = vmatpush1.bf16.msra.mxu0 %v7623
        %8370 = vmatprep.mubr.bf16.mxu0 %v6221
        %8371 = vmatmul.mubr.bf16.gmra.mrb[0].mxu0 %v6215
        %v8372 = vpop.f32.mrb[0].mxu0
        %v8373 = vadd.f32 %v8324, %v8372
        %v8374 = vpop.f32.mrb[0].mxu0
        %v8375 = vpop.f32.mrb[0].mxu0
        %v8376 = vadd.f32 %v8327, %v8375
        %v8377 = vpop.f32.mrb[0].mxu0
        %8378 = vmatprep.mubr.bf16.mxu0 %v6222
        %8379 = vmatmul.mubr.bf16.gmra.mrb[0].mxu0 %v6216
        %v8380 = vpop.f32.mrb[0].mxu0
        %v8381 = vadd.f32 %v8332, %v8380
        %v8382 = vpop.f32.mrb[0].mxu0
        %v8383 = vpop.f32.mrb[0].mxu0
        %v8384 = vadd.f32 %v8335, %v8383
        %v8385 = vpop.f32.mrb[0].mxu0
        %8386 = vdwg.mxu0
        %8387 = vmatprep.subr.bf16.mxu0 0
        %8388 = vmatpush1.bf16.msra.mxu0 %v7624
        %8389 = vmatprep.subr.bf16.mxu0 0
        %8390 = vmatpush1.bf16.msra.mxu0 %v7625
        %8391 = vmatprep.subr.bf16.mxu0 0
        %8392 = vmatpush1.bf16.msra.mxu0 %v7626
        %8393 = vmatprep.subr.bf16.mxu0 0
        %8394 = vmatpush1.bf16.msra.mxu0 %v7627
        %8395 = vmatprep.subr.bf16.mxu0 0
        %8396 = vmatpush1.bf16.msra.mxu0 %v7628
        %8397 = vmatprep.subr.bf16.mxu0 0
        %8398 = vmatpush1.bf16.msra.mxu0 %v7629
        %8399 = vmatprep.subr.bf16.mxu0 0
        %8400 = vmatpush1.bf16.msra.mxu0 %v7630
        %8401 = vmatprep.subr.bf16.mxu0 0
        %8402 = vmatpush1.bf16.msra.mxu0 %v7631
        %8403 = vmatprep.subr.bf16.mxu0 0
        %8404 = vmatpush1.bf16.msra.mxu0 %v7632
        %8405 = vmatprep.subr.bf16.mxu0 0
        %8406 = vmatpush1.bf16.msra.mxu0 %v7633
        %8407 = vmatprep.subr.bf16.mxu0 0
        %8408 = vmatpush1.bf16.msra.mxu0 %v7634
        %8409 = vmatprep.subr.bf16.mxu0 0
        %8410 = vmatpush1.bf16.msra.mxu0 %v7635
        %8411 = vmatprep.subr.bf16.mxu0 0
        %8412 = vmatpush1.bf16.msra.mxu0 %v7636
        %8413 = vmatprep.subr.bf16.mxu0 0
        %8414 = vmatpush1.bf16.msra.mxu0 %v7637
        %8415 = vmatprep.subr.bf16.mxu0 0
        %8416 = vmatpush1.bf16.msra.mxu0 %v7638
        %8417 = vmatprep.subr.bf16.mxu0 0
        %8418 = vmatpush1.bf16.msra.mxu0 %v7639
        %8419 = vmatprep.mubr.bf16.mxu0 %v6233
        %8420 = vmatmul.mubr.bf16.gmra.mrb[0].mxu0 %v6227
        %v8421 = vpop.f32.mrb[0].mxu0
        %v8422 = vadd.f32 %v8373, %v8421
        %v8423 = vpop.f32.mrb[0].mxu0
        %v8424 = vpop.f32.mrb[0].mxu0
        %v8425 = vadd.f32 %v8376, %v8424
        %v8426 = vpop.f32.mrb[0].mxu0
        %8427 = vmatprep.mubr.bf16.mxu0 %v6234
        %8428 = vmatmul.mubr.bf16.gmra.mrb[0].mxu0 %v6228
        %v8429 = vpop.f32.mrb[0].mxu0
        %v8430 = vadd.f32 %v8381, %v8429
        %v8431 = vpop.f32.mrb[0].mxu0
        %v8432 = vpop.f32.mrb[0].mxu0
        %v8433 = vadd.f32 %v8384, %v8432
        %v8434 = vpop.f32.mrb[0].mxu0
        %8435 = vdwg.mxu0
        %8436 = vmatprep.subr.bf16.mxu0 0
        %8437 = vmatpush1.bf16.msra.mxu0 %v7640
        %8438 = vmatprep.subr.bf16.mxu0 0
        %8439 = vmatpush1.bf16.msra.mxu0 %v7641
        %8440 = vmatprep.subr.bf16.mxu0 0
        %8441 = vmatpush1.bf16.msra.mxu0 %v7642
        %8442 = vmatprep.subr.bf16.mxu0 0
        %8443 = vmatpush1.bf16.msra.mxu0 %v7643
        %8444 = vmatprep.subr.bf16.mxu0 0
        %8445 = vmatpush1.bf16.msra.mxu0 %v7644
        %8446 = vmatprep.subr.bf16.mxu0 0
        %8447 = vmatpush1.bf16.msra.mxu0 %v7645
        %8448 = vmatprep.subr.bf16.mxu0 0
        %8449 = vmatpush1.bf16.msra.mxu0 %v7646
        %8450 = vmatprep.subr.bf16.mxu0 0
        %8451 = vmatpush1.bf16.msra.mxu0 %v7647
        %8452 = vmatprep.subr.bf16.mxu0 0
        %8453 = vmatpush1.bf16.msra.mxu0 0
        %8454 = vmatprep.subr.bf16.mxu0 0
        %8455 = vmatpush1.bf16.msra.mxu0 0
        %8456 = vmatprep.subr.bf16.mxu0 0
        %8457 = vmatpush1.bf16.msra.mxu0 0
        %8458 = vmatprep.subr.bf16.mxu0 0
        %8459 = vmatpush1.bf16.msra.mxu0 0
        %8460 = vmatprep.subr.bf16.mxu0 0
        %8461 = vmatpush1.bf16.msra.mxu0 0
        %8462 = vmatprep.subr.bf16.mxu0 0
        %8463 = vmatpush1.bf16.msra.mxu0 0
        %8464 = vmatprep.subr.bf16.mxu0 0
        %8465 = vmatpush1.bf16.msra.mxu0 0
        %8466 = vmatprep.subr.bf16.mxu0 0
        %8467 = vmatpush1.bf16.msra.mxu0 0
        %8468 = vmatprep.mubr.bf16.mxu0 0
        %8469 = vmatmul.mubr.bf16.gmra.mrb[0].mxu0 %v6239
        %v8470 = vpop.f32.mrb[0].mxu0
        %v8471 = vadd.f32 %v8422, %v8470
        %v8472 = vpop.f32.mrb[0].mxu0
        %v8473 = vpop.f32.mrb[0].mxu0
        %v8474 = vadd.f32 %v8425, %v8473
        %v8475 = vpop.f32.mrb[0].mxu0
        %8476 = vmatprep.mubr.bf16.mxu0 0
        %8477 = vmatmul.mubr.bf16.gmra.mrb[0].mxu0 %v6240
        %v8478 = vpop.f32.mrb[0].mxu0
        %v8479 = vadd.f32 %v8430, %v8478
        %v8480 = vpop.f32.mrb[0].mxu0
        %v8481 = vpop.f32.mrb[0].mxu0
        %v8482 = vadd.f32 %v8433, %v8481
        %v8483 = vpop.f32.mrb[0].mxu0
        %8484 = vdwg.mxu0
        %v8485 = vmax.f32 %v8471, 0.0
        %v8486 = vmax.f32 %v8474, 0.0
        %v8487 = vmax.f32 %v8479, 0.0
        %v8488 = vmax.f32 %v8482, 0.0
        %v8489 = vpack.c.bf16 %v8486, %v8485
        %v8490 = vpack.c.bf16 %v8488, %v8487
        %v8491 = vld [vmem:[%s7] sm:$0xff]
        %v8492 = vld [vmem:[%s7 + $0x8] sm:$0xff]
        %v8493 = vld [vmem:[%s7 + $0x10] sm:$0xff]
        %v8494 = vld [vmem:[%s7 + $0x18] sm:$0xff]
        %v8495 = vld [vmem:[%s7 + $0x20] sm:$0xff]
        %v8496 = vld [vmem:[%s7 + $0x28] sm:$0xff]
        %v8497 = vld [vmem:[%s7 + $0x30] sm:$0xff]
        %v8498 = vld [vmem:[%s7 + $0x38] sm:$0xff]
        %v8499 = vld [vmem:[%s7 + $0x40] sm:$0xff]
        %v8509 = vunpack.c.l.b16 %v8491
        %v8510 = vunpack.c.h.b16 %v8491
        %v8511 = vunpack.c.l.b16 %v8492
        %v8512 = vunpack.c.h.b16 %v8492
        %v8513 = vunpack.c.l.b16 %v8493
        %v8514 = vunpack.c.h.b16 %v8493
        %v8515 = vunpack.c.l.b16 %v8494
        %v8516 = vunpack.c.h.b16 %v8494
        %v8517 = vunpack.c.l.b16 %v8495
        %v8518 = vunpack.c.h.b16 %v8495
        %v8519 = vunpack.c.l.b16 %v8496
        %v8520 = vunpack.c.h.b16 %v8496
        %v8521 = vunpack.c.l.b16 %v8497
        %v8522 = vunpack.c.h.b16 %v8497
        %v8523 = vunpack.c.l.b16 %v8498
        %v8524 = vunpack.c.h.b16 %v8498
        %v8525 = vunpack.c.l.b16 %v8499
        %v8526 = vunpack.c.h.b16 %v8499
        %v8527 = vpack.c.b16 %v8515, %v8509
        %v8528 = vpack.c.b16 %v8516, %v8510
        %v8529 = vpack.c.b16 %v8517, %v8511
        %v8530 = vpack.c.b16 %v8518, %v8512
        %v8531 = vpack.c.b16 %v8519, %v8513
        %v8532 = vpack.c.b16 %v8520, %v8514
        %v8533 = vpack.c.b16 %v8521, %v8521
        %v8534 = vpack.c.b16 %v8522, %v8522
        %v8535 = vpack.c.b16 %v8523, %v8523
        %v8536 = vpack.c.b16 %v8524, %v8524
        %v8537 = vpack.c.b16 %v8525, %v8525
        %v8538 = vpack.c.b16 %v8526, %v8526
        %vm8545 = vcmask 195584
        %v8547 = vsel %vm8545, %v8489, 0
        %v8550 = vsel %vm8545, %v8490, 0
        %vm8552 = vcmask 1043456
        %v8554 = vsel %vm8552, %v8533, 0
        %v8557 = vsel %vm8552, %v8534, 0
        %v8560 = vsel %vm8552, %v8535, 0
        %v8563 = vsel %vm8552, %v8536, 0
        %v8566 = vsel %vm8552, %v8537, 0
        %v8569 = vsel %vm8552, %v8538, 0
        %8571 = vmatprep.subr.bf16.mxu0 %v8528
        %8572 = vmatpush1.bf16.msra.mxu0 %v8527
        %8573 = vmatprep.subr.bf16.mxu0 %v8557
        %8574 = vmatpush1.bf16.msra.mxu0 %v8554
        %8575 = vmatprep.subr.bf16.mxu0 0
        %8576 = vmatpush1.bf16.msra.mxu0 0
        %8577 = vmatprep.subr.bf16.mxu0 0
        %8578 = vmatpush1.bf16.msra.mxu0 0
        %8579 = vmatprep.subr.bf16.mxu0 0
        %8580 = vmatpush1.bf16.msra.mxu0 0
        %8581 = vmatprep.subr.bf16.mxu0 0
        %8582 = vmatpush1.bf16.msra.mxu0 0
        %8583 = vmatprep.subr.bf16.mxu0 0
        %8584 = vmatpush1.bf16.msra.mxu0 0
        %8585 = vmatprep.subr.bf16.mxu0 0
        %8586 = vmatpush1.bf16.msra.mxu0 0
        %8587 = vmatprep.subr.bf16.mxu0 0
        %8588 = vmatpush1.bf16.msra.mxu0 0
        %8589 = vmatprep.subr.bf16.mxu0 0
        %8590 = vmatpush1.bf16.msra.mxu0 0
        %8591 = vmatprep.subr.bf16.mxu0 0
        %8592 = vmatpush1.bf16.msra.mxu0 0
        %8593 = vmatprep.subr.bf16.mxu0 0
        %8594 = vmatpush1.bf16.msra.mxu0 0
        %8595 = vmatprep.subr.bf16.mxu0 0
        %8596 = vmatpush1.bf16.msra.mxu0 0
        %8597 = vmatprep.subr.bf16.mxu0 0
        %8598 = vmatpush1.bf16.msra.mxu0 0
        %8599 = vmatprep.subr.bf16.mxu0 0
        %8600 = vmatpush1.bf16.msra.mxu0 0
        %8601 = vmatprep.subr.bf16.mxu0 0
        %8602 = vmatpush1.bf16.msra.mxu0 0
        %8603 = vmatprep.mubr.bf16.mxu0 0
        %8604 = vmatmul.mubr.bf16.gmra.mrb[0].mxu0 %v8547
        %v8605 = vpop.f32.mrb[0].mxu0
        %v8606 = vadd.f32 0.0, %v8605
        %v8607 = vpop.f32.mrb[0].mxu0
        %v8608 = vadd.f32 0.0, %v8607
        %v8609 = vpop.f32.mrb[0].mxu0
        %v8610 = vadd.f32 0.0, %v8609
        %v8611 = vpop.f32.mrb[0].mxu0
        %v8612 = vadd.f32 0.0, %v8611
        %8613 = vmatprep.mubr.bf16.mxu0 0
        %8614 = vmatmul.mubr.bf16.gmra.mrb[0].mxu0 %v8550
        %v8615 = vpop.f32.mrb[0].mxu0
        %v8616 = vadd.f32 0.0, %v8615
        %v8617 = vpop.f32.mrb[0].mxu0
        %v8618 = vadd.f32 0.0, %v8617
        %v8619 = vpop.f32.mrb[0].mxu0
        %v8620 = vadd.f32 0.0, %v8619
        %v8621 = vpop.f32.mrb[0].mxu0
        %v8622 = vadd.f32 0.0, %v8621
        %8623 = vdwg.mxu0
        %8624 = vmatprep.subr.bf16.mxu0 %v8530
        %8625 = vmatpush1.bf16.msra.mxu0 %v8529
        %8626 = vmatprep.subr.bf16.mxu0 %v8563
        %8627 = vmatpush1.bf16.msra.mxu0 %v8560
        %8628 = vmatprep.subr.bf16.mxu0 0
        %8629 = vmatpush1.bf16.msra.mxu0 0
        %8630 = vmatprep.subr.bf16.mxu0 0
        %8631 = vmatpush1.bf16.msra.mxu0 0
        %8632 = vmatprep.subr.bf16.mxu0 0
        %8633 = vmatpush1.bf16.msra.mxu0 0
        %8634 = vmatprep.subr.bf16.mxu0 0
        %8635 = vmatpush1.bf16.msra.mxu0 0
        %8636 = vmatprep.subr.bf16.mxu0 0
        %8637 = vmatpush1.bf16.msra.mxu0 0
        %8638 = vmatprep.subr.bf16.mxu0 0
        %8639 = vmatpush1.bf16.msra.mxu0 0
        %8640 = vmatprep.subr.bf16.mxu0 0
        %8641 = vmatpush1.bf16.msra.mxu0 0
        %8642 = vmatprep.subr.bf16.mxu0 0
        %8643 = vmatpush1.bf16.msra.mxu0 0
        %8644 = vmatprep.subr.bf16.mxu0 0
        %8645 = vmatpush1.bf16.msra.mxu0 0
        %8646 = vmatprep.subr.bf16.mxu0 0
        %8647 = vmatpush1.bf16.msra.mxu0 0
        %8648 = vmatprep.subr.bf16.mxu0 0
        %8649 = vmatpush1.bf16.msra.mxu0 0
        %8650 = vmatprep.subr.bf16.mxu0 0
        %8651 = vmatpush1.bf16.msra.mxu0 0
        %8652 = vmatprep.subr.bf16.mxu0 0
        %8653 = vmatpush1.bf16.msra.mxu0 0
        %8654 = vmatprep.subr.bf16.mxu0 0
        %8655 = vmatpush1.bf16.msra.mxu0 0
        %8656 = vmatprep.mubr.bf16.mxu0 0
        %8657 = vmatmul.mubr.bf16.gmra.mrb[0].mxu0 %v8547
        %v8658 = vpop.f32.mrb[0].mxu0
        %v8659 = vadd.f32 0.0, %v8658
        %v8660 = vpop.f32.mrb[0].mxu0
        %v8661 = vadd.f32 0.0, %v8660
        %v8662 = vpop.f32.mrb[0].mxu0
        %v8663 = vadd.f32 0.0, %v8662
        %v8664 = vpop.f32.mrb[0].mxu0
        %v8665 = vadd.f32 0.0, %v8664
        %8666 = vmatprep.mubr.bf16.mxu0 0
        %8667 = vmatmul.mubr.bf16.gmra.mrb[0].mxu0 %v8550
        %v8668 = vpop.f32.mrb[0].mxu0
        %v8669 = vadd.f32 0.0, %v8668
        %v8670 = vpop.f32.mrb[0].mxu0
        %v8671 = vadd.f32 0.0, %v8670
        %v8672 = vpop.f32.mrb[0].mxu0
        %v8673 = vadd.f32 0.0, %v8672
        %v8674 = vpop.f32.mrb[0].mxu0
        %v8675 = vadd.f32 0.0, %v8674
        %8676 = vdwg.mxu0
        %8677 = vmatprep.subr.bf16.mxu0 %v8532
        %8678 = vmatpush1.bf16.msra.mxu0 %v8531
        %8679 = vmatprep.subr.bf16.mxu0 %v8569
        %8680 = vmatpush1.bf16.msra.mxu0 %v8566
        %8681 = vmatprep.subr.bf16.mxu0 0
        %8682 = vmatpush1.bf16.msra.mxu0 0
        %8683 = vmatprep.subr.bf16.mxu0 0
        %8684 = vmatpush1.bf16.msra.mxu0 0
        %8685 = vmatprep.subr.bf16.mxu0 0
        %8686 = vmatpush1.bf16.msra.mxu0 0
        %8687 = vmatprep.subr.bf16.mxu0 0
        %8688 = vmatpush1.bf16.msra.mxu0 0
        %8689 = vmatprep.subr.bf16.mxu0 0
        %8690 = vmatpush1.bf16.msra.mxu0 0
        %8691 = vmatprep.subr.bf16.mxu0 0
        %8692 = vmatpush1.bf16.msra.mxu0 0
        %8693 = vmatprep.subr.bf16.mxu0 0
        %8694 = vmatpush1.bf16.msra.mxu0 0
        %8695 = vmatprep.subr.bf16.mxu0 0
        %8696 = vmatpush1.bf16.msra.mxu0 0
        %8697 = vmatprep.subr.bf16.mxu0 0
        %8698 = vmatpush1.bf16.msra.mxu0 0
        %8699 = vmatprep.subr.bf16.mxu0 0
        %8700 = vmatpush1.bf16.msra.mxu0 0
        %8701 = vmatprep.subr.bf16.mxu0 0
        %8702 = vmatpush1.bf16.msra.mxu0 0
        %8703 = vmatprep.subr.bf16.mxu0 0
        %8704 = vmatpush1.bf16.msra.mxu0 0
        %8705 = vmatprep.subr.bf16.mxu0 0
        %8706 = vmatpush1.bf16.msra.mxu0 0
        %8707 = vmatprep.subr.bf16.mxu0 0
        %8708 = vmatpush1.bf16.msra.mxu0 0
        %8709 = vmatprep.mubr.bf16.mxu0 0
        %8710 = vmatmul.mubr.bf16.gmra.mrb[0].mxu0 %v8547
        %v8711 = vpop.f32.mrb[0].mxu0
        %v8712 = vadd.f32 0.0, %v8711
        %v8713 = vpop.f32.mrb[0].mxu0
        %v8714 = vadd.f32 0.0, %v8713
        %v8715 = vpop.f32.mrb[0].mxu0
        %v8716 = vadd.f32 0.0, %v8715
        %v8717 = vpop.f32.mrb[0].mxu0
        %v8718 = vadd.f32 0.0, %v8717
        %8719 = vmatprep.mubr.bf16.mxu0 0
        %8720 = vmatmul.mubr.bf16.gmra.mrb[0].mxu0 %v8550
        %v8721 = vpop.f32.mrb[0].mxu0
        %v8722 = vadd.f32 0.0, %v8721
        %v8723 = vpop.f32.mrb[0].mxu0
        %v8724 = vadd.f32 0.0, %v8723
        %v8725 = vpop.f32.mrb[0].mxu0
        %v8726 = vadd.f32 0.0, %v8725
        %v8727 = vpop.f32.mrb[0].mxu0
        %v8728 = vadd.f32 0.0, %v8727
        %8729 = vdwg.mxu0
        %v8730 = vld [vmem:[%s8] sm:$0xff]
        %v8731 = vld [vmem:[%s8 + $0x8] sm:$0xff]
        %v8732 = vld [vmem:[%s8 + $0x10] sm:$0xff]
        %v8733 = vld [vmem:[%s8 + $0x18] sm:$0xff]
        %v8734 = vld [vmem:[%s8 + $0x20] sm:$0xff]
        %v8735 = vld [vmem:[%s8 + $0x28] sm:$0xff]
        %v8736 = vld [vmem:[%s8 + $0x30] sm:$0xff]
        %v8737 = vld [vmem:[%s8 + $0x38] sm:$0xff]
        %v8738 = vld [vmem:[%s8 + $0x40] sm:$0xff]
        %v8739 = vld [vmem:[%s8 + $0x48] sm:$0xff]
        %v8740 = vld [vmem:[%s8 + $0x50] sm:$0xff]
        %v8741 = vld [vmem:[%s8 + $0x58] sm:$0xff]
        %v8742 = vld [vmem:[%s8 + $0x60] sm:$0xff]
        %v8743 = vld [vmem:[%s8 + $0x68] sm:$0xff]
        %v8744 = vld [vmem:[%s8 + $0x70] sm:$0xff]
        %v8745 = vld [vmem:[%s8 + $0x78] sm:$0xff]
        %v8746 = vld [vmem:[%s8 + $0x80] sm:$0xff]
        %v8747 = vld [vmem:[%s8 + $0x88] sm:$0xff]
        %v8748 = vld [vmem:[%s8 + $0x90] sm:$0xff]
        %v8749 = vld [vmem:[%s8 + $0x98] sm:$0xff]
        %v8750 = vld [vmem:[%s8 + $0xa0] sm:$0xff]
        %v8751 = vld [vmem:[%s8 + $0xa8] sm:$0xff]
        %v8752 = vld [vmem:[%s8 + $0xb0] sm:$0xff]
        %v8753 = vld [vmem:[%s8 + $0xb8] sm:$0xff]
        %v8754 = vmul.f32 %v8606, %v8730
        %v8755 = vmul.f32 %v8608, %v8731
        %v8756 = vmul.f32 %v8659, %v8732
        %v8757 = vmul.f32 %v8661, %v8733
        %v8758 = vmul.f32 %v8712, %v8734
        %v8759 = vmul.f32 %v8714, %v8735
        %v8760 = vmul.f32 %v8610, %v8736
        %v8761 = vmul.f32 %v8612, %v8737
        %v8762 = vmul.f32 %v8663, %v8738
        %v8763 = vmul.f32 %v8665, %v8739
        %v8764 = vmul.f32 %v8716, %v8740
        %v8765 = vmul.f32 %v8718, %v8741
        %v8766 = vmul.f32 %v8616, %v8742
        %v8767 = vmul.f32 %v8618, %v8743
        %v8768 = vmul.f32 %v8669, %v8744
        %v8769 = vmul.f32 %v8671, %v8745
        %v8770 = vmul.f32 %v8722, %v8746
        %v8771 = vmul.f32 %v8724, %v8747
        %v8772 = vmul.f32 %v8620, %v8748
        %v8773 = vmul.f32 %v8622, %v8749
        %v8774 = vmul.f32 %v8673, %v8750
        %v8775 = vmul.f32 %v8675, %v8751
        %v8776 = vmul.f32 %v8726, %v8752
        %v8777 = vmul.f32 %v8728, %v8753
        %v8778 = vadd.f32 %v8754, %v8760
        %v8779 = vadd.f32 %v8778, %v8766
        %v8780 = vadd.f32 %v8779, %v8772
        %v8781 = vrot.slane %v8780, 4
        %v8782 = vadd.f32 %v8780, %v8781
        %v8783 = vrot.slane %v8782, 2
        %v8784 = vadd.f32 %v8782, %v8783
        %v8785 = vrot.slane %v8784, 1
        %v8786 = vadd.f32 %v8784, %v8785
        %v8787 = vadd.f32 %v8755, %v8761
        %v8788 = vadd.f32 %v8787, %v8767
        %v8789 = vadd.f32 %v8788, %v8773
        %v8790 = vrot.slane %v8789, 4
        %v8791 = vadd.f32 %v8789, %v8790
        %v8792 = vrot.slane %v8791, 2
        %v8793 = vadd.f32 %v8791, %v8792
        %v8794 = vrot.slane %v8793, 1
        %v8795 = vadd.f32 %v8793, %v8794
        %v8796 = vadd.f32 %v8756, %v8762
        %v8797 = vadd.f32 %v8796, %v8768
        %v8798 = vadd.f32 %v8797, %v8774
        %v8799 = vrot.slane %v8798, 4
        %v8800 = vadd.f32 %v8798, %v8799
        %v8801 = vrot.slane %v8800, 2
        %v8802 = vadd.f32 %v8800, %v8801
        %v8803 = vrot.slane %v8802, 1
        %v8804 = vadd.f32 %v8802, %v8803
        %v8805 = vadd.f32 %v8757, %v8763
        %v8806 = vadd.f32 %v8805, %v8769
        %v8807 = vadd.f32 %v8806, %v8775
        %v8808 = vrot.slane %v8807, 4
        %v8809 = vadd.f32 %v8807, %v8808
        %v8810 = vrot.slane %v8809, 2
        %v8811 = vadd.f32 %v8809, %v8810
        %v8812 = vrot.slane %v8811, 1
        %v8813 = vadd.f32 %v8811, %v8812
        %v8814 = vadd.f32 %v8758, %v8764
        %v8815 = vadd.f32 %v8814, %v8770
        %v8816 = vadd.f32 %v8815, %v8776
        %v8817 = vrot.slane %v8816, 4
        %v8818 = vadd.f32 %v8816, %v8817
        %v8819 = vrot.slane %v8818, 2
        %v8820 = vadd.f32 %v8818, %v8819
        %v8821 = vrot.slane %v8820, 1
        %v8822 = vadd.f32 %v8820, %v8821
        %v8823 = vadd.f32 %v8759, %v8765
        %v8824 = vadd.f32 %v8823, %v8771
        %v8825 = vadd.f32 %v8824, %v8777
        %v8826 = vrot.slane %v8825, 4
        %v8827 = vadd.f32 %v8825, %v8826
        %v8828 = vrot.slane %v8827, 2
        %v8829 = vadd.f32 %v8827, %v8828
        %v8830 = vrot.slane %v8829, 1
        %v8831 = vadd.f32 %v8829, %v8830
        %v8832 = vpack.c.bf16 %v8786, %v8786
        %v8833 = vpack.c.bf16 %v8795, %v8795
        %v8834 = vpack.c.bf16 %v8804, %v8804
        %v8835 = vpack.c.bf16 %v8813, %v8813
        %v8836 = vpack.c.bf16 %v8822, %v8822
        %v8837 = vpack.c.bf16 %v8831, %v8831
        %v8838 = vld [vmem:[%s9] sm:$0xf]
        %v8839 = vld [vmem:[%s9 + $0x4] sm:$0xf]
        %v8840 = vld [vmem:[%s9 + $0x8] sm:$0xf]
        %v8841 = vld [vmem:[%s9 + $0xc] sm:$0xf]
        %v8842 = vld [vmem:[%s9 + $0x10] sm:$0xf]
        %v8843 = vld [vmem:[%s9 + $0x14] sm:$0xf]
        %v8844 = vld [vmem:[%s9 + $0x18] sm:$0xf]
        %v8845 = vld [vmem:[%s9 + $0x1c] sm:$0xf]
        %v8846 = vld [vmem:[%s9 + $0x20] sm:$0xf]
        %v8847 = vld [vmem:[%s9 + $0x24] sm:$0xf]
        %v8848 = vld [vmem:[%s9 + $0x28] sm:$0xf]
        %v8849 = vld [vmem:[%s9 + $0x2c] sm:$0xf]
        %v8850 = vld [vmem:[%s9 + $0x30] sm:$0xf]
        %v8851 = vld [vmem:[%s9 + $0x34] sm:$0xf]
        %v8852 = vld [vmem:[%s9 + $0x38] sm:$0xf]
        %v8853 = vld [vmem:[%s9 + $0x3c] sm:$0xf]
        %v8854 = vld [vmem:[%s9 + $0x40] sm:$0xf]
        %v8855 = vld [vmem:[%s9 + $0x44] sm:$0xf]
        %v8856 = vld [vmem:[%s9 + $0x48] sm:$0xf]
        %v8857 = vld [vmem:[%s9 + $0x4c] sm:$0xf]
        %v8858 = vld [vmem:[%s9 + $0x50] sm:$0xf]
        %v8859 = vld [vmem:[%s9 + $0x54] sm:$0xf]
        %v8860 = vld [vmem:[%s9 + $0x58] sm:$0xf]
        %v8861 = vld [vmem:[%s9 + $0x5c] sm:$0xf]
        %v8862 = vld [vmem:[%s9 + $0x60] sm:$0xf]
        %v8863 = vld [vmem:[%s9 + $0x64] sm:$0xf]
        %v8864 = vld [vmem:[%s9 + $0x68] sm:$0xf]
        %v8865 = vld [vmem:[%s9 + $0x6c] sm:$0xf]
        %v8866 = vld [vmem:[%s9 + $0x70] sm:$0xf]
        %v8867 = vld [vmem:[%s9 + $0x74] sm:$0xf]
        %v8868 = vld [vmem:[%s9 + $0x78] sm:$0xf]
        %v8869 = vld [vmem:[%s9 + $0x7c] sm:$0xf]
        %v8870 = vld [vmem:[%s9 + $0x80] sm:$0xf]
        %v8871 = vld [vmem:[%s9 + $0x84] sm:$0xf]
        %v8872 = vld [vmem:[%s9 + $0x88] sm:$0xf]
        %v8873 = vld [vmem:[%s9 + $0x8c] sm:$0xf]
        %v8874 = vld [vmem:[%s9 + $0x90] sm:$0xf]
        %v8875 = vld [vmem:[%s9 + $0x94] sm:$0xf]
        %v8876 = vld [vmem:[%s9 + $0x98] sm:$0xf]
        %v8877 = vld [vmem:[%s9 + $0x9c] sm:$0xf]
        %v8878 = vld [vmem:[%s9 + $0xa0] sm:$0xf]
        %v8879 = vld [vmem:[%s9 + $0xa4] sm:$0xf]
        %v8880 = vld [vmem:[%s9 + $0xa8] sm:$0xf]
        %v8881 = vld [vmem:[%s9 + $0xac] sm:$0xf]
        %v8882 = vld [vmem:[%s9 + $0xb0] sm:$0xf]
        %v8883 = vld [vmem:[%s9 + $0xb4] sm:$0xf]
        %v8884 = vld [vmem:[%s9 + $0xb8] sm:$0xf]
        %v8885 = vld [vmem:[%s9 + $0xbc] sm:$0xf]
        %v8886 = vld [vmem:[%s9 + $0xc0] sm:$0xf]
        %v8887 = vld [vmem:[%s9 + $0xc4] sm:$0xf]
        %v8888 = vld [vmem:[%s9 + $0xc8] sm:$0xf]
        %v8889 = vld [vmem:[%s9 + $0xcc] sm:$0xf]
        %v8890 = vld [vmem:[%s9 + $0xd0] sm:$0xf]
        %v8891 = vld [vmem:[%s9 + $0xd4] sm:$0xf]
        %v8892 = vld [vmem:[%s9 + $0xd8] sm:$0xf]
        %v8893 = vld [vmem:[%s9 + $0xdc] sm:$0xf]
        %v8894 = vld [vmem:[%s9 + $0xe0] sm:$0xf]
        %v8895 = vld [vmem:[%s9 + $0xe4] sm:$0xf]
        %v8896 = vld [vmem:[%s9 + $0xe8] sm:$0xf]
        %v8897 = vld [vmem:[%s9 + $0xec] sm:$0xf]
        %v8898 = vld [vmem:[%s9 + $0xf0] sm:$0xf]
        %v8899 = vld [vmem:[%s9 + $0xf4] sm:$0xf]
        %v8900 = vld [vmem:[%s9 + $0xf8] sm:$0xf]
        %v8901 = vld [vmem:[%s9 + $0xfc] sm:$0xf]
        %v8902 = vld [vmem:[%s9 + $0x100] sm:$0xf]
        %v8903 = vld [vmem:[%s9 + $0x104] sm:$0xf]
        %v8904 = vld [vmem:[%s9 + $0x108] sm:$0xf]
        %v8905 = vld [vmem:[%s9 + $0x10c] sm:$0xf]
        %v8906 = vld [vmem:[%s9 + $0x110] sm:$0xf]
        %v8907 = vld [vmem:[%s9 + $0x114] sm:$0xf]
        %v8908 = vld [vmem:[%s9 + $0x118] sm:$0xf]
        %v8909 = vld [vmem:[%s9 + $0x11c] sm:$0xf]
        %v8910 = vld [vmem:[%s9 + $0x120] sm:$0xf]
        %v8911 = vld [vmem:[%s9 + $0x124] sm:$0xf]
        %v8912 = vld [vmem:[%s9 + $0x128] sm:$0xf]
        %v8913 = vld [vmem:[%s9 + $0x12c] sm:$0xf]
        %v8914 = vld [vmem:[%s9 + $0x130] sm:$0xf]
        %v8915 = vld [vmem:[%s9 + $0x134] sm:$0xf]
        %v8916 = vld [vmem:[%s9 + $0x138] sm:$0xf]
        %v8917 = vld [vmem:[%s9 + $0x13c] sm:$0xf]
        %v8918 = vld [vmem:[%s9 + $0x140] sm:$0xf]
        %v8919 = vld [vmem:[%s9 + $0x144] sm:$0xf]
        %v8920 = vld [vmem:[%s9 + $0x148] sm:$0xf]
        %v8921 = vld [vmem:[%s9 + $0x14c] sm:$0xf]
        %v8922 = vld [vmem:[%s9 + $0x150] sm:$0xf]
        %v8923 = vld [vmem:[%s9 + $0x154] sm:$0xf]
        %v8924 = vld [vmem:[%s9 + $0x158] sm:$0xf]
        %v8925 = vld [vmem:[%s9 + $0x15c] sm:$0xf]
        %v8926 = vld [vmem:[%s9 + $0x160] sm:$0xf]
        %v8927 = vld [vmem:[%s9 + $0x164] sm:$0xf]
        %v8928 = vld [vmem:[%s9 + $0x168] sm:$0xf]
        %v8929 = vld [vmem:[%s9 + $0x16c] sm:$0xf]
        %v8930 = vld [vmem:[%s9 + $0x170] sm:$0xf]
        %v8931 = vld [vmem:[%s9 + $0x174] sm:$0xf]
        %v8932 = vld [vmem:[%s9 + $0x178] sm:$0xf]
        %v8933 = vld [vmem:[%s9 + $0x17c] sm:$0xf]
        %v8934 = vld [vmem:[%s10] sm:$0x1]
        %v9031 = vunpack.c.l.b16 %v8838
        %v9032 = vunpack.c.l.b16 %v8839
        %v9033 = vunpack.c.l.b16 %v8840
        %v9034 = vunpack.c.l.b16 %v8841
        %v9035 = vunpack.c.l.b16 %v8842
        %v9036 = vunpack.c.l.b16 %v8843
        %v9037 = vunpack.c.l.b16 %v8844
        %v9038 = vunpack.c.l.b16 %v8845
        %v9039 = vunpack.c.l.b16 %v8846
        %v9040 = vunpack.c.l.b16 %v8847
        %v9041 = vunpack.c.l.b16 %v8848
        %v9042 = vunpack.c.l.b16 %v8849
        %v9043 = vunpack.c.l.b16 %v8850
        %v9044 = vunpack.c.l.b16 %v8851
        %v9045 = vunpack.c.l.b16 %v8852
        %v9046 = vunpack.c.l.b16 %v8853
        %v9047 = vunpack.c.l.b16 %v8854
        %v9048 = vunpack.c.l.b16 %v8855
        %v9049 = vunpack.c.l.b16 %v8856
        %v9050 = vunpack.c.l.b16 %v8857
        %v9051 = vunpack.c.l.b16 %v8858
        %v9052 = vunpack.c.l.b16 %v8859
        %v9053 = vunpack.c.l.b16 %v8860
        %v9054 = vunpack.c.l.b16 %v8861
        %v9055 = vunpack.c.l.b16 %v8862
        %v9056 = vunpack.c.l.b16 %v8863
        %v9057 = vunpack.c.l.b16 %v8864
        %v9058 = vunpack.c.l.b16 %v8865
        %v9059 = vunpack.c.l.b16 %v8866
        %v9060 = vunpack.c.l.b16 %v8867
        %v9061 = vunpack.c.l.b16 %v8868
        %v9062 = vunpack.c.l.b16 %v8869
        %v9063 = vunpack.c.l.b16 %v8870
        %v9064 = vunpack.c.l.b16 %v8871
        %v9065 = vunpack.c.l.b16 %v8872
        %v9066 = vunpack.c.l.b16 %v8873
        %v9067 = vunpack.c.l.b16 %v8874
        %v9068 = vunpack.c.l.b16 %v8875
        %v9069 = vunpack.c.l.b16 %v8876
        %v9070 = vunpack.c.l.b16 %v8877
        %v9071 = vunpack.c.l.b16 %v8878
        %v9072 = vunpack.c.l.b16 %v8879
        %v9073 = vunpack.c.l.b16 %v8880
        %v9074 = vunpack.c.l.b16 %v8881
        %v9075 = vunpack.c.l.b16 %v8882
        %v9076 = vunpack.c.l.b16 %v8883
        %v9077 = vunpack.c.l.b16 %v8884
        %v9078 = vunpack.c.l.b16 %v8885
        %v9079 = vunpack.c.l.b16 %v8886
        %v9080 = vunpack.c.l.b16 %v8887
        %v9081 = vunpack.c.l.b16 %v8888
        %v9082 = vunpack.c.l.b16 %v8889
        %v9083 = vunpack.c.l.b16 %v8890
        %v9084 = vunpack.c.l.b16 %v8891
        %v9085 = vunpack.c.l.b16 %v8892
        %v9086 = vunpack.c.l.b16 %v8893
        %v9087 = vunpack.c.l.b16 %v8894
        %v9088 = vunpack.c.l.b16 %v8895
        %v9089 = vunpack.c.l.b16 %v8896
        %v9090 = vunpack.c.l.b16 %v8897
        %v9091 = vunpack.c.l.b16 %v8898
        %v9092 = vunpack.c.l.b16 %v8899
        %v9093 = vunpack.c.l.b16 %v8900
        %v9094 = vunpack.c.l.b16 %v8901
        %v9095 = vunpack.c.l.b16 %v8902
        %v9096 = vunpack.c.l.b16 %v8903
        %v9097 = vunpack.c.l.b16 %v8904
        %v9098 = vunpack.c.l.b16 %v8905
        %v9099 = vunpack.c.l.b16 %v8906
        %v9100 = vunpack.c.l.b16 %v8907
        %v9101 = vunpack.c.l.b16 %v8908
        %v9102 = vunpack.c.l.b16 %v8909
        %v9103 = vunpack.c.l.b16 %v8910
        %v9104 = vunpack.c.l.b16 %v8911
        %v9105 = vunpack.c.l.b16 %v8912
        %v9106 = vunpack.c.l.b16 %v8913
        %v9107 = vunpack.c.l.b16 %v8914
        %v9108 = vunpack.c.l.b16 %v8915
        %v9109 = vunpack.c.l.b16 %v8916
        %v9110 = vunpack.c.l.b16 %v8917
        %v9111 = vunpack.c.l.b16 %v8918
        %v9112 = vunpack.c.l.b16 %v8919
        %v9113 = vunpack.c.l.b16 %v8920
        %v9114 = vunpack.c.l.b16 %v8921
        %v9115 = vunpack.c.l.b16 %v8922
        %v9116 = vunpack.c.l.b16 %v8923
        %v9117 = vunpack.c.l.b16 %v8924
        %v9118 = vunpack.c.l.b16 %v8925
        %v9119 = vunpack.c.l.b16 %v8926
        %v9120 = vunpack.c.l.b16 %v8927
        %v9121 = vunpack.c.l.b16 %v8928
        %v9122 = vunpack.c.l.b16 %v8929
        %v9123 = vunpack.c.l.b16 %v8930
        %v9124 = vunpack.c.l.b16 %v8931
        %v9125 = vunpack.c.l.b16 %v8932
        %v9126 = vunpack.c.l.b16 %v8933
        %v9127 = vpack.c.b16 %v9032, %v9031
        %v9128 = vpack.c.b16 %v9034, %v9033
        %v9129 = vpack.c.b16 %v9036, %v9035
        %v9130 = vpack.c.b16 %v9038, %v9037
        %v9131 = vpack.c.b16 %v9040, %v9039
        %v9132 = vpack.c.b16 %v9042, %v9041
        %v9133 = vpack.c.b16 %v9044, %v9043
        %v9134 = vpack.c.b16 %v9046, %v9045
        %v9135 = vpack.c.b16 %v9048, %v9047
        %v9136 = vpack.c.b16 %v9050, %v9049
        %v9137 = vpack.c.b16 %v9052, %v9051
        %v9138 = vpack.c.b16 %v9054, %v9053
        %v9139 = vpack.c.b16 %v9056, %v9055
        %v9140 = vpack.c.b16 %v9058, %v9057
        %v9141 = vpack.c.b16 %v9060, %v9059
        %v9142 = vpack.c.b16 %v9062, %v9061
        %v9143 = vpack.c.b16 %v9064, %v9063
        %v9144 = vpack.c.b16 %v9066, %v9065
        %v9145 = vpack.c.b16 %v9068, %v9067
        %v9146 = vpack.c.b16 %v9070, %v9069
        %v9147 = vpack.c.b16 %v9072, %v9071
        %v9148 = vpack.c.b16 %v9074, %v9073
        %v9149 = vpack.c.b16 %v9076, %v9075
        %v9150 = vpack.c.b16 %v9078, %v9077
        %v9151 = vpack.c.b16 %v9080, %v9079
        %v9152 = vpack.c.b16 %v9082, %v9081
        %v9153 = vpack.c.b16 %v9084, %v9083
        %v9154 = vpack.c.b16 %v9086, %v9085
        %v9155 = vpack.c.b16 %v9088, %v9087
        %v9156 = vpack.c.b16 %v9090, %v9089
        %v9157 = vpack.c.b16 %v9092, %v9091
        %v9158 = vpack.c.b16 %v9094, %v9093
        %v9159 = vpack.c.b16 %v9096, %v9095
        %v9160 = vpack.c.b16 %v9098, %v9097
        %v9161 = vpack.c.b16 %v9100, %v9099
        %v9162 = vpack.c.b16 %v9102, %v9101
        %v9163 = vpack.c.b16 %v9104, %v9103
        %v9164 = vpack.c.b16 %v9106, %v9105
        %v9165 = vpack.c.b16 %v9108, %v9107
        %v9166 = vpack.c.b16 %v9110, %v9109
        %v9167 = vpack.c.b16 %v9112, %v9111
        %v9168 = vpack.c.b16 %v9114, %v9113
        %v9169 = vpack.c.b16 %v9116, %v9115
        %v9170 = vpack.c.b16 %v9118, %v9117
        %v9171 = vpack.c.b16 %v9120, %v9119
        %v9172 = vpack.c.b16 %v9122, %v9121
        %v9173 = vpack.c.b16 %v9124, %v9123
        %v9174 = vpack.c.b16 %v9126, %v9125
        %9223 = vmatprep.subr.bf16.mxu0 0
        %9224 = vmatpush1.bf16.msra.mxu0 %v9127
        %9225 = vmatprep.subr.bf16.mxu0 0
        %9226 = vmatpush1.bf16.msra.mxu0 %v9128
        %9227 = vmatprep.subr.bf16.mxu0 0
        %9228 = vmatpush1.bf16.msra.mxu0 %v9129
        %9229 = vmatprep.subr.bf16.mxu0 0
        %9230 = vmatpush1.bf16.msra.mxu0 %v9130
        %9231 = vmatprep.subr.bf16.mxu0 0
        %9232 = vmatpush1.bf16.msra.mxu0 %v9131
        %9233 = vmatprep.subr.bf16.mxu0 0
        %9234 = vmatpush1.bf16.msra.mxu0 %v9132
        %9235 = vmatprep.subr.bf16.mxu0 0
        %9236 = vmatpush1.bf16.msra.mxu0 %v9133
        %9237 = vmatprep.subr.bf16.mxu0 0
        %9238 = vmatpush1.bf16.msra.mxu0 %v9134
        %9239 = vmatprep.subr.bf16.mxu0 0
        %9240 = vmatpush1.bf16.msra.mxu0 %v9135
        %9241 = vmatprep.subr.bf16.mxu0 0
        %9242 = vmatpush1.bf16.msra.mxu0 %v9136
        %9243 = vmatprep.subr.bf16.mxu0 0
        %9244 = vmatpush1.bf16.msra.mxu0 %v9137
        %9245 = vmatprep.subr.bf16.mxu0 0
        %9246 = vmatpush1.bf16.msra.mxu0 %v9138
        %9247 = vmatprep.subr.bf16.mxu0 0
        %9248 = vmatpush1.bf16.msra.mxu0 %v9139
        %9249 = vmatprep.subr.bf16.mxu0 0
        %9250 = vmatpush1.bf16.msra.mxu0 %v9140
        %9251 = vmatprep.subr.bf16.mxu0 0
        %9252 = vmatpush1.bf16.msra.mxu0 %v9141
        %9253 = vmatprep.subr.bf16.mxu0 0
        %9254 = vmatpush1.bf16.msra.mxu0 %v9142
        %9255 = vmatprep.mubr.bf16.mxu0 %v8833
        %9256 = vmatmul.mubr.bf16.gmra.mrb[0].mxu0 %v8832
        %v9257 = vpop.f32.mrb[0].mxu0
        %v9258 = vadd.f32 %v8934, %v9257
        %v9259 = vpop.f32.mrb[0].mxu0
        %v9260 = vpop.f32.mrb[0].mxu0
        %v9261 = vpop.f32.mrb[0].mxu0
        %9262 = vdwg.mxu0
        %9263 = vmatprep.subr.bf16.mxu0 0
        %9264 = vmatpush1.bf16.msra.mxu0 %v9143
        %9265 = vmatprep.subr.bf16.mxu0 0
        %9266 = vmatpush1.bf16.msra.mxu0 %v9144
        %9267 = vmatprep.subr.bf16.mxu0 0
        %9268 = vmatpush1.bf16.msra.mxu0 %v9145
        %9269 = vmatprep.subr.bf16.mxu0 0
        %9270 = vmatpush1.bf16.msra.mxu0 %v9146
        %9271 = vmatprep.subr.bf16.mxu0 0
        %9272 = vmatpush1.bf16.msra.mxu0 %v9147
        %9273 = vmatprep.subr.bf16.mxu0 0
        %9274 = vmatpush1.bf16.msra.mxu0 %v9148
        %9275 = vmatprep.subr.bf16.mxu0 0
        %9276 = vmatpush1.bf16.msra.mxu0 %v9149
        %9277 = vmatprep.subr.bf16.mxu0 0
        %9278 = vmatpush1.bf16.msra.mxu0 %v9150
        %9279 = vmatprep.subr.bf16.mxu0 0
        %9280 = vmatpush1.bf16.msra.mxu0 %v9151
        %9281 = vmatprep.subr.bf16.mxu0 0
        %9282 = vmatpush1.bf16.msra.mxu0 %v9152
        %9283 = vmatprep.subr.bf16.mxu0 0
        %9284 = vmatpush1.bf16.msra.mxu0 %v9153
        %9285 = vmatprep.subr.bf16.mxu0 0
        %9286 = vmatpush1.bf16.msra.mxu0 %v9154
        %9287 = vmatprep.subr.bf16.mxu0 0
        %9288 = vmatpush1.bf16.msra.mxu0 %v9155
        %9289 = vmatprep.subr.bf16.mxu0 0
        %9290 = vmatpush1.bf16.msra.mxu0 %v9156
        %9291 = vmatprep.subr.bf16.mxu0 0
        %9292 = vmatpush1.bf16.msra.mxu0 %v9157
        %9293 = vmatprep.subr.bf16.mxu0 0
        %9294 = vmatpush1.bf16.msra.mxu0 %v9158
        %9295 = vmatprep.mubr.bf16.mxu0 %v8835
        %9296 = vmatmul.mubr.bf16.gmra.mrb[0].mxu0 %v8834
        %v9297 = vpop.f32.mrb[0].mxu0
        %v9298 = vadd.f32 %v9258, %v9297
        %v9299 = vpop.f32.mrb[0].mxu0
        %v9300 = vpop.f32.mrb[0].mxu0
        %v9301 = vpop.f32.mrb[0].mxu0
        %9302 = vdwg.mxu0
        %9303 = vmatprep.subr.bf16.mxu0 0
        %9304 = vmatpush1.bf16.msra.mxu0 %v9159
        %9305 = vmatprep.subr.bf16.mxu0 0
        %9306 = vmatpush1.bf16.msra.mxu0 %v9160
        %9307 = vmatprep.subr.bf16.mxu0 0
        %9308 = vmatpush1.bf16.msra.mxu0 %v9161
        %9309 = vmatprep.subr.bf16.mxu0 0
        %9310 = vmatpush1.bf16.msra.mxu0 %v9162
        %9311 = vmatprep.subr.bf16.mxu0 0
        %9312 = vmatpush1.bf16.msra.mxu0 %v9163
        %9313 = vmatprep.subr.bf16.mxu0 0
        %9314 = vmatpush1.bf16.msra.mxu0 %v9164
        %9315 = vmatprep.subr.bf16.mxu0 0
        %9316 = vmatpush1.bf16.msra.mxu0 %v9165
        %9317 = vmatprep.subr.bf16.mxu0 0
        %9318 = vmatpush1.bf16.msra.mxu0 %v9166
        %9319 = vmatprep.subr.bf16.mxu0 0
        %9320 = vmatpush1.bf16.msra.mxu0 %v9167
        %9321 = vmatprep.subr.bf16.mxu0 0
        %9322 = vmatpush1.bf16.msra.mxu0 %v9168
        %9323 = vmatprep.subr.bf16.mxu0 0
        %9324 = vmatpush1.bf16.msra.mxu0 %v9169
        %9325 = vmatprep.subr.bf16.mxu0 0
        %9326 = vmatpush1.bf16.msra.mxu0 %v9170
        %9327 = vmatprep.subr.bf16.mxu0 0
        %9328 = vmatpush1.bf16.msra.mxu0 %v9171
        %9329 = vmatprep.subr.bf16.mxu0 0
        %9330 = vmatpush1.bf16.msra.mxu0 %v9172
        %9331 = vmatprep.subr.bf16.mxu0 0
        %9332 = vmatpush1.bf16.msra.mxu0 %v9173
        %9333 = vmatprep.subr.bf16.mxu0 0
        %9334 = vmatpush1.bf16.msra.mxu0 %v9174
        %9335 = vmatprep.mubr.bf16.mxu0 %v8837
        %9336 = vmatmul.mubr.bf16.gmra.mrb[0].mxu0 %v8836
        %v9337 = vpop.f32.mrb[0].mxu0
        %v9338 = vadd.f32 %v9298, %v9337
        %v9339 = vpop.f32.mrb[0].mxu0
        %v9340 = vpop.f32.mrb[0].mxu0
        %v9341 = vpop.f32.mrb[0].mxu0
        %9342 = vdwg.mxu0
        %v9343 = vmax.f32 %v9338, 0.0
        %v9344 = vpack.c.bf16 %v9343, %v9343
        %v9345 = vld [vmem:[%s11] sm:$0xf]
        %v9346 = vld [vmem:[%s11 + $0x4] sm:$0xf]
        %v9347 = vld [vmem:[%s11 + $0x8] sm:$0xf]
        %v9348 = vld [vmem:[%s11 + $0xc] sm:$0xf]
        %v9349 = vld [vmem:[%s11 + $0x10] sm:$0xf]
        %v9350 = vld [vmem:[%s11 + $0x14] sm:$0xf]
        %v9351 = vld [vmem:[%s11 + $0x18] sm:$0xf]
        %v9352 = vld [vmem:[%s11 + $0x1c] sm:$0xf]
        %v9353 = vld [vmem:[%s11 + $0x20] sm:$0xf]
        %v9354 = vld [vmem:[%s11 + $0x24] sm:$0xf]
        %v9355 = vld [vmem:[%s11 + $0x28] sm:$0xf]
        %v9356 = vld [vmem:[%s11 + $0x2c] sm:$0xf]
        %v9357 = vld [vmem:[%s11 + $0x30] sm:$0xf]
        %v9358 = vld [vmem:[%s11 + $0x34] sm:$0xf]
        %v9359 = vld [vmem:[%s11 + $0x38] sm:$0xf]
        %v9360 = vld [vmem:[%s11 + $0x3c] sm:$0xf]
        %v9361 = vld [vmem:[%s12] sm:$0x1]
        %v9378 = vunpack.c.l.b16 %v9345
        %v9379 = vunpack.c.l.b16 %v9346
        %v9380 = vunpack.c.l.b16 %v9347
        %v9381 = vunpack.c.l.b16 %v9348
        %v9382 = vunpack.c.l.b16 %v9349
        %v9383 = vunpack.c.l.b16 %v9350
        %v9384 = vunpack.c.l.b16 %v9351
        %v9385 = vunpack.c.l.b16 %v9352
        %v9386 = vunpack.c.l.b16 %v9353
        %v9387 = vunpack.c.l.b16 %v9354
        %v9388 = vunpack.c.l.b16 %v9355
        %v9389 = vunpack.c.l.b16 %v9356
        %v9390 = vunpack.c.l.b16 %v9357
        %v9391 = vunpack.c.l.b16 %v9358
        %v9392 = vunpack.c.l.b16 %v9359
        %v9393 = vunpack.c.l.b16 %v9360
        %v9394 = vpack.c.b16 %v9379, %v9378
        %v9395 = vpack.c.b16 %v9381, %v9380
        %v9396 = vpack.c.b16 %v9383, %v9382
        %v9397 = vpack.c.b16 %v9385, %v9384
        %v9398 = vpack.c.b16 %v9387, %v9386
        %v9399 = vpack.c.b16 %v9389, %v9388
        %v9400 = vpack.c.b16 %v9391, %v9390
        %v9401 = vpack.c.b16 %v9393, %v9392
        %9410 = vmatprep.subr.bf16.mxu0 0
        %9411 = vmatpush1.bf16.msra.mxu0 %v9394
        %9412 = vmatprep.subr.bf16.mxu0 0
        %9413 = vmatpush1.bf16.msra.mxu0 %v9395
        %9414 = vmatprep.subr.bf16.mxu0 0
        %9415 = vmatpush1.bf16.msra.mxu0 %v9396
        %9416 = vmatprep.subr.bf16.mxu0 0
        %9417 = vmatpush1.bf16.msra.mxu0 %v9397
        %9418 = vmatprep.subr.bf16.mxu0 0
        %9419 = vmatpush1.bf16.msra.mxu0 %v9398
        %9420 = vmatprep.subr.bf16.mxu0 0
        %9421 = vmatpush1.bf16.msra.mxu0 %v9399
        %9422 = vmatprep.subr.bf16.mxu0 0
        %9423 = vmatpush1.bf16.msra.mxu0 %v9400
        %9424 = vmatprep.subr.bf16.mxu0 0
        %9425 = vmatpush1.bf16.msra.mxu0 %v9401
        %9426 = vmatprep.subr.bf16.mxu0 0
        %9427 = vmatpush1.bf16.msra.mxu0 0
        %9428 = vmatprep.subr.bf16.mxu0 0
        %9429 = vmatpush1.bf16.msra.mxu0 0
        %9430 = vmatprep.subr.bf16.mxu0 0
        %9431 = vmatpush1.bf16.msra.mxu0 0
        %9432 = vmatprep.subr.bf16.mxu0 0
        %9433 = vmatpush1.bf16.msra.mxu0 0
        %9434 = vmatprep.subr.bf16.mxu0 0
        %9435 = vmatpush1.bf16.msra.mxu0 0
        %9436 = vmatprep.subr.bf16.mxu0 0
        %9437 = vmatpush1.bf16.msra.mxu0 0
        %9438 = vmatprep.subr.bf16.mxu0 0
        %9439 = vmatpush1.bf16.msra.mxu0 0
        %9440 = vmatprep.subr.bf16.mxu0 0
        %9441 = vmatpush1.bf16.msra.mxu0 0
        %9442 = vmatprep.mubr.bf16.mxu0 0
        %9443 = vmatmul.mubr.bf16.gmra.mrb[0].mxu0 %v9344
        %v9444 = vpop.f32.mrb[0].mxu0
        %v9445 = vadd.f32 %v9361, %v9444
        %v9446 = vpop.f32.mrb[0].mxu0
        %v9447 = vpop.f32.mrb[0].mxu0
        %v9448 = vpop.f32.mrb[0].mxu0
        %9449 = vdwg.mxu0
        %v9450 = vmul.f32 %v9445, -3.0
        %v9451 = vmul.f32 %v9450, 1.442695
        %v9452 = vpow.pop %v9451
        %v9453 = vadd.f32 %v9452, 1.0
        %v9454 = vrcp.pop %v9453
        %v9455 = vmul.f32 1.0, %v9454
        %v9456 = vld [vmem:[%s13] sm:$0x1]
        %v9457 = vmul.f32 %v9455, %v9456
        %vm9458 = vcmask 122880
        %9459 = vst.msk [vmem:[%s555] sm:$0x1] %vm9458, %v9457
        %v9460 = vld [vmem:[%s14] sm:$0xf]
        %v9461 = vld [vmem:[%s15] sm:$0xf]
        %v9462 = vmax.f32 %v9457, 0.0
        %v9463 = vmin.f32 %v9462, 15.0
        %v9464 = vmin.f32 %v9462, 31.0
        %v9465 = vfloor.f32 %v9463
        %v9466 = vceil.f32 %v9463
        %v9467 = vfloor.f32 %v9464
        %v9468 = vceil.f32 %v9464
        %v9469 = vsub.f32 %v9463, %v9465
        %v9470 = vsub.f32 %v9464, %v9467
        %9472 = vset.pattern.permute.xlu0 0
        %9473 = vperm.xlu0 %9472, %v9465
        %v9474 = vpop.permute.xlu0 %9473
        %v9475 = vlaneseq
        %v9476 = vshrl.u32 %v9475, 7
        %v9477 = vsub.s32 0, %v9476
        %v9478 = vrot.slane %v9474, %v9477
        %vm9480 = vcmp.eq.f32.partialorder %v9460, %v9478
        %v9481 = vsub.f32 1.0, %v9469
        %9483 = vset.pattern.permute.xlu0 0
        %9484 = vperm.xlu0 %9483, %v9481
        %v9485 = vpop.permute.xlu0 %9484
        %v9486 = vlaneseq
        %v9487 = vshrl.u32 %v9486, 7
        %v9488 = vsub.s32 0, %v9487
        %v9489 = vrot.slane %v9485, %v9488
        %v9491 = vsel %vm9480, %v9489, 0.0
        %9493 = vset.pattern.permute.xlu0 0
        %9494 = vperm.xlu0 %9493, %v9466
        %v9495 = vpop.permute.xlu0 %9494
        %v9496 = vlaneseq
        %v9497 = vshrl.u32 %v9496, 7
        %v9498 = vsub.s32 0, %v9497
        %v9499 = vrot.slane %v9495, %v9498
        %vm9501 = vcmp.eq.f32.partialorder %v9460, %v9499
        %9503 = vset.pattern.permute.xlu0 0
        %9504 = vperm.xlu0 %9503, %v9469
        %v9505 = vpop.permute.xlu0 %9504
        %v9506 = vlaneseq
        %v9507 = vshrl.u32 %v9506, 7
        %v9508 = vsub.s32 0, %v9507
        %v9509 = vrot.slane %v9505, %v9508
        %v9511 = vsel %vm9501, %v9509, 0.0
        %v9512 = vadd.f32 %v9491, %v9511
        %9514 = vset.pattern.permute.xlu0 1
        %9515 = vperm.xlu0 %9514, %v9467
        %v9516 = vpop.permute.xlu0 %9515
        %v9517 = vlaneseq
        %v9518 = vshrl.u32 %v9517, 7
        %v9519 = vsub.s32 0, %v9518
        %v9520 = vrot.slane %v9516, %v9519
        %vm9522 = vcmp.eq.f32.partialorder %v9461, %v9520
        %v9523 = vsub.f32 1.0, %v9470
        %9525 = vset.pattern.permute.xlu0 1
        %9526 = vperm.xlu0 %9525, %v9523
        %v9527 = vpop.permute.xlu0 %9526
        %v9528 = vlaneseq
        %v9529 = vshrl.u32 %v9528, 7
        %v9530 = vsub.s32 0, %v9529
        %v9531 = vrot.slane %v9527, %v9530
        %v9533 = vsel %vm9522, %v9531, 0.0
        %9535 = vset.pattern.permute.xlu0 1
        %9536 = vperm.xlu0 %9535, %v9468
        %v9537 = vpop.permute.xlu0 %9536
        %v9538 = vlaneseq
        %v9539 = vshrl.u32 %v9538, 7
        %v9540 = vsub.s32 0, %v9539
        %v9541 = vrot.slane %v9537, %v9540
        %vm9543 = vcmp.eq.f32.partialorder %v9461, %v9541
        %9545 = vset.pattern.permute.xlu0 1
        %9546 = vperm.xlu0 %9545, %v9470
        %v9547 = vpop.permute.xlu0 %9546
        %v9548 = vlaneseq
        %v9549 = vshrl.u32 %v9548, 7
        %v9550 = vsub.s32 0, %v9549
        %v9551 = vrot.slane %v9547, %v9550
        %v9553 = vsel %vm9543, %v9551, 0.0
        %v9554 = vadd.f32 %v9533, %v9553
        %v9555 = vmul.f32 %v9512, %v9554
        %v9556 = vlaneseq
        %vm9557 = vcmp.ge.s32.totalorder %v9556, 0
        %vm9558 = vcmp.lt.s32.totalorder %v9556, 512
        %vm9559 = vmand %vm9557, %vm9558
        %9560 = vst.msk [vmem:[#allocation4] ss:$8 sm:$0xf] %vm9559, %v9555
        %9561 = vst.msk [vmem:[#allocation4] ss:$8 sm:$0x0] %vm9559, %v9555
        %9562 = vset.pattern.permute.xlu0 2
        %9563 = vperm.xlu0 %9562, %v9465
        %v9564 = vpop.permute.xlu0 %9563
        %v9565 = vlaneseq
        %v9566 = vshrl.u32 %v9565, 7
        %v9567 = vsub.s32 0, %v9566
        %v9568 = vrot.slane %v9564, %v9567
        %vm9570 = vcmp.eq.f32.partialorder %v9460, %v9568
        %9571 = vset.pattern.permute.xlu0 2
        %9572 = vperm.xlu0 %9571, %v9481
        %v9573 = vpop.permute.xlu0 %9572
        %v9574 = vlaneseq
        %v9575 = vshrl.u32 %v9574, 7
        %v9576 = vsub.s32 0, %v9575
        %v9577 = vrot.slane %v9573, %v9576
        %v9579 = vsel %vm9570, %v9577, 0.0
        %9580 = vset.pattern.permute.xlu0 2
        %9581 = vperm.xlu0 %9580, %v9466
        %v9582 = vpop.permute.xlu0 %9581
        %v9583 = vlaneseq
        %v9584 = vshrl.u32 %v9583, 7
        %v9585 = vsub.s32 0, %v9584
        %v9586 = vrot.slane %v9582, %v9585
        %vm9588 = vcmp.eq.f32.partialorder %v9460, %v9586
        %9589 = vset.pattern.permute.xlu0 2
        %9590 = vperm.xlu0 %9589, %v9469
        %v9591 = vpop.permute.xlu0 %9590
        %v9592 = vlaneseq
        %v9593 = vshrl.u32 %v9592, 7
        %v9594 = vsub.s32 0, %v9593
        %v9595 = vrot.slane %v9591, %v9594
        %v9597 = vsel %vm9588, %v9595, 0.0
        %v9598 = vadd.f32 %v9579, %v9597
        %9599 = vset.pattern.permute.xlu0 3
        %9600 = vperm.xlu0 %9599, %v9467
        %v9601 = vpop.permute.xlu0 %9600
        %v9602 = vlaneseq
        %v9603 = vshrl.u32 %v9602, 7
        %v9604 = vsub.s32 0, %v9603
        %v9605 = vrot.slane %v9601, %v9604
        %vm9607 = vcmp.eq.f32.partialorder %v9461, %v9605
        %9608 = vset.pattern.permute.xlu0 3
        %9609 = vperm.xlu0 %9608, %v9523
        %v9610 = vpop.permute.xlu0 %9609
        %v9611 = vlaneseq
        %v9612 = vshrl.u32 %v9611, 7
        %v9613 = vsub.s32 0, %v9612
        %v9614 = vrot.slane %v9610, %v9613
        %v9616 = vsel %vm9607, %v9614, 0.0
        %9617 = vset.pattern.permute.xlu0 3
        %9618 = vperm.xlu0 %9617, %v9468
        %v9619 = vpop.permute.xlu0 %9618
        %v9620 = vlaneseq
        %v9621 = vshrl.u32 %v9620, 7
        %v9622 = vsub.s32 0, %v9621
        %v9623 = vrot.slane %v9619, %v9622
        %vm9625 = vcmp.eq.f32.partialorder %v9461, %v9623
        %9626 = vset.pattern.permute.xlu0 3
        %9627 = vperm.xlu0 %9626, %v9470
        %v9628 = vpop.permute.xlu0 %9627
        %v9629 = vlaneseq
        %v9630 = vshrl.u32 %v9629, 7
        %v9631 = vsub.s32 0, %v9630
        %v9632 = vrot.slane %v9628, %v9631
        %v9634 = vsel %vm9625, %v9632, 0.0
        %v9635 = vadd.f32 %v9616, %v9634
        %v9636 = vmul.f32 %v9598, %v9635
        %s9637 = scalar_lea.vmem [#allocation4], 1
        %9638 = vst.msk [vmem:[%s9637] ss:$8 sm:$0xf] %vm9559, %v9636
        %9639 = vst.msk [vmem:[%s9637] ss:$8 sm:$0x0] %vm9559, %v9636
        %9640 = vset.pattern.permute.xlu0 4
        %9641 = vperm.xlu0 %9640, %v9465
        %v9642 = vpop.permute.xlu0 %9641
        %v9643 = vlaneseq
        %v9644 = vshrl.u32 %v9643, 7
        %v9645 = vsub.s32 0, %v9644
        %v9646 = vrot.slane %v9642, %v9645
        %vm9648 = vcmp.eq.f32.partialorder %v9460, %v9646
        %9649 = vset.pattern.permute.xlu0 4
        %9650 = vperm.xlu0 %9649, %v9481
        %v9651 = vpop.permute.xlu0 %9650
        %v9652 = vlaneseq
        %v9653 = vshrl.u32 %v9652, 7
        %v9654 = vsub.s32 0, %v9653
        %v9655 = vrot.slane %v9651, %v9654
        %v9657 = vsel %vm9648, %v9655, 0.0
        %9658 = vset.pattern.permute.xlu0 4
        %9659 = vperm.xlu0 %9658, %v9466
        %v9660 = vpop.permute.xlu0 %9659
        %v9661 = vlaneseq
        %v9662 = vshrl.u32 %v9661, 7
        %v9663 = vsub.s32 0, %v9662
        %v9664 = vrot.slane %v9660, %v9663
        %vm9666 = vcmp.eq.f32.partialorder %v9460, %v9664
        %9667 = vset.pattern.permute.xlu0 4
        %9668 = vperm.xlu0 %9667, %v9469
        %v9669 = vpop.permute.xlu0 %9668
        %v9670 = vlaneseq
        %v9671 = vshrl.u32 %v9670, 7
        %v9672 = vsub.s32 0, %v9671
        %v9673 = vrot.slane %v9669, %v9672
        %v9675 = vsel %vm9666, %v9673, 0.0
        %v9676 = vadd.f32 %v9657, %v9675
        %9677 = vset.pattern.permute.xlu0 5
        %9678 = vperm.xlu0 %9677, %v9467
        %v9679 = vpop.permute.xlu0 %9678
        %v9680 = vlaneseq
        %v9681 = vshrl.u32 %v9680, 7
        %v9682 = vsub.s32 0, %v9681
        %v9683 = vrot.slane %v9679, %v9682
        %vm9685 = vcmp.eq.f32.partialorder %v9461, %v9683
        %9686 = vset.pattern.permute.xlu0 5
        %9687 = vperm.xlu0 %9686, %v9523
        %v9688 = vpop.permute.xlu0 %9687
        %v9689 = vlaneseq
        %v9690 = vshrl.u32 %v9689, 7
        %v9691 = vsub.s32 0, %v9690
        %v9692 = vrot.slane %v9688, %v9691
        %v9694 = vsel %vm9685, %v9692, 0.0
        %9695 = vset.pattern.permute.xlu0 5
        %9696 = vperm.xlu0 %9695, %v9468
        %v9697 = vpop.permute.xlu0 %9696
        %v9698 = vlaneseq
        %v9699 = vshrl.u32 %v9698, 7
        %v9700 = vsub.s32 0, %v9699
        %v9701 = vrot.slane %v9697, %v9700
        %vm9703 = vcmp.eq.f32.partialorder %v9461, %v9701
        %9704 = vset.pattern.permute.xlu0 5
        %9705 = vperm.xlu0 %9704, %v9470
        %v9706 = vpop.permute.xlu0 %9705
        %v9707 = vlaneseq
        %v9708 = vshrl.u32 %v9707, 7
        %v9709 = vsub.s32 0, %v9708
        %v9710 = vrot.slane %v9706, %v9709
        %v9712 = vsel %vm9703, %v9710, 0.0
        %v9713 = vadd.f32 %v9694, %v9712
        %v9714 = vmul.f32 %v9676, %v9713
        %s9715 = scalar_lea.vmem [#allocation4], 2
        %9716 = vst.msk [vmem:[%s9715] ss:$8 sm:$0xf] %vm9559, %v9714
        %9717 = vst.msk [vmem:[%s9715] ss:$8 sm:$0x0] %vm9559, %v9714
        %9718 = vset.pattern.permute.xlu0 6
        %9719 = vperm.xlu0 %9718, %v9465
        %v9720 = vpop.permute.xlu0 %9719
        %v9721 = vlaneseq
        %v9722 = vshrl.u32 %v9721, 7
        %v9723 = vsub.s32 0, %v9722
        %v9724 = vrot.slane %v9720, %v9723
        %vm9726 = vcmp.eq.f32.partialorder %v9460, %v9724
        %9727 = vset.pattern.permute.xlu0 6
        %9728 = vperm.xlu0 %9727, %v9481
        %v9729 = vpop.permute.xlu0 %9728
        %v9730 = vlaneseq
        %v9731 = vshrl.u32 %v9730, 7
        %v9732 = vsub.s32 0, %v9731
        %v9733 = vrot.slane %v9729, %v9732
        %v9735 = vsel %vm9726, %v9733, 0.0
        %9736 = vset.pattern.permute.xlu0 6
        %9737 = vperm.xlu0 %9736, %v9466
        %v9738 = vpop.permute.xlu0 %9737
        %v9739 = vlaneseq
        %v9740 = vshrl.u32 %v9739, 7
        %v9741 = vsub.s32 0, %v9740
        %v9742 = vrot.slane %v9738, %v9741
        %vm9744 = vcmp.eq.f32.partialorder %v9460, %v9742
        %9745 = vset.pattern.permute.xlu0 6
        %9746 = vperm.xlu0 %9745, %v9469
        %v9747 = vpop.permute.xlu0 %9746
        %v9748 = vlaneseq
        %v9749 = vshrl.u32 %v9748, 7
        %v9750 = vsub.s32 0, %v9749
        %v9751 = vrot.slane %v9747, %v9750
        %v9753 = vsel %vm9744, %v9751, 0.0
        %v9754 = vadd.f32 %v9735, %v9753
        %9755 = vset.pattern.permute.xlu0 7
        %9756 = vperm.xlu0 %9755, %v9467
        %v9757 = vpop.permute.xlu0 %9756
        %v9758 = vlaneseq
        %v9759 = vshrl.u32 %v9758, 7
        %v9760 = vsub.s32 0, %v9759
        %v9761 = vrot.slane %v9757, %v9760
        %vm9763 = vcmp.eq.f32.partialorder %v9461, %v9761
        %9764 = vset.pattern.permute.xlu0 7
        %9765 = vperm.xlu0 %9764, %v9523
        %v9766 = vpop.permute.xlu0 %9765
        %v9767 = vlaneseq
        %v9768 = vshrl.u32 %v9767, 7
        %v9769 = vsub.s32 0, %v9768
        %v9770 = vrot.slane %v9766, %v9769
        %v9772 = vsel %vm9763, %v9770, 0.0
        %9773 = vset.pattern.permute.xlu0 7
        %9774 = vperm.xlu0 %9773, %v9468
        %v9775 = vpop.permute.xlu0 %9774
        %v9776 = vlaneseq
        %v9777 = vshrl.u32 %v9776, 7
        %v9778 = vsub.s32 0, %v9777
        %v9779 = vrot.slane %v9775, %v9778
        %vm9781 = vcmp.eq.f32.partialorder %v9461, %v9779
        %9782 = vset.pattern.permute.xlu0 7
        %9783 = vperm.xlu0 %9782, %v9470
        %v9784 = vpop.permute.xlu0 %9783
        %v9785 = vlaneseq
        %v9786 = vshrl.u32 %v9785, 7
        %v9787 = vsub.s32 0, %v9786
        %v9788 = vrot.slane %v9784, %v9787
        %v9790 = vsel %vm9781, %v9788, 0.0
        %v9791 = vadd.f32 %v9772, %v9790
        %v9792 = vmul.f32 %v9754, %v9791
        %s9793 = scalar_lea.vmem [#allocation4], 3
        %9794 = vst.msk [vmem:[%s9793] ss:$8 sm:$0xf] %vm9559, %v9792
        %9795 = vst.msk [vmem:[%s9793] ss:$8 sm:$0x0] %vm9559, %v9792
        %9796 = vset.pattern.permute.xlu0 8
        %9797 = vperm.xlu0 %9796, %v9465
        %v9798 = vpop.permute.xlu0 %9797
        %v9799 = vlaneseq
        %v9800 = vshrl.u32 %v9799, 7
        %v9801 = vsub.s32 0, %v9800
        %v9802 = vrot.slane %v9798, %v9801
        %vm9804 = vcmp.eq.f32.partialorder %v9460, %v9802
        %9805 = vset.pattern.permute.xlu0 8
        %9806 = vperm.xlu0 %9805, %v9481
        %v9807 = vpop.permute.xlu0 %9806
        %v9808 = vlaneseq
        %v9809 = vshrl.u32 %v9808, 7
        %v9810 = vsub.s32 0, %v9809
        %v9811 = vrot.slane %v9807, %v9810
        %v9813 = vsel %vm9804, %v9811, 0.0
        %9814 = vset.pattern.permute.xlu0 8
        %9815 = vperm.xlu0 %9814, %v9466
        %v9816 = vpop.permute.xlu0 %9815
        %v9817 = vlaneseq
        %v9818 = vshrl.u32 %v9817, 7
        %v9819 = vsub.s32 0, %v9818
        %v9820 = vrot.slane %v9816, %v9819
        %vm9822 = vcmp.eq.f32.partialorder %v9460, %v9820
        %9823 = vset.pattern.permute.xlu0 8
        %9824 = vperm.xlu0 %9823, %v9469
        %v9825 = vpop.permute.xlu0 %9824
        %v9826 = vlaneseq
        %v9827 = vshrl.u32 %v9826, 7
        %v9828 = vsub.s32 0, %v9827
        %v9829 = vrot.slane %v9825, %v9828
        %v9831 = vsel %vm9822, %v9829, 0.0
        %v9832 = vadd.f32 %v9813, %v9831
        %9833 = vset.pattern.permute.xlu0 9
        %9834 = vperm.xlu0 %9833, %v9467
        %v9835 = vpop.permute.xlu0 %9834
        %v9836 = vlaneseq
        %v9837 = vshrl.u32 %v9836, 7
        %v9838 = vsub.s32 0, %v9837
        %v9839 = vrot.slane %v9835, %v9838
        %vm9841 = vcmp.eq.f32.partialorder %v9461, %v9839
        %9842 = vset.pattern.permute.xlu0 9
        %9843 = vperm.xlu0 %9842, %v9523
        %v9844 = vpop.permute.xlu0 %9843
        %v9845 = vlaneseq
        %v9846 = vshrl.u32 %v9845, 7
        %v9847 = vsub.s32 0, %v9846
        %v9848 = vrot.slane %v9844, %v9847
        %v9850 = vsel %vm9841, %v9848, 0.0
        %9851 = vset.pattern.permute.xlu0 9
        %9852 = vperm.xlu0 %9851, %v9468
        %v9853 = vpop.permute.xlu0 %9852
        %v9854 = vlaneseq
        %v9855 = vshrl.u32 %v9854, 7
        %v9856 = vsub.s32 0, %v9855
        %v9857 = vrot.slane %v9853, %v9856
        %vm9859 = vcmp.eq.f32.partialorder %v9461, %v9857
        %9860 = vset.pattern.permute.xlu0 9
        %9861 = vperm.xlu0 %9860, %v9470
        %v9862 = vpop.permute.xlu0 %9861
        %v9863 = vlaneseq
        %v9864 = vshrl.u32 %v9863, 7
        %v9865 = vsub.s32 0, %v9864
        %v9866 = vrot.slane %v9862, %v9865
        %v9868 = vsel %vm9859, %v9866, 0.0
        %v9869 = vadd.f32 %v9850, %v9868
        %v9870 = vmul.f32 %v9832, %v9869
        %s9871 = scalar_lea.vmem [#allocation4], 4
        %9872 = vst.msk [vmem:[%s9871] ss:$8 sm:$0xf] %vm9559, %v9870
        %9873 = vst.msk [vmem:[%s9871] ss:$8 sm:$0x0] %vm9559, %v9870
        %9874 = vset.pattern.permute.xlu0 10
        %9875 = vperm.xlu0 %9874, %v9465
        %v9876 = vpop.permute.xlu0 %9875
        %v9877 = vlaneseq
        %v9878 = vshrl.u32 %v9877, 7
        %v9879 = vsub.s32 0, %v9878
        %v9880 = vrot.slane %v9876, %v9879
        %vm9882 = vcmp.eq.f32.partialorder %v9460, %v9880
        %9883 = vset.pattern.permute.xlu0 10
        %9884 = vperm.xlu0 %9883, %v9481
        %v9885 = vpop.permute.xlu0 %9884
        %v9886 = vlaneseq
        %v9887 = vshrl.u32 %v9886, 7
        %v9888 = vsub.s32 0, %v9887
        %v9889 = vrot.slane %v9885, %v9888
        %v9891 = vsel %vm9882, %v9889, 0.0
        %9892 = vset.pattern.permute.xlu0 10
        %9893 = vperm.xlu0 %9892, %v9466
        %v9894 = vpop.permute.xlu0 %9893
        %v9895 = vlaneseq
        %v9896 = vshrl.u32 %v9895, 7
        %v9897 = vsub.s32 0, %v9896
        %v9898 = vrot.slane %v9894, %v9897
        %vm9900 = vcmp.eq.f32.partialorder %v9460, %v9898
        %9901 = vset.pattern.permute.xlu0 10
        %9902 = vperm.xlu0 %9901, %v9469
        %v9903 = vpop.permute.xlu0 %9902
        %v9904 = vlaneseq
        %v9905 = vshrl.u32 %v9904, 7
        %v9906 = vsub.s32 0, %v9905
        %v9907 = vrot.slane %v9903, %v9906
        %v9909 = vsel %vm9900, %v9907, 0.0
        %v9910 = vadd.f32 %v9891, %v9909
        %9911 = vset.pattern.permute.xlu0 11
        %9912 = vperm.xlu0 %9911, %v9467
        %v9913 = vpop.permute.xlu0 %9912
        %v9914 = vlaneseq
        %v9915 = vshrl.u32 %v9914, 7
        %v9916 = vsub.s32 0, %v9915
        %v9917 = vrot.slane %v9913, %v9916
        %vm9919 = vcmp.eq.f32.partialorder %v9461, %v9917
        %9920 = vset.pattern.permute.xlu0 11
        %9921 = vperm.xlu0 %9920, %v9523
        %v9922 = vpop.permute.xlu0 %9921
        %v9923 = vlaneseq
        %v9924 = vshrl.u32 %v9923, 7
        %v9925 = vsub.s32 0, %v9924
        %v9926 = vrot.slane %v9922, %v9925
        %v9928 = vsel %vm9919, %v9926, 0.0
        %9929 = vset.pattern.permute.xlu0 11
        %9930 = vperm.xlu0 %9929, %v9468
        %v9931 = vpop.permute.xlu0 %9930
        %v9932 = vlaneseq
        %v9933 = vshrl.u32 %v9932, 7
        %v9934 = vsub.s32 0, %v9933
        %v9935 = vrot.slane %v9931, %v9934
        %vm9937 = vcmp.eq.f32.partialorder %v9461, %v9935
        %9938 = vset.pattern.permute.xlu0 11
        %9939 = vperm.xlu0 %9938, %v9470
        %v9940 = vpop.permute.xlu0 %9939
        %v9941 = vlaneseq
        %v9942 = vshrl.u32 %v9941, 7
        %v9943 = vsub.s32 0, %v9942
        %v9944 = vrot.slane %v9940, %v9943
        %v9946 = vsel %vm9937, %v9944, 0.0
        %v9947 = vadd.f32 %v9928, %v9946
        %v9948 = vmul.f32 %v9910, %v9947
        %s9949 = scalar_lea.vmem [#allocation4], 5
        %9950 = vst.msk [vmem:[%s9949] ss:$8 sm:$0xf] %vm9559, %v9948
        %9951 = vst.msk [vmem:[%s9949] ss:$8 sm:$0x0] %vm9559, %v9948
        %9952 = vset.pattern.permute.xlu0 12
        %9953 = vperm.xlu0 %9952, %v9465
        %v9954 = vpop.permute.xlu0 %9953
        %v9955 = vlaneseq
        %v9956 = vshrl.u32 %v9955, 7
        %v9957 = vsub.s32 0, %v9956
        %v9958 = vrot.slane %v9954, %v9957
        %vm9960 = vcmp.eq.f32.partialorder %v9460, %v9958
        %9961 = vset.pattern.permute.xlu0 12
        %9962 = vperm.xlu0 %9961, %v9481
        %v9963 = vpop.permute.xlu0 %9962
        %v9964 = vlaneseq
        %v9965 = vshrl.u32 %v9964, 7
        %v9966 = vsub.s32 0, %v9965
        %v9967 = vrot.slane %v9963, %v9966
        %v9969 = vsel %vm9960, %v9967, 0.0
        %9970 = vset.pattern.permute.xlu0 12
        %9971 = vperm.xlu0 %9970, %v9466
        %v9972 = vpop.permute.xlu0 %9971
        %v9973 = vlaneseq
        %v9974 = vshrl.u32 %v9973, 7
        %v9975 = vsub.s32 0, %v9974
        %v9976 = vrot.slane %v9972, %v9975
        %vm9978 = vcmp.eq.f32.partialorder %v9460, %v9976
        %9979 = vset.pattern.permute.xlu0 12
        %9980 = vperm.xlu0 %9979, %v9469
        %v9981 = vpop.permute.xlu0 %9980
        %v9982 = vlaneseq
        %v9983 = vshrl.u32 %v9982, 7
        %v9984 = vsub.s32 0, %v9983
        %v9985 = vrot.slane %v9981, %v9984
        %v9987 = vsel %vm9978, %v9985, 0.0
        %v9988 = vadd.f32 %v9969, %v9987
        %9989 = vset.pattern.permute.xlu0 13
        %9990 = vperm.xlu0 %9989, %v9467
        %v9991 = vpop.permute.xlu0 %9990
        %v9992 = vlaneseq
        %v9993 = vshrl.u32 %v9992, 7
        %v9994 = vsub.s32 0, %v9993
        %v9995 = vrot.slane %v9991, %v9994
        %vm9997 = vcmp.eq.f32.partialorder %v9461, %v9995
        %9998 = vset.pattern.permute.xlu0 13
        %9999 = vperm.xlu0 %9998, %v9523
        %v10000 = vpop.permute.xlu0 %9999
        %v10001 = vlaneseq
        %v10002 = vshrl.u32 %v10001, 7
        %v10003 = vsub.s32 0, %v10002
        %v10004 = vrot.slane %v10000, %v10003
        %v10006 = vsel %vm9997, %v10004, 0.0
        %10007 = vset.pattern.permute.xlu0 13
        %10008 = vperm.xlu0 %10007, %v9468
        %v10009 = vpop.permute.xlu0 %10008
        %v10010 = vlaneseq
        %v10011 = vshrl.u32 %v10010, 7
        %v10012 = vsub.s32 0, %v10011
        %v10013 = vrot.slane %v10009, %v10012
        %vm10015 = vcmp.eq.f32.partialorder %v9461, %v10013
        %10016 = vset.pattern.permute.xlu0 13
        %10017 = vperm.xlu0 %10016, %v9470
        %v10018 = vpop.permute.xlu0 %10017
        %v10019 = vlaneseq
        %v10020 = vshrl.u32 %v10019, 7
        %v10021 = vsub.s32 0, %v10020
        %v10022 = vrot.slane %v10018, %v10021
        %v10024 = vsel %vm10015, %v10022, 0.0
        %v10025 = vadd.f32 %v10006, %v10024
        %v10026 = vmul.f32 %v9988, %v10025
        %s10027 = scalar_lea.vmem [#allocation4], 6
        %10028 = vst.msk [vmem:[%s10027] ss:$8 sm:$0xf] %vm9559, %v10026
        %10029 = vst.msk [vmem:[%s10027] ss:$8 sm:$0x0] %vm9559, %v10026
        %10030 = vset.pattern.permute.xlu0 14
        %10031 = vperm.xlu0 %10030, %v9465
        %v10032 = vpop.permute.xlu0 %10031
        %v10033 = vlaneseq
        %v10034 = vshrl.u32 %v10033, 7
        %v10035 = vsub.s32 0, %v10034
        %v10036 = vrot.slane %v10032, %v10035
        %vm10038 = vcmp.eq.f32.partialorder %v9460, %v10036
        %10039 = vset.pattern.permute.xlu0 14
        %10040 = vperm.xlu0 %10039, %v9481
        %v10041 = vpop.permute.xlu0 %10040
        %v10042 = vlaneseq
        %v10043 = vshrl.u32 %v10042, 7
        %v10044 = vsub.s32 0, %v10043
        %v10045 = vrot.slane %v10041, %v10044
        %v10047 = vsel %vm10038, %v10045, 0.0
        %10048 = vset.pattern.permute.xlu0 14
        %10049 = vperm.xlu0 %10048, %v9466
        %v10050 = vpop.permute.xlu0 %10049
        %v10051 = vlaneseq
        %v10052 = vshrl.u32 %v10051, 7
        %v10053 = vsub.s32 0, %v10052
        %v10054 = vrot.slane %v10050, %v10053
        %vm10056 = vcmp.eq.f32.partialorder %v9460, %v10054
        %10057 = vset.pattern.permute.xlu0 14
        %10058 = vperm.xlu0 %10057, %v9469
        %v10059 = vpop.permute.xlu0 %10058
        %v10060 = vlaneseq
        %v10061 = vshrl.u32 %v10060, 7
        %v10062 = vsub.s32 0, %v10061
        %v10063 = vrot.slane %v10059, %v10062
        %v10065 = vsel %vm10056, %v10063, 0.0
        %v10066 = vadd.f32 %v10047, %v10065
        %10067 = vset.pattern.permute.xlu0 15
        %10068 = vperm.xlu0 %10067, %v9467
        %v10069 = vpop.permute.xlu0 %10068
        %v10070 = vlaneseq
        %v10071 = vshrl.u32 %v10070, 7
        %v10072 = vsub.s32 0, %v10071
        %v10073 = vrot.slane %v10069, %v10072
        %vm10075 = vcmp.eq.f32.partialorder %v9461, %v10073
        %10076 = vset.pattern.permute.xlu0 15
        %10077 = vperm.xlu0 %10076, %v9523
        %v10078 = vpop.permute.xlu0 %10077
        %v10079 = vlaneseq
        %v10080 = vshrl.u32 %v10079, 7
        %v10081 = vsub.s32 0, %v10080
        %v10082 = vrot.slane %v10078, %v10081
        %v10084 = vsel %vm10075, %v10082, 0.0
        %10085 = vset.pattern.permute.xlu0 15
        %10086 = vperm.xlu0 %10085, %v9468
        %v10087 = vpop.permute.xlu0 %10086
        %v10088 = vlaneseq
        %v10089 = vshrl.u32 %v10088, 7
        %v10090 = vsub.s32 0, %v10089
        %v10091 = vrot.slane %v10087, %v10090
        %vm10093 = vcmp.eq.f32.partialorder %v9461, %v10091
        %10094 = vset.pattern.permute.xlu0 15
        %10095 = vperm.xlu0 %10094, %v9470
        %v10096 = vpop.permute.xlu0 %10095
        %v10097 = vlaneseq
        %v10098 = vshrl.u32 %v10097, 7
        %v10099 = vsub.s32 0, %v10098
        %v10100 = vrot.slane %v10096, %v10099
        %v10102 = vsel %vm10093, %v10100, 0.0
        %v10103 = vadd.f32 %v10084, %v10102
        %v10104 = vmul.f32 %v10066, %v10103
        %s10105 = scalar_lea.vmem [#allocation4], 7
        %10106 = vst.msk [vmem:[%s10105] ss:$8 sm:$0xf] %vm9559, %v10104
        %10107 = vst.msk [vmem:[%s10105] ss:$8 sm:$0x0] %vm9559, %v10104
        %v10108 = vld [vmem:[#allocation4] sm:$0xff]
        %v10109 = vld [vmem:[#allocation4 + $0x8] sm:$0xff]
        %v10110 = vld [vmem:[#allocation4 + $0x10] sm:$0xff]
        %v10111 = vld [vmem:[#allocation4 + $0x18] sm:$0xff]
        %10112 = vmatprep.subr.mxu0 0.0
        %10113 = vmatpush1.msra.mxu0 %v557
        %10114 = vmatprep.subr.mxu0 0.0
        %10115 = vmatpush1.msra.mxu0 %v558
        %10116 = vmatprep.subr.mxu0 0.0
        %10117 = vmatpush1.msra.mxu0 %v559
        %10118 = vmatprep.subr.mxu0 0.0
        %10119 = vmatpush1.msra.mxu0 %v560
        %10120 = vmatprep.subr.mxu0 0.0
        %10121 = vmatpush1.msra.mxu0 %v561
        %10122 = vmatprep.subr.mxu0 0.0
        %10123 = vmatpush1.msra.mxu0 %v562
        %10124 = vmatprep.subr.mxu0 0.0
        %10125 = vmatpush1.msra.mxu0 %v563
        %10126 = vmatprep.subr.mxu0 0.0
        %10127 = vmatpush1.msra.mxu0 %v564
        %10128 = vmatprep.subr.mxu0 0.0
        %10129 = vmatpush1.msra.mxu0 %v565
        %10130 = vmatprep.subr.mxu0 0.0
        %10131 = vmatpush1.msra.mxu0 %v566
        %10132 = vmatprep.subr.mxu0 0.0
        %10133 = vmatpush1.msra.mxu0 %v567
        %10134 = vmatprep.subr.mxu0 0.0
        %10135 = vmatpush1.msra.mxu0 %v568
        %10136 = vmatprep.subr.mxu0 0.0
        %10137 = vmatpush1.msra.mxu0 %v569
        %10138 = vmatprep.subr.mxu0 0.0
        %10139 = vmatpush1.msra.mxu0 %v570
        %10140 = vmatprep.subr.mxu0 0.0
        %10141 = vmatpush1.msra.mxu0 %v571
        %10142 = vmatprep.subr.mxu0 0.0
        %10143 = vmatpush1.msra.mxu0 %v572
        %10144 = vmatprep.subr.mxu0 0.0
        %10145 = vmatpush1.msra.mxu0 %v573
        %10146 = vmatprep.subr.mxu0 0.0
        %10147 = vmatpush1.msra.mxu0 %v574
        %10148 = vmatprep.subr.mxu0 0.0
        %10149 = vmatpush1.msra.mxu0 %v575
        %10150 = vmatprep.subr.mxu0 0.0
        %10151 = vmatpush1.msra.mxu0 %v576
        %10152 = vmatprep.subr.mxu0 0.0
        %10153 = vmatpush1.msra.mxu0 %v577
        %10154 = vmatprep.subr.mxu0 0.0
        %10155 = vmatpush1.msra.mxu0 %v578
        %10156 = vmatprep.subr.mxu0 0.0
        %10157 = vmatpush1.msra.mxu0 %v579
        %10158 = vmatprep.subr.mxu0 0.0
        %10159 = vmatpush1.msra.mxu0 %v580
        %10160 = vmatprep.subr.mxu0 0.0
        %10161 = vmatpush1.msra.mxu0 %v581
        %10162 = vmatprep.subr.mxu0 0.0
        %10163 = vmatpush1.msra.mxu0 %v582
        %10164 = vmatprep.subr.mxu0 0.0
        %10165 = vmatpush1.msra.mxu0 %v583
        %10166 = vmatprep.subr.mxu0 0.0
        %10167 = vmatpush1.msra.mxu0 %v584
        %10168 = vmatprep.subr.mxu0 0.0
        %10169 = vmatpush1.msra.mxu0 %v585
        %10170 = vmatprep.subr.mxu0 0.0
        %10171 = vmatpush1.msra.mxu0 %v586
        %10172 = vmatprep.subr.mxu0 0.0
        %10173 = vmatpush1.msra.mxu0 %v587
        %10174 = vmatprep.subr.mxu0 0.0
        %10175 = vmatpush1.msra.mxu0 %v588
        %10176 = vmatprep.mubr.f32.mxu0 %v10109
        %10177 = vmatmul.mubr.f32.gmra.mrb[0].mxu0 %v10108
        %v10178 = vpop.f32.mrb[0].mxu0
        %v10179 = vadd.f32 0.0, %v10178
        %v10180 = vpop.f32.mrb[0].mxu0
        %10181 = vdwg.mxu0
        %10182 = vmatprep.subr.mxu0 0.0
        %10183 = vmatpush1.msra.mxu0 %v589
        %10184 = vmatprep.subr.mxu0 0.0
        %10185 = vmatpush1.msra.mxu0 %v590
        %10186 = vmatprep.subr.mxu0 0.0
        %10187 = vmatpush1.msra.mxu0 %v591
        %10188 = vmatprep.subr.mxu0 0.0
        %10189 = vmatpush1.msra.mxu0 %v592
        %10190 = vmatprep.subr.mxu0 0.0
        %10191 = vmatpush1.msra.mxu0 %v593
        %10192 = vmatprep.subr.mxu0 0.0
        %10193 = vmatpush1.msra.mxu0 %v594
        %10194 = vmatprep.subr.mxu0 0.0
        %10195 = vmatpush1.msra.mxu0 %v595
        %10196 = vmatprep.subr.mxu0 0.0
        %10197 = vmatpush1.msra.mxu0 %v596
        %10198 = vmatprep.subr.mxu0 0.0
        %10199 = vmatpush1.msra.mxu0 %v597
        %10200 = vmatprep.subr.mxu0 0.0
        %10201 = vmatpush1.msra.mxu0 %v598
        %10202 = vmatprep.subr.mxu0 0.0
        %10203 = vmatpush1.msra.mxu0 %v599
        %10204 = vmatprep.subr.mxu0 0.0
        %10205 = vmatpush1.msra.mxu0 %v600
        %10206 = vmatprep.subr.mxu0 0.0
        %10207 = vmatpush1.msra.mxu0 %v601
        %10208 = vmatprep.subr.mxu0 0.0
        %10209 = vmatpush1.msra.mxu0 %v602
        %10210 = vmatprep.subr.mxu0 0.0
        %10211 = vmatpush1.msra.mxu0 %v603
        %10212 = vmatprep.subr.mxu0 0.0
        %10213 = vmatpush1.msra.mxu0 %v604
        %10214 = vmatprep.subr.mxu0 0.0
        %10215 = vmatpush1.msra.mxu0 %v605
        %10216 = vmatprep.subr.mxu0 0.0
        %10217 = vmatpush1.msra.mxu0 %v606
        %10218 = vmatprep.subr.mxu0 0.0
        %10219 = vmatpush1.msra.mxu0 %v607
        %10220 = vmatprep.subr.mxu0 0.0
        %10221 = vmatpush1.msra.mxu0 %v608
        %10222 = vmatprep.subr.mxu0 0.0
        %10223 = vmatpush1.msra.mxu0 %v609
        %10224 = vmatprep.subr.mxu0 0.0
        %10225 = vmatpush1.msra.mxu0 %v610
        %10226 = vmatprep.subr.mxu0 0.0
        %10227 = vmatpush1.msra.mxu0 %v611
        %10228 = vmatprep.subr.mxu0 0.0
        %10229 = vmatpush1.msra.mxu0 %v612
        %10230 = vmatprep.subr.mxu0 0.0
        %10231 = vmatpush1.msra.mxu0 %v613
        %10232 = vmatprep.subr.mxu0 0.0
        %10233 = vmatpush1.msra.mxu0 %v614
        %10234 = vmatprep.subr.mxu0 0.0
        %10235 = vmatpush1.msra.mxu0 %v615
        %10236 = vmatprep.subr.mxu0 0.0
        %10237 = vmatpush1.msra.mxu0 %v616
        %10238 = vmatprep.subr.mxu0 0.0
        %10239 = vmatpush1.msra.mxu0 %v617
        %10240 = vmatprep.subr.mxu0 0.0
        %10241 = vmatpush1.msra.mxu0 %v618
        %10242 = vmatprep.subr.mxu0 0.0
        %10243 = vmatpush1.msra.mxu0 %v619
        %10244 = vmatprep.subr.mxu0 0.0
        %10245 = vmatpush1.msra.mxu0 %v620
        %10246 = vmatprep.mubr.f32.mxu0 %v10111
        %10247 = vmatmul.mubr.f32.gmra.mrb[0].mxu0 %v10110
        %v10248 = vpop.f32.mrb[0].mxu0
        %v10249 = vadd.f32 %v10179, %v10248
        %v10250 = vpop.f32.mrb[0].mxu0
        %10251 = vdwg.mxu0
        %10252 = vst.msk [vmem:[%s542] sm:$0xff] %vm2282, %v10249
        %s10253 = sand.u32 %s381, 1
        %s10254 = scalar_lea.sflag [#allocation6], %s10253
        %s10255 = sand.u32 %s381, 1
        %s10256 = smul.addr %s10255, 8
        %s10257 = scalar_lea.vmem [#allocation5], %s10256
        %p10258 = scmp.lt.s32.totalorder %s32, 1
        %s10259 = scalar_select %p10258, %s32, 1
        %s10260 = scalar_lea.vmem %s17, %s10259
        // Predicated region
        $region85: #{graph_feat_forward.1} parent=83 // pred_check
          %p10261 = pneg %p391
        $region86: #{graph_feat_forward.1} parent=83 // pred_check_branch
          %10263 = sbr.rel (%p10261) target = $region88
        $region87: #{graph_feat_forward.1} parent=83 // pred_region
          %s10265 = ssub.s32 128, 128
          %10266 = vsyncadd %s10254, %s10265
          %s10267 = smul.addr %s32, 128
          %s10268 = scalar_lea.hbm %s16, %s10267
          %s10270 = sshll.u32 %s10257, 4
          %s10271 = int_to_ptr.vmem [resolvable:$true] %s10270
          %10273 = dma.vmem_to_hbm [thread:$0]  %s10271, 128, %s10268, %s10254
        $region88: #{graph_feat_forward.1} parent=83 // pred_fallthru
          _
        // Predicated region
        $region89: #{graph_feat_forward.1} parent=83 // pred_check
          %p10274 = pneg %p417
        $region90: #{graph_feat_forward.1} parent=83 // pred_check_branch
          %10276 = sbr.rel (%p10274) target = $region92
        $region91: #{graph_feat_forward.1} parent=83 // pred_region
          _
        $region92: #{graph_feat_forward.1} parent=83 // pred_fallthru
          _
      $region84: #{graph_feat_forward.1} parent=5 // pred_fallthru
        _
      %p10277 = scmp.le.s32.totalorder 2, %s27
      // Predicated region
      $region93: #{graph_feat_forward.1} parent=5 // pred_check
        %p10278 = pneg %p10277
      $region94: #{graph_feat_forward.1} parent=5 // pred_check_branch
        %10280 = sbr.rel (%p10278) target = $region96
      $region95: #{graph_feat_forward.1} parent=5 // pred_region
        %s10281 = ssub.s32 %s27, 2
        // Predicated region
        $region97: #{graph_feat_forward.1} parent=95 // pred_check
          %p10282 = pneg %p397
        $region98: #{graph_feat_forward.1} parent=95 // pred_check_branch
          %10284 = sbr.rel (%p10282) target = $region100
        $region99: #{graph_feat_forward.1} parent=95 // pred_region
          %s10285 = sand.u32 %s382, 1
          %s10286 = scalar_lea.sflag [#allocation6], %s10285
          %s10287 = sand.u32 %s382, 1
          %s10288 = smul.addr %s10287, 8
          %s10289 = scalar_lea.vmem [#allocation5], %s10288
          %10290 = dma.done %s10286, 128
        $region100: #{graph_feat_forward.1} parent=95 // pred_fallthru
          _
        // Predicated region
        $region101: #{graph_feat_forward.1} parent=95 // pred_check
          %p10291 = pneg %p423
        $region102: #{graph_feat_forward.1} parent=95 // pred_check_branch
          %10293 = sbr.rel (%p10291) target = $region104
        $region103: #{graph_feat_forward.1} parent=95 // pred_region
          %p10294 = scmp.lt.s32.totalorder %s33, 1
          %s10295 = scalar_select %p10294, %s33, 1
          %s10296 = scalar_lea.vmem %s17, %s10295
        $region104: #{graph_feat_forward.1} parent=95 // pred_fallthru
          _
      $region96: #{graph_feat_forward.1} parent=5 // pred_fallthru
        _
    $region6: #{graph_feat_forward.1} parent=1 // loop_footer
      %s31 = sadd.s32 1, %s27
    $region7: #{graph_feat_forward.1} parent=1 // loop_footer_branch
      %26 = sbr.rel target = $region3
    $region8: #{graph_feat_forward.1} parent=1 // loop_exit
      _
    %10297 = vsyncpa [#allocation6], 1
    %s10298 = scalar_lea.sflag [#allocation6], 1
    %10299 = vsyncpa %s10298, 1

</llo_original>
